<compile_context>
chip_gen: v7x
topology: tpu7x:2x2x1
jax: 0.10.0
libtpu: 0.0.40
codegen_flags: <defaults>
</compile_context>

<pallas_src>
import functools

import jax
import jax.numpy as jnp
from jax.experimental import pallas as pl
from jax.experimental.pallas import tpu as pltpu

PA_FEAT = 10
PC_FEAT = 10
COMMON_FEAT = 10
POLYBERT_DIM = 600
OUT_LANES = 128  # lane-dense padded output width (column 0 is the real output)


def _ipec_kernel(
    # activations (batch-tiled)
    tok_pa_ref, mask_pa_ref, tok_pc_ref, mask_pc_ref,
    pa_feat_ref, pc_feat_ref, common_feat_ref,
    # PA_chem: Linear(600,128) ReLU, Linear(128,64) ReLU
    w_pa_c1_ref, b_pa_c1_ref, w_pa_c2_ref, b_pa_c2_ref,
    # PC_chem
    w_pc_c1_ref, b_pc_c1_ref, w_pc_c2_ref, b_pc_c2_ref,
    # feature_PA / feature_PC: Linear(10,64) ReLU
    w_f_pa_ref, b_f_pa_ref, w_f_pc_ref, b_f_pc_ref,
    # PA_all / PC_all: Linear(128,64) ReLU, weight pre-split into two (64,64)
    w_pa_all_a_ref, w_pa_all_b_ref, b_pa_all_ref,
    w_pc_all_a_ref, w_pc_all_b_ref, b_pc_all_ref,
    # layers_stack_all: Linear(138,64) ReLU (split 64/64/10), Linear(64,1) padded to 128
    w_fin1_a_ref, w_fin1_b_ref, w_fin1_c_ref, b_fin1_ref,
    w_fin2_ref, b_fin2_ref,
    # output (lane-padded)
    out_ref,
):
    f32 = jnp.float32

    def mean_pool(tok_ref, mask_ref):
        tok = tok_ref[...]                                   # [TB, T, D] (f32 or bf16)
        mask = mask_ref[...]                                 # [TB, 1, T] f32
        # Masked sum over T as a batched MXU contraction ([1,T] x [T,D] per row),
        # accumulated in f32.  Keeps the VPU/XLU slots free for the epilogue.
        emb_sum = jax.lax.dot_general(
            mask.astype(tok.dtype), tok,
            dimension_numbers=(((2,), (1,)), ((0,), (0,))),
            preferred_element_type=f32)                      # [TB, 1, D]
        emb_sum = emb_sum[:, 0, :]                           # [TB, D]
        mask_sum = jnp.sum(mask.astype(f32), axis=2)         # [TB, 1]
        return emb_sum / jnp.maximum(mask_sum, 1e-9)

    def linear(x, w_ref, b_ref):
        # Weights stay in their stored dtype; accumulation is forced to f32.
        return jnp.dot(x, w_ref[...], preferred_element_type=f32) + b_ref[...]

    relu = lambda v: jnp.maximum(v, 0.0)

    # ---- masked mean pooling (replaces polyBERT mean_pooling output) ----
    out_1 = mean_pool(tok_pa_ref, mask_pa_ref)               # [TB, 600]
    out_2 = mean_pool(tok_pc_ref, mask_pc_ref)               # [TB, 600]

    # ---- PA_chem / PC_chem MLPs (dropout = identity in eval) ----
    pa_chem = relu(linear(relu(linear(out_1, w_pa_c1_ref, b_pa_c1_ref)),
                          w_pa_c2_ref, b_pa_c2_ref))         # [TB, 64]
    pc_chem = relu(linear(relu(linear(out_2, w_pc_c1_ref, b_pc_c1_ref)),
                          w_pc_c2_ref, b_pc_c2_ref))         # [TB, 64]

    # ---- feature_PA / feature_PC ----
    pa_feat = relu(linear(pa_feat_ref[...].astype(f32), w_f_pa_ref, b_f_pa_ref))
    pc_feat = relu(linear(pc_feat_ref[...].astype(f32), w_f_pc_ref, b_f_pc_ref))

    # ---- PA_all / PC_all on cat([chem, feat]) -> split matmuls ----
    pa_all = relu(
        jnp.dot(pa_chem, w_pa_all_a_ref[...], preferred_element_type=f32)
        + jnp.dot(pa_feat, w_pa_all_b_ref[...], preferred_element_type=f32)
        + b_pa_all_ref[...])                                 # [TB, 64]
    pc_all = relu(
        jnp.dot(pc_chem, w_pc_all_a_ref[...], preferred_element_type=f32)
        + jnp.dot(pc_feat, w_pc_all_b_ref[...], preferred_element_type=f32)
        + b_pc_all_ref[...])                                 # [TB, 64]

    # ---- layers_stack_all on cat([pa_all, pc_all, common]) ----
    common = common_feat_ref[...].astype(f32)                # [TB, 10]
    hidden = relu(
        jnp.dot(pa_all, w_fin1_a_ref[...], preferred_element_type=f32)
        + jnp.dot(pc_all, w_fin1_b_ref[...], preferred_element_type=f32)
        + jnp.dot(common, w_fin1_c_ref[...], preferred_element_type=f32)
        + b_fin1_ref[...])                                   # [TB, 64]

    # Final layer: weight/bias are zero-padded to 128 lanes so the store is a
    # full, unmasked (TB, 128) tile; only column 0 carries the model output.
    final = (jnp.dot(hidden, w_fin2_ref[...], preferred_element_type=f32)
             + b_fin2_ref[...])                              # [TB, 128]
    out_ref[...] = final.astype(out_ref.dtype)


def init_params(key):
    """Deterministic parameter init matching the nn.Module shapes."""
    ks = jax.random.split(key, 16)

    def lin(k, fan_in, fan_out):
        kw, kb = jax.random.split(k)
        bound = 1.0 / jnp.sqrt(fan_in)
        w = jax.random.uniform(kw, (fan_in, fan_out), jnp.float32, -bound, bound)
        b = jax.random.uniform(kb, (1, fan_out), jnp.float32, -bound, bound)
        return w, b

    p = {}
    # PA_chem / PC_chem
    p["w_pa_c1"], p["b_pa_c1"] = lin(ks[0], POLYBERT_DIM, 128)
    p["w_pa_c2"], p["b_pa_c2"] = lin(ks[1], 128, 64)
    p["w_pc_c1"], p["b_pc_c1"] = lin(ks[2], POLYBERT_DIM, 128)
    p["w_pc_c2"], p["b_pc_c2"] = lin(ks[3], 128, 64)
    # feature_PA / feature_PC
    p["w_f_pa"], p["b_f_pa"] = lin(ks[4], PA_FEAT, 64)
    p["w_f_pc"], p["b_f_pc"] = lin(ks[5], PC_FEAT, 64)
    # PA_all / PC_all   (Linear(128,64); weight split along the 128 input dim)
    w_pa_all, p["b_pa_all"] = lin(ks[6], 128, 64)
    p["w_pa_all_a"], p["w_pa_all_b"] = w_pa_all[:64], w_pa_all[64:]
    w_pc_all, p["b_pc_all"] = lin(ks[7], 128, 64)
    p["w_pc_all_a"], p["w_pc_all_b"] = w_pc_all[:64], w_pc_all[64:]
    # layers_stack_all  (Linear(138,64) split 64/64/10, Linear(64,1))
    w_fin1, p["b_fin1"] = lin(ks[8], 128 + COMMON_FEAT, 64)
    p["w_fin1_a"] = w_fin1[:64]
    p["w_fin1_b"] = w_fin1[64:128]
    p["w_fin1_c"] = w_fin1[128:]
    p["w_fin2"], p["b_fin2"] = lin(ks[9], 64, 1)
    return p


@functools.partial(jax.jit, static_argnames=("block_b",))
def ipec_forward(tok_pa, mask_pa, tok_pc, mask_pc,
                 pa_features, pc_features, common_features, params,
                 *, block_b=8):
    B, T, D = tok_pa.shape
    f32 = jnp.float32

    # Batch tile: multiple of 8 sublanes, or the full (small) batch.
    if block_b >= B:
        tb = B
    else:
        tb = max(8, (block_b // 8) * 8)
    grid = (pl.cdiv(B, tb),)

    # Masks enter the kernel as [B, 1, T] so the masked sum is a batched matmul.
    mask_pa3 = jnp.reshape(mask_pa, (B, 1, T)).astype(f32)
    mask_pc3 = jnp.reshape(mask_pc, (B, 1, T)).astype(f32)

    # Zero-pad the last Linear(64,1) to 128 lanes (lane-dense output store).
    w_fin2_p = jnp.zeros((64, OUT_LANES), f32).at[:, :1].set(params["w_fin2"].astype(f32))
    b_fin2_p = jnp.zeros((1, OUT_LANES), f32).at[:, :1].set(params["b_fin2"].astype(f32))

    weights = (
        params["w_pa_c1"], params["b_pa_c1"], params["w_pa_c2"], params["b_pa_c2"],
        params["w_pc_c1"], params["b_pc_c1"], params["w_pc_c2"], params["b_pc_c2"],
        params["w_f_pa"], params["b_f_pa"], params["w_f_pc"], params["b_f_pc"],
        params["w_pa_all_a"], params["w_pa_all_b"], params["b_pa_all"],
        params["w_pc_all_a"], params["w_pc_all_b"], params["b_pc_all"],
        params["w_fin1_a"], params["w_fin1_b"], params["w_fin1_c"], params["b_fin1"],
        w_fin2_p, b_fin2_p,
    )
    inputs = (tok_pa, mask_pa3, tok_pc, mask_pc3,
              pa_features, pc_features, common_features) + weights

    tok_spec = lambda: pl.BlockSpec((tb, T, D), lambda i: (i, 0, 0))
    mask_spec = lambda: pl.BlockSpec((tb, 1, T), lambda i: (i, 0, 0))
    feat_spec = lambda f: pl.BlockSpec((tb, f), lambda i: (i, 0))
    resident = lambda w: pl.BlockSpec(w.shape, lambda i: (0, 0))  # stays in VMEM

    in_specs = [
        tok_spec(), mask_spec(), tok_spec(), mask_spec(),
        feat_spec(pa_features.shape[1]),
        feat_spec(pc_features.shape[1]),
        feat_spec(common_features.shape[1]),
    ] + [resident(w) for w in weights]
    out_spec = pl.BlockSpec((tb, OUT_LANES), lambda i: (i, 0))

    # VMEM budget: double-buffered batch-tiled streams + resident weights.
    isz = lambda x: jnp.dtype(x.dtype).itemsize
    tok_tile = tb * T * D * isz(tok_pa)
    mask_tile = tb * T * 4
    small_tile = tb * OUT_LANES * 4           # feature + output tiles (generous)
    streamed = 2 * (2 * tok_tile + 2 * mask_tile + 4 * small_tile)
    weight_bytes = sum(int(w.size) * isz(w) for w in weights)
    vmem_limit = int(min(max(streamed + 2 * weight_bytes + (8 << 20), 32 << 20),
                         120 << 20))

    out_padded = pl.pallas_call(
        _ipec_kernel,
        grid=grid,
        out_shape=jax.ShapeDtypeStruct((B, OUT_LANES), f32),
        in_specs=in_specs,
        out_specs=out_spec,
        compiler_params=pltpu.CompilerParams(
            dimension_semantics=("parallel",),
            vmem_limit_bytes=vmem_limit),
    )(*inputs)
    return out_padded[:, :1]


def ipec_reference(tok_pa, mask_pa, tok_pc, mask_pc,
                   pa_features, pc_features, common_features, params):
    """Pure-JAX reference mirroring the PyTorch forward (eval mode)."""
    f32 = jnp.float32

    def mean_pool(tok, mask):
        m = mask.astype(f32)[:, :, None]
        t = tok.astype(f32)
        s = jnp.sum(t * m, axis=1)
        d = jnp.maximum(jnp.sum(m, axis=1), 1e-9)
        return s / d

    relu = lambda v: jnp.maximum(v, 0.0)
    out_1 = mean_pool(tok_pa, mask_pa)
    out_2 = mean_pool(tok_pc, mask_pc)

    pa_chem = relu(relu(out_1 @ params["w_pa_c1"] + params["b_pa_c1"])
                   @ params["w_pa_c2"] + params["b_pa_c2"])
    pc_chem = relu(relu(out_2 @ params["w_pc_c1"] + params["b_pc_c1"])
                   @ params["w_pc_c2"] + params["b_pc_c2"])
    pa_feat = relu(pa_features @ params["w_f_pa"] + params["b_f_pa"])
    pc_feat = relu(pc_features @ params["w_f_pc"] + params["b_f_pc"])

    pa_all = relu(jnp.concatenate([pa_chem, pa_feat], axis=1)
                  @ jnp.concatenate([params["w_pa_all_a"], params["w_pa_all_b"]], axis=0)
                  + params["b_pa_all"])
    pc_all = relu(jnp.concatenate([pc_chem, pc_feat], axis=1)
                  @ jnp.concatenate([params["w_pc_all_a"], params["w_pc_all_b"]], axis=0)
                  + params["b_pc_all"])

    combined = jnp.concatenate([pa_all, pc_all, common_features], axis=1)
    w_fin1 = jnp.concatenate(
        [params["w_fin1_a"], params["w_fin1_b"], params["w_fin1_c"]], axis=0)
    hidden = relu(combined @ w_fin1 + params["b_fin1"])
    return hidden @ params["w_fin2"] + params["b_fin2"]


if __name__ == "__main__":
    key = jax.random.PRNGKey(0)
    k_tok_pa, k_tok_pc, k_pa, k_pc, k_common, k_params = jax.random.split(key, 6)

    B, T = 16, 16  # small demo shapes; block_b=8 -> grid of 2 batch tiles

    # bf16 token storage halves HBM traffic of the dominant [B,T,600] streams.
    tok_pa = jax.random.normal(
        k_tok_pa, (B, T, POLYBERT_DIM), jnp.float32).astype(jnp.bfloat16)
    tok_pc = jax.random.normal(
        k_tok_pc, (B, T, POLYBERT_DIM), jnp.float32).astype(jnp.bfloat16)

    # Deterministic attention masks with varying numbers of valid tokens.
    tok_idx = jnp.arange(T)[None, :]
    len_pa = (jnp.arange(B) % T) + 1
    len_pc = T - (jnp.arange(B) % (T // 2))
    mask_pa = (tok_idx < len_pa[:, None]).astype(jnp.float32)   # [B, T]
    mask_pc = (tok_idx < len_pc[:, None]).astype(jnp.float32)   # [B, T]

    pa_features = jax.random.normal(k_pa, (B, PA_FEAT), jnp.float32)
    pc_features = jax.random.normal(k_pc, (B, PC_FEAT), jnp.float32)
    common_features = jax.random.normal(k_common, (B, COMMON_FEAT), jnp.float32)

    params = init_params(k_params)

    out = ipec_forward(tok_pa, mask_pa, tok_pc, mask_pc,
                       pa_features, pc_features, common_features, params,
                       block_b=8)
    out = jax.block_until_ready(out)

    ref = ipec_reference(tok_pa, mask_pa, tok_pc, mask_pc,
                         pa_features, pc_features, common_features, params)
    assert out.shape == (B, 1), out.shape
    assert jnp.allclose(out, ref, atol=1e-3, rtol=1e-3), (out, ref)

    # TODO(synk): the polyBERT tokenizer/encoder is an external HF model and is
    # not reproduced; the kernel consumes its token embeddings + attention masks.
    print("KERNEL_OK")
</pallas_src>

<mosaic_0001>
module attributes {stable_mosaic.version = 11 : i64} {
  func.func @_ipec_kernel(%arg0: i32, %arg1: memref<8x16x600xbf16, #tpu.memory_space<vmem>>, %arg2: memref<8x1x16xf32, #tpu.memory_space<vmem>>, %arg3: memref<8x16x600xbf16, #tpu.memory_space<vmem>>, %arg4: memref<8x1x16xf32, #tpu.memory_space<vmem>>, %arg5: memref<8x10xf32, #tpu.memory_space<vmem>>, %arg6: memref<8x10xf32, #tpu.memory_space<vmem>>, %arg7: memref<8x10xf32, #tpu.memory_space<vmem>>, %arg8: memref<600x128xf32, #tpu.memory_space<vmem>>, %arg9: memref<1x128xf32, #tpu.memory_space<vmem>>, %arg10: memref<128x64xf32, #tpu.memory_space<vmem>>, %arg11: memref<1x64xf32, #tpu.memory_space<vmem>>, %arg12: memref<600x128xf32, #tpu.memory_space<vmem>>, %arg13: memref<1x128xf32, #tpu.memory_space<vmem>>, %arg14: memref<128x64xf32, #tpu.memory_space<vmem>>, %arg15: memref<1x64xf32, #tpu.memory_space<vmem>>, %arg16: memref<10x64xf32, #tpu.memory_space<vmem>>, %arg17: memref<1x64xf32, #tpu.memory_space<vmem>>, %arg18: memref<10x64xf32, #tpu.memory_space<vmem>>, %arg19: memref<1x64xf32, #tpu.memory_space<vmem>>, %arg20: memref<64x64xf32, #tpu.memory_space<vmem>>, %arg21: memref<64x64xf32, #tpu.memory_space<vmem>>, %arg22: memref<1x64xf32, #tpu.memory_space<vmem>>, %arg23: memref<64x64xf32, #tpu.memory_space<vmem>>, %arg24: memref<64x64xf32, #tpu.memory_space<vmem>>, %arg25: memref<1x64xf32, #tpu.memory_space<vmem>>, %arg26: memref<64x64xf32, #tpu.memory_space<vmem>>, %arg27: memref<64x64xf32, #tpu.memory_space<vmem>>, %arg28: memref<10x64xf32, #tpu.memory_space<vmem>>, %arg29: memref<1x64xf32, #tpu.memory_space<vmem>>, %arg30: memref<64x128xf32, #tpu.memory_space<vmem>>, %arg31: memref<1x128xf32, #tpu.memory_space<vmem>>, %arg32: memref<8x128xf32, #tpu.memory_space<vmem>>) attributes {dimension_semantics = [#tpu.dimension_semantics<parallel>], iteration_bounds = array<i64: 2>, scalar_prefetch = 0 : i64, scratch_operands = 0 : i64, tpu.core_type = #tpu.core_type<tc>, window_params = [{transform_indices = @transform_0, window_bounds = array<i64: 8, 16, 600>}, {transform_indices = @transform_1, window_bounds = array<i64: 8, 1, 16>}, {transform_indices = @transform_2, window_bounds = array<i64: 8, 16, 600>}, {transform_indices = @transform_3, window_bounds = array<i64: 8, 1, 16>}, {transform_indices = @transform_4, window_bounds = array<i64: 8, 10>}, {transform_indices = @transform_5, window_bounds = array<i64: 8, 10>}, {transform_indices = @transform_6, window_bounds = array<i64: 8, 10>}, {pipeline_mode = #tpu.pipeline_mode<synchronous>, transform_indices = @transform_7, window_bounds = array<i64: 600, 128>}, {pipeline_mode = #tpu.pipeline_mode<synchronous>, transform_indices = @transform_8, window_bounds = array<i64: 1, 128>}, {pipeline_mode = #tpu.pipeline_mode<synchronous>, transform_indices = @transform_9, window_bounds = array<i64: 128, 64>}, {pipeline_mode = #tpu.pipeline_mode<synchronous>, transform_indices = @transform_10, window_bounds = array<i64: 1, 64>}, {pipeline_mode = #tpu.pipeline_mode<synchronous>, transform_indices = @transform_11, window_bounds = array<i64: 600, 128>}, {pipeline_mode = #tpu.pipeline_mode<synchronous>, transform_indices = @transform_12, window_bounds = array<i64: 1, 128>}, {pipeline_mode = #tpu.pipeline_mode<synchronous>, transform_indices = @transform_13, window_bounds = array<i64: 128, 64>}, {pipeline_mode = #tpu.pipeline_mode<synchronous>, transform_indices = @transform_14, window_bounds = array<i64: 1, 64>}, {pipeline_mode = #tpu.pipeline_mode<synchronous>, transform_indices = @transform_15, window_bounds = array<i64: 10, 64>}, {pipeline_mode = #tpu.pipeline_mode<synchronous>, transform_indices = @transform_16, window_bounds = array<i64: 1, 64>}, {pipeline_mode = #tpu.pipeline_mode<synchronous>, transform_indices = @transform_17, window_bounds = array<i64: 10, 64>}, {pipeline_mode = #tpu.pipeline_mode<synchronous>, transform_indices = @transform_18, window_bounds = array<i64: 1, 64>}, {pipeline_mode = #tpu.pipeline_mode<synchronous>, transform_indices = @transform_19, window_bounds = array<i64: 64, 64>}, {pipeline_mode = #tpu.pipeline_mode<synchronous>, transform_indices = @transform_20, window_bounds = array<i64: 64, 64>}, {pipeline_mode = #tpu.pipeline_mode<synchronous>, transform_indices = @transform_21, window_bounds = array<i64: 1, 64>}, {pipeline_mode = #tpu.pipeline_mode<synchronous>, transform_indices = @transform_22, window_bounds = array<i64: 64, 64>}, {pipeline_mode = #tpu.pipeline_mode<synchronous>, transform_indices = @transform_23, window_bounds = array<i64: 64, 64>}, {pipeline_mode = #tpu.pipeline_mode<synchronous>, transform_indices = @transform_24, window_bounds = array<i64: 1, 64>}, {pipeline_mode = #tpu.pipeline_mode<synchronous>, transform_indices = @transform_25, window_bounds = array<i64: 64, 64>}, {pipeline_mode = #tpu.pipeline_mode<synchronous>, transform_indices = @transform_26, window_bounds = array<i64: 64, 64>}, {pipeline_mode = #tpu.pipeline_mode<synchronous>, transform_indices = @transform_27, window_bounds = array<i64: 10, 64>}, {pipeline_mode = #tpu.pipeline_mode<synchronous>, transform_indices = @transform_28, window_bounds = array<i64: 1, 64>}, {pipeline_mode = #tpu.pipeline_mode<synchronous>, transform_indices = @transform_29, window_bounds = array<i64: 64, 128>}, {pipeline_mode = #tpu.pipeline_mode<synchronous>, transform_indices = @transform_30, window_bounds = array<i64: 1, 128>}, {transform_indices = @transform_31, window_bounds = array<i64: 8, 128>}]} {
    %c0 = arith.constant 0 : index
    %c0_0 = arith.constant 0 : index
    %c0_1 = arith.constant 0 : index
    %0 = vector.load %arg1[%c0, %c0_0, %c0_1] : memref<8x16x600xbf16, #tpu.memory_space<vmem>>, vector<8x16x600xbf16>
    %c0_2 = arith.constant 0 : index
    %c0_3 = arith.constant 0 : index
    %c0_4 = arith.constant 0 : index
    %1 = vector.load %arg2[%c0_2, %c0_3, %c0_4] : memref<8x1x16xf32, #tpu.memory_space<vmem>>, vector<8x1x16xf32>
    %2 = arith.truncf %1 : vector<8x1x16xf32> to vector<8x1x16xbf16>
    %cst = arith.constant dense<0.000000e+00> : vector<8x1x600xf32>
    %3 = tpu.matmul %2, %0, %cst {dimension_numbers = #tpu.dot_dimension_numbers<[2], [1], [1], [2], [0, 0, 0, 1, 1, 2], [0], [0]>} : vector<8x1x16xbf16>, vector<8x16x600xbf16>, vector<8x1x600xf32> -> vector<8x1x600xf32>
    %4 = vector.shape_cast %3 : vector<8x1x600xf32> to vector<8x600xf32>
    %cst_5 = arith.constant dense<0.000000e+00> : vector<8x1xf32>
    %5 = vector.multi_reduction <add>, %1, %cst_5 [2] : vector<8x1x16xf32> to vector<8x1xf32>
    %cst_6 = arith.constant 9.99999971E-10 : f32
    %6 = vector.broadcast %cst_6 : f32 to vector<8x1xf32>
    %7 = arith.maximumf %5, %6 : vector<8x1xf32>
    %8 = vector.broadcast %7 : vector<8x1xf32> to vector<8x600xf32>
    %9 = arith.divf %4, %8 : vector<8x600xf32>
    %c0_7 = arith.constant 0 : index
    %c0_8 = arith.constant 0 : index
    %c0_9 = arith.constant 0 : index
    %10 = vector.load %arg3[%c0_7, %c0_8, %c0_9] : memref<8x16x600xbf16, #tpu.memory_space<vmem>>, vector<8x16x600xbf16>
    %c0_10 = arith.constant 0 : index
    %c0_11 = arith.constant 0 : index
    %c0_12 = arith.constant 0 : index
    %11 = vector.load %arg4[%c0_10, %c0_11, %c0_12] : memref<8x1x16xf32, #tpu.memory_space<vmem>>, vector<8x1x16xf32>
    %12 = arith.truncf %11 : vector<8x1x16xf32> to vector<8x1x16xbf16>
    %cst_13 = arith.constant dense<0.000000e+00> : vector<8x1x600xf32>
    %13 = tpu.matmul %12, %10, %cst_13 {dimension_numbers = #tpu.dot_dimension_numbers<[2], [1], [1], [2], [0, 0, 0, 1, 1, 2], [0], [0]>} : vector<8x1x16xbf16>, vector<8x16x600xbf16>, vector<8x1x600xf32> -> vector<8x1x600xf32>
    %14 = vector.shape_cast %13 : vector<8x1x600xf32> to vector<8x600xf32>
    %cst_14 = arith.constant dense<0.000000e+00> : vector<8x1xf32>
    %15 = vector.multi_reduction <add>, %11, %cst_14 [2] : vector<8x1x16xf32> to vector<8x1xf32>
    %cst_15 = arith.constant 9.99999971E-10 : f32
    %16 = vector.broadcast %cst_15 : f32 to vector<8x1xf32>
    %17 = arith.maximumf %15, %16 : vector<8x1xf32>
    %18 = vector.broadcast %17 : vector<8x1xf32> to vector<8x600xf32>
    %19 = arith.divf %14, %18 : vector<8x600xf32>
    %c0_16 = arith.constant 0 : index
    %c0_17 = arith.constant 0 : index
    %20 = vector.load %arg8[%c0_16, %c0_17] : memref<600x128xf32, #tpu.memory_space<vmem>>, vector<600x128xf32>
    %cst_18 = arith.constant dense<0.000000e+00> : vector<8x128xf32>
    %21 = tpu.matmul %9, %20, %cst_18 {dimension_numbers = #tpu.dot_dimension_numbers<[1], [0], [0], [1], [0, 0, 1, 1], [], []>} : vector<8x600xf32>, vector<600x128xf32>, vector<8x128xf32> -> vector<8x128xf32>
    %c0_19 = arith.constant 0 : index
    %c0_20 = arith.constant 0 : index
    %22 = vector.load %arg9[%c0_19, %c0_20] : memref<1x128xf32, #tpu.memory_space<vmem>>, vector<1x128xf32>
    %23 = vector.broadcast %22 : vector<1x128xf32> to vector<8x128xf32>
    %24 = arith.addf %21, %23 : vector<8x128xf32>
    %cst_21 = arith.constant 0.000000e+00 : f32
    %25 = vector.broadcast %cst_21 : f32 to vector<8x128xf32>
    %26 = arith.maximumf %24, %25 : vector<8x128xf32>
    %c0_22 = arith.constant 0 : index
    %c0_23 = arith.constant 0 : index
    %27 = vector.load %arg10[%c0_22, %c0_23] : memref<128x64xf32, #tpu.memory_space<vmem>>, vector<128x64xf32>
    %cst_24 = arith.constant dense<0.000000e+00> : vector<8x64xf32>
    %28 = tpu.matmul %26, %27, %cst_24 {dimension_numbers = #tpu.dot_dimension_numbers<[1], [0], [0], [1], [0, 0, 1, 1], [], []>} : vector<8x128xf32>, vector<128x64xf32>, vector<8x64xf32> -> vector<8x64xf32>
    %c0_25 = arith.constant 0 : index
    %c0_26 = arith.constant 0 : index
    %29 = vector.load %arg11[%c0_25, %c0_26] : memref<1x64xf32, #tpu.memory_space<vmem>>, vector<1x64xf32>
    %30 = vector.broadcast %29 : vector<1x64xf32> to vector<8x64xf32>
    %31 = arith.addf %28, %30 : vector<8x64xf32>
    %cst_27 = arith.constant 0.000000e+00 : f32
    %32 = vector.broadcast %cst_27 : f32 to vector<8x64xf32>
    %33 = arith.maximumf %31, %32 : vector<8x64xf32>
    %c0_28 = arith.constant 0 : index
    %c0_29 = arith.constant 0 : index
    %34 = vector.load %arg12[%c0_28, %c0_29] : memref<600x128xf32, #tpu.memory_space<vmem>>, vector<600x128xf32>
    %cst_30 = arith.constant dense<0.000000e+00> : vector<8x128xf32>
    %35 = tpu.matmul %19, %34, %cst_30 {dimension_numbers = #tpu.dot_dimension_numbers<[1], [0], [0], [1], [0, 0, 1, 1], [], []>} : vector<8x600xf32>, vector<600x128xf32>, vector<8x128xf32> -> vector<8x128xf32>
    %c0_31 = arith.constant 0 : index
    %c0_32 = arith.constant 0 : index
    %36 = vector.load %arg13[%c0_31, %c0_32] : memref<1x128xf32, #tpu.memory_space<vmem>>, vector<1x128xf32>
    %37 = vector.broadcast %36 : vector<1x128xf32> to vector<8x128xf32>
    %38 = arith.addf %35, %37 : vector<8x128xf32>
    %cst_33 = arith.constant 0.000000e+00 : f32
    %39 = vector.broadcast %cst_33 : f32 to vector<8x128xf32>
    %40 = arith.maximumf %38, %39 : vector<8x128xf32>
    %c0_34 = arith.constant 0 : index
    %c0_35 = arith.constant 0 : index
    %41 = vector.load %arg14[%c0_34, %c0_35] : memref<128x64xf32, #tpu.memory_space<vmem>>, vector<128x64xf32>
    %cst_36 = arith.constant dense<0.000000e+00> : vector<8x64xf32>
    %42 = tpu.matmul %40, %41, %cst_36 {dimension_numbers = #tpu.dot_dimension_numbers<[1], [0], [0], [1], [0, 0, 1, 1], [], []>} : vector<8x128xf32>, vector<128x64xf32>, vector<8x64xf32> -> vector<8x64xf32>
    %c0_37 = arith.constant 0 : index
    %c0_38 = arith.constant 0 : index
    %43 = vector.load %arg15[%c0_37, %c0_38] : memref<1x64xf32, #tpu.memory_space<vmem>>, vector<1x64xf32>
    %44 = vector.broadcast %43 : vector<1x64xf32> to vector<8x64xf32>
    %45 = arith.addf %42, %44 : vector<8x64xf32>
    %cst_39 = arith.constant 0.000000e+00 : f32
    %46 = vector.broadcast %cst_39 : f32 to vector<8x64xf32>
    %47 = arith.maximumf %45, %46 : vector<8x64xf32>
    %c0_40 = arith.constant 0 : index
    %c0_41 = arith.constant 0 : index
    %48 = vector.load %arg5[%c0_40, %c0_41] : memref<8x10xf32, #tpu.memory_space<vmem>>, vector<8x10xf32>
    %c0_42 = arith.constant 0 : index
    %c0_43 = arith.constant 0 : index
    %49 = vector.load %arg16[%c0_42, %c0_43] : memref<10x64xf32, #tpu.memory_space<vmem>>, vector<10x64xf32>
    %cst_44 = arith.constant dense<0.000000e+00> : vector<8x64xf32>
    %50 = tpu.matmul %48, %49, %cst_44 {dimension_numbers = #tpu.dot_dimension_numbers<[1], [0], [0], [1], [0, 0, 1, 1], [], []>} : vector<8x10xf32>, vector<10x64xf32>, vector<8x64xf32> -> vector<8x64xf32>
    %c0_45 = arith.constant 0 : index
    %c0_46 = arith.constant 0 : index
    %51 = vector.load %arg17[%c0_45, %c0_46] : memref<1x64xf32, #tpu.memory_space<vmem>>, vector<1x64xf32>
    %52 = vector.broadcast %51 : vector<1x64xf32> to vector<8x64xf32>
    %53 = arith.addf %50, %52 : vector<8x64xf32>
    %cst_47 = arith.constant 0.000000e+00 : f32
    %54 = vector.broadcast %cst_47 : f32 to vector<8x64xf32>
    %55 = arith.maximumf %53, %54 : vector<8x64xf32>
    %c0_48 = arith.constant 0 : index
    %c0_49 = arith.constant 0 : index
    %56 = vector.load %arg6[%c0_48, %c0_49] : memref<8x10xf32, #tpu.memory_space<vmem>>, vector<8x10xf32>
    %c0_50 = arith.constant 0 : index
    %c0_51 = arith.constant 0 : index
    %57 = vector.load %arg18[%c0_50, %c0_51] : memref<10x64xf32, #tpu.memory_space<vmem>>, vector<10x64xf32>
    %cst_52 = arith.constant dense<0.000000e+00> : vector<8x64xf32>
    %58 = tpu.matmul %56, %57, %cst_52 {dimension_numbers = #tpu.dot_dimension_numbers<[1], [0], [0], [1], [0, 0, 1, 1], [], []>} : vector<8x10xf32>, vector<10x64xf32>, vector<8x64xf32> -> vector<8x64xf32>
    %c0_53 = arith.constant 0 : index
    %c0_54 = arith.constant 0 : index
    %59 = vector.load %arg19[%c0_53, %c0_54] : memref<1x64xf32, #tpu.memory_space<vmem>>, vector<1x64xf32>
    %60 = vector.broadcast %59 : vector<1x64xf32> to vector<8x64xf32>
    %61 = arith.addf %58, %60 : vector<8x64xf32>
    %cst_55 = arith.constant 0.000000e+00 : f32
    %62 = vector.broadcast %cst_55 : f32 to vector<8x64xf32>
    %63 = arith.maximumf %61, %62 : vector<8x64xf32>
    %c0_56 = arith.constant 0 : index
    %c0_57 = arith.constant 0 : index
    %64 = vector.load %arg20[%c0_56, %c0_57] : memref<64x64xf32, #tpu.memory_space<vmem>>, vector<64x64xf32>
    %cst_58 = arith.constant dense<0.000000e+00> : vector<8x64xf32>
    %65 = tpu.matmul %33, %64, %cst_58 {dimension_numbers = #tpu.dot_dimension_numbers<[1], [0], [0], [1], [0, 0, 1, 1], [], []>} : vector<8x64xf32>, vector<64x64xf32>, vector<8x64xf32> -> vector<8x64xf32>
    %c0_59 = arith.constant 0 : index
    %c0_60 = arith.constant 0 : index
    %66 = vector.load %arg21[%c0_59, %c0_60] : memref<64x64xf32, #tpu.memory_space<vmem>>, vector<64x64xf32>
    %cst_61 = arith.constant dense<0.000000e+00> : vector<8x64xf32>
    %67 = tpu.matmul %55, %66, %cst_61 {dimension_numbers = #tpu.dot_dimension_numbers<[1], [0], [0], [1], [0, 0, 1, 1], [], []>} : vector<8x64xf32>, vector<64x64xf32>, vector<8x64xf32> -> vector<8x64xf32>
    %68 = arith.addf %65, %67 : vector<8x64xf32>
    %c0_62 = arith.constant 0 : index
    %c0_63 = arith.constant 0 : index
    %69 = vector.load %arg22[%c0_62, %c0_63] : memref<1x64xf32, #tpu.memory_space<vmem>>, vector<1x64xf32>
    %70 = vector.broadcast %69 : vector<1x64xf32> to vector<8x64xf32>
    %71 = arith.addf %68, %70 : vector<8x64xf32>
    %cst_64 = arith.constant 0.000000e+00 : f32
    %72 = vector.broadcast %cst_64 : f32 to vector<8x64xf32>
    %73 = arith.maximumf %71, %72 : vector<8x64xf32>
    %c0_65 = arith.constant 0 : index
    %c0_66 = arith.constant 0 : index
    %74 = vector.load %arg23[%c0_65, %c0_66] : memref<64x64xf32, #tpu.memory_space<vmem>>, vector<64x64xf32>
    %cst_67 = arith.constant dense<0.000000e+00> : vector<8x64xf32>
    %75 = tpu.matmul %47, %74, %cst_67 {dimension_numbers = #tpu.dot_dimension_numbers<[1], [0], [0], [1], [0, 0, 1, 1], [], []>} : vector<8x64xf32>, vector<64x64xf32>, vector<8x64xf32> -> vector<8x64xf32>
    %c0_68 = arith.constant 0 : index
    %c0_69 = arith.constant 0 : index
    %76 = vector.load %arg24[%c0_68, %c0_69] : memref<64x64xf32, #tpu.memory_space<vmem>>, vector<64x64xf32>
    %cst_70 = arith.constant dense<0.000000e+00> : vector<8x64xf32>
    %77 = tpu.matmul %63, %76, %cst_70 {dimension_numbers = #tpu.dot_dimension_numbers<[1], [0], [0], [1], [0, 0, 1, 1], [], []>} : vector<8x64xf32>, vector<64x64xf32>, vector<8x64xf32> -> vector<8x64xf32>
    %78 = arith.addf %75, %77 : vector<8x64xf32>
    %c0_71 = arith.constant 0 : index
    %c0_72 = arith.constant 0 : index
    %79 = vector.load %arg25[%c0_71, %c0_72] : memref<1x64xf32, #tpu.memory_space<vmem>>, vector<1x64xf32>
    %80 = vector.broadcast %79 : vector<1x64xf32> to vector<8x64xf32>
    %81 = arith.addf %78, %80 : vector<8x64xf32>
    %cst_73 = arith.constant 0.000000e+00 : f32
    %82 = vector.broadcast %cst_73 : f32 to vector<8x64xf32>
    %83 = arith.maximumf %81, %82 : vector<8x64xf32>
    %c0_74 = arith.constant 0 : index
    %c0_75 = arith.constant 0 : index
    %84 = vector.load %arg7[%c0_74, %c0_75] : memref<8x10xf32, #tpu.memory_space<vmem>>, vector<8x10xf32>
    %c0_76 = arith.constant 0 : index
    %c0_77 = arith.constant 0 : index
    %85 = vector.load %arg26[%c0_76, %c0_77] : memref<64x64xf32, #tpu.memory_space<vmem>>, vector<64x64xf32>
    %cst_78 = arith.constant dense<0.000000e+00> : vector<8x64xf32>
    %86 = tpu.matmul %73, %85, %cst_78 {dimension_numbers = #tpu.dot_dimension_numbers<[1], [0], [0], [1], [0, 0, 1, 1], [], []>} : vector<8x64xf32>, vector<64x64xf32>, vector<8x64xf32> -> vector<8x64xf32>
    %c0_79 = arith.constant 0 : index
    %c0_80 = arith.constant 0 : index
    %87 = vector.load %arg27[%c0_79, %c0_80] : memref<64x64xf32, #tpu.memory_space<vmem>>, vector<64x64xf32>
    %cst_81 = arith.constant dense<0.000000e+00> : vector<8x64xf32>
    %88 = tpu.matmul %83, %87, %cst_81 {dimension_numbers = #tpu.dot_dimension_numbers<[1], [0], [0], [1], [0, 0, 1, 1], [], []>} : vector<8x64xf32>, vector<64x64xf32>, vector<8x64xf32> -> vector<8x64xf32>
    %89 = arith.addf %86, %88 : vector<8x64xf32>
    %c0_82 = arith.constant 0 : index
    %c0_83 = arith.constant 0 : index
    %90 = vector.load %arg28[%c0_82, %c0_83] : memref<10x64xf32, #tpu.memory_space<vmem>>, vector<10x64xf32>
    %cst_84 = arith.constant dense<0.000000e+00> : vector<8x64xf32>
    %91 = tpu.matmul %84, %90, %cst_84 {dimension_numbers = #tpu.dot_dimension_numbers<[1], [0], [0], [1], [0, 0, 1, 1], [], []>} : vector<8x10xf32>, vector<10x64xf32>, vector<8x64xf32> -> vector<8x64xf32>
    %92 = arith.addf %89, %91 : vector<8x64xf32>
    %c0_85 = arith.constant 0 : index
    %c0_86 = arith.constant 0 : index
    %93 = vector.load %arg29[%c0_85, %c0_86] : memref<1x64xf32, #tpu.memory_space<vmem>>, vector<1x64xf32>
    %94 = vector.broadcast %93 : vector<1x64xf32> to vector<8x64xf32>
    %95 = arith.addf %92, %94 : vector<8x64xf32>
    %cst_87 = arith.constant 0.000000e+00 : f32
    %96 = vector.broadcast %cst_87 : f32 to vector<8x64xf32>
    %97 = arith.maximumf %95, %96 : vector<8x64xf32>
    %c0_88 = arith.constant 0 : index
    %c0_89 = arith.constant 0 : index
    %98 = vector.load %arg30[%c0_88, %c0_89] : memref<64x128xf32, #tpu.memory_space<vmem>>, vector<64x128xf32>
    %cst_90 = arith.constant dense<0.000000e+00> : vector<8x128xf32>
    %99 = tpu.matmul %97, %98, %cst_90 {dimension_numbers = #tpu.dot_dimension_numbers<[1], [0], [0], [1], [0, 0, 1, 1], [], []>} : vector<8x64xf32>, vector<64x128xf32>, vector<8x128xf32> -> vector<8x128xf32>
    %c0_91 = arith.constant 0 : index
    %c0_92 = arith.constant 0 : index
    %100 = vector.load %arg31[%c0_91, %c0_92] : memref<1x128xf32, #tpu.memory_space<vmem>>, vector<1x128xf32>
    %101 = vector.broadcast %100 : vector<1x128xf32> to vector<8x128xf32>
    %102 = arith.addf %99, %101 : vector<8x128xf32>
    %c0_93 = arith.constant 0 : index
    %c0_94 = arith.constant 0 : index
    %103 = vector.load %arg32[%c0_93, %c0_94] : memref<8x128xf32, #tpu.memory_space<vmem>>, vector<8x128xf32>
    tpu.vector_store %arg32[%c0_93, %c0_94], %102 {strides = array<i32>} : memref<8x128xf32, #tpu.memory_space<vmem>>, vector<8x128xf32>,
    return
  }
  func.func @transform_0(%arg0: i32) -> (i32, i32, i32) {
    %c0_i32 = arith.constant 0 : i32
    %c0_i32_0 = arith.constant 0 : i32
    %c0_i32_1 = arith.constant 0 : i32
    return %arg0, %c0_i32, %c0_i32_0 : i32, i32, i32
  }
  func.func @transform_1(%arg0: i32) -> (i32, i32, i32) {
    %c0_i32 = arith.constant 0 : i32
    %c0_i32_0 = arith.constant 0 : i32
    %c0_i32_1 = arith.constant 0 : i32
    return %arg0, %c0_i32, %c0_i32_0 : i32, i32, i32
  }
  func.func @transform_2(%arg0: i32) -> (i32, i32, i32) {
    %c0_i32 = arith.constant 0 : i32
    %c0_i32_0 = arith.constant 0 : i32
    %c0_i32_1 = arith.constant 0 : i32
    return %arg0, %c0_i32, %c0_i32_0 : i32, i32, i32
  }
  func.func @transform_3(%arg0: i32) -> (i32, i32, i32) {
    %c0_i32 = arith.constant 0 : i32
    %c0_i32_0 = arith.constant 0 : i32
    %c0_i32_1 = arith.constant 0 : i32
    return %arg0, %c0_i32, %c0_i32_0 : i32, i32, i32
  }
  func.func @transform_4(%arg0: i32) -> (i32, i32) {
    %c0_i32 = arith.constant 0 : i32
    %c0_i32_0 = arith.constant 0 : i32
    return %arg0, %c0_i32 : i32, i32
  }
  func.func @transform_5(%arg0: i32) -> (i32, i32) {
    %c0_i32 = arith.constant 0 : i32
    %c0_i32_0 = arith.constant 0 : i32
    return %arg0, %c0_i32 : i32, i32
  }
  func.func @transform_6(%arg0: i32) -> (i32, i32) {
    %c0_i32 = arith.constant 0 : i32
    %c0_i32_0 = arith.constant 0 : i32
    return %arg0, %c0_i32 : i32, i32
  }
  func.func @transform_7(%arg0: i32) -> (i32, i32) {
    %c0_i32 = arith.constant 0 : i32
    %c0_i32_0 = arith.constant 0 : i32
    %c0_i32_1 = arith.constant 0 : i32
    return %c0_i32, %c0_i32_0 : i32, i32
  }
  func.func @transform_8(%arg0: i32) -> (i32, i32) {
    %c0_i32 = arith.constant 0 : i32
    %c0_i32_0 = arith.constant 0 : i32
    %c0_i32_1 = arith.constant 0 : i32
    return %c0_i32, %c0_i32_0 : i32, i32
  }
  func.func @transform_9(%arg0: i32) -> (i32, i32) {
    %c0_i32 = arith.constant 0 : i32
    %c0_i32_0 = arith.constant 0 : i32
    %c0_i32_1 = arith.constant 0 : i32
    return %c0_i32, %c0_i32_0 : i32, i32
  }
  func.func @transform_10(%arg0: i32) -> (i32, i32) {
    %c0_i32 = arith.constant 0 : i32
    %c0_i32_0 = arith.constant 0 : i32
    %c0_i32_1 = arith.constant 0 : i32
    return %c0_i32, %c0_i32_0 : i32, i32
  }
  func.func @transform_11(%arg0: i32) -> (i32, i32) {
    %c0_i32 = arith.constant 0 : i32
    %c0_i32_0 = arith.constant 0 : i32
    %c0_i32_1 = arith.constant 0 : i32
    return %c0_i32, %c0_i32_0 : i32, i32
  }
  func.func @transform_12(%arg0: i32) -> (i32, i32) {
    %c0_i32 = arith.constant 0 : i32
    %c0_i32_0 = arith.constant 0 : i32
    %c0_i32_1 = arith.constant 0 : i32
    return %c0_i32, %c0_i32_0 : i32, i32
  }
  func.func @transform_13(%arg0: i32) -> (i32, i32) {
    %c0_i32 = arith.constant 0 : i32
    %c0_i32_0 = arith.constant 0 : i32
    %c0_i32_1 = arith.constant 0 : i32
    return %c0_i32, %c0_i32_0 : i32, i32
  }
  func.func @transform_14(%arg0: i32) -> (i32, i32) {
    %c0_i32 = arith.constant 0 : i32
    %c0_i32_0 = arith.constant 0 : i32
    %c0_i32_1 = arith.constant 0 : i32
    return %c0_i32, %c0_i32_0 : i32, i32
  }
  func.func @transform_15(%arg0: i32) -> (i32, i32) {
    %c0_i32 = arith.constant 0 : i32
    %c0_i32_0 = arith.constant 0 : i32
    %c0_i32_1 = arith.constant 0 : i32
    return %c0_i32, %c0_i32_0 : i32, i32
  }
  func.func @transform_16(%arg0: i32) -> (i32, i32) {
    %c0_i32 = arith.constant 0 : i32
    %c0_i32_0 = arith.constant 0 : i32
    %c0_i32_1 = arith.constant 0 : i32
    return %c0_i32, %c0_i32_0 : i32, i32
  }
  func.func @transform_17(%arg0: i32) -> (i32, i32) {
    %c0_i32 = arith.constant 0 : i32
    %c0_i32_0 = arith.constant 0 : i32
    %c0_i32_1 = arith.constant 0 : i32
    return %c0_i32, %c0_i32_0 : i32, i32
  }
  func.func @transform_18(%arg0: i32) -> (i32, i32) {
    %c0_i32 = arith.constant 0 : i32
    %c0_i32_0 = arith.constant 0 : i32
    %c0_i32_1 = arith.constant 0 : i32
    return %c0_i32, %c0_i32_0 : i32, i32
  }
  func.func @transform_19(%arg0: i32) -> (i32, i32) {
    %c0_i32 = arith.constant 0 : i32
    %c0_i32_0 = arith.constant 0 : i32
    %c0_i32_1 = arith.constant 0 : i32
    return %c0_i32, %c0_i32_0 : i32, i32
  }
  func.func @transform_20(%arg0: i32) -> (i32, i32) {
    %c0_i32 = arith.constant 0 : i32
    %c0_i32_0 = arith.constant 0 : i32
    %c0_i32_1 = arith.constant 0 : i32
    return %c0_i32, %c0_i32_0 : i32, i32
  }
  func.func @transform_21(%arg0: i32) -> (i32, i32) {
    %c0_i32 = arith.constant 0 : i32
    %c0_i32_0 = arith.constant 0 : i32
    %c0_i32_1 = arith.constant 0 : i32
    return %c0_i32, %c0_i32_0 : i32, i32
  }
  func.func @transform_22(%arg0: i32) -> (i32, i32) {
    %c0_i32 = arith.constant 0 : i32
    %c0_i32_0 = arith.constant 0 : i32
    %c0_i32_1 = arith.constant 0 : i32
    return %c0_i32, %c0_i32_0 : i32, i32
  }
  func.func @transform_23(%arg0: i32) -> (i32, i32) {
    %c0_i32 = arith.constant 0 : i32
    %c0_i32_0 = arith.constant 0 : i32
    %c0_i32_1 = arith.constant 0 : i32
    return %c0_i32, %c0_i32_0 : i32, i32
  }
  func.func @transform_24(%arg0: i32) -> (i32, i32) {
    %c0_i32 = arith.constant 0 : i32
    %c0_i32_0 = arith.constant 0 : i32
    %c0_i32_1 = arith.constant 0 : i32
    return %c0_i32, %c0_i32_0 : i32, i32
  }
  func.func @transform_25(%arg0: i32) -> (i32, i32) {
    %c0_i32 = arith.constant 0 : i32
    %c0_i32_0 = arith.constant 0 : i32
    %c0_i32_1 = arith.constant 0 : i32
    return %c0_i32, %c0_i32_0 : i32, i32
  }
  func.func @transform_26(%arg0: i32) -> (i32, i32) {
    %c0_i32 = arith.constant 0 : i32
    %c0_i32_0 = arith.constant 0 : i32
    %c0_i32_1 = arith.constant 0 : i32
    return %c0_i32, %c0_i32_0 : i32, i32
  }
  func.func @transform_27(%arg0: i32) -> (i32, i32) {
    %c0_i32 = arith.constant 0 : i32
    %c0_i32_0 = arith.constant 0 : i32
    %c0_i32_1 = arith.constant 0 : i32
    return %c0_i32, %c0_i32_0 : i32, i32
  }
  func.func @transform_28(%arg0: i32) -> (i32, i32) {
    %c0_i32 = arith.constant 0 : i32
    %c0_i32_0 = arith.constant 0 : i32
    %c0_i32_1 = arith.constant 0 : i32
    return %c0_i32, %c0_i32_0 : i32, i32
  }
  func.func @transform_29(%arg0: i32) -> (i32, i32) {
    %c0_i32 = arith.constant 0 : i32
    %c0_i32_0 = arith.constant 0 : i32
    %c0_i32_1 = arith.constant 0 : i32
    return %c0_i32, %c0_i32_0 : i32, i32
  }
  func.func @transform_30(%arg0: i32) -> (i32, i32) {
    %c0_i32 = arith.constant 0 : i32
    %c0_i32_0 = arith.constant 0 : i32
    %c0_i32_1 = arith.constant 0 : i32
    return %c0_i32, %c0_i32_0 : i32, i32
  }
  func.func @transform_31(%arg0: i32) -> (i32, i32) {
    %c0_i32 = arith.constant 0 : i32
    %c0_i32_0 = arith.constant 0 : i32
    return %arg0, %c0_i32 : i32, i32
  }
}

</mosaic_0001>

<llo_original>
// kernel: ipec_forward.1
$region0: #{ipec_forward.1}
  #allocation0 [shape = 'u32[]', space=smem, size = 0x4, offset = 0x4, fixed_abs, tag = 'smem constant byte address 0x4 - core index']
  #allocation1 [shape = 'u32[144,128]{1,0:T(1,128)}', space=vmem, size = 0x12000, scoped, tag = 'internal scratch']
  %s0 = inlined_call_operand.smem [shape: u32[32], index: -1, kind: input, shape index: {}]
  %s1 = sld [smem:[%s0]]
  %s2 = scalar_lea.smem %s0, 1
  %s3 = sld [smem:[%s2]]
  %s4 = scalar_lea.smem %s0, 2
  %s5 = sld [smem:[%s4]]
  %s6 = scalar_lea.smem %s0, 3
  %s7 = sld [smem:[%s6]]
  %s8 = scalar_lea.smem %s0, 4
  %s9 = sld [smem:[%s8]]
  %s10 = scalar_lea.smem %s0, 5
  %s11 = sld [smem:[%s10]]
  %s12 = scalar_lea.smem %s0, 6
  %s13 = sld [smem:[%s12]]
  %s14 = scalar_lea.smem %s0, 7
  %s15 = sld [smem:[%s14]]
  %s16 = scalar_lea.smem %s0, 8
  %s17 = sld [smem:[%s16]]
  %s18 = scalar_lea.smem %s0, 9
  %s19 = sld [smem:[%s18]]
  %s20 = scalar_lea.smem %s0, 10
  %s21 = sld [smem:[%s20]]
  %s22 = scalar_lea.smem %s0, 11
  %s23 = sld [smem:[%s22]]
  %s24 = scalar_lea.smem %s0, 12
  %s25 = sld [smem:[%s24]]
  %s26 = scalar_lea.smem %s0, 13
  %s27 = sld [smem:[%s26]]
  %s28 = scalar_lea.smem %s0, 14
  %s29 = sld [smem:[%s28]]
  %s30 = scalar_lea.smem %s0, 15
  %s31 = sld [smem:[%s30]]
  %s32 = scalar_lea.smem %s0, 16
  %s33 = sld [smem:[%s32]]
  %s34 = scalar_lea.smem %s0, 17
  %s35 = sld [smem:[%s34]]
  %s36 = scalar_lea.smem %s0, 18
  %s37 = sld [smem:[%s36]]
  %s38 = scalar_lea.smem %s0, 19
  %s39 = sld [smem:[%s38]]
  %s40 = scalar_lea.smem %s0, 20
  %s41 = sld [smem:[%s40]]
  %s42 = scalar_lea.smem %s0, 21
  %s43 = sld [smem:[%s42]]
  %s44 = scalar_lea.smem %s0, 22
  %s45 = sld [smem:[%s44]]
  %s46 = scalar_lea.smem %s0, 23
  %s47 = sld [smem:[%s46]]
  %s48 = scalar_lea.smem %s0, 24
  %s49 = sld [smem:[%s48]]
  %s50 = scalar_lea.smem %s0, 25
  %s51 = sld [smem:[%s50]]
  %s52 = scalar_lea.smem %s0, 26
  %s53 = sld [smem:[%s52]]
  %s54 = scalar_lea.smem %s0, 27
  %s55 = sld [smem:[%s54]]
  %s56 = scalar_lea.smem %s0, 28
  %s57 = sld [smem:[%s56]]
  %s58 = scalar_lea.smem %s0, 29
  %s59 = sld [smem:[%s58]]
  %s60 = scalar_lea.smem %s0, 30
  %s61 = sld [smem:[%s60]]
  %s62 = scalar_lea.smem %s0, 31
  %s63 = sld [smem:[%s62]]
  %s64 = sld [smem:[#allocation0]]
  $region257: #{ipec_forward.1} parent=0
    _
  %s66 = ssub.s32 1, %s64
  %s67 = scalar_select 0, %s66, %s64
  $region1: #{ipec_forward.1} parent=0
    #allocation2 [shape = 'u8[8192]{0}', space=vmem, size = 0x2000, scoped, tag = 'input window, operand 1']
    #allocation3 [shape = 's32[2]{0}', space=sflag, size = 0x8, scoped, tag = 'scoped memory for ipec_forward.1']
    #allocation4 [shape = 'u8[327680]{0}', space=vmem, size = 0x50000, scoped, tag = 'input window, operand 2']
    #allocation5 [shape = 's32[2]{0}', space=sflag, size = 0x8, scoped, tag = 'scoped memory for ipec_forward.1']
    #allocation6 [shape = 'u8[8192]{0}', space=vmem, size = 0x2000, scoped, tag = 'input window, operand 3']
    #allocation7 [shape = 'u8[8192]{0}', space=vmem, size = 0x2000, scoped, tag = 'input window, operand 4']
    #allocation8 [shape = 's32[2]{0}', space=sflag, size = 0x8, scoped, tag = 'scoped memory for ipec_forward.1']
    #allocation9 [shape = 'u8[8192]{0}', space=vmem, size = 0x2000, scoped, tag = 'input window, operand 5']
    #allocation10 [shape = 'u8[8192]{0}', space=vmem, size = 0x2000, scoped, tag = 'input window, operand 6']
    #allocation11 [shape = 's32[2]{0}', space=sflag, size = 0x8, scoped, tag = 'scoped memory for ipec_forward.1']
    #allocation12 [shape = 'u8[307200]{0}', space=vmem, size = 0x4b000, scoped, tag = 'input window, operand 7, single buffered']
    #allocation13 [shape = 'u8[512]{0}', space=vmem, size = 0x400, scoped, tag = 'input window, operand 8, single buffered']
    #allocation14 [shape = 's32[1]{0}', space=sflag, size = 0x4, scoped, tag = 'scoped memory for ipec_forward.1']
    #allocation15 [shape = 'u8[512]{0}', space=vmem, size = 0x400, scoped, tag = 'input window, operand 10, single buffered']
    #allocation16 [shape = 'u8[307200]{0}', space=vmem, size = 0x4b000, scoped, tag = 'input window, operand 11, single buffered']
    #allocation17 [shape = 's32[1]{0}', space=sflag, size = 0x4, scoped, tag = 'scoped memory for ipec_forward.1']
    #allocation18 [shape = 'u8[512]{0}', space=vmem, size = 0x400, scoped, tag = 'input window, operand 12, single buffered']
    #allocation19 [shape = 'u8[512]{0}', space=vmem, size = 0x400, scoped, tag = 'input window, operand 14, single buffered']
    #allocation20 [shape = 's32[1]{0}', space=sflag, size = 0x4, scoped, tag = 'scoped memory for ipec_forward.1']
    #allocation21 [shape = 'u8[8192]{0}', space=vmem, size = 0x2000, scoped, tag = 'input window, operand 15, single buffered']
    #allocation22 [shape = 'u8[512]{0}', space=vmem, size = 0x400, scoped, tag = 'input window, operand 16, single buffered']
    #allocation23 [shape = 's32[1]{0}', space=sflag, size = 0x4, scoped, tag = 'scoped memory for ipec_forward.1']
    #allocation24 [shape = 'u8[8192]{0}', space=vmem, size = 0x2000, scoped, tag = 'input window, operand 17, single buffered']
    #allocation25 [shape = 'u8[512]{0}', space=vmem, size = 0x400, scoped, tag = 'input window, operand 18, single buffered']
    #allocation26 [shape = 's32[1]{0}', space=sflag, size = 0x4, scoped, tag = 'scoped memory for ipec_forward.1']
    #allocation27 [shape = 'u8[32768]{0}', space=vmem, size = 0x8000, scoped, tag = 'input window, operand 19, single buffered']
    #allocation28 [shape = 'u8[32768]{0}', space=vmem, size = 0x8000, scoped, tag = 'input window, operand 20, single buffered']
    #allocation29 [shape = 's32[1]{0}', space=sflag, size = 0x4, scoped, tag = 'scoped memory for ipec_forward.1']
    #allocation30 [shape = 'u8[512]{0}', space=vmem, size = 0x400, scoped, tag = 'input window, operand 21, single buffered']
    #allocation31 [shape = 'u8[32768]{0}', space=vmem, size = 0x8000, scoped, tag = 'input window, operand 23, single buffered']
    #allocation32 [shape = 's32[1]{0}', space=sflag, size = 0x4, scoped, tag = 'scoped memory for ipec_forward.1']
    #allocation33 [shape = 'u8[512]{0}', space=vmem, size = 0x400, scoped, tag = 'input window, operand 24, single buffered']
    #allocation34 [shape = 'u8[32768]{0}', space=vmem, size = 0x8000, scoped, tag = 'input window, operand 25, single buffered']
    #allocation35 [shape = 's32[1]{0}', space=sflag, size = 0x4, scoped, tag = 'scoped memory for ipec_forward.1']
    #allocation36 [shape = 'u8[32768]{0}', space=vmem, size = 0x8000, scoped, tag = 'input window, operand 26, single buffered']
    #allocation37 [shape = 'u8[8192]{0}', space=vmem, size = 0x2000, scoped, tag = 'input window, operand 27, single buffered']
    #allocation38 [shape = 's32[1]{0}', space=sflag, size = 0x4, scoped, tag = 'scoped memory for ipec_forward.1']
    #allocation39 [shape = 'u8[512]{0}', space=vmem, size = 0x400, scoped, tag = 'input window, operand 28, single buffered']
    %68 = vsyncpa [#allocation3], 0
    %s69 = scalar_lea.sflag [#allocation3], 1
    %70 = vsyncpa %s69, 0
    %71 = vsyncpa [#allocation5], 0
    %s72 = scalar_lea.sflag [#allocation5], 1
    %73 = vsyncpa %s72, 0
    %74 = vsyncpa [#allocation8], 0
    %s75 = scalar_lea.sflag [#allocation8], 1
    %76 = vsyncpa %s75, 0
    %77 = vsyncpa [#allocation11], 0
    %s78 = scalar_lea.sflag [#allocation11], 1
    %79 = vsyncpa %s78, 0
    %80 = vsyncpa [#allocation14], 0
    %81 = vsyncpa [#allocation17], 0
    %82 = vsyncpa [#allocation20], 0
    %83 = vsyncpa [#allocation23], 0
    %84 = vsyncpa [#allocation26], 0
    %85 = vsyncpa [#allocation29], 0
    %86 = vsyncpa [#allocation32], 0
    %87 = vsyncpa [#allocation35], 0
    %88 = vsyncpa [#allocation38], 0
    loop: start=0, step=1, limit=4
    $region2: #{ipec_forward.1} parent=1 // loop_pre_header
      _
    $region3: #{ipec_forward.1} parent=1 // loop_header
      %s90 = sphi 0, %s94
      %p91 = scmp.ge.s32.totalorder %s90, 4
      %s100 = sphi 0, %s102
      %s103 = sphi 0, %s100
      %s104 = sphi 0, %s103
      %s120 = sphi 0, %s104
      %s126 = sphi 0, %s128
      %s129 = sphi 0, %s126
      %s130 = sphi 0, %s129
      %s146 = sphi 0, %s130
      %s152 = sphi 0, %s154
      %s155 = sphi 0, %s152
      %s156 = sphi 0, %s155
      %s172 = sphi 0, %s156
      %s178 = sphi 0, %s180
      %s181 = sphi 0, %s178
      %s182 = sphi 0, %s181
      %s198 = sphi 0, %s182
      %s204 = sphi 0, %s206
      %s207 = sphi 0, %s204
      %s208 = sphi 0, %s207
      %s224 = sphi 0, %s208
      %s230 = sphi 0, %s232
      %s233 = sphi 0, %s230
      %s234 = sphi 0, %s233
      %s250 = sphi 0, %s234
      %s256 = sphi 0, %s258
      %s259 = sphi 0, %s256
      %s260 = sphi 0, %s259
      %s276 = sphi 0, %s260
      %s280 = sphi 0, %s280
      %s282 = sphi 0, %s280
      %s283 = sphi 0, %s282
      %s297 = sphi 0, %s283
      %s301 = sphi 0, %s301
      %s303 = sphi 0, %s301
      %s304 = sphi 0, %s303
      %s318 = sphi 0, %s304
      %s322 = sphi 0, %s322
      %s324 = sphi 0, %s322
      %s325 = sphi 0, %s324
      %s339 = sphi 0, %s325
      %s343 = sphi 0, %s343
      %s345 = sphi 0, %s343
      %s346 = sphi 0, %s345
      %s360 = sphi 0, %s346
      %s364 = sphi 0, %s364
      %s366 = sphi 0, %s364
      %s367 = sphi 0, %s366
      %s381 = sphi 0, %s367
      %s385 = sphi 0, %s385
      %s387 = sphi 0, %s385
      %s388 = sphi 0, %s387
      %s402 = sphi 0, %s388
      %s406 = sphi 0, %s406
      %s408 = sphi 0, %s406
      %s409 = sphi 0, %s408
      %s423 = sphi 0, %s409
      %s427 = sphi 0, %s427
      %s429 = sphi 0, %s427
      %s430 = sphi 0, %s429
      %s444 = sphi 0, %s430
      %s448 = sphi 0, %s448
      %s450 = sphi 0, %s448
      %s451 = sphi 0, %s450
      %s465 = sphi 0, %s451
      %s469 = sphi 0, %s469
      %s471 = sphi 0, %s469
      %s472 = sphi 0, %s471
      %s486 = sphi 0, %s472
      %s490 = sphi 0, %s490
      %s492 = sphi 0, %s490
      %s493 = sphi 0, %s492
      %s507 = sphi 0, %s493
      %s511 = sphi 0, %s511
      %s513 = sphi 0, %s511
      %s514 = sphi 0, %s513
      %s528 = sphi 0, %s514
      %s532 = sphi 0, %s532
      %s534 = sphi 0, %s532
      %s535 = sphi 0, %s534
      %s549 = sphi 0, %s535
      %s553 = sphi 0, %s553
      %s555 = sphi 0, %s553
      %s556 = sphi 0, %s555
      %s570 = sphi 0, %s556
      %s574 = sphi 0, %s574
      %s576 = sphi 0, %s574
      %s577 = sphi 0, %s576
      %s591 = sphi 0, %s577
      %s595 = sphi 0, %s595
      %s597 = sphi 0, %s595
      %s598 = sphi 0, %s597
      %s612 = sphi 0, %s598
      %s616 = sphi 0, %s616
      %s618 = sphi 0, %s616
      %s619 = sphi 0, %s618
      %s633 = sphi 0, %s619
      %s637 = sphi 0, %s637
      %s639 = sphi 0, %s637
      %s640 = sphi 0, %s639
      %s654 = sphi 0, %s640
      %s658 = sphi 0, %s658
      %s660 = sphi 0, %s658
      %s661 = sphi 0, %s660
      %s675 = sphi 0, %s661
      %s679 = sphi 0, %s679
      %s681 = sphi 0, %s679
      %s682 = sphi 0, %s681
      %s696 = sphi 0, %s682
      %s700 = sphi 0, %s700
      %s702 = sphi 0, %s700
      %s703 = sphi 0, %s702
      %s717 = sphi 0, %s703
      %s721 = sphi 0, %s721
      %s723 = sphi 0, %s721
      %s724 = sphi 0, %s723
      %s738 = sphi 0, %s724
      %s742 = sphi 0, %s742
      %s744 = sphi 0, %s742
      %s745 = sphi 0, %s744
      %s759 = sphi 0, %s745
      %s763 = sphi 0, %s763
      %s765 = sphi 0, %s763
      %s766 = sphi 0, %s765
      %s780 = sphi 0, %s766
      %s786 = sphi 0, %s788
      %s789 = sphi 0, %s786
      %s790 = sphi 0, %s789
      %s806 = sphi 0, %s790
    $region4: #{ipec_forward.1} parent=1 // loop_header_branch
      %93 = sbr.rel (%p91) target = $region8
    $region5: #{ipec_forward.1} parent=1 // loop_body
      %s95 = ssub.s32 %s90, 1
      %s96 = ssub.s32 %s90, 2
      %s97 = sadd.s32 %s90, 1
      %s98 = ssub.s32 %s90, %s97
      %p99 = scmp.eq.s32.totalorder %s98, 0
      %s101 = sadd.s32 %s100, 1
      %s102 = scalar_select %p99, %s100, %s101
      %p105 = pneg %p99
      %p106 = scmp.eq.s32.totalorder %s90, 1
      %p107 = por %p105, %p106
      %p108 = scmp.ne.s32.totalorder %s100, %s103
      %p109 = scmp.eq.s32.totalorder %s90, 0
      %p110 = por %p108, %p109
      %p111 = scmp.ne.s32.totalorder %s100, %s103
      %p112 = scmp.eq.s32.totalorder %s95, 1
      %p113 = por %p111, %p112
      %p114 = scmp.ne.s32.totalorder %s103, %s104
      %p115 = scmp.eq.s32.totalorder %s95, 0
      %p116 = por %p114, %p115
      %p117 = scmp.ne.s32.totalorder %s103, %s104
      %p118 = scmp.eq.s32.totalorder %s96, 1
      %p119 = por %p117, %p118
      %p121 = scmp.ne.s32.totalorder %s104, %s120
      %p122 = scmp.eq.s32.totalorder %s96, 0
      %p123 = por %p121, %p122
      %s124 = ssub.s32 %s90, %s97
      %p125 = scmp.eq.s32.totalorder %s124, 0
      %s127 = sadd.s32 %s126, 1
      %s128 = scalar_select %p125, %s126, %s127
      %p131 = pneg %p125
      %p132 = scmp.eq.s32.totalorder %s90, 1
      %p133 = por %p131, %p132
      %p134 = scmp.ne.s32.totalorder %s126, %s129
      %p135 = scmp.eq.s32.totalorder %s90, 0
      %p136 = por %p134, %p135
      %p137 = scmp.ne.s32.totalorder %s126, %s129
      %p138 = scmp.eq.s32.totalorder %s95, 1
      %p139 = por %p137, %p138
      %p140 = scmp.ne.s32.totalorder %s129, %s130
      %p141 = scmp.eq.s32.totalorder %s95, 0
      %p142 = por %p140, %p141
      %p143 = scmp.ne.s32.totalorder %s129, %s130
      %p144 = scmp.eq.s32.totalorder %s96, 1
      %p145 = por %p143, %p144
      %p147 = scmp.ne.s32.totalorder %s130, %s146
      %p148 = scmp.eq.s32.totalorder %s96, 0
      %p149 = por %p147, %p148
      %s150 = ssub.s32 %s90, %s97
      %p151 = scmp.eq.s32.totalorder %s150, 0
      %s153 = sadd.s32 %s152, 1
      %s154 = scalar_select %p151, %s152, %s153
      %p157 = pneg %p151
      %p158 = scmp.eq.s32.totalorder %s90, 1
      %p159 = por %p157, %p158
      %p160 = scmp.ne.s32.totalorder %s152, %s155
      %p161 = scmp.eq.s32.totalorder %s90, 0
      %p162 = por %p160, %p161
      %p163 = scmp.ne.s32.totalorder %s152, %s155
      %p164 = scmp.eq.s32.totalorder %s95, 1
      %p165 = por %p163, %p164
      %p166 = scmp.ne.s32.totalorder %s155, %s156
      %p167 = scmp.eq.s32.totalorder %s95, 0
      %p168 = por %p166, %p167
      %p169 = scmp.ne.s32.totalorder %s155, %s156
      %p170 = scmp.eq.s32.totalorder %s96, 1
      %p171 = por %p169, %p170
      %p173 = scmp.ne.s32.totalorder %s156, %s172
      %p174 = scmp.eq.s32.totalorder %s96, 0
      %p175 = por %p173, %p174
      %s176 = ssub.s32 %s90, %s97
      %p177 = scmp.eq.s32.totalorder %s176, 0
      %s179 = sadd.s32 %s178, 1
      %s180 = scalar_select %p177, %s178, %s179
      %p183 = pneg %p177
      %p184 = scmp.eq.s32.totalorder %s90, 1
      %p185 = por %p183, %p184
      %p186 = scmp.ne.s32.totalorder %s178, %s181
      %p187 = scmp.eq.s32.totalorder %s90, 0
      %p188 = por %p186, %p187
      %p189 = scmp.ne.s32.totalorder %s178, %s181
      %p190 = scmp.eq.s32.totalorder %s95, 1
      %p191 = por %p189, %p190
      %p192 = scmp.ne.s32.totalorder %s181, %s182
      %p193 = scmp.eq.s32.totalorder %s95, 0
      %p194 = por %p192, %p193
      %p195 = scmp.ne.s32.totalorder %s181, %s182
      %p196 = scmp.eq.s32.totalorder %s96, 1
      %p197 = por %p195, %p196
      %p199 = scmp.ne.s32.totalorder %s182, %s198
      %p200 = scmp.eq.s32.totalorder %s96, 0
      %p201 = por %p199, %p200
      %s202 = ssub.s32 %s90, %s97
      %p203 = scmp.eq.s32.totalorder %s202, 0
      %s205 = sadd.s32 %s204, 1
      %s206 = scalar_select %p203, %s204, %s205
      %p209 = pneg %p203
      %p210 = scmp.eq.s32.totalorder %s90, 1
      %p211 = por %p209, %p210
      %p212 = scmp.ne.s32.totalorder %s204, %s207
      %p213 = scmp.eq.s32.totalorder %s90, 0
      %p214 = por %p212, %p213
      %p215 = scmp.ne.s32.totalorder %s204, %s207
      %p216 = scmp.eq.s32.totalorder %s95, 1
      %p217 = por %p215, %p216
      %p218 = scmp.ne.s32.totalorder %s207, %s208
      %p219 = scmp.eq.s32.totalorder %s95, 0
      %p220 = por %p218, %p219
      %p221 = scmp.ne.s32.totalorder %s207, %s208
      %p222 = scmp.eq.s32.totalorder %s96, 1
      %p223 = por %p221, %p222
      %p225 = scmp.ne.s32.totalorder %s208, %s224
      %p226 = scmp.eq.s32.totalorder %s96, 0
      %p227 = por %p225, %p226
      %s228 = ssub.s32 %s90, %s97
      %p229 = scmp.eq.s32.totalorder %s228, 0
      %s231 = sadd.s32 %s230, 1
      %s232 = scalar_select %p229, %s230, %s231
      %p235 = pneg %p229
      %p236 = scmp.eq.s32.totalorder %s90, 1
      %p237 = por %p235, %p236
      %p238 = scmp.ne.s32.totalorder %s230, %s233
      %p239 = scmp.eq.s32.totalorder %s90, 0
      %p240 = por %p238, %p239
      %p241 = scmp.ne.s32.totalorder %s230, %s233
      %p242 = scmp.eq.s32.totalorder %s95, 1
      %p243 = por %p241, %p242
      %p244 = scmp.ne.s32.totalorder %s233, %s234
      %p245 = scmp.eq.s32.totalorder %s95, 0
      %p246 = por %p244, %p245
      %p247 = scmp.ne.s32.totalorder %s233, %s234
      %p248 = scmp.eq.s32.totalorder %s96, 1
      %p249 = por %p247, %p248
      %p251 = scmp.ne.s32.totalorder %s234, %s250
      %p252 = scmp.eq.s32.totalorder %s96, 0
      %p253 = por %p251, %p252
      %s254 = ssub.s32 %s90, %s97
      %p255 = scmp.eq.s32.totalorder %s254, 0
      %s257 = sadd.s32 %s256, 1
      %s258 = scalar_select %p255, %s256, %s257
      %p261 = pneg %p255
      %p262 = scmp.eq.s32.totalorder %s90, 1
      %p263 = por %p261, %p262
      %p264 = scmp.ne.s32.totalorder %s256, %s259
      %p265 = scmp.eq.s32.totalorder %s90, 0
      %p266 = por %p264, %p265
      %p267 = scmp.ne.s32.totalorder %s256, %s259
      %p268 = scmp.eq.s32.totalorder %s95, 1
      %p269 = por %p267, %p268
      %p270 = scmp.ne.s32.totalorder %s259, %s260
      %p271 = scmp.eq.s32.totalorder %s95, 0
      %p272 = por %p270, %p271
      %p273 = scmp.ne.s32.totalorder %s259, %s260
      %p274 = scmp.eq.s32.totalorder %s96, 1
      %p275 = por %p273, %p274
      %p277 = scmp.ne.s32.totalorder %s260, %s276
      %p278 = scmp.eq.s32.totalorder %s96, 0
      %p279 = por %p277, %p278
      %s281 = sadd.s32 %s280, 1
      %p284 = scmp.eq.s32.totalorder %s90, 1
      %p285 = scmp.ne.s32.totalorder %s280, %s282
      %p286 = scmp.eq.s32.totalorder %s90, 0
      %p287 = por %p285, %p286
      %p288 = scmp.ne.s32.totalorder %s280, %s282
      %p289 = scmp.eq.s32.totalorder %s95, 1
      %p290 = por %p288, %p289
      %p291 = scmp.ne.s32.totalorder %s282, %s283
      %p292 = scmp.eq.s32.totalorder %s95, 0
      %p293 = por %p291, %p292
      %p294 = scmp.ne.s32.totalorder %s282, %s283
      %p295 = scmp.eq.s32.totalorder %s96, 1
      %p296 = por %p294, %p295
      %p298 = scmp.ne.s32.totalorder %s283, %s297
      %p299 = scmp.eq.s32.totalorder %s96, 0
      %p300 = por %p298, %p299
      %s302 = sadd.s32 %s301, 1
      %p305 = scmp.eq.s32.totalorder %s90, 1
      %p306 = scmp.ne.s32.totalorder %s301, %s303
      %p307 = scmp.eq.s32.totalorder %s90, 0
      %p308 = por %p306, %p307
      %p309 = scmp.ne.s32.totalorder %s301, %s303
      %p310 = scmp.eq.s32.totalorder %s95, 1
      %p311 = por %p309, %p310
      %p312 = scmp.ne.s32.totalorder %s303, %s304
      %p313 = scmp.eq.s32.totalorder %s95, 0
      %p314 = por %p312, %p313
      %p315 = scmp.ne.s32.totalorder %s303, %s304
      %p316 = scmp.eq.s32.totalorder %s96, 1
      %p317 = por %p315, %p316
      %p319 = scmp.ne.s32.totalorder %s304, %s318
      %p320 = scmp.eq.s32.totalorder %s96, 0
      %p321 = por %p319, %p320
      %s323 = sadd.s32 %s322, 1
      %p326 = scmp.eq.s32.totalorder %s90, 1
      %p327 = scmp.ne.s32.totalorder %s322, %s324
      %p328 = scmp.eq.s32.totalorder %s90, 0
      %p329 = por %p327, %p328
      %p330 = scmp.ne.s32.totalorder %s322, %s324
      %p331 = scmp.eq.s32.totalorder %s95, 1
      %p332 = por %p330, %p331
      %p333 = scmp.ne.s32.totalorder %s324, %s325
      %p334 = scmp.eq.s32.totalorder %s95, 0
      %p335 = por %p333, %p334
      %p336 = scmp.ne.s32.totalorder %s324, %s325
      %p337 = scmp.eq.s32.totalorder %s96, 1
      %p338 = por %p336, %p337
      %p340 = scmp.ne.s32.totalorder %s325, %s339
      %p341 = scmp.eq.s32.totalorder %s96, 0
      %p342 = por %p340, %p341
      %s344 = sadd.s32 %s343, 1
      %p347 = scmp.eq.s32.totalorder %s90, 1
      %p348 = scmp.ne.s32.totalorder %s343, %s345
      %p349 = scmp.eq.s32.totalorder %s90, 0
      %p350 = por %p348, %p349
      %p351 = scmp.ne.s32.totalorder %s343, %s345
      %p352 = scmp.eq.s32.totalorder %s95, 1
      %p353 = por %p351, %p352
      %p354 = scmp.ne.s32.totalorder %s345, %s346
      %p355 = scmp.eq.s32.totalorder %s95, 0
      %p356 = por %p354, %p355
      %p357 = scmp.ne.s32.totalorder %s345, %s346
      %p358 = scmp.eq.s32.totalorder %s96, 1
      %p359 = por %p357, %p358
      %p361 = scmp.ne.s32.totalorder %s346, %s360
      %p362 = scmp.eq.s32.totalorder %s96, 0
      %p363 = por %p361, %p362
      %s365 = sadd.s32 %s364, 1
      %p368 = scmp.eq.s32.totalorder %s90, 1
      %p369 = scmp.ne.s32.totalorder %s364, %s366
      %p370 = scmp.eq.s32.totalorder %s90, 0
      %p371 = por %p369, %p370
      %p372 = scmp.ne.s32.totalorder %s364, %s366
      %p373 = scmp.eq.s32.totalorder %s95, 1
      %p374 = por %p372, %p373
      %p375 = scmp.ne.s32.totalorder %s366, %s367
      %p376 = scmp.eq.s32.totalorder %s95, 0
      %p377 = por %p375, %p376
      %p378 = scmp.ne.s32.totalorder %s366, %s367
      %p379 = scmp.eq.s32.totalorder %s96, 1
      %p380 = por %p378, %p379
      %p382 = scmp.ne.s32.totalorder %s367, %s381
      %p383 = scmp.eq.s32.totalorder %s96, 0
      %p384 = por %p382, %p383
      %s386 = sadd.s32 %s385, 1
      %p389 = scmp.eq.s32.totalorder %s90, 1
      %p390 = scmp.ne.s32.totalorder %s385, %s387
      %p391 = scmp.eq.s32.totalorder %s90, 0
      %p392 = por %p390, %p391
      %p393 = scmp.ne.s32.totalorder %s385, %s387
      %p394 = scmp.eq.s32.totalorder %s95, 1
      %p395 = por %p393, %p394
      %p396 = scmp.ne.s32.totalorder %s387, %s388
      %p397 = scmp.eq.s32.totalorder %s95, 0
      %p398 = por %p396, %p397
      %p399 = scmp.ne.s32.totalorder %s387, %s388
      %p400 = scmp.eq.s32.totalorder %s96, 1
      %p401 = por %p399, %p400
      %p403 = scmp.ne.s32.totalorder %s388, %s402
      %p404 = scmp.eq.s32.totalorder %s96, 0
      %p405 = por %p403, %p404
      %s407 = sadd.s32 %s406, 1
      %p410 = scmp.eq.s32.totalorder %s90, 1
      %p411 = scmp.ne.s32.totalorder %s406, %s408
      %p412 = scmp.eq.s32.totalorder %s90, 0
      %p413 = por %p411, %p412
      %p414 = scmp.ne.s32.totalorder %s406, %s408
      %p415 = scmp.eq.s32.totalorder %s95, 1
      %p416 = por %p414, %p415
      %p417 = scmp.ne.s32.totalorder %s408, %s409
      %p418 = scmp.eq.s32.totalorder %s95, 0
      %p419 = por %p417, %p418
      %p420 = scmp.ne.s32.totalorder %s408, %s409
      %p421 = scmp.eq.s32.totalorder %s96, 1
      %p422 = por %p420, %p421
      %p424 = scmp.ne.s32.totalorder %s409, %s423
      %p425 = scmp.eq.s32.totalorder %s96, 0
      %p426 = por %p424, %p425
      %s428 = sadd.s32 %s427, 1
      %p431 = scmp.eq.s32.totalorder %s90, 1
      %p432 = scmp.ne.s32.totalorder %s427, %s429
      %p433 = scmp.eq.s32.totalorder %s90, 0
      %p434 = por %p432, %p433
      %p435 = scmp.ne.s32.totalorder %s427, %s429
      %p436 = scmp.eq.s32.totalorder %s95, 1
      %p437 = por %p435, %p436
      %p438 = scmp.ne.s32.totalorder %s429, %s430
      %p439 = scmp.eq.s32.totalorder %s95, 0
      %p440 = por %p438, %p439
      %p441 = scmp.ne.s32.totalorder %s429, %s430
      %p442 = scmp.eq.s32.totalorder %s96, 1
      %p443 = por %p441, %p442
      %p445 = scmp.ne.s32.totalorder %s430, %s444
      %p446 = scmp.eq.s32.totalorder %s96, 0
      %p447 = por %p445, %p446
      %s449 = sadd.s32 %s448, 1
      %p452 = scmp.eq.s32.totalorder %s90, 1
      %p453 = scmp.ne.s32.totalorder %s448, %s450
      %p454 = scmp.eq.s32.totalorder %s90, 0
      %p455 = por %p453, %p454
      %p456 = scmp.ne.s32.totalorder %s448, %s450
      %p457 = scmp.eq.s32.totalorder %s95, 1
      %p458 = por %p456, %p457
      %p459 = scmp.ne.s32.totalorder %s450, %s451
      %p460 = scmp.eq.s32.totalorder %s95, 0
      %p461 = por %p459, %p460
      %p462 = scmp.ne.s32.totalorder %s450, %s451
      %p463 = scmp.eq.s32.totalorder %s96, 1
      %p464 = por %p462, %p463
      %p466 = scmp.ne.s32.totalorder %s451, %s465
      %p467 = scmp.eq.s32.totalorder %s96, 0
      %p468 = por %p466, %p467
      %s470 = sadd.s32 %s469, 1
      %p473 = scmp.eq.s32.totalorder %s90, 1
      %p474 = scmp.ne.s32.totalorder %s469, %s471
      %p475 = scmp.eq.s32.totalorder %s90, 0
      %p476 = por %p474, %p475
      %p477 = scmp.ne.s32.totalorder %s469, %s471
      %p478 = scmp.eq.s32.totalorder %s95, 1
      %p479 = por %p477, %p478
      %p480 = scmp.ne.s32.totalorder %s471, %s472
      %p481 = scmp.eq.s32.totalorder %s95, 0
      %p482 = por %p480, %p481
      %p483 = scmp.ne.s32.totalorder %s471, %s472
      %p484 = scmp.eq.s32.totalorder %s96, 1
      %p485 = por %p483, %p484
      %p487 = scmp.ne.s32.totalorder %s472, %s486
      %p488 = scmp.eq.s32.totalorder %s96, 0
      %p489 = por %p487, %p488
      %s491 = sadd.s32 %s490, 1
      %p494 = scmp.eq.s32.totalorder %s90, 1
      %p495 = scmp.ne.s32.totalorder %s490, %s492
      %p496 = scmp.eq.s32.totalorder %s90, 0
      %p497 = por %p495, %p496
      %p498 = scmp.ne.s32.totalorder %s490, %s492
      %p499 = scmp.eq.s32.totalorder %s95, 1
      %p500 = por %p498, %p499
      %p501 = scmp.ne.s32.totalorder %s492, %s493
      %p502 = scmp.eq.s32.totalorder %s95, 0
      %p503 = por %p501, %p502
      %p504 = scmp.ne.s32.totalorder %s492, %s493
      %p505 = scmp.eq.s32.totalorder %s96, 1
      %p506 = por %p504, %p505
      %p508 = scmp.ne.s32.totalorder %s493, %s507
      %p509 = scmp.eq.s32.totalorder %s96, 0
      %p510 = por %p508, %p509
      %s512 = sadd.s32 %s511, 1
      %p515 = scmp.eq.s32.totalorder %s90, 1
      %p516 = scmp.ne.s32.totalorder %s511, %s513
      %p517 = scmp.eq.s32.totalorder %s90, 0
      %p518 = por %p516, %p517
      %p519 = scmp.ne.s32.totalorder %s511, %s513
      %p520 = scmp.eq.s32.totalorder %s95, 1
      %p521 = por %p519, %p520
      %p522 = scmp.ne.s32.totalorder %s513, %s514
      %p523 = scmp.eq.s32.totalorder %s95, 0
      %p524 = por %p522, %p523
      %p525 = scmp.ne.s32.totalorder %s513, %s514
      %p526 = scmp.eq.s32.totalorder %s96, 1
      %p527 = por %p525, %p526
      %p529 = scmp.ne.s32.totalorder %s514, %s528
      %p530 = scmp.eq.s32.totalorder %s96, 0
      %p531 = por %p529, %p530
      %s533 = sadd.s32 %s532, 1
      %p536 = scmp.eq.s32.totalorder %s90, 1
      %p537 = scmp.ne.s32.totalorder %s532, %s534
      %p538 = scmp.eq.s32.totalorder %s90, 0
      %p539 = por %p537, %p538
      %p540 = scmp.ne.s32.totalorder %s532, %s534
      %p541 = scmp.eq.s32.totalorder %s95, 1
      %p542 = por %p540, %p541
      %p543 = scmp.ne.s32.totalorder %s534, %s535
      %p544 = scmp.eq.s32.totalorder %s95, 0
      %p545 = por %p543, %p544
      %p546 = scmp.ne.s32.totalorder %s534, %s535
      %p547 = scmp.eq.s32.totalorder %s96, 1
      %p548 = por %p546, %p547
      %p550 = scmp.ne.s32.totalorder %s535, %s549
      %p551 = scmp.eq.s32.totalorder %s96, 0
      %p552 = por %p550, %p551
      %s554 = sadd.s32 %s553, 1
      %p557 = scmp.eq.s32.totalorder %s90, 1
      %p558 = scmp.ne.s32.totalorder %s553, %s555
      %p559 = scmp.eq.s32.totalorder %s90, 0
      %p560 = por %p558, %p559
      %p561 = scmp.ne.s32.totalorder %s553, %s555
      %p562 = scmp.eq.s32.totalorder %s95, 1
      %p563 = por %p561, %p562
      %p564 = scmp.ne.s32.totalorder %s555, %s556
      %p565 = scmp.eq.s32.totalorder %s95, 0
      %p566 = por %p564, %p565
      %p567 = scmp.ne.s32.totalorder %s555, %s556
      %p568 = scmp.eq.s32.totalorder %s96, 1
      %p569 = por %p567, %p568
      %p571 = scmp.ne.s32.totalorder %s556, %s570
      %p572 = scmp.eq.s32.totalorder %s96, 0
      %p573 = por %p571, %p572
      %s575 = sadd.s32 %s574, 1
      %p578 = scmp.eq.s32.totalorder %s90, 1
      %p579 = scmp.ne.s32.totalorder %s574, %s576
      %p580 = scmp.eq.s32.totalorder %s90, 0
      %p581 = por %p579, %p580
      %p582 = scmp.ne.s32.totalorder %s574, %s576
      %p583 = scmp.eq.s32.totalorder %s95, 1
      %p584 = por %p582, %p583
      %p585 = scmp.ne.s32.totalorder %s576, %s577
      %p586 = scmp.eq.s32.totalorder %s95, 0
      %p587 = por %p585, %p586
      %p588 = scmp.ne.s32.totalorder %s576, %s577
      %p589 = scmp.eq.s32.totalorder %s96, 1
      %p590 = por %p588, %p589
      %p592 = scmp.ne.s32.totalorder %s577, %s591
      %p593 = scmp.eq.s32.totalorder %s96, 0
      %p594 = por %p592, %p593
      %s596 = sadd.s32 %s595, 1
      %p599 = scmp.eq.s32.totalorder %s90, 1
      %p600 = scmp.ne.s32.totalorder %s595, %s597
      %p601 = scmp.eq.s32.totalorder %s90, 0
      %p602 = por %p600, %p601
      %p603 = scmp.ne.s32.totalorder %s595, %s597
      %p604 = scmp.eq.s32.totalorder %s95, 1
      %p605 = por %p603, %p604
      %p606 = scmp.ne.s32.totalorder %s597, %s598
      %p607 = scmp.eq.s32.totalorder %s95, 0
      %p608 = por %p606, %p607
      %p609 = scmp.ne.s32.totalorder %s597, %s598
      %p610 = scmp.eq.s32.totalorder %s96, 1
      %p611 = por %p609, %p610
      %p613 = scmp.ne.s32.totalorder %s598, %s612
      %p614 = scmp.eq.s32.totalorder %s96, 0
      %p615 = por %p613, %p614
      %s617 = sadd.s32 %s616, 1
      %p620 = scmp.eq.s32.totalorder %s90, 1
      %p621 = scmp.ne.s32.totalorder %s616, %s618
      %p622 = scmp.eq.s32.totalorder %s90, 0
      %p623 = por %p621, %p622
      %p624 = scmp.ne.s32.totalorder %s616, %s618
      %p625 = scmp.eq.s32.totalorder %s95, 1
      %p626 = por %p624, %p625
      %p627 = scmp.ne.s32.totalorder %s618, %s619
      %p628 = scmp.eq.s32.totalorder %s95, 0
      %p629 = por %p627, %p628
      %p630 = scmp.ne.s32.totalorder %s618, %s619
      %p631 = scmp.eq.s32.totalorder %s96, 1
      %p632 = por %p630, %p631
      %p634 = scmp.ne.s32.totalorder %s619, %s633
      %p635 = scmp.eq.s32.totalorder %s96, 0
      %p636 = por %p634, %p635
      %s638 = sadd.s32 %s637, 1
      %p641 = scmp.eq.s32.totalorder %s90, 1
      %p642 = scmp.ne.s32.totalorder %s637, %s639
      %p643 = scmp.eq.s32.totalorder %s90, 0
      %p644 = por %p642, %p643
      %p645 = scmp.ne.s32.totalorder %s637, %s639
      %p646 = scmp.eq.s32.totalorder %s95, 1
      %p647 = por %p645, %p646
      %p648 = scmp.ne.s32.totalorder %s639, %s640
      %p649 = scmp.eq.s32.totalorder %s95, 0
      %p650 = por %p648, %p649
      %p651 = scmp.ne.s32.totalorder %s639, %s640
      %p652 = scmp.eq.s32.totalorder %s96, 1
      %p653 = por %p651, %p652
      %p655 = scmp.ne.s32.totalorder %s640, %s654
      %p656 = scmp.eq.s32.totalorder %s96, 0
      %p657 = por %p655, %p656
      %s659 = sadd.s32 %s658, 1
      %p662 = scmp.eq.s32.totalorder %s90, 1
      %p663 = scmp.ne.s32.totalorder %s658, %s660
      %p664 = scmp.eq.s32.totalorder %s90, 0
      %p665 = por %p663, %p664
      %p666 = scmp.ne.s32.totalorder %s658, %s660
      %p667 = scmp.eq.s32.totalorder %s95, 1
      %p668 = por %p666, %p667
      %p669 = scmp.ne.s32.totalorder %s660, %s661
      %p670 = scmp.eq.s32.totalorder %s95, 0
      %p671 = por %p669, %p670
      %p672 = scmp.ne.s32.totalorder %s660, %s661
      %p673 = scmp.eq.s32.totalorder %s96, 1
      %p674 = por %p672, %p673
      %p676 = scmp.ne.s32.totalorder %s661, %s675
      %p677 = scmp.eq.s32.totalorder %s96, 0
      %p678 = por %p676, %p677
      %s680 = sadd.s32 %s679, 1
      %p683 = scmp.eq.s32.totalorder %s90, 1
      %p684 = scmp.ne.s32.totalorder %s679, %s681
      %p685 = scmp.eq.s32.totalorder %s90, 0
      %p686 = por %p684, %p685
      %p687 = scmp.ne.s32.totalorder %s679, %s681
      %p688 = scmp.eq.s32.totalorder %s95, 1
      %p689 = por %p687, %p688
      %p690 = scmp.ne.s32.totalorder %s681, %s682
      %p691 = scmp.eq.s32.totalorder %s95, 0
      %p692 = por %p690, %p691
      %p693 = scmp.ne.s32.totalorder %s681, %s682
      %p694 = scmp.eq.s32.totalorder %s96, 1
      %p695 = por %p693, %p694
      %p697 = scmp.ne.s32.totalorder %s682, %s696
      %p698 = scmp.eq.s32.totalorder %s96, 0
      %p699 = por %p697, %p698
      %s701 = sadd.s32 %s700, 1
      %p704 = scmp.eq.s32.totalorder %s90, 1
      %p705 = scmp.ne.s32.totalorder %s700, %s702
      %p706 = scmp.eq.s32.totalorder %s90, 0
      %p707 = por %p705, %p706
      %p708 = scmp.ne.s32.totalorder %s700, %s702
      %p709 = scmp.eq.s32.totalorder %s95, 1
      %p710 = por %p708, %p709
      %p711 = scmp.ne.s32.totalorder %s702, %s703
      %p712 = scmp.eq.s32.totalorder %s95, 0
      %p713 = por %p711, %p712
      %p714 = scmp.ne.s32.totalorder %s702, %s703
      %p715 = scmp.eq.s32.totalorder %s96, 1
      %p716 = por %p714, %p715
      %p718 = scmp.ne.s32.totalorder %s703, %s717
      %p719 = scmp.eq.s32.totalorder %s96, 0
      %p720 = por %p718, %p719
      %s722 = sadd.s32 %s721, 1
      %p725 = scmp.eq.s32.totalorder %s90, 1
      %p726 = scmp.ne.s32.totalorder %s721, %s723
      %p727 = scmp.eq.s32.totalorder %s90, 0
      %p728 = por %p726, %p727
      %p729 = scmp.ne.s32.totalorder %s721, %s723
      %p730 = scmp.eq.s32.totalorder %s95, 1
      %p731 = por %p729, %p730
      %p732 = scmp.ne.s32.totalorder %s723, %s724
      %p733 = scmp.eq.s32.totalorder %s95, 0
      %p734 = por %p732, %p733
      %p735 = scmp.ne.s32.totalorder %s723, %s724
      %p736 = scmp.eq.s32.totalorder %s96, 1
      %p737 = por %p735, %p736
      %p739 = scmp.ne.s32.totalorder %s724, %s738
      %p740 = scmp.eq.s32.totalorder %s96, 0
      %p741 = por %p739, %p740
      %s743 = sadd.s32 %s742, 1
      %p746 = scmp.eq.s32.totalorder %s90, 1
      %p747 = scmp.ne.s32.totalorder %s742, %s744
      %p748 = scmp.eq.s32.totalorder %s90, 0
      %p749 = por %p747, %p748
      %p750 = scmp.ne.s32.totalorder %s742, %s744
      %p751 = scmp.eq.s32.totalorder %s95, 1
      %p752 = por %p750, %p751
      %p753 = scmp.ne.s32.totalorder %s744, %s745
      %p754 = scmp.eq.s32.totalorder %s95, 0
      %p755 = por %p753, %p754
      %p756 = scmp.ne.s32.totalorder %s744, %s745
      %p757 = scmp.eq.s32.totalorder %s96, 1
      %p758 = por %p756, %p757
      %p760 = scmp.ne.s32.totalorder %s745, %s759
      %p761 = scmp.eq.s32.totalorder %s96, 0
      %p762 = por %p760, %p761
      %s764 = sadd.s32 %s763, 1
      %p767 = scmp.eq.s32.totalorder %s90, 1
      %p768 = scmp.ne.s32.totalorder %s763, %s765
      %p769 = scmp.eq.s32.totalorder %s90, 0
      %p770 = por %p768, %p769
      %p771 = scmp.ne.s32.totalorder %s763, %s765
      %p772 = scmp.eq.s32.totalorder %s95, 1
      %p773 = por %p771, %p772
      %p774 = scmp.ne.s32.totalorder %s765, %s766
      %p775 = scmp.eq.s32.totalorder %s95, 0
      %p776 = por %p774, %p775
      %p777 = scmp.ne.s32.totalorder %s765, %s766
      %p778 = scmp.eq.s32.totalorder %s96, 1
      %p779 = por %p777, %p778
      %p781 = scmp.ne.s32.totalorder %s766, %s780
      %p782 = scmp.eq.s32.totalorder %s96, 0
      %p783 = por %p781, %p782
      %s784 = ssub.s32 %s90, %s97
      %p785 = scmp.eq.s32.totalorder %s784, 0
      %s787 = sadd.s32 %s786, 1
      %s788 = scalar_select %p785, %s786, %s787
      %p791 = pneg %p785
      %p792 = scmp.eq.s32.totalorder %s90, 1
      %p793 = por %p791, %p792
      %p794 = scmp.ne.s32.totalorder %s786, %s789
      %p795 = scmp.eq.s32.totalorder %s90, 0
      %p796 = por %p794, %p795
      %p797 = scmp.ne.s32.totalorder %s786, %s789
      %p798 = scmp.eq.s32.totalorder %s95, 1
      %p799 = por %p797, %p798
      %p800 = scmp.ne.s32.totalorder %s789, %s790
      %p801 = scmp.eq.s32.totalorder %s95, 0
      %p802 = por %p800, %p801
      %p803 = scmp.ne.s32.totalorder %s789, %s790
      %p804 = scmp.eq.s32.totalorder %s96, 1
      %p805 = por %p803, %p804
      %p807 = scmp.ne.s32.totalorder %s790, %s806
      %p808 = scmp.eq.s32.totalorder %s96, 0
      %p809 = por %p807, %p808
      %p810 = scmp.le.s32.totalorder 1, %s90
      %p811 = scmp.lt.s32.totalorder %s90, 3
      %p812 = pnand %p810, %p811
      %p813 = pneg %p812
      // Predicated region
      $region9: #{ipec_forward.1} parent=5 // pred_check
        _
      $region10: #{ipec_forward.1} parent=5 // pred_check_branch
        %815 = sbr.rel (%p812) target = $region12
      $region11: #{ipec_forward.1} parent=5 // pred_region
        %s816 = ssub.s32 %s90, 1
        // Predicated region
        $region13: #{ipec_forward.1} parent=11 // pred_check
          %p817 = pneg %p293
        $region14: #{ipec_forward.1} parent=11 // pred_check_branch
          %819 = sbr.rel (%p817) target = $region16
        $region15: #{ipec_forward.1} parent=11 // pred_region
          %s821 = ssub.s32 9600, 9600
          %822 = vsyncadd [#allocation11], %s821
          %s823 = sshll.u32 [#allocation12], 4
          %s824 = int_to_ptr.vmem [resolvable:$true] %s823
          %829 = dma.hbm_to_vmem [thread:$0]  %s15, 9600, %s824, [#allocation11], 128, 128, 8
        $region16: #{ipec_forward.1} parent=11 // pred_fallthru
          _
        // Predicated region
        $region17: #{ipec_forward.1} parent=11 // pred_check
          %p830 = pneg %p314
        $region18: #{ipec_forward.1} parent=11 // pred_check_branch
          %832 = sbr.rel (%p830) target = $region20
        $region19: #{ipec_forward.1} parent=11 // pred_region
          %s834 = ssub.s32 16, 16
          %835 = vsyncadd [#allocation14], %s834
          %s837 = sshll.u32 [#allocation13], 4
          %s838 = int_to_ptr.vmem [resolvable:$true] %s837
          %840 = dma.hbm_to_vmem [thread:$0]  %s17, 16, %s838, [#allocation14]
        $region20: #{ipec_forward.1} parent=11 // pred_fallthru
          _
        // Predicated region
        $region21: #{ipec_forward.1} parent=11 // pred_check
          %p841 = pneg %p335
        $region22: #{ipec_forward.1} parent=11 // pred_check_branch
          %843 = sbr.rel (%p841) target = $region24
        $region23: #{ipec_forward.1} parent=11 // pred_region
          _
        $region24: #{ipec_forward.1} parent=11 // pred_fallthru
          _
        // Predicated region
        $region25: #{ipec_forward.1} parent=11 // pred_check
          %p844 = pneg %p356
        $region26: #{ipec_forward.1} parent=11 // pred_check_branch
          %846 = sbr.rel (%p844) target = $region28
        $region27: #{ipec_forward.1} parent=11 // pred_region
          %s848 = ssub.s32 16, 16
          %849 = vsyncadd [#allocation14], %s848
          %s851 = sshll.u32 [#allocation15], 4
          %s852 = int_to_ptr.vmem [resolvable:$true] %s851
          %854 = dma.hbm_to_vmem [thread:$0]  %s21, 16, %s852, [#allocation14]
        $region28: #{ipec_forward.1} parent=11 // pred_fallthru
          _
        // Predicated region
        $region29: #{ipec_forward.1} parent=11 // pred_check
          %p855 = pneg %p377
        $region30: #{ipec_forward.1} parent=11 // pred_check_branch
          %857 = sbr.rel (%p855) target = $region32
        $region31: #{ipec_forward.1} parent=11 // pred_region
          %s859 = ssub.s32 9600, 9600
          %860 = vsyncadd [#allocation17], %s859
          %s861 = sshll.u32 [#allocation16], 4
          %s862 = int_to_ptr.vmem [resolvable:$true] %s861
          %867 = dma.hbm_to_vmem [thread:$0]  %s23, 9600, %s862, [#allocation17], 128, 128, 8
        $region32: #{ipec_forward.1} parent=11 // pred_fallthru
          _
        // Predicated region
        $region33: #{ipec_forward.1} parent=11 // pred_check
          %p868 = pneg %p398
        $region34: #{ipec_forward.1} parent=11 // pred_check_branch
          %870 = sbr.rel (%p868) target = $region36
        $region35: #{ipec_forward.1} parent=11 // pred_region
          %s872 = ssub.s32 16, 16
          %873 = vsyncadd [#allocation17], %s872
          %s875 = sshll.u32 [#allocation18], 4
          %s876 = int_to_ptr.vmem [resolvable:$true] %s875
          %878 = dma.hbm_to_vmem [thread:$0]  %s25, 16, %s876, [#allocation17]
        $region36: #{ipec_forward.1} parent=11 // pred_fallthru
          _
        // Predicated region
        $region37: #{ipec_forward.1} parent=11 // pred_check
          %p879 = pneg %p419
        $region38: #{ipec_forward.1} parent=11 // pred_check_branch
          %881 = sbr.rel (%p879) target = $region40
        $region39: #{ipec_forward.1} parent=11 // pred_region
          _
        $region40: #{ipec_forward.1} parent=11 // pred_fallthru
          _
        // Predicated region
        $region41: #{ipec_forward.1} parent=11 // pred_check
          %p882 = pneg %p440
        $region42: #{ipec_forward.1} parent=11 // pred_check_branch
          %884 = sbr.rel (%p882) target = $region44
        $region43: #{ipec_forward.1} parent=11 // pred_region
          %s886 = ssub.s32 16, 16
          %887 = vsyncadd [#allocation20], %s886
          %s889 = sshll.u32 [#allocation19], 4
          %s890 = int_to_ptr.vmem [resolvable:$true] %s889
          %892 = dma.hbm_to_vmem [thread:$0]  %s29, 16, %s890, [#allocation20]
        $region44: #{ipec_forward.1} parent=11 // pred_fallthru
          _
        // Predicated region
        $region45: #{ipec_forward.1} parent=11 // pred_check
          %p893 = pneg %p461
        $region46: #{ipec_forward.1} parent=11 // pred_check_branch
          %895 = sbr.rel (%p893) target = $region48
        $region47: #{ipec_forward.1} parent=11 // pred_region
          %s897 = ssub.s32 256, 256
          %898 = vsyncadd [#allocation20], %s897
          %s899 = sshll.u32 [#allocation21], 4
          %s900 = int_to_ptr.vmem [resolvable:$true] %s899
          %905 = dma.hbm_to_vmem [thread:$0]  %s31, 256, %s900, [#allocation20], 128, 128, 8
        $region48: #{ipec_forward.1} parent=11 // pred_fallthru
          _
        // Predicated region
        $region49: #{ipec_forward.1} parent=11 // pred_check
          %p906 = pneg %p482
        $region50: #{ipec_forward.1} parent=11 // pred_check_branch
          %908 = sbr.rel (%p906) target = $region52
        $region51: #{ipec_forward.1} parent=11 // pred_region
          %s910 = ssub.s32 16, 16
          %911 = vsyncadd [#allocation23], %s910
          %s913 = sshll.u32 [#allocation22], 4
          %s914 = int_to_ptr.vmem [resolvable:$true] %s913
          %916 = dma.hbm_to_vmem [thread:$0]  %s33, 16, %s914, [#allocation23]
        $region52: #{ipec_forward.1} parent=11 // pred_fallthru
          _
        // Predicated region
        $region53: #{ipec_forward.1} parent=11 // pred_check
          %p917 = pneg %p503
        $region54: #{ipec_forward.1} parent=11 // pred_check_branch
          %919 = sbr.rel (%p917) target = $region56
        $region55: #{ipec_forward.1} parent=11 // pred_region
          %s921 = ssub.s32 256, 256
          %922 = vsyncadd [#allocation23], %s921
          %s923 = sshll.u32 [#allocation24], 4
          %s924 = int_to_ptr.vmem [resolvable:$true] %s923
          %929 = dma.hbm_to_vmem [thread:$0]  %s35, 256, %s924, [#allocation23], 128, 128, 8
        $region56: #{ipec_forward.1} parent=11 // pred_fallthru
          _
        // Predicated region
        $region57: #{ipec_forward.1} parent=11 // pred_check
          %p930 = pneg %p524
        $region58: #{ipec_forward.1} parent=11 // pred_check_branch
          %932 = sbr.rel (%p930) target = $region60
        $region59: #{ipec_forward.1} parent=11 // pred_region
          %s934 = ssub.s32 16, 16
          %935 = vsyncadd [#allocation26], %s934
          %s937 = sshll.u32 [#allocation25], 4
          %s938 = int_to_ptr.vmem [resolvable:$true] %s937
          %940 = dma.hbm_to_vmem [thread:$0]  %s37, 16, %s938, [#allocation26]
        $region60: #{ipec_forward.1} parent=11 // pred_fallthru
          _
        // Predicated region
        $region61: #{ipec_forward.1} parent=11 // pred_check
          %p941 = pneg %p545
        $region62: #{ipec_forward.1} parent=11 // pred_check_branch
          %943 = sbr.rel (%p941) target = $region64
        $region63: #{ipec_forward.1} parent=11 // pred_region
          %s945 = ssub.s32 1024, 1024
          %946 = vsyncadd [#allocation26], %s945
          %s947 = sshll.u32 [#allocation27], 4
          %s948 = int_to_ptr.vmem [resolvable:$true] %s947
          %953 = dma.hbm_to_vmem [thread:$0]  %s39, 1024, %s948, [#allocation26], 128, 128, 8
        $region64: #{ipec_forward.1} parent=11 // pred_fallthru
          _
        // Predicated region
        $region65: #{ipec_forward.1} parent=11 // pred_check
          %p954 = pneg %p566
        $region66: #{ipec_forward.1} parent=11 // pred_check_branch
          %956 = sbr.rel (%p954) target = $region68
        $region67: #{ipec_forward.1} parent=11 // pred_region
          %s958 = ssub.s32 1024, 1024
          %959 = vsyncadd [#allocation29], %s958
          %s960 = sshll.u32 [#allocation28], 4
          %s961 = int_to_ptr.vmem [resolvable:$true] %s960
          %966 = dma.hbm_to_vmem [thread:$0]  %s41, 1024, %s961, [#allocation29], 128, 128, 8
        $region68: #{ipec_forward.1} parent=11 // pred_fallthru
          _
        // Predicated region
        $region69: #{ipec_forward.1} parent=11 // pred_check
          %p967 = pneg %p587
        $region70: #{ipec_forward.1} parent=11 // pred_check_branch
          %969 = sbr.rel (%p967) target = $region72
        $region71: #{ipec_forward.1} parent=11 // pred_region
          %s971 = ssub.s32 16, 16
          %972 = vsyncadd [#allocation29], %s971
          %s974 = sshll.u32 [#allocation30], 4
          %s975 = int_to_ptr.vmem [resolvable:$true] %s974
          %977 = dma.hbm_to_vmem [thread:$0]  %s43, 16, %s975, [#allocation29]
        $region72: #{ipec_forward.1} parent=11 // pred_fallthru
          _
        // Predicated region
        $region73: #{ipec_forward.1} parent=11 // pred_check
          %p978 = pneg %p608
        $region74: #{ipec_forward.1} parent=11 // pred_check_branch
          %980 = sbr.rel (%p978) target = $region76
        $region75: #{ipec_forward.1} parent=11 // pred_region
          _
        $region76: #{ipec_forward.1} parent=11 // pred_fallthru
          _
        // Predicated region
        $region77: #{ipec_forward.1} parent=11 // pred_check
          %p981 = pneg %p629
        $region78: #{ipec_forward.1} parent=11 // pred_check_branch
          %983 = sbr.rel (%p981) target = $region80
        $region79: #{ipec_forward.1} parent=11 // pred_region
          %s985 = ssub.s32 1024, 1024
          %986 = vsyncadd [#allocation32], %s985
          %s987 = sshll.u32 [#allocation31], 4
          %s988 = int_to_ptr.vmem [resolvable:$true] %s987
          %993 = dma.hbm_to_vmem [thread:$0]  %s47, 1024, %s988, [#allocation32], 128, 128, 8
        $region80: #{ipec_forward.1} parent=11 // pred_fallthru
          _
        // Predicated region
        $region81: #{ipec_forward.1} parent=11 // pred_check
          %p994 = pneg %p650
        $region82: #{ipec_forward.1} parent=11 // pred_check_branch
          %996 = sbr.rel (%p994) target = $region84
        $region83: #{ipec_forward.1} parent=11 // pred_region
          %s998 = ssub.s32 16, 16
          %999 = vsyncadd [#allocation32], %s998
          %s1001 = sshll.u32 [#allocation33], 4
          %s1002 = int_to_ptr.vmem [resolvable:$true] %s1001
          %1004 = dma.hbm_to_vmem [thread:$0]  %s49, 16, %s1002, [#allocation32]
        $region84: #{ipec_forward.1} parent=11 // pred_fallthru
          _
        // Predicated region
        $region85: #{ipec_forward.1} parent=11 // pred_check
          %p1005 = pneg %p671
        $region86: #{ipec_forward.1} parent=11 // pred_check_branch
          %1007 = sbr.rel (%p1005) target = $region88
        $region87: #{ipec_forward.1} parent=11 // pred_region
          %s1009 = ssub.s32 1024, 1024
          %1010 = vsyncadd [#allocation35], %s1009
          %s1011 = sshll.u32 [#allocation34], 4
          %s1012 = int_to_ptr.vmem [resolvable:$true] %s1011
          %1017 = dma.hbm_to_vmem [thread:$0]  %s51, 1024, %s1012, [#allocation35], 128, 128, 8
        $region88: #{ipec_forward.1} parent=11 // pred_fallthru
          _
        // Predicated region
        $region89: #{ipec_forward.1} parent=11 // pred_check
          %p1018 = pneg %p692
        $region90: #{ipec_forward.1} parent=11 // pred_check_branch
          %1020 = sbr.rel (%p1018) target = $region92
        $region91: #{ipec_forward.1} parent=11 // pred_region
          %s1022 = ssub.s32 1024, 1024
          %1023 = vsyncadd [#allocation35], %s1022
          %s1024 = sshll.u32 [#allocation36], 4
          %s1025 = int_to_ptr.vmem [resolvable:$true] %s1024
          %1030 = dma.hbm_to_vmem [thread:$0]  %s53, 1024, %s1025, [#allocation35], 128, 128, 8
        $region92: #{ipec_forward.1} parent=11 // pred_fallthru
          _
        // Predicated region
        $region93: #{ipec_forward.1} parent=11 // pred_check
          %p1031 = pneg %p713
        $region94: #{ipec_forward.1} parent=11 // pred_check_branch
          %1033 = sbr.rel (%p1031) target = $region96
        $region95: #{ipec_forward.1} parent=11 // pred_region
          %s1035 = ssub.s32 256, 256
          %1036 = vsyncadd [#allocation38], %s1035
          %s1037 = sshll.u32 [#allocation37], 4
          %s1038 = int_to_ptr.vmem [resolvable:$true] %s1037
          %1043 = dma.hbm_to_vmem [thread:$0]  %s55, 256, %s1038, [#allocation38], 128, 128, 8
        $region96: #{ipec_forward.1} parent=11 // pred_fallthru
          _
        // Predicated region
        $region97: #{ipec_forward.1} parent=11 // pred_check
          %p1044 = pneg %p734
        $region98: #{ipec_forward.1} parent=11 // pred_check_branch
          %1046 = sbr.rel (%p1044) target = $region100
        $region99: #{ipec_forward.1} parent=11 // pred_region
          %s1048 = ssub.s32 16, 16
          %1049 = vsyncadd [#allocation38], %s1048
          %s1051 = sshll.u32 [#allocation39], 4
          %s1052 = int_to_ptr.vmem [resolvable:$true] %s1051
          %1054 = dma.hbm_to_vmem [thread:$0]  %s57, 16, %s1052, [#allocation38]
        $region100: #{ipec_forward.1} parent=11 // pred_fallthru
          _
        // Predicated region
        $region101: #{ipec_forward.1} parent=11 // pred_check
          %p1055 = pneg %p755
        $region102: #{ipec_forward.1} parent=11 // pred_check_branch
          %1057 = sbr.rel (%p1055) target = $region104
        $region103: #{ipec_forward.1} parent=11 // pred_region
          _
        $region104: #{ipec_forward.1} parent=11 // pred_fallthru
          _
        // Predicated region
        $region105: #{ipec_forward.1} parent=11 // pred_check
          %p1058 = pneg %p776
        $region106: #{ipec_forward.1} parent=11 // pred_check_branch
          %1060 = sbr.rel (%p1058) target = $region108
        $region107: #{ipec_forward.1} parent=11 // pred_region
          _
        $region108: #{ipec_forward.1} parent=11 // pred_fallthru
          _
      $region12: #{ipec_forward.1} parent=5 // pred_fallthru
        _
      %p1061 = scmp.lt.s32.totalorder %s90, 2
      // Predicated region
      $region109: #{ipec_forward.1} parent=5 // pred_check
        %p1062 = pneg %p1061
      $region110: #{ipec_forward.1} parent=5 // pred_check_branch
        %1064 = sbr.rel (%p1062) target = $region112
      $region111: #{ipec_forward.1} parent=5 // pred_region
        // Predicated region
        $region113: #{ipec_forward.1} parent=111 // pred_check
          %p1065 = pneg %p110
        $region114: #{ipec_forward.1} parent=111 // pred_check_branch
          %1067 = sbr.rel (%p1065) target = $region116
        $region115: #{ipec_forward.1} parent=111 // pred_region
          %s1068 = smul.u32 8, %s90
          %p1069 = scmp.lt.s32.totalorder %s1068, 15
          %s1070 = scalar_select %p1069, %s1068, 15
          %s1071 = smul.addr %s1070, 10
          %s1072 = smul.addr %s1071, 4
          %s1073 = scalar_lea.vmem %s1, %s1072
          %s1074 = smul.u32 8, %s90
        $region116: #{ipec_forward.1} parent=111 // pred_fallthru
          _
        // Predicated region
        $region117: #{ipec_forward.1} parent=111 // pred_check
          %p1075 = pneg %p136
        $region118: #{ipec_forward.1} parent=111 // pred_check_branch
          %1077 = sbr.rel (%p1075) target = $region120
        $region119: #{ipec_forward.1} parent=111 // pred_region
          %s1078 = sand.u32 %s126, 1
          %s1079 = scalar_lea.sflag [#allocation3], %s1078
          %s1080 = sand.u32 %s126, 1
          %s1081 = smul.addr %s1080, 8
          %s1082 = scalar_lea.vmem [#allocation2], %s1081
          %s1083 = smul.u32 8, %s90
          %s1085 = ssub.s32 128, 128
          %1086 = vsyncadd %s1079, %s1085
          %s1087 = smul.addr %s1083, 16
          %s1088 = scalar_lea.hbm %s3, %s1087
          %s1089 = sshll.u32 %s1082, 4
          %s1090 = int_to_ptr.vmem [resolvable:$true] %s1089
          %1095 = dma.hbm_to_vmem [thread:$0]  %s1088, 128, %s1090, %s1079, 16, 16, 1
        $region120: #{ipec_forward.1} parent=111 // pred_fallthru
          _
        // Predicated region
        $region121: #{ipec_forward.1} parent=111 // pred_check
          %p1096 = pneg %p162
        $region122: #{ipec_forward.1} parent=111 // pred_check_branch
          %1098 = sbr.rel (%p1096) target = $region124
        $region123: #{ipec_forward.1} parent=111 // pred_region
          %s1099 = sand.u32 %s90, 1
          %s1100 = scalar_lea.sflag [#allocation5], %s1099
          %s1101 = sand.u32 %s152, 1
          %s1102 = smul.addr %s1101, 320
          %s1103 = scalar_lea.vmem [#allocation4], %s1102
          %s1104 = smul.u32 8, %s90
          %s1106 = ssub.s32 5120, 5120
          %1107 = vsyncadd %s1100, %s1106
          %s1108 = smul.addr %s1104, 10
          %s1109 = smul.addr %s1108, 64
          %s1110 = scalar_lea.hbm %s5, %s1109
          %s1111 = sshll.u32 %s1103, 4
          %s1112 = int_to_ptr.vmem [resolvable:$true] %s1111
          %1117 = dma.hbm_to_vmem [thread:$0]  %s1110, 5120, %s1112, %s1100, 320, 320, 20
        $region124: #{ipec_forward.1} parent=111 // pred_fallthru
          _
        // Predicated region
        $region125: #{ipec_forward.1} parent=111 // pred_check
          %p1118 = pneg %p188
        $region126: #{ipec_forward.1} parent=111 // pred_check_branch
          %1120 = sbr.rel (%p1118) target = $region128
        $region127: #{ipec_forward.1} parent=111 // pred_region
          %s1121 = sand.u32 %s90, 1
          %s1122 = scalar_lea.sflag [#allocation5], %s1121
          %s1123 = sand.u32 %s178, 1
          %s1124 = smul.addr %s1123, 8
          %s1125 = scalar_lea.vmem [#allocation6], %s1124
          %s1126 = smul.u32 8, %s90
          %s1128 = ssub.s32 128, 128
          %1129 = vsyncadd %s1122, %s1128
          %s1130 = smul.addr %s1126, 16
          %s1131 = scalar_lea.hbm %s7, %s1130
          %s1132 = sshll.u32 %s1125, 4
          %s1133 = int_to_ptr.vmem [resolvable:$true] %s1132
          %1138 = dma.hbm_to_vmem [thread:$0]  %s1131, 128, %s1133, %s1122, 16, 16, 1
        $region128: #{ipec_forward.1} parent=111 // pred_fallthru
          _
        // Predicated region
        $region129: #{ipec_forward.1} parent=111 // pred_check
          %p1139 = pneg %p214
        $region130: #{ipec_forward.1} parent=111 // pred_check_branch
          %1141 = sbr.rel (%p1139) target = $region132
        $region131: #{ipec_forward.1} parent=111 // pred_region
          %s1142 = sand.u32 %s90, 1
          %s1143 = scalar_lea.sflag [#allocation8], %s1142
          %s1144 = sand.u32 %s204, 1
          %s1145 = smul.addr %s1144, 8
          %s1146 = scalar_lea.vmem [#allocation7], %s1145
          %s1148 = ssub.s32 128, 128
          %1149 = vsyncadd %s1143, %s1148
          %s1150 = smul.addr %s90, 128
          %s1151 = scalar_lea.hbm %s9, %s1150
          %s1153 = sshll.u32 %s1146, 4
          %s1154 = int_to_ptr.vmem [resolvable:$true] %s1153
          %1156 = dma.hbm_to_vmem [thread:$0]  %s1151, 128, %s1154, %s1143
        $region132: #{ipec_forward.1} parent=111 // pred_fallthru
          _
        // Predicated region
        $region133: #{ipec_forward.1} parent=111 // pred_check
          %p1157 = pneg %p240
        $region134: #{ipec_forward.1} parent=111 // pred_check_branch
          %1159 = sbr.rel (%p1157) target = $region136
        $region135: #{ipec_forward.1} parent=111 // pred_region
          %s1160 = sand.u32 %s90, 1
          %s1161 = scalar_lea.sflag [#allocation8], %s1160
          %s1162 = sand.u32 %s230, 1
          %s1163 = smul.addr %s1162, 8
          %s1164 = scalar_lea.vmem [#allocation9], %s1163
          %s1166 = ssub.s32 128, 128
          %1167 = vsyncadd %s1161, %s1166
          %s1168 = smul.addr %s90, 128
          %s1169 = scalar_lea.hbm %s11, %s1168
          %s1171 = sshll.u32 %s1164, 4
          %s1172 = int_to_ptr.vmem [resolvable:$true] %s1171
          %1174 = dma.hbm_to_vmem [thread:$0]  %s1169, 128, %s1172, %s1161
        $region136: #{ipec_forward.1} parent=111 // pred_fallthru
          _
        // Predicated region
        $region137: #{ipec_forward.1} parent=111 // pred_check
          %p1175 = pneg %p266
        $region138: #{ipec_forward.1} parent=111 // pred_check_branch
          %1177 = sbr.rel (%p1175) target = $region140
        $region139: #{ipec_forward.1} parent=111 // pred_region
          %s1178 = sand.u32 %s90, 1
          %s1179 = scalar_lea.sflag [#allocation11], %s1178
          %s1180 = sand.u32 %s256, 1
          %s1181 = smul.addr %s1180, 8
          %s1182 = scalar_lea.vmem [#allocation10], %s1181
          %s1184 = ssub.s32 128, 128
          %1185 = vsyncadd %s1179, %s1184
          %s1186 = smul.addr %s90, 128
          %s1187 = scalar_lea.hbm %s13, %s1186
          %s1189 = sshll.u32 %s1182, 4
          %s1190 = int_to_ptr.vmem [resolvable:$true] %s1189
          %1192 = dma.hbm_to_vmem [thread:$0]  %s1187, 128, %s1190, %s1179
        $region140: #{ipec_forward.1} parent=111 // pred_fallthru
          _
      $region112: #{ipec_forward.1} parent=5 // pred_fallthru
        _
      %p1193 = scmp.le.s32.totalorder 1, %s90
      %p1194 = scmp.lt.s32.totalorder %s90, 3
      %p1195 = pnand %p1193, %p1194
      %p1196 = pneg %p1195
      // Predicated region
      $region141: #{ipec_forward.1} parent=5 // pred_check
        _
      $region142: #{ipec_forward.1} parent=5 // pred_check_branch
        %1198 = sbr.rel (%p1195) target = $region144
      $region143: #{ipec_forward.1} parent=5 // pred_region
        %s1199 = ssub.s32 %s90, 1
        %s1200 = sand.u32 %s129, 1
        %s1201 = scalar_lea.sflag [#allocation3], %s1200
        %s1202 = sand.u32 %s129, 1
        %s1203 = smul.addr %s1202, 8
        %s1204 = scalar_lea.vmem [#allocation2], %s1203
        // Predicated region
        $region145: #{ipec_forward.1} parent=143 // pred_check
          %p1205 = pneg %p142
        $region146: #{ipec_forward.1} parent=143 // pred_check_branch
          %1207 = sbr.rel (%p1205) target = $region148
        $region147: #{ipec_forward.1} parent=143 // pred_region
          %1208 = dma.done %s1201, 128
        $region148: #{ipec_forward.1} parent=143 // pred_fallthru
          _
        %s1209 = sand.u32 %s95, 1
        %s1210 = scalar_lea.sflag [#allocation5], %s1209
        %s1211 = sand.u32 %s155, 1
        %s1212 = smul.addr %s1211, 320
        %s1213 = scalar_lea.vmem [#allocation4], %s1212
        // Predicated region
        $region149: #{ipec_forward.1} parent=143 // pred_check
          %p1214 = pneg %p168
        $region150: #{ipec_forward.1} parent=143 // pred_check_branch
          %1216 = sbr.rel (%p1214) target = $region152
        $region151: #{ipec_forward.1} parent=143 // pred_region
          %1217 = dma.done %s1210, 5120
        $region152: #{ipec_forward.1} parent=143 // pred_fallthru
          _
        %s1218 = sand.u32 %s95, 1
        %s1219 = scalar_lea.sflag [#allocation5], %s1218
        %s1220 = sand.u32 %s181, 1
        %s1221 = smul.addr %s1220, 8
        %s1222 = scalar_lea.vmem [#allocation6], %s1221
        // Predicated region
        $region153: #{ipec_forward.1} parent=143 // pred_check
          %p1223 = pneg %p194
        $region154: #{ipec_forward.1} parent=143 // pred_check_branch
          %1225 = sbr.rel (%p1223) target = $region156
        $region155: #{ipec_forward.1} parent=143 // pred_region
          %1226 = dma.done %s1219, 128
        $region156: #{ipec_forward.1} parent=143 // pred_fallthru
          _
        %s1227 = sand.u32 %s95, 1
        %s1228 = scalar_lea.sflag [#allocation8], %s1227
        %s1229 = sand.u32 %s207, 1
        %s1230 = smul.addr %s1229, 8
        %s1231 = scalar_lea.vmem [#allocation7], %s1230
        // Predicated region
        $region157: #{ipec_forward.1} parent=143 // pred_check
          %p1232 = pneg %p220
        $region158: #{ipec_forward.1} parent=143 // pred_check_branch
          %1234 = sbr.rel (%p1232) target = $region160
        $region159: #{ipec_forward.1} parent=143 // pred_region
          %1235 = dma.done %s1228, 128
        $region160: #{ipec_forward.1} parent=143 // pred_fallthru
          _
        %s1236 = sand.u32 %s95, 1
        %s1237 = scalar_lea.sflag [#allocation8], %s1236
        %s1238 = sand.u32 %s233, 1
        %s1239 = smul.addr %s1238, 8
        %s1240 = scalar_lea.vmem [#allocation9], %s1239
        // Predicated region
        $region161: #{ipec_forward.1} parent=143 // pred_check
          %p1241 = pneg %p246
        $region162: #{ipec_forward.1} parent=143 // pred_check_branch
          %1243 = sbr.rel (%p1241) target = $region164
        $region163: #{ipec_forward.1} parent=143 // pred_region
          %1244 = dma.done %s1237, 128
        $region164: #{ipec_forward.1} parent=143 // pred_fallthru
          _
        %s1245 = sand.u32 %s95, 1
        %s1246 = scalar_lea.sflag [#allocation11], %s1245
        %s1247 = sand.u32 %s259, 1
        %s1248 = smul.addr %s1247, 8
        %s1249 = scalar_lea.vmem [#allocation10], %s1248
        // Predicated region
        $region165: #{ipec_forward.1} parent=143 // pred_check
          %p1250 = pneg %p272
        $region166: #{ipec_forward.1} parent=143 // pred_check_branch
          %1252 = sbr.rel (%p1250) target = $region168
        $region167: #{ipec_forward.1} parent=143 // pred_region
          %1253 = dma.done %s1246, 128
        $region168: #{ipec_forward.1} parent=143 // pred_fallthru
          _
        // Predicated region
        $region169: #{ipec_forward.1} parent=143 // pred_check
          %p1254 = pneg %p293
        $region170: #{ipec_forward.1} parent=143 // pred_check_branch
          %1256 = sbr.rel (%p1254) target = $region172
        $region171: #{ipec_forward.1} parent=143 // pred_region
          %1257 = dma.done [#allocation11], 9600
        $region172: #{ipec_forward.1} parent=143 // pred_fallthru
          _
        // Predicated region
        $region173: #{ipec_forward.1} parent=143 // pred_check
          %p1258 = pneg %p314
        $region174: #{ipec_forward.1} parent=143 // pred_check_branch
          %1260 = sbr.rel (%p1258) target = $region176
        $region175: #{ipec_forward.1} parent=143 // pred_region
          %1261 = dma.done [#allocation14], 16
        $region176: #{ipec_forward.1} parent=143 // pred_fallthru
          _
        // Predicated region
        $region177: #{ipec_forward.1} parent=143 // pred_check
          %p1262 = pneg %p356
        $region178: #{ipec_forward.1} parent=143 // pred_check_branch
          %1264 = sbr.rel (%p1262) target = $region180
        $region179: #{ipec_forward.1} parent=143 // pred_region
          %1265 = dma.done [#allocation14], 16
        $region180: #{ipec_forward.1} parent=143 // pred_fallthru
          _
        // Predicated region
        $region181: #{ipec_forward.1} parent=143 // pred_check
          %p1266 = pneg %p377
        $region182: #{ipec_forward.1} parent=143 // pred_check_branch
          %1268 = sbr.rel (%p1266) target = $region184
        $region183: #{ipec_forward.1} parent=143 // pred_region
          %1269 = dma.done [#allocation17], 9600
        $region184: #{ipec_forward.1} parent=143 // pred_fallthru
          _
        // Predicated region
        $region185: #{ipec_forward.1} parent=143 // pred_check
          %p1270 = pneg %p398
        $region186: #{ipec_forward.1} parent=143 // pred_check_branch
          %1272 = sbr.rel (%p1270) target = $region188
        $region187: #{ipec_forward.1} parent=143 // pred_region
          %1273 = dma.done [#allocation17], 16
        $region188: #{ipec_forward.1} parent=143 // pred_fallthru
          _
        // Predicated region
        $region189: #{ipec_forward.1} parent=143 // pred_check
          %p1274 = pneg %p440
        $region190: #{ipec_forward.1} parent=143 // pred_check_branch
          %1276 = sbr.rel (%p1274) target = $region192
        $region191: #{ipec_forward.1} parent=143 // pred_region
          %1277 = dma.done [#allocation20], 16
        $region192: #{ipec_forward.1} parent=143 // pred_fallthru
          _
        // Predicated region
        $region193: #{ipec_forward.1} parent=143 // pred_check
          %p1278 = pneg %p461
        $region194: #{ipec_forward.1} parent=143 // pred_check_branch
          %1280 = sbr.rel (%p1278) target = $region196
        $region195: #{ipec_forward.1} parent=143 // pred_region
          %1281 = dma.done [#allocation20], 256
        $region196: #{ipec_forward.1} parent=143 // pred_fallthru
          _
        // Predicated region
        $region197: #{ipec_forward.1} parent=143 // pred_check
          %p1282 = pneg %p482
        $region198: #{ipec_forward.1} parent=143 // pred_check_branch
          %1284 = sbr.rel (%p1282) target = $region200
        $region199: #{ipec_forward.1} parent=143 // pred_region
          %1285 = dma.done [#allocation23], 16
        $region200: #{ipec_forward.1} parent=143 // pred_fallthru
          _
        // Predicated region
        $region201: #{ipec_forward.1} parent=143 // pred_check
          %p1286 = pneg %p503
        $region202: #{ipec_forward.1} parent=143 // pred_check_branch
          %1288 = sbr.rel (%p1286) target = $region204
        $region203: #{ipec_forward.1} parent=143 // pred_region
          %1289 = dma.done [#allocation23], 256
        $region204: #{ipec_forward.1} parent=143 // pred_fallthru
          _
        // Predicated region
        $region205: #{ipec_forward.1} parent=143 // pred_check
          %p1290 = pneg %p524
        $region206: #{ipec_forward.1} parent=143 // pred_check_branch
          %1292 = sbr.rel (%p1290) target = $region208
        $region207: #{ipec_forward.1} parent=143 // pred_region
          %1293 = dma.done [#allocation26], 16
        $region208: #{ipec_forward.1} parent=143 // pred_fallthru
          _
        // Predicated region
        $region209: #{ipec_forward.1} parent=143 // pred_check
          %p1294 = pneg %p545
        $region210: #{ipec_forward.1} parent=143 // pred_check_branch
          %1296 = sbr.rel (%p1294) target = $region212
        $region211: #{ipec_forward.1} parent=143 // pred_region
          %1297 = dma.done [#allocation26], 1024
        $region212: #{ipec_forward.1} parent=143 // pred_fallthru
          _
        // Predicated region
        $region213: #{ipec_forward.1} parent=143 // pred_check
          %p1298 = pneg %p566
        $region214: #{ipec_forward.1} parent=143 // pred_check_branch
          %1300 = sbr.rel (%p1298) target = $region216
        $region215: #{ipec_forward.1} parent=143 // pred_region
          %1301 = dma.done [#allocation29], 1024
        $region216: #{ipec_forward.1} parent=143 // pred_fallthru
          _
        // Predicated region
        $region217: #{ipec_forward.1} parent=143 // pred_check
          %p1302 = pneg %p587
        $region218: #{ipec_forward.1} parent=143 // pred_check_branch
          %1304 = sbr.rel (%p1302) target = $region220
        $region219: #{ipec_forward.1} parent=143 // pred_region
          %1305 = dma.done [#allocation29], 16
        $region220: #{ipec_forward.1} parent=143 // pred_fallthru
          _
        // Predicated region
        $region221: #{ipec_forward.1} parent=143 // pred_check
          %p1306 = pneg %p629
        $region222: #{ipec_forward.1} parent=143 // pred_check_branch
          %1308 = sbr.rel (%p1306) target = $region224
        $region223: #{ipec_forward.1} parent=143 // pred_region
          %1309 = dma.done [#allocation32], 1024
        $region224: #{ipec_forward.1} parent=143 // pred_fallthru
          _
        // Predicated region
        $region225: #{ipec_forward.1} parent=143 // pred_check
          %p1310 = pneg %p650
        $region226: #{ipec_forward.1} parent=143 // pred_check_branch
          %1312 = sbr.rel (%p1310) target = $region228
        $region227: #{ipec_forward.1} parent=143 // pred_region
          %1313 = dma.done [#allocation32], 16
        $region228: #{ipec_forward.1} parent=143 // pred_fallthru
          _
        // Predicated region
        $region229: #{ipec_forward.1} parent=143 // pred_check
          %p1314 = pneg %p671
        $region230: #{ipec_forward.1} parent=143 // pred_check_branch
          %1316 = sbr.rel (%p1314) target = $region232
        $region231: #{ipec_forward.1} parent=143 // pred_region
          %1317 = dma.done [#allocation35], 1024
        $region232: #{ipec_forward.1} parent=143 // pred_fallthru
          _
        // Predicated region
        $region233: #{ipec_forward.1} parent=143 // pred_check
          %p1318 = pneg %p692
        $region234: #{ipec_forward.1} parent=143 // pred_check_branch
          %1320 = sbr.rel (%p1318) target = $region236
        $region235: #{ipec_forward.1} parent=143 // pred_region
          %1321 = dma.done [#allocation35], 1024
        $region236: #{ipec_forward.1} parent=143 // pred_fallthru
          _
        // Predicated region
        $region237: #{ipec_forward.1} parent=143 // pred_check
          %p1322 = pneg %p713
        $region238: #{ipec_forward.1} parent=143 // pred_check_branch
          %1324 = sbr.rel (%p1322) target = $region240
        $region239: #{ipec_forward.1} parent=143 // pred_region
          %1325 = dma.done [#allocation38], 256
        $region240: #{ipec_forward.1} parent=143 // pred_fallthru
          _
        // Predicated region
        $region241: #{ipec_forward.1} parent=143 // pred_check
          %p1326 = pneg %p734
        $region242: #{ipec_forward.1} parent=143 // pred_check_branch
          %1328 = sbr.rel (%p1326) target = $region244
        $region243: #{ipec_forward.1} parent=143 // pred_region
          %1329 = dma.done [#allocation38], 16
        $region244: #{ipec_forward.1} parent=143 // pred_fallthru
          _
        %s1330 = smul.u32 8, %s95
        %p1331 = scmp.lt.s32.totalorder %s1330, 15
        %s1332 = scalar_select %p1331, %s1330, 15
        %s1333 = smul.addr %s1332, 10
        %s1334 = smul.addr %s1333, 4
        %s1335 = scalar_lea.vmem %s1, %s1334
        %p1336 = pneg %p116
        %p1337 = pneg %p113
        %s1338 = sand.u32 %s129, 1
        %s1339 = scalar_lea.sflag [#allocation3], %s1338
        %s1340 = sand.u32 %s129, 1
        %s1341 = smul.addr %s1340, 8
        %s1342 = scalar_lea.vmem [#allocation2], %s1341
        %p1343 = pneg %p142
        %p1344 = pneg %p139
        %s1345 = sand.u32 %s95, 1
        %s1346 = scalar_lea.sflag [#allocation5], %s1345
        %s1347 = sand.u32 %s155, 1
        %s1348 = smul.addr %s1347, 320
        %s1349 = scalar_lea.vmem [#allocation4], %s1348
        %p1350 = pneg %p168
        %p1351 = pneg %p165
        %s1352 = sand.u32 %s95, 1
        %s1353 = scalar_lea.sflag [#allocation5], %s1352
        %s1354 = sand.u32 %s181, 1
        %s1355 = smul.addr %s1354, 8
        %s1356 = scalar_lea.vmem [#allocation6], %s1355
        %p1357 = pneg %p194
        %p1358 = pneg %p191
        %s1359 = sand.u32 %s95, 1
        %s1360 = scalar_lea.sflag [#allocation8], %s1359
        %s1361 = sand.u32 %s207, 1
        %s1362 = smul.addr %s1361, 8
        %s1363 = scalar_lea.vmem [#allocation7], %s1362
        %p1364 = pneg %p220
        %p1365 = pneg %p217
        %s1366 = sand.u32 %s95, 1
        %s1367 = scalar_lea.sflag [#allocation8], %s1366
        %s1368 = sand.u32 %s233, 1
        %s1369 = smul.addr %s1368, 8
        %s1370 = scalar_lea.vmem [#allocation9], %s1369
        %p1371 = pneg %p246
        %p1372 = pneg %p243
        %s1373 = sand.u32 %s95, 1
        %s1374 = scalar_lea.sflag [#allocation11], %s1373
        %s1375 = sand.u32 %s259, 1
        %s1376 = smul.addr %s1375, 8
        %s1377 = scalar_lea.vmem [#allocation10], %s1376
        %p1378 = pneg %p272
        %p1379 = pneg %p269
        %p1380 = pneg %p293
        %p1381 = pneg %p290
        %p1382 = pneg %p314
        %p1383 = pneg %p311
        %p1384 = pneg %p335
        %p1385 = pneg %p332
        %p1386 = pneg %p356
        %p1387 = pneg %p353
        %p1388 = pneg %p377
        %p1389 = pneg %p374
        %p1390 = pneg %p398
        %p1391 = pneg %p395
        %p1392 = pneg %p419
        %p1393 = pneg %p416
        %p1394 = pneg %p440
        %p1395 = pneg %p437
        %p1396 = pneg %p461
        %p1397 = pneg %p458
        %p1398 = pneg %p482
        %p1399 = pneg %p479
        %p1400 = pneg %p503
        %p1401 = pneg %p500
        %p1402 = pneg %p524
        %p1403 = pneg %p521
        %p1404 = pneg %p545
        %p1405 = pneg %p542
        %p1406 = pneg %p566
        %p1407 = pneg %p563
        %p1408 = pneg %p587
        %p1409 = pneg %p584
        %p1410 = pneg %p608
        %p1411 = pneg %p605
        %p1412 = pneg %p629
        %p1413 = pneg %p626
        %p1414 = pneg %p650
        %p1415 = pneg %p647
        %p1416 = pneg %p671
        %p1417 = pneg %p668
        %p1418 = pneg %p692
        %p1419 = pneg %p689
        %p1420 = pneg %p713
        %p1421 = pneg %p710
        %p1422 = pneg %p734
        %p1423 = pneg %p731
        %p1424 = pneg %p755
        %p1425 = pneg %p752
        %p1426 = pneg %p776
        %p1427 = pneg %p773
        %p1428 = pneg %p802
        %p1429 = pneg %p799
        %p1430 = scmp.lt.s32.totalorder %s95, 1
        %s1431 = scalar_select %p1430, %s95, 1
        %s1432 = smul.addr %s1431, 8
        %s1433 = scalar_lea.vmem %s63, %s1432
        %s1434 = smul.u32 8, %s95
        %p1435 = scmp.lt.s32.totalorder %s1434, 15
        %s1436 = scalar_select %p1435, %s1434, 15
        %s1437 = smul.addr %s1436, 10
        %s1438 = smul.addr %s1437, 4
        %s1439 = scalar_lea.vmem %s1, %s1438
        %s1440 = smul.u32 8, %s95
        %s1441 = smul.u32 8, %s95
        %s1442 = smul.u32 8, %s95
        %s1443 = smul.u32 8, %s95
        %p1444 = scmp.lt.s32.totalorder %s95, 1
        %s1445 = scalar_select %p1444, %s95, 1
        %s1446 = smul.addr %s1445, 8
        %s1447 = scalar_lea.vmem %s63, %s1446
        %v1449 = vld [vmem:[%s1439] sm:$0xff]
        %v1450 = vld [vmem:[%s1439 + $0x8] sm:$0xff]
        %v1451 = vld [vmem:[%s1439 + $0x10] sm:$0xf]
        %v1452 = vld [vmem:[%s1439 + $0x14] sm:$0xff]
        %v1453 = vld [vmem:[%s1439 + $0x1c] sm:$0xff]
        %v1454 = vld [vmem:[%s1439 + $0x24] sm:$0xf]
        %v1455 = vld [vmem:[%s1439 + $0x28] sm:$0xff]
        %v1456 = vld [vmem:[%s1439 + $0x30] sm:$0xff]
        %v1457 = vld [vmem:[%s1439 + $0x38] sm:$0xf]
        %v1458 = vld [vmem:[%s1439 + $0x3c] sm:$0xff]
        %v1459 = vld [vmem:[%s1439 + $0x44] sm:$0xff]
        %v1460 = vld [vmem:[%s1439 + $0x4c] sm:$0xf]
        %v1461 = vld [vmem:[%s1439 + $0x50] sm:$0xff]
        %v1462 = vld [vmem:[%s1439 + $0x58] sm:$0xff]
        %v1463 = vld [vmem:[%s1439 + $0x60] sm:$0xf]
        %v1464 = vld [vmem:[%s1439 + $0x64] sm:$0xff]
        %v1465 = vld [vmem:[%s1439 + $0x6c] sm:$0xff]
        %v1466 = vld [vmem:[%s1439 + $0x74] sm:$0xf]
        %v1467 = vld [vmem:[%s1439 + $0x78] sm:$0xff]
        %v1468 = vld [vmem:[%s1439 + $0x80] sm:$0xff]
        %v1469 = vld [vmem:[%s1439 + $0x88] sm:$0xf]
        %v1470 = vld [vmem:[%s1439 + $0x8c] sm:$0xff]
        %v1471 = vld [vmem:[%s1439 + $0x94] sm:$0xff]
        %v1472 = vld [vmem:[%s1439 + $0x9c] sm:$0xf]
        %v1473 = vld [vmem:[%s1439 + $0xa0] sm:$0xff]
        %v1474 = vld [vmem:[%s1439 + $0xa8] sm:$0xff]
        %v1475 = vld [vmem:[%s1439 + $0xb0] sm:$0xf]
        %v1476 = vld [vmem:[%s1439 + $0xb4] sm:$0xff]
        %v1477 = vld [vmem:[%s1439 + $0xbc] sm:$0xff]
        %v1478 = vld [vmem:[%s1439 + $0xc4] sm:$0xf]
        %v1479 = vld [vmem:[%s1439 + $0xc8] sm:$0xff]
        %v1480 = vld [vmem:[%s1439 + $0xd0] sm:$0xff]
        %v1481 = vld [vmem:[%s1439 + $0xd8] sm:$0xf]
        %v1482 = vld [vmem:[%s1439 + $0xdc] sm:$0xff]
        %v1483 = vld [vmem:[%s1439 + $0xe4] sm:$0xff]
        %v1484 = vld [vmem:[%s1439 + $0xec] sm:$0xf]
        %v1485 = vld [vmem:[%s1439 + $0xf0] sm:$0xff]
        %v1486 = vld [vmem:[%s1439 + $0xf8] sm:$0xff]
        %v1487 = vld [vmem:[%s1439 + $0x100] sm:$0xf]
        %v1488 = vld [vmem:[%s1439 + $0x104] sm:$0xff]
        %v1489 = vld [vmem:[%s1439 + $0x10c] sm:$0xff]
        %v1490 = vld [vmem:[%s1439 + $0x114] sm:$0xf]
        %v1491 = vld [vmem:[%s1439 + $0x118] sm:$0xff]
        %v1492 = vld [vmem:[%s1439 + $0x120] sm:$0xff]
        %v1493 = vld [vmem:[%s1439 + $0x128] sm:$0xf]
        %v1494 = vld [vmem:[%s1439 + $0x12c] sm:$0xff]
        %v1495 = vld [vmem:[%s1439 + $0x134] sm:$0xff]
        %v1496 = vld [vmem:[%s1439 + $0x13c] sm:$0xf]
        %v1497 = vld [vmem:[%s1204] sm:$0x1]
        %v1498 = vld [vmem:[%s1204 + $0x1] sm:$0x1]
        %v1499 = vld [vmem:[%s1204 + $0x2] sm:$0x1]
        %v1500 = vld [vmem:[%s1204 + $0x3] sm:$0x1]
        %v1501 = vld [vmem:[%s1204 + $0x4] sm:$0x1]
        %v1502 = vld [vmem:[%s1204 + $0x5] sm:$0x1]
        %v1503 = vld [vmem:[%s1204 + $0x6] sm:$0x1]
        %v1504 = vld [vmem:[%s1204 + $0x7] sm:$0x1]
        %v1505 = vpack.c.bf16 %v1497, %v1497
        %v1506 = vpack.c.bf16 %v1498, %v1498
        %v1507 = vpack.c.bf16 %v1499, %v1499
        %v1508 = vpack.c.bf16 %v1500, %v1500
        %v1509 = vpack.c.bf16 %v1501, %v1501
        %v1510 = vpack.c.bf16 %v1502, %v1502
        %v1511 = vpack.c.bf16 %v1503, %v1503
        %v1512 = vpack.c.bf16 %v1504, %v1504
        %v1519 = vunpack.c.l.b16 %v1449
        %v1520 = vunpack.c.h.b16 %v1449
        %v1521 = vunpack.c.l.b16 %v1450
        %v1522 = vunpack.c.h.b16 %v1450
        %v1523 = vunpack.c.l.b16 %v1451
        %v1524 = vunpack.c.l.b16 %v1452
        %v1525 = vunpack.c.h.b16 %v1452
        %v1526 = vunpack.c.l.b16 %v1453
        %v1527 = vunpack.c.h.b16 %v1453
        %v1528 = vunpack.c.l.b16 %v1454
        %v1529 = vpack.c.b16 %v1524, %v1519
        %v1530 = vpack.c.b16 %v1525, %v1520
        %v1531 = vpack.c.b16 %v1526, %v1521
        %v1532 = vpack.c.b16 %v1527, %v1522
        %v1533 = vpack.c.b16 %v1528, %v1523
        %vm1539 = vcmask 130048
        %v1541 = vsel %vm1539, %v1505, 0
        %1543 = vmatprep.subr.bf16.mxu0 %v1530
        %1544 = vmatpush1.bf16.msra.mxu0 %v1529
        %1545 = vmatprep.subr.bf16.mxu0 0
        %1546 = vmatpush1.bf16.msra.mxu0 0
        %1547 = vmatprep.subr.bf16.mxu0 0
        %1548 = vmatpush1.bf16.msra.mxu0 0
        %1549 = vmatprep.subr.bf16.mxu0 0
        %1550 = vmatpush1.bf16.msra.mxu0 0
        %1551 = vmatprep.subr.bf16.mxu0 0
        %1552 = vmatpush1.bf16.msra.mxu0 0
        %1553 = vmatprep.subr.bf16.mxu0 0
        %1554 = vmatpush1.bf16.msra.mxu0 0
        %1555 = vmatprep.subr.bf16.mxu0 0
        %1556 = vmatpush1.bf16.msra.mxu0 0
        %1557 = vmatprep.subr.bf16.mxu0 0
        %1558 = vmatpush1.bf16.msra.mxu0 0
        %1559 = vmatprep.subr.bf16.mxu0 0
        %1560 = vmatpush1.bf16.msra.mxu0 0
        %1561 = vmatprep.subr.bf16.mxu0 0
        %1562 = vmatpush1.bf16.msra.mxu0 0
        %1563 = vmatprep.subr.bf16.mxu0 0
        %1564 = vmatpush1.bf16.msra.mxu0 0
        %1565 = vmatprep.subr.bf16.mxu0 0
        %1566 = vmatpush1.bf16.msra.mxu0 0
        %1567 = vmatprep.subr.bf16.mxu0 0
        %1568 = vmatpush1.bf16.msra.mxu0 0
        %1569 = vmatprep.subr.bf16.mxu0 0
        %1570 = vmatpush1.bf16.msra.mxu0 0
        %1571 = vmatprep.subr.bf16.mxu0 0
        %1572 = vmatpush1.bf16.msra.mxu0 0
        %1573 = vmatprep.subr.bf16.mxu0 0
        %1574 = vmatpush1.bf16.msra.mxu0 0
        %1575 = vmatprep.mubr.bf16.mxu0 0
        %1576 = vmatmul.mubr.bf16.gmra.mrb[0].mxu0 %v1541
        %v1577 = vpop.f32.mrb[0].mxu0
        %v1578 = vadd.f32 0.0, %v1577
        %v1579 = vpop.f32.mrb[0].mxu0
        %v1580 = vadd.f32 0.0, %v1579
        %v1581 = vpop.f32.mrb[0].mxu0
        %v1582 = vpop.f32.mrb[0].mxu0
        %1583 = vdwg.mxu0
        %1584 = vmatprep.subr.bf16.mxu0 %v1532
        %1585 = vmatpush1.bf16.msra.mxu0 %v1531
        %1586 = vmatprep.subr.bf16.mxu0 0
        %1587 = vmatpush1.bf16.msra.mxu0 0
        %1588 = vmatprep.subr.bf16.mxu0 0
        %1589 = vmatpush1.bf16.msra.mxu0 0
        %1590 = vmatprep.subr.bf16.mxu0 0
        %1591 = vmatpush1.bf16.msra.mxu0 0
        %1592 = vmatprep.subr.bf16.mxu0 0
        %1593 = vmatpush1.bf16.msra.mxu0 0
        %1594 = vmatprep.subr.bf16.mxu0 0
        %1595 = vmatpush1.bf16.msra.mxu0 0
        %1596 = vmatprep.subr.bf16.mxu0 0
        %1597 = vmatpush1.bf16.msra.mxu0 0
        %1598 = vmatprep.subr.bf16.mxu0 0
        %1599 = vmatpush1.bf16.msra.mxu0 0
        %1600 = vmatprep.subr.bf16.mxu0 0
        %1601 = vmatpush1.bf16.msra.mxu0 0
        %1602 = vmatprep.subr.bf16.mxu0 0
        %1603 = vmatpush1.bf16.msra.mxu0 0
        %1604 = vmatprep.subr.bf16.mxu0 0
        %1605 = vmatpush1.bf16.msra.mxu0 0
        %1606 = vmatprep.subr.bf16.mxu0 0
        %1607 = vmatpush1.bf16.msra.mxu0 0
        %1608 = vmatprep.subr.bf16.mxu0 0
        %1609 = vmatpush1.bf16.msra.mxu0 0
        %1610 = vmatprep.subr.bf16.mxu0 0
        %1611 = vmatpush1.bf16.msra.mxu0 0
        %1612 = vmatprep.subr.bf16.mxu0 0
        %1613 = vmatpush1.bf16.msra.mxu0 0
        %1614 = vmatprep.subr.bf16.mxu0 0
        %1615 = vmatpush1.bf16.msra.mxu0 0
        %1616 = vmatprep.mubr.bf16.mxu0 0
        %1617 = vmatmul.mubr.bf16.gmra.mrb[0].mxu0 %v1541
        %v1618 = vpop.f32.mrb[0].mxu0
        %v1619 = vadd.f32 0.0, %v1618
        %v1620 = vpop.f32.mrb[0].mxu0
        %v1621 = vadd.f32 0.0, %v1620
        %v1622 = vpop.f32.mrb[0].mxu0
        %v1623 = vpop.f32.mrb[0].mxu0
        %1624 = vdwg.mxu0
        %1625 = vmatprep.subr.bf16.mxu0 0
        %1626 = vmatpush1.bf16.msra.mxu0 %v1533
        %1627 = vmatprep.subr.bf16.mxu0 0
        %1628 = vmatpush1.bf16.msra.mxu0 0
        %1629 = vmatprep.subr.bf16.mxu0 0
        %1630 = vmatpush1.bf16.msra.mxu0 0
        %1631 = vmatprep.subr.bf16.mxu0 0
        %1632 = vmatpush1.bf16.msra.mxu0 0
        %1633 = vmatprep.subr.bf16.mxu0 0
        %1634 = vmatpush1.bf16.msra.mxu0 0
        %1635 = vmatprep.subr.bf16.mxu0 0
        %1636 = vmatpush1.bf16.msra.mxu0 0
        %1637 = vmatprep.subr.bf16.mxu0 0
        %1638 = vmatpush1.bf16.msra.mxu0 0
        %1639 = vmatprep.subr.bf16.mxu0 0
        %1640 = vmatpush1.bf16.msra.mxu0 0
        %1641 = vmatprep.subr.bf16.mxu0 0
        %1642 = vmatpush1.bf16.msra.mxu0 0
        %1643 = vmatprep.subr.bf16.mxu0 0
        %1644 = vmatpush1.bf16.msra.mxu0 0
        %1645 = vmatprep.subr.bf16.mxu0 0
        %1646 = vmatpush1.bf16.msra.mxu0 0
        %1647 = vmatprep.subr.bf16.mxu0 0
        %1648 = vmatpush1.bf16.msra.mxu0 0
        %1649 = vmatprep.subr.bf16.mxu0 0
        %1650 = vmatpush1.bf16.msra.mxu0 0
        %1651 = vmatprep.subr.bf16.mxu0 0
        %1652 = vmatpush1.bf16.msra.mxu0 0
        %1653 = vmatprep.subr.bf16.mxu0 0
        %1654 = vmatpush1.bf16.msra.mxu0 0
        %1655 = vmatprep.subr.bf16.mxu0 0
        %1656 = vmatpush1.bf16.msra.mxu0 0
        %1657 = vmatprep.mubr.bf16.mxu0 0
        %1658 = vmatmul.mubr.bf16.gmra.mrb[0].mxu0 %v1541
        %v1659 = vpop.f32.mrb[0].mxu0
        %v1660 = vadd.f32 0.0, %v1659
        %v1661 = vpop.f32.mrb[0].mxu0
        %v1662 = vpop.f32.mrb[0].mxu0
        %v1663 = vpop.f32.mrb[0].mxu0
        %1664 = vdwg.mxu0
        %v1671 = vunpack.c.l.b16 %v1455
        %v1672 = vunpack.c.h.b16 %v1455
        %v1673 = vunpack.c.l.b16 %v1456
        %v1674 = vunpack.c.h.b16 %v1456
        %v1675 = vunpack.c.l.b16 %v1457
        %v1676 = vunpack.c.l.b16 %v1458
        %v1677 = vunpack.c.h.b16 %v1458
        %v1678 = vunpack.c.l.b16 %v1459
        %v1679 = vunpack.c.h.b16 %v1459
        %v1680 = vunpack.c.l.b16 %v1460
        %v1681 = vpack.c.b16 %v1676, %v1671
        %v1682 = vpack.c.b16 %v1677, %v1672
        %v1683 = vpack.c.b16 %v1678, %v1673
        %v1684 = vpack.c.b16 %v1679, %v1674
        %v1685 = vpack.c.b16 %v1680, %v1675
        %v1692 = vsel %vm1539, %v1506, 0
        %1694 = vmatprep.subr.bf16.mxu0 %v1682
        %1695 = vmatpush1.bf16.msra.mxu0 %v1681
        %1696 = vmatprep.subr.bf16.mxu0 0
        %1697 = vmatpush1.bf16.msra.mxu0 0
        %1698 = vmatprep.subr.bf16.mxu0 0
        %1699 = vmatpush1.bf16.msra.mxu0 0
        %1700 = vmatprep.subr.bf16.mxu0 0
        %1701 = vmatpush1.bf16.msra.mxu0 0
        %1702 = vmatprep.subr.bf16.mxu0 0
        %1703 = vmatpush1.bf16.msra.mxu0 0
        %1704 = vmatprep.subr.bf16.mxu0 0
        %1705 = vmatpush1.bf16.msra.mxu0 0
        %1706 = vmatprep.subr.bf16.mxu0 0
        %1707 = vmatpush1.bf16.msra.mxu0 0
        %1708 = vmatprep.subr.bf16.mxu0 0
        %1709 = vmatpush1.bf16.msra.mxu0 0
        %1710 = vmatprep.subr.bf16.mxu0 0
        %1711 = vmatpush1.bf16.msra.mxu0 0
        %1712 = vmatprep.subr.bf16.mxu0 0
        %1713 = vmatpush1.bf16.msra.mxu0 0
        %1714 = vmatprep.subr.bf16.mxu0 0
        %1715 = vmatpush1.bf16.msra.mxu0 0
        %1716 = vmatprep.subr.bf16.mxu0 0
        %1717 = vmatpush1.bf16.msra.mxu0 0
        %1718 = vmatprep.subr.bf16.mxu0 0
        %1719 = vmatpush1.bf16.msra.mxu0 0
        %1720 = vmatprep.subr.bf16.mxu0 0
        %1721 = vmatpush1.bf16.msra.mxu0 0
        %1722 = vmatprep.subr.bf16.mxu0 0
        %1723 = vmatpush1.bf16.msra.mxu0 0
        %1724 = vmatprep.subr.bf16.mxu0 0
        %1725 = vmatpush1.bf16.msra.mxu0 0
        %1726 = vmatprep.mubr.bf16.mxu0 0
        %1727 = vmatmul.mubr.bf16.gmra.mrb[0].mxu0 %v1692
        %v1728 = vpop.f32.mrb[0].mxu0
        %v1729 = vadd.f32 0.0, %v1728
        %v1730 = vpop.f32.mrb[0].mxu0
        %v1731 = vadd.f32 0.0, %v1730
        %v1732 = vpop.f32.mrb[0].mxu0
        %v1733 = vpop.f32.mrb[0].mxu0
        %1734 = vdwg.mxu0
        %1735 = vmatprep.subr.bf16.mxu0 %v1684
        %1736 = vmatpush1.bf16.msra.mxu0 %v1683
        %1737 = vmatprep.subr.bf16.mxu0 0
        %1738 = vmatpush1.bf16.msra.mxu0 0
        %1739 = vmatprep.subr.bf16.mxu0 0
        %1740 = vmatpush1.bf16.msra.mxu0 0
        %1741 = vmatprep.subr.bf16.mxu0 0
        %1742 = vmatpush1.bf16.msra.mxu0 0
        %1743 = vmatprep.subr.bf16.mxu0 0
        %1744 = vmatpush1.bf16.msra.mxu0 0
        %1745 = vmatprep.subr.bf16.mxu0 0
        %1746 = vmatpush1.bf16.msra.mxu0 0
        %1747 = vmatprep.subr.bf16.mxu0 0
        %1748 = vmatpush1.bf16.msra.mxu0 0
        %1749 = vmatprep.subr.bf16.mxu0 0
        %1750 = vmatpush1.bf16.msra.mxu0 0
        %1751 = vmatprep.subr.bf16.mxu0 0
        %1752 = vmatpush1.bf16.msra.mxu0 0
        %1753 = vmatprep.subr.bf16.mxu0 0
        %1754 = vmatpush1.bf16.msra.mxu0 0
        %1755 = vmatprep.subr.bf16.mxu0 0
        %1756 = vmatpush1.bf16.msra.mxu0 0
        %1757 = vmatprep.subr.bf16.mxu0 0
        %1758 = vmatpush1.bf16.msra.mxu0 0
        %1759 = vmatprep.subr.bf16.mxu0 0
        %1760 = vmatpush1.bf16.msra.mxu0 0
        %1761 = vmatprep.subr.bf16.mxu0 0
        %1762 = vmatpush1.bf16.msra.mxu0 0
        %1763 = vmatprep.subr.bf16.mxu0 0
        %1764 = vmatpush1.bf16.msra.mxu0 0
        %1765 = vmatprep.subr.bf16.mxu0 0
        %1766 = vmatpush1.bf16.msra.mxu0 0
        %1767 = vmatprep.mubr.bf16.mxu0 0
        %1768 = vmatmul.mubr.bf16.gmra.mrb[0].mxu0 %v1692
        %v1769 = vpop.f32.mrb[0].mxu0
        %v1770 = vadd.f32 0.0, %v1769
        %v1771 = vpop.f32.mrb[0].mxu0
        %v1772 = vadd.f32 0.0, %v1771
        %v1773 = vpop.f32.mrb[0].mxu0
        %v1774 = vpop.f32.mrb[0].mxu0
        %1775 = vdwg.mxu0
        %1776 = vmatprep.subr.bf16.mxu0 0
        %1777 = vmatpush1.bf16.msra.mxu0 %v1685
        %1778 = vmatprep.subr.bf16.mxu0 0
        %1779 = vmatpush1.bf16.msra.mxu0 0
        %1780 = vmatprep.subr.bf16.mxu0 0
        %1781 = vmatpush1.bf16.msra.mxu0 0
        %1782 = vmatprep.subr.bf16.mxu0 0
        %1783 = vmatpush1.bf16.msra.mxu0 0
        %1784 = vmatprep.subr.bf16.mxu0 0
        %1785 = vmatpush1.bf16.msra.mxu0 0
        %1786 = vmatprep.subr.bf16.mxu0 0
        %1787 = vmatpush1.bf16.msra.mxu0 0
        %1788 = vmatprep.subr.bf16.mxu0 0
        %1789 = vmatpush1.bf16.msra.mxu0 0
        %1790 = vmatprep.subr.bf16.mxu0 0
        %1791 = vmatpush1.bf16.msra.mxu0 0
        %1792 = vmatprep.subr.bf16.mxu0 0
        %1793 = vmatpush1.bf16.msra.mxu0 0
        %1794 = vmatprep.subr.bf16.mxu0 0
        %1795 = vmatpush1.bf16.msra.mxu0 0
        %1796 = vmatprep.subr.bf16.mxu0 0
        %1797 = vmatpush1.bf16.msra.mxu0 0
        %1798 = vmatprep.subr.bf16.mxu0 0
        %1799 = vmatpush1.bf16.msra.mxu0 0
        %1800 = vmatprep.subr.bf16.mxu0 0
        %1801 = vmatpush1.bf16.msra.mxu0 0
        %1802 = vmatprep.subr.bf16.mxu0 0
        %1803 = vmatpush1.bf16.msra.mxu0 0
        %1804 = vmatprep.subr.bf16.mxu0 0
        %1805 = vmatpush1.bf16.msra.mxu0 0
        %1806 = vmatprep.subr.bf16.mxu0 0
        %1807 = vmatpush1.bf16.msra.mxu0 0
        %1808 = vmatprep.mubr.bf16.mxu0 0
        %1809 = vmatmul.mubr.bf16.gmra.mrb[0].mxu0 %v1692
        %v1810 = vpop.f32.mrb[0].mxu0
        %v1811 = vadd.f32 0.0, %v1810
        %v1812 = vpop.f32.mrb[0].mxu0
        %v1813 = vpop.f32.mrb[0].mxu0
        %v1814 = vpop.f32.mrb[0].mxu0
        %1815 = vdwg.mxu0
        %v1822 = vunpack.c.l.b16 %v1461
        %v1823 = vunpack.c.h.b16 %v1461
        %v1824 = vunpack.c.l.b16 %v1462
        %v1825 = vunpack.c.h.b16 %v1462
        %v1826 = vunpack.c.l.b16 %v1463
        %v1827 = vunpack.c.l.b16 %v1464
        %v1828 = vunpack.c.h.b16 %v1464
        %v1829 = vunpack.c.l.b16 %v1465
        %v1830 = vunpack.c.h.b16 %v1465
        %v1831 = vunpack.c.l.b16 %v1466
        %v1832 = vpack.c.b16 %v1827, %v1822
        %v1833 = vpack.c.b16 %v1828, %v1823
        %v1834 = vpack.c.b16 %v1829, %v1824
        %v1835 = vpack.c.b16 %v1830, %v1825
        %v1836 = vpack.c.b16 %v1831, %v1826
        %v1843 = vsel %vm1539, %v1507, 0
        %1845 = vmatprep.subr.bf16.mxu0 %v1833
        %1846 = vmatpush1.bf16.msra.mxu0 %v1832
        %1847 = vmatprep.subr.bf16.mxu0 0
        %1848 = vmatpush1.bf16.msra.mxu0 0
        %1849 = vmatprep.subr.bf16.mxu0 0
        %1850 = vmatpush1.bf16.msra.mxu0 0
        %1851 = vmatprep.subr.bf16.mxu0 0
        %1852 = vmatpush1.bf16.msra.mxu0 0
        %1853 = vmatprep.subr.bf16.mxu0 0
        %1854 = vmatpush1.bf16.msra.mxu0 0
        %1855 = vmatprep.subr.bf16.mxu0 0
        %1856 = vmatpush1.bf16.msra.mxu0 0
        %1857 = vmatprep.subr.bf16.mxu0 0
        %1858 = vmatpush1.bf16.msra.mxu0 0
        %1859 = vmatprep.subr.bf16.mxu0 0
        %1860 = vmatpush1.bf16.msra.mxu0 0
        %1861 = vmatprep.subr.bf16.mxu0 0
        %1862 = vmatpush1.bf16.msra.mxu0 0
        %1863 = vmatprep.subr.bf16.mxu0 0
        %1864 = vmatpush1.bf16.msra.mxu0 0
        %1865 = vmatprep.subr.bf16.mxu0 0
        %1866 = vmatpush1.bf16.msra.mxu0 0
        %1867 = vmatprep.subr.bf16.mxu0 0
        %1868 = vmatpush1.bf16.msra.mxu0 0
        %1869 = vmatprep.subr.bf16.mxu0 0
        %1870 = vmatpush1.bf16.msra.mxu0 0
        %1871 = vmatprep.subr.bf16.mxu0 0
        %1872 = vmatpush1.bf16.msra.mxu0 0
        %1873 = vmatprep.subr.bf16.mxu0 0
        %1874 = vmatpush1.bf16.msra.mxu0 0
        %1875 = vmatprep.subr.bf16.mxu0 0
        %1876 = vmatpush1.bf16.msra.mxu0 0
        %1877 = vmatprep.mubr.bf16.mxu0 0
        %1878 = vmatmul.mubr.bf16.gmra.mrb[0].mxu0 %v1843
        %v1879 = vpop.f32.mrb[0].mxu0
        %v1880 = vadd.f32 0.0, %v1879
        %v1881 = vpop.f32.mrb[0].mxu0
        %v1882 = vadd.f32 0.0, %v1881
        %v1883 = vpop.f32.mrb[0].mxu0
        %v1884 = vpop.f32.mrb[0].mxu0
        %1885 = vdwg.mxu0
        %1886 = vmatprep.subr.bf16.mxu0 %v1835
        %1887 = vmatpush1.bf16.msra.mxu0 %v1834
        %1888 = vmatprep.subr.bf16.mxu0 0
        %1889 = vmatpush1.bf16.msra.mxu0 0
        %1890 = vmatprep.subr.bf16.mxu0 0
        %1891 = vmatpush1.bf16.msra.mxu0 0
        %1892 = vmatprep.subr.bf16.mxu0 0
        %1893 = vmatpush1.bf16.msra.mxu0 0
        %1894 = vmatprep.subr.bf16.mxu0 0
        %1895 = vmatpush1.bf16.msra.mxu0 0
        %1896 = vmatprep.subr.bf16.mxu0 0
        %1897 = vmatpush1.bf16.msra.mxu0 0
        %1898 = vmatprep.subr.bf16.mxu0 0
        %1899 = vmatpush1.bf16.msra.mxu0 0
        %1900 = vmatprep.subr.bf16.mxu0 0
        %1901 = vmatpush1.bf16.msra.mxu0 0
        %1902 = vmatprep.subr.bf16.mxu0 0
        %1903 = vmatpush1.bf16.msra.mxu0 0
        %1904 = vmatprep.subr.bf16.mxu0 0
        %1905 = vmatpush1.bf16.msra.mxu0 0
        %1906 = vmatprep.subr.bf16.mxu0 0
        %1907 = vmatpush1.bf16.msra.mxu0 0
        %1908 = vmatprep.subr.bf16.mxu0 0
        %1909 = vmatpush1.bf16.msra.mxu0 0
        %1910 = vmatprep.subr.bf16.mxu0 0
        %1911 = vmatpush1.bf16.msra.mxu0 0
        %1912 = vmatprep.subr.bf16.mxu0 0
        %1913 = vmatpush1.bf16.msra.mxu0 0
        %1914 = vmatprep.subr.bf16.mxu0 0
        %1915 = vmatpush1.bf16.msra.mxu0 0
        %1916 = vmatprep.subr.bf16.mxu0 0
        %1917 = vmatpush1.bf16.msra.mxu0 0
        %1918 = vmatprep.mubr.bf16.mxu0 0
        %1919 = vmatmul.mubr.bf16.gmra.mrb[0].mxu0 %v1843
        %v1920 = vpop.f32.mrb[0].mxu0
        %v1921 = vadd.f32 0.0, %v1920
        %v1922 = vpop.f32.mrb[0].mxu0
        %v1923 = vadd.f32 0.0, %v1922
        %v1924 = vpop.f32.mrb[0].mxu0
        %v1925 = vpop.f32.mrb[0].mxu0
        %1926 = vdwg.mxu0
        %1927 = vmatprep.subr.bf16.mxu0 0
        %1928 = vmatpush1.bf16.msra.mxu0 %v1836
        %1929 = vmatprep.subr.bf16.mxu0 0
        %1930 = vmatpush1.bf16.msra.mxu0 0
        %1931 = vmatprep.subr.bf16.mxu0 0
        %1932 = vmatpush1.bf16.msra.mxu0 0
        %1933 = vmatprep.subr.bf16.mxu0 0
        %1934 = vmatpush1.bf16.msra.mxu0 0
        %1935 = vmatprep.subr.bf16.mxu0 0
        %1936 = vmatpush1.bf16.msra.mxu0 0
        %1937 = vmatprep.subr.bf16.mxu0 0
        %1938 = vmatpush1.bf16.msra.mxu0 0
        %1939 = vmatprep.subr.bf16.mxu0 0
        %1940 = vmatpush1.bf16.msra.mxu0 0
        %1941 = vmatprep.subr.bf16.mxu0 0
        %1942 = vmatpush1.bf16.msra.mxu0 0
        %1943 = vmatprep.subr.bf16.mxu0 0
        %1944 = vmatpush1.bf16.msra.mxu0 0
        %1945 = vmatprep.subr.bf16.mxu0 0
        %1946 = vmatpush1.bf16.msra.mxu0 0
        %1947 = vmatprep.subr.bf16.mxu0 0
        %1948 = vmatpush1.bf16.msra.mxu0 0
        %1949 = vmatprep.subr.bf16.mxu0 0
        %1950 = vmatpush1.bf16.msra.mxu0 0
        %1951 = vmatprep.subr.bf16.mxu0 0
        %1952 = vmatpush1.bf16.msra.mxu0 0
        %1953 = vmatprep.subr.bf16.mxu0 0
        %1954 = vmatpush1.bf16.msra.mxu0 0
        %1955 = vmatprep.subr.bf16.mxu0 0
        %1956 = vmatpush1.bf16.msra.mxu0 0
        %1957 = vmatprep.subr.bf16.mxu0 0
        %1958 = vmatpush1.bf16.msra.mxu0 0
        %1959 = vmatprep.mubr.bf16.mxu0 0
        %1960 = vmatmul.mubr.bf16.gmra.mrb[0].mxu0 %v1843
        %v1961 = vpop.f32.mrb[0].mxu0
        %v1962 = vadd.f32 0.0, %v1961
        %v1963 = vpop.f32.mrb[0].mxu0
        %v1964 = vpop.f32.mrb[0].mxu0
        %v1965 = vpop.f32.mrb[0].mxu0
        %1966 = vdwg.mxu0
        %v1973 = vunpack.c.l.b16 %v1467
        %v1974 = vunpack.c.h.b16 %v1467
        %v1975 = vunpack.c.l.b16 %v1468
        %v1976 = vunpack.c.h.b16 %v1468
        %v1977 = vunpack.c.l.b16 %v1469
        %v1978 = vunpack.c.l.b16 %v1470
        %v1979 = vunpack.c.h.b16 %v1470
        %v1980 = vunpack.c.l.b16 %v1471
        %v1981 = vunpack.c.h.b16 %v1471
        %v1982 = vunpack.c.l.b16 %v1472
        %v1983 = vpack.c.b16 %v1978, %v1973
        %v1984 = vpack.c.b16 %v1979, %v1974
        %v1985 = vpack.c.b16 %v1980, %v1975
        %v1986 = vpack.c.b16 %v1981, %v1976
        %v1987 = vpack.c.b16 %v1982, %v1977
        %v1994 = vsel %vm1539, %v1508, 0
        %1996 = vmatprep.subr.bf16.mxu0 %v1984
        %1997 = vmatpush1.bf16.msra.mxu0 %v1983
        %1998 = vmatprep.subr.bf16.mxu0 0
        %1999 = vmatpush1.bf16.msra.mxu0 0
        %2000 = vmatprep.subr.bf16.mxu0 0
        %2001 = vmatpush1.bf16.msra.mxu0 0
        %2002 = vmatprep.subr.bf16.mxu0 0
        %2003 = vmatpush1.bf16.msra.mxu0 0
        %2004 = vmatprep.subr.bf16.mxu0 0
        %2005 = vmatpush1.bf16.msra.mxu0 0
        %2006 = vmatprep.subr.bf16.mxu0 0
        %2007 = vmatpush1.bf16.msra.mxu0 0
        %2008 = vmatprep.subr.bf16.mxu0 0
        %2009 = vmatpush1.bf16.msra.mxu0 0
        %2010 = vmatprep.subr.bf16.mxu0 0
        %2011 = vmatpush1.bf16.msra.mxu0 0
        %2012 = vmatprep.subr.bf16.mxu0 0
        %2013 = vmatpush1.bf16.msra.mxu0 0
        %2014 = vmatprep.subr.bf16.mxu0 0
        %2015 = vmatpush1.bf16.msra.mxu0 0
        %2016 = vmatprep.subr.bf16.mxu0 0
        %2017 = vmatpush1.bf16.msra.mxu0 0
        %2018 = vmatprep.subr.bf16.mxu0 0
        %2019 = vmatpush1.bf16.msra.mxu0 0
        %2020 = vmatprep.subr.bf16.mxu0 0
        %2021 = vmatpush1.bf16.msra.mxu0 0
        %2022 = vmatprep.subr.bf16.mxu0 0
        %2023 = vmatpush1.bf16.msra.mxu0 0
        %2024 = vmatprep.subr.bf16.mxu0 0
        %2025 = vmatpush1.bf16.msra.mxu0 0
        %2026 = vmatprep.subr.bf16.mxu0 0
        %2027 = vmatpush1.bf16.msra.mxu0 0
        %2028 = vmatprep.mubr.bf16.mxu0 0
        %2029 = vmatmul.mubr.bf16.gmra.mrb[0].mxu0 %v1994
        %v2030 = vpop.f32.mrb[0].mxu0
        %v2031 = vadd.f32 0.0, %v2030
        %v2032 = vpop.f32.mrb[0].mxu0
        %v2033 = vadd.f32 0.0, %v2032
        %v2034 = vpop.f32.mrb[0].mxu0
        %v2035 = vpop.f32.mrb[0].mxu0
        %2036 = vdwg.mxu0
        %2037 = vmatprep.subr.bf16.mxu0 %v1986
        %2038 = vmatpush1.bf16.msra.mxu0 %v1985
        %2039 = vmatprep.subr.bf16.mxu0 0
        %2040 = vmatpush1.bf16.msra.mxu0 0
        %2041 = vmatprep.subr.bf16.mxu0 0
        %2042 = vmatpush1.bf16.msra.mxu0 0
        %2043 = vmatprep.subr.bf16.mxu0 0
        %2044 = vmatpush1.bf16.msra.mxu0 0
        %2045 = vmatprep.subr.bf16.mxu0 0
        %2046 = vmatpush1.bf16.msra.mxu0 0
        %2047 = vmatprep.subr.bf16.mxu0 0
        %2048 = vmatpush1.bf16.msra.mxu0 0
        %2049 = vmatprep.subr.bf16.mxu0 0
        %2050 = vmatpush1.bf16.msra.mxu0 0
        %2051 = vmatprep.subr.bf16.mxu0 0
        %2052 = vmatpush1.bf16.msra.mxu0 0
        %2053 = vmatprep.subr.bf16.mxu0 0
        %2054 = vmatpush1.bf16.msra.mxu0 0
        %2055 = vmatprep.subr.bf16.mxu0 0
        %2056 = vmatpush1.bf16.msra.mxu0 0
        %2057 = vmatprep.subr.bf16.mxu0 0
        %2058 = vmatpush1.bf16.msra.mxu0 0
        %2059 = vmatprep.subr.bf16.mxu0 0
        %2060 = vmatpush1.bf16.msra.mxu0 0
        %2061 = vmatprep.subr.bf16.mxu0 0
        %2062 = vmatpush1.bf16.msra.mxu0 0
        %2063 = vmatprep.subr.bf16.mxu0 0
        %2064 = vmatpush1.bf16.msra.mxu0 0
        %2065 = vmatprep.subr.bf16.mxu0 0
        %2066 = vmatpush1.bf16.msra.mxu0 0
        %2067 = vmatprep.subr.bf16.mxu0 0
        %2068 = vmatpush1.bf16.msra.mxu0 0
        %2069 = vmatprep.mubr.bf16.mxu0 0
        %2070 = vmatmul.mubr.bf16.gmra.mrb[0].mxu0 %v1994
        %v2071 = vpop.f32.mrb[0].mxu0
        %v2072 = vadd.f32 0.0, %v2071
        %v2073 = vpop.f32.mrb[0].mxu0
        %v2074 = vadd.f32 0.0, %v2073
        %v2075 = vpop.f32.mrb[0].mxu0
        %v2076 = vpop.f32.mrb[0].mxu0
        %2077 = vdwg.mxu0
        %2078 = vmatprep.subr.bf16.mxu0 0
        %2079 = vmatpush1.bf16.msra.mxu0 %v1987
        %2080 = vmatprep.subr.bf16.mxu0 0
        %2081 = vmatpush1.bf16.msra.mxu0 0
        %2082 = vmatprep.subr.bf16.mxu0 0
        %2083 = vmatpush1.bf16.msra.mxu0 0
        %2084 = vmatprep.subr.bf16.mxu0 0
        %2085 = vmatpush1.bf16.msra.mxu0 0
        %2086 = vmatprep.subr.bf16.mxu0 0
        %2087 = vmatpush1.bf16.msra.mxu0 0
        %2088 = vmatprep.subr.bf16.mxu0 0
        %2089 = vmatpush1.bf16.msra.mxu0 0
        %2090 = vmatprep.subr.bf16.mxu0 0
        %2091 = vmatpush1.bf16.msra.mxu0 0
        %2092 = vmatprep.subr.bf16.mxu0 0
        %2093 = vmatpush1.bf16.msra.mxu0 0
        %2094 = vmatprep.subr.bf16.mxu0 0
        %2095 = vmatpush1.bf16.msra.mxu0 0
        %2096 = vmatprep.subr.bf16.mxu0 0
        %2097 = vmatpush1.bf16.msra.mxu0 0
        %2098 = vmatprep.subr.bf16.mxu0 0
        %2099 = vmatpush1.bf16.msra.mxu0 0
        %2100 = vmatprep.subr.bf16.mxu0 0
        %2101 = vmatpush1.bf16.msra.mxu0 0
        %2102 = vmatprep.subr.bf16.mxu0 0
        %2103 = vmatpush1.bf16.msra.mxu0 0
        %2104 = vmatprep.subr.bf16.mxu0 0
        %2105 = vmatpush1.bf16.msra.mxu0 0
        %2106 = vmatprep.subr.bf16.mxu0 0
        %2107 = vmatpush1.bf16.msra.mxu0 0
        %2108 = vmatprep.subr.bf16.mxu0 0
        %2109 = vmatpush1.bf16.msra.mxu0 0
        %2110 = vmatprep.mubr.bf16.mxu0 0
        %2111 = vmatmul.mubr.bf16.gmra.mrb[0].mxu0 %v1994
        %v2112 = vpop.f32.mrb[0].mxu0
        %v2113 = vadd.f32 0.0, %v2112
        %v2114 = vpop.f32.mrb[0].mxu0
        %v2115 = vpop.f32.mrb[0].mxu0
        %v2116 = vpop.f32.mrb[0].mxu0
        %2117 = vdwg.mxu0
        %v2124 = vunpack.c.l.b16 %v1473
        %v2125 = vunpack.c.h.b16 %v1473
        %v2126 = vunpack.c.l.b16 %v1474
        %v2127 = vunpack.c.h.b16 %v1474
        %v2128 = vunpack.c.l.b16 %v1475
        %v2129 = vunpack.c.l.b16 %v1476
        %v2130 = vunpack.c.h.b16 %v1476
        %v2131 = vunpack.c.l.b16 %v1477
        %v2132 = vunpack.c.h.b16 %v1477
        %v2133 = vunpack.c.l.b16 %v1478
        %v2134 = vpack.c.b16 %v2129, %v2124
        %v2135 = vpack.c.b16 %v2130, %v2125
        %v2136 = vpack.c.b16 %v2131, %v2126
        %v2137 = vpack.c.b16 %v2132, %v2127
        %v2138 = vpack.c.b16 %v2133, %v2128
        %v2145 = vsel %vm1539, %v1509, 0
        %2147 = vmatprep.subr.bf16.mxu0 %v2135
        %2148 = vmatpush1.bf16.msra.mxu0 %v2134
        %2149 = vmatprep.subr.bf16.mxu0 0
        %2150 = vmatpush1.bf16.msra.mxu0 0
        %2151 = vmatprep.subr.bf16.mxu0 0
        %2152 = vmatpush1.bf16.msra.mxu0 0
        %2153 = vmatprep.subr.bf16.mxu0 0
        %2154 = vmatpush1.bf16.msra.mxu0 0
        %2155 = vmatprep.subr.bf16.mxu0 0
        %2156 = vmatpush1.bf16.msra.mxu0 0
        %2157 = vmatprep.subr.bf16.mxu0 0
        %2158 = vmatpush1.bf16.msra.mxu0 0
        %2159 = vmatprep.subr.bf16.mxu0 0
        %2160 = vmatpush1.bf16.msra.mxu0 0
        %2161 = vmatprep.subr.bf16.mxu0 0
        %2162 = vmatpush1.bf16.msra.mxu0 0
        %2163 = vmatprep.subr.bf16.mxu0 0
        %2164 = vmatpush1.bf16.msra.mxu0 0
        %2165 = vmatprep.subr.bf16.mxu0 0
        %2166 = vmatpush1.bf16.msra.mxu0 0
        %2167 = vmatprep.subr.bf16.mxu0 0
        %2168 = vmatpush1.bf16.msra.mxu0 0
        %2169 = vmatprep.subr.bf16.mxu0 0
        %2170 = vmatpush1.bf16.msra.mxu0 0
        %2171 = vmatprep.subr.bf16.mxu0 0
        %2172 = vmatpush1.bf16.msra.mxu0 0
        %2173 = vmatprep.subr.bf16.mxu0 0
        %2174 = vmatpush1.bf16.msra.mxu0 0
        %2175 = vmatprep.subr.bf16.mxu0 0
        %2176 = vmatpush1.bf16.msra.mxu0 0
        %2177 = vmatprep.subr.bf16.mxu0 0
        %2178 = vmatpush1.bf16.msra.mxu0 0
        %2179 = vmatprep.mubr.bf16.mxu0 0
        %2180 = vmatmul.mubr.bf16.gmra.mrb[0].mxu0 %v2145
        %v2181 = vpop.f32.mrb[0].mxu0
        %v2182 = vadd.f32 0.0, %v2181
        %v2183 = vpop.f32.mrb[0].mxu0
        %v2184 = vadd.f32 0.0, %v2183
        %v2185 = vpop.f32.mrb[0].mxu0
        %v2186 = vpop.f32.mrb[0].mxu0
        %2187 = vdwg.mxu0
        %2188 = vmatprep.subr.bf16.mxu0 %v2137
        %2189 = vmatpush1.bf16.msra.mxu0 %v2136
        %2190 = vmatprep.subr.bf16.mxu0 0
        %2191 = vmatpush1.bf16.msra.mxu0 0
        %2192 = vmatprep.subr.bf16.mxu0 0
        %2193 = vmatpush1.bf16.msra.mxu0 0
        %2194 = vmatprep.subr.bf16.mxu0 0
        %2195 = vmatpush1.bf16.msra.mxu0 0
        %2196 = vmatprep.subr.bf16.mxu0 0
        %2197 = vmatpush1.bf16.msra.mxu0 0
        %2198 = vmatprep.subr.bf16.mxu0 0
        %2199 = vmatpush1.bf16.msra.mxu0 0
        %2200 = vmatprep.subr.bf16.mxu0 0
        %2201 = vmatpush1.bf16.msra.mxu0 0
        %2202 = vmatprep.subr.bf16.mxu0 0
        %2203 = vmatpush1.bf16.msra.mxu0 0
        %2204 = vmatprep.subr.bf16.mxu0 0
        %2205 = vmatpush1.bf16.msra.mxu0 0
        %2206 = vmatprep.subr.bf16.mxu0 0
        %2207 = vmatpush1.bf16.msra.mxu0 0
        %2208 = vmatprep.subr.bf16.mxu0 0
        %2209 = vmatpush1.bf16.msra.mxu0 0
        %2210 = vmatprep.subr.bf16.mxu0 0
        %2211 = vmatpush1.bf16.msra.mxu0 0
        %2212 = vmatprep.subr.bf16.mxu0 0
        %2213 = vmatpush1.bf16.msra.mxu0 0
        %2214 = vmatprep.subr.bf16.mxu0 0
        %2215 = vmatpush1.bf16.msra.mxu0 0
        %2216 = vmatprep.subr.bf16.mxu0 0
        %2217 = vmatpush1.bf16.msra.mxu0 0
        %2218 = vmatprep.subr.bf16.mxu0 0
        %2219 = vmatpush1.bf16.msra.mxu0 0
        %2220 = vmatprep.mubr.bf16.mxu0 0
        %2221 = vmatmul.mubr.bf16.gmra.mrb[0].mxu0 %v2145
        %v2222 = vpop.f32.mrb[0].mxu0
        %v2223 = vadd.f32 0.0, %v2222
        %v2224 = vpop.f32.mrb[0].mxu0
        %v2225 = vadd.f32 0.0, %v2224
        %v2226 = vpop.f32.mrb[0].mxu0
        %v2227 = vpop.f32.mrb[0].mxu0
        %2228 = vdwg.mxu0
        %2229 = vmatprep.subr.bf16.mxu0 0
        %2230 = vmatpush1.bf16.msra.mxu0 %v2138
        %2231 = vmatprep.subr.bf16.mxu0 0
        %2232 = vmatpush1.bf16.msra.mxu0 0
        %2233 = vmatprep.subr.bf16.mxu0 0
        %2234 = vmatpush1.bf16.msra.mxu0 0
        %2235 = vmatprep.subr.bf16.mxu0 0
        %2236 = vmatpush1.bf16.msra.mxu0 0
        %2237 = vmatprep.subr.bf16.mxu0 0
        %2238 = vmatpush1.bf16.msra.mxu0 0
        %2239 = vmatprep.subr.bf16.mxu0 0
        %2240 = vmatpush1.bf16.msra.mxu0 0
        %2241 = vmatprep.subr.bf16.mxu0 0
        %2242 = vmatpush1.bf16.msra.mxu0 0
        %2243 = vmatprep.subr.bf16.mxu0 0
        %2244 = vmatpush1.bf16.msra.mxu0 0
        %2245 = vmatprep.subr.bf16.mxu0 0
        %2246 = vmatpush1.bf16.msra.mxu0 0
        %2247 = vmatprep.subr.bf16.mxu0 0
        %2248 = vmatpush1.bf16.msra.mxu0 0
        %2249 = vmatprep.subr.bf16.mxu0 0
        %2250 = vmatpush1.bf16.msra.mxu0 0
        %2251 = vmatprep.subr.bf16.mxu0 0
        %2252 = vmatpush1.bf16.msra.mxu0 0
        %2253 = vmatprep.subr.bf16.mxu0 0
        %2254 = vmatpush1.bf16.msra.mxu0 0
        %2255 = vmatprep.subr.bf16.mxu0 0
        %2256 = vmatpush1.bf16.msra.mxu0 0
        %2257 = vmatprep.subr.bf16.mxu0 0
        %2258 = vmatpush1.bf16.msra.mxu0 0
        %2259 = vmatprep.subr.bf16.mxu0 0
        %2260 = vmatpush1.bf16.msra.mxu0 0
        %2261 = vmatprep.mubr.bf16.mxu0 0
        %2262 = vmatmul.mubr.bf16.gmra.mrb[0].mxu0 %v2145
        %v2263 = vpop.f32.mrb[0].mxu0
        %v2264 = vadd.f32 0.0, %v2263
        %v2265 = vpop.f32.mrb[0].mxu0
        %v2266 = vpop.f32.mrb[0].mxu0
        %v2267 = vpop.f32.mrb[0].mxu0
        %2268 = vdwg.mxu0
        %v2275 = vunpack.c.l.b16 %v1479
        %v2276 = vunpack.c.h.b16 %v1479
        %v2277 = vunpack.c.l.b16 %v1480
        %v2278 = vunpack.c.h.b16 %v1480
        %v2279 = vunpack.c.l.b16 %v1481
        %v2280 = vunpack.c.l.b16 %v1482
        %v2281 = vunpack.c.h.b16 %v1482
        %v2282 = vunpack.c.l.b16 %v1483
        %v2283 = vunpack.c.h.b16 %v1483
        %v2284 = vunpack.c.l.b16 %v1484
        %v2285 = vpack.c.b16 %v2280, %v2275
        %v2286 = vpack.c.b16 %v2281, %v2276
        %v2287 = vpack.c.b16 %v2282, %v2277
        %v2288 = vpack.c.b16 %v2283, %v2278
        %v2289 = vpack.c.b16 %v2284, %v2279
        %v2296 = vsel %vm1539, %v1510, 0
        %2298 = vmatprep.subr.bf16.mxu0 %v2286
        %2299 = vmatpush1.bf16.msra.mxu0 %v2285
        %2300 = vmatprep.subr.bf16.mxu0 0
        %2301 = vmatpush1.bf16.msra.mxu0 0
        %2302 = vmatprep.subr.bf16.mxu0 0
        %2303 = vmatpush1.bf16.msra.mxu0 0
        %2304 = vmatprep.subr.bf16.mxu0 0
        %2305 = vmatpush1.bf16.msra.mxu0 0
        %2306 = vmatprep.subr.bf16.mxu0 0
        %2307 = vmatpush1.bf16.msra.mxu0 0
        %2308 = vmatprep.subr.bf16.mxu0 0
        %2309 = vmatpush1.bf16.msra.mxu0 0
        %2310 = vmatprep.subr.bf16.mxu0 0
        %2311 = vmatpush1.bf16.msra.mxu0 0
        %2312 = vmatprep.subr.bf16.mxu0 0
        %2313 = vmatpush1.bf16.msra.mxu0 0
        %2314 = vmatprep.subr.bf16.mxu0 0
        %2315 = vmatpush1.bf16.msra.mxu0 0
        %2316 = vmatprep.subr.bf16.mxu0 0
        %2317 = vmatpush1.bf16.msra.mxu0 0
        %2318 = vmatprep.subr.bf16.mxu0 0
        %2319 = vmatpush1.bf16.msra.mxu0 0
        %2320 = vmatprep.subr.bf16.mxu0 0
        %2321 = vmatpush1.bf16.msra.mxu0 0
        %2322 = vmatprep.subr.bf16.mxu0 0
        %2323 = vmatpush1.bf16.msra.mxu0 0
        %2324 = vmatprep.subr.bf16.mxu0 0
        %2325 = vmatpush1.bf16.msra.mxu0 0
        %2326 = vmatprep.subr.bf16.mxu0 0
        %2327 = vmatpush1.bf16.msra.mxu0 0
        %2328 = vmatprep.subr.bf16.mxu0 0
        %2329 = vmatpush1.bf16.msra.mxu0 0
        %2330 = vmatprep.mubr.bf16.mxu0 0
        %2331 = vmatmul.mubr.bf16.gmra.mrb[0].mxu0 %v2296
        %v2332 = vpop.f32.mrb[0].mxu0
        %v2333 = vadd.f32 0.0, %v2332
        %v2334 = vpop.f32.mrb[0].mxu0
        %v2335 = vadd.f32 0.0, %v2334
        %v2336 = vpop.f32.mrb[0].mxu0
        %v2337 = vpop.f32.mrb[0].mxu0
        %2338 = vdwg.mxu0
        %2339 = vmatprep.subr.bf16.mxu0 %v2288
        %2340 = vmatpush1.bf16.msra.mxu0 %v2287
        %2341 = vmatprep.subr.bf16.mxu0 0
        %2342 = vmatpush1.bf16.msra.mxu0 0
        %2343 = vmatprep.subr.bf16.mxu0 0
        %2344 = vmatpush1.bf16.msra.mxu0 0
        %2345 = vmatprep.subr.bf16.mxu0 0
        %2346 = vmatpush1.bf16.msra.mxu0 0
        %2347 = vmatprep.subr.bf16.mxu0 0
        %2348 = vmatpush1.bf16.msra.mxu0 0
        %2349 = vmatprep.subr.bf16.mxu0 0
        %2350 = vmatpush1.bf16.msra.mxu0 0
        %2351 = vmatprep.subr.bf16.mxu0 0
        %2352 = vmatpush1.bf16.msra.mxu0 0
        %2353 = vmatprep.subr.bf16.mxu0 0
        %2354 = vmatpush1.bf16.msra.mxu0 0
        %2355 = vmatprep.subr.bf16.mxu0 0
        %2356 = vmatpush1.bf16.msra.mxu0 0
        %2357 = vmatprep.subr.bf16.mxu0 0
        %2358 = vmatpush1.bf16.msra.mxu0 0
        %2359 = vmatprep.subr.bf16.mxu0 0
        %2360 = vmatpush1.bf16.msra.mxu0 0
        %2361 = vmatprep.subr.bf16.mxu0 0
        %2362 = vmatpush1.bf16.msra.mxu0 0
        %2363 = vmatprep.subr.bf16.mxu0 0
        %2364 = vmatpush1.bf16.msra.mxu0 0
        %2365 = vmatprep.subr.bf16.mxu0 0
        %2366 = vmatpush1.bf16.msra.mxu0 0
        %2367 = vmatprep.subr.bf16.mxu0 0
        %2368 = vmatpush1.bf16.msra.mxu0 0
        %2369 = vmatprep.subr.bf16.mxu0 0
        %2370 = vmatpush1.bf16.msra.mxu0 0
        %2371 = vmatprep.mubr.bf16.mxu0 0
        %2372 = vmatmul.mubr.bf16.gmra.mrb[0].mxu0 %v2296
        %v2373 = vpop.f32.mrb[0].mxu0
        %v2374 = vadd.f32 0.0, %v2373
        %v2375 = vpop.f32.mrb[0].mxu0
        %v2376 = vadd.f32 0.0, %v2375
        %v2377 = vpop.f32.mrb[0].mxu0
        %v2378 = vpop.f32.mrb[0].mxu0
        %2379 = vdwg.mxu0
        %2380 = vmatprep.subr.bf16.mxu0 0
        %2381 = vmatpush1.bf16.msra.mxu0 %v2289
        %2382 = vmatprep.subr.bf16.mxu0 0
        %2383 = vmatpush1.bf16.msra.mxu0 0
        %2384 = vmatprep.subr.bf16.mxu0 0
        %2385 = vmatpush1.bf16.msra.mxu0 0
        %2386 = vmatprep.subr.bf16.mxu0 0
        %2387 = vmatpush1.bf16.msra.mxu0 0
        %2388 = vmatprep.subr.bf16.mxu0 0
        %2389 = vmatpush1.bf16.msra.mxu0 0
        %2390 = vmatprep.subr.bf16.mxu0 0
        %2391 = vmatpush1.bf16.msra.mxu0 0
        %2392 = vmatprep.subr.bf16.mxu0 0
        %2393 = vmatpush1.bf16.msra.mxu0 0
        %2394 = vmatprep.subr.bf16.mxu0 0
        %2395 = vmatpush1.bf16.msra.mxu0 0
        %2396 = vmatprep.subr.bf16.mxu0 0
        %2397 = vmatpush1.bf16.msra.mxu0 0
        %2398 = vmatprep.subr.bf16.mxu0 0
        %2399 = vmatpush1.bf16.msra.mxu0 0
        %2400 = vmatprep.subr.bf16.mxu0 0
        %2401 = vmatpush1.bf16.msra.mxu0 0
        %2402 = vmatprep.subr.bf16.mxu0 0
        %2403 = vmatpush1.bf16.msra.mxu0 0
        %2404 = vmatprep.subr.bf16.mxu0 0
        %2405 = vmatpush1.bf16.msra.mxu0 0
        %2406 = vmatprep.subr.bf16.mxu0 0
        %2407 = vmatpush1.bf16.msra.mxu0 0
        %2408 = vmatprep.subr.bf16.mxu0 0
        %2409 = vmatpush1.bf16.msra.mxu0 0
        %2410 = vmatprep.subr.bf16.mxu0 0
        %2411 = vmatpush1.bf16.msra.mxu0 0
        %2412 = vmatprep.mubr.bf16.mxu0 0
        %2413 = vmatmul.mubr.bf16.gmra.mrb[0].mxu0 %v2296
        %v2414 = vpop.f32.mrb[0].mxu0
        %v2415 = vadd.f32 0.0, %v2414
        %v2416 = vpop.f32.mrb[0].mxu0
        %v2417 = vpop.f32.mrb[0].mxu0
        %v2418 = vpop.f32.mrb[0].mxu0
        %2419 = vdwg.mxu0
        %v2426 = vunpack.c.l.b16 %v1485
        %v2427 = vunpack.c.h.b16 %v1485
        %v2428 = vunpack.c.l.b16 %v1486
        %v2429 = vunpack.c.h.b16 %v1486
        %v2430 = vunpack.c.l.b16 %v1487
        %v2431 = vunpack.c.l.b16 %v1488
        %v2432 = vunpack.c.h.b16 %v1488
        %v2433 = vunpack.c.l.b16 %v1489
        %v2434 = vunpack.c.h.b16 %v1489
        %v2435 = vunpack.c.l.b16 %v1490
        %v2436 = vpack.c.b16 %v2431, %v2426
        %v2437 = vpack.c.b16 %v2432, %v2427
        %v2438 = vpack.c.b16 %v2433, %v2428
        %v2439 = vpack.c.b16 %v2434, %v2429
        %v2440 = vpack.c.b16 %v2435, %v2430
        %v2447 = vsel %vm1539, %v1511, 0
        %2449 = vmatprep.subr.bf16.mxu0 %v2437
        %2450 = vmatpush1.bf16.msra.mxu0 %v2436
        %2451 = vmatprep.subr.bf16.mxu0 0
        %2452 = vmatpush1.bf16.msra.mxu0 0
        %2453 = vmatprep.subr.bf16.mxu0 0
        %2454 = vmatpush1.bf16.msra.mxu0 0
        %2455 = vmatprep.subr.bf16.mxu0 0
        %2456 = vmatpush1.bf16.msra.mxu0 0
        %2457 = vmatprep.subr.bf16.mxu0 0
        %2458 = vmatpush1.bf16.msra.mxu0 0
        %2459 = vmatprep.subr.bf16.mxu0 0
        %2460 = vmatpush1.bf16.msra.mxu0 0
        %2461 = vmatprep.subr.bf16.mxu0 0
        %2462 = vmatpush1.bf16.msra.mxu0 0
        %2463 = vmatprep.subr.bf16.mxu0 0
        %2464 = vmatpush1.bf16.msra.mxu0 0
        %2465 = vmatprep.subr.bf16.mxu0 0
        %2466 = vmatpush1.bf16.msra.mxu0 0
        %2467 = vmatprep.subr.bf16.mxu0 0
        %2468 = vmatpush1.bf16.msra.mxu0 0
        %2469 = vmatprep.subr.bf16.mxu0 0
        %2470 = vmatpush1.bf16.msra.mxu0 0
        %2471 = vmatprep.subr.bf16.mxu0 0
        %2472 = vmatpush1.bf16.msra.mxu0 0
        %2473 = vmatprep.subr.bf16.mxu0 0
        %2474 = vmatpush1.bf16.msra.mxu0 0
        %2475 = vmatprep.subr.bf16.mxu0 0
        %2476 = vmatpush1.bf16.msra.mxu0 0
        %2477 = vmatprep.subr.bf16.mxu0 0
        %2478 = vmatpush1.bf16.msra.mxu0 0
        %2479 = vmatprep.subr.bf16.mxu0 0
        %2480 = vmatpush1.bf16.msra.mxu0 0
        %2481 = vmatprep.mubr.bf16.mxu0 0
        %2482 = vmatmul.mubr.bf16.gmra.mrb[0].mxu0 %v2447
        %v2483 = vpop.f32.mrb[0].mxu0
        %v2484 = vadd.f32 0.0, %v2483
        %v2485 = vpop.f32.mrb[0].mxu0
        %v2486 = vadd.f32 0.0, %v2485
        %v2487 = vpop.f32.mrb[0].mxu0
        %v2488 = vpop.f32.mrb[0].mxu0
        %2489 = vdwg.mxu0
        %2490 = vmatprep.subr.bf16.mxu0 %v2439
        %2491 = vmatpush1.bf16.msra.mxu0 %v2438
        %2492 = vmatprep.subr.bf16.mxu0 0
        %2493 = vmatpush1.bf16.msra.mxu0 0
        %2494 = vmatprep.subr.bf16.mxu0 0
        %2495 = vmatpush1.bf16.msra.mxu0 0
        %2496 = vmatprep.subr.bf16.mxu0 0
        %2497 = vmatpush1.bf16.msra.mxu0 0
        %2498 = vmatprep.subr.bf16.mxu0 0
        %2499 = vmatpush1.bf16.msra.mxu0 0
        %2500 = vmatprep.subr.bf16.mxu0 0
        %2501 = vmatpush1.bf16.msra.mxu0 0
        %2502 = vmatprep.subr.bf16.mxu0 0
        %2503 = vmatpush1.bf16.msra.mxu0 0
        %2504 = vmatprep.subr.bf16.mxu0 0
        %2505 = vmatpush1.bf16.msra.mxu0 0
        %2506 = vmatprep.subr.bf16.mxu0 0
        %2507 = vmatpush1.bf16.msra.mxu0 0
        %2508 = vmatprep.subr.bf16.mxu0 0
        %2509 = vmatpush1.bf16.msra.mxu0 0
        %2510 = vmatprep.subr.bf16.mxu0 0
        %2511 = vmatpush1.bf16.msra.mxu0 0
        %2512 = vmatprep.subr.bf16.mxu0 0
        %2513 = vmatpush1.bf16.msra.mxu0 0
        %2514 = vmatprep.subr.bf16.mxu0 0
        %2515 = vmatpush1.bf16.msra.mxu0 0
        %2516 = vmatprep.subr.bf16.mxu0 0
        %2517 = vmatpush1.bf16.msra.mxu0 0
        %2518 = vmatprep.subr.bf16.mxu0 0
        %2519 = vmatpush1.bf16.msra.mxu0 0
        %2520 = vmatprep.subr.bf16.mxu0 0
        %2521 = vmatpush1.bf16.msra.mxu0 0
        %2522 = vmatprep.mubr.bf16.mxu0 0
        %2523 = vmatmul.mubr.bf16.gmra.mrb[0].mxu0 %v2447
        %v2524 = vpop.f32.mrb[0].mxu0
        %v2525 = vadd.f32 0.0, %v2524
        %v2526 = vpop.f32.mrb[0].mxu0
        %v2527 = vadd.f32 0.0, %v2526
        %v2528 = vpop.f32.mrb[0].mxu0
        %v2529 = vpop.f32.mrb[0].mxu0
        %2530 = vdwg.mxu0
        %2531 = vmatprep.subr.bf16.mxu0 0
        %2532 = vmatpush1.bf16.msra.mxu0 %v2440
        %2533 = vmatprep.subr.bf16.mxu0 0
        %2534 = vmatpush1.bf16.msra.mxu0 0
        %2535 = vmatprep.subr.bf16.mxu0 0
        %2536 = vmatpush1.bf16.msra.mxu0 0
        %2537 = vmatprep.subr.bf16.mxu0 0
        %2538 = vmatpush1.bf16.msra.mxu0 0
        %2539 = vmatprep.subr.bf16.mxu0 0
        %2540 = vmatpush1.bf16.msra.mxu0 0
        %2541 = vmatprep.subr.bf16.mxu0 0
        %2542 = vmatpush1.bf16.msra.mxu0 0
        %2543 = vmatprep.subr.bf16.mxu0 0
        %2544 = vmatpush1.bf16.msra.mxu0 0
        %2545 = vmatprep.subr.bf16.mxu0 0
        %2546 = vmatpush1.bf16.msra.mxu0 0
        %2547 = vmatprep.subr.bf16.mxu0 0
        %2548 = vmatpush1.bf16.msra.mxu0 0
        %2549 = vmatprep.subr.bf16.mxu0 0
        %2550 = vmatpush1.bf16.msra.mxu0 0
        %2551 = vmatprep.subr.bf16.mxu0 0
        %2552 = vmatpush1.bf16.msra.mxu0 0
        %2553 = vmatprep.subr.bf16.mxu0 0
        %2554 = vmatpush1.bf16.msra.mxu0 0
        %2555 = vmatprep.subr.bf16.mxu0 0
        %2556 = vmatpush1.bf16.msra.mxu0 0
        %2557 = vmatprep.subr.bf16.mxu0 0
        %2558 = vmatpush1.bf16.msra.mxu0 0
        %2559 = vmatprep.subr.bf16.mxu0 0
        %2560 = vmatpush1.bf16.msra.mxu0 0
        %2561 = vmatprep.subr.bf16.mxu0 0
        %2562 = vmatpush1.bf16.msra.mxu0 0
        %2563 = vmatprep.mubr.bf16.mxu0 0
        %2564 = vmatmul.mubr.bf16.gmra.mrb[0].mxu0 %v2447
        %v2565 = vpop.f32.mrb[0].mxu0
        %v2566 = vadd.f32 0.0, %v2565
        %v2567 = vpop.f32.mrb[0].mxu0
        %v2568 = vpop.f32.mrb[0].mxu0
        %v2569 = vpop.f32.mrb[0].mxu0
        %2570 = vdwg.mxu0
        %v2577 = vunpack.c.l.b16 %v1491
        %v2578 = vunpack.c.h.b16 %v1491
        %v2579 = vunpack.c.l.b16 %v1492
        %v2580 = vunpack.c.h.b16 %v1492
        %v2581 = vunpack.c.l.b16 %v1493
        %v2582 = vunpack.c.l.b16 %v1494
        %v2583 = vunpack.c.h.b16 %v1494
        %v2584 = vunpack.c.l.b16 %v1495
        %v2585 = vunpack.c.h.b16 %v1495
        %v2586 = vunpack.c.l.b16 %v1496
        %v2587 = vpack.c.b16 %v2582, %v2577
        %v2588 = vpack.c.b16 %v2583, %v2578
        %v2589 = vpack.c.b16 %v2584, %v2579
        %v2590 = vpack.c.b16 %v2585, %v2580
        %v2591 = vpack.c.b16 %v2586, %v2581
        %v2598 = vsel %vm1539, %v1512, 0
        %2600 = vmatprep.subr.bf16.mxu0 %v2588
        %2601 = vmatpush1.bf16.msra.mxu0 %v2587
        %2602 = vmatprep.subr.bf16.mxu0 0
        %2603 = vmatpush1.bf16.msra.mxu0 0
        %2604 = vmatprep.subr.bf16.mxu0 0
        %2605 = vmatpush1.bf16.msra.mxu0 0
        %2606 = vmatprep.subr.bf16.mxu0 0
        %2607 = vmatpush1.bf16.msra.mxu0 0
        %2608 = vmatprep.subr.bf16.mxu0 0
        %2609 = vmatpush1.bf16.msra.mxu0 0
        %2610 = vmatprep.subr.bf16.mxu0 0
        %2611 = vmatpush1.bf16.msra.mxu0 0
        %2612 = vmatprep.subr.bf16.mxu0 0
        %2613 = vmatpush1.bf16.msra.mxu0 0
        %2614 = vmatprep.subr.bf16.mxu0 0
        %2615 = vmatpush1.bf16.msra.mxu0 0
        %2616 = vmatprep.subr.bf16.mxu0 0
        %2617 = vmatpush1.bf16.msra.mxu0 0
        %2618 = vmatprep.subr.bf16.mxu0 0
        %2619 = vmatpush1.bf16.msra.mxu0 0
        %2620 = vmatprep.subr.bf16.mxu0 0
        %2621 = vmatpush1.bf16.msra.mxu0 0
        %2622 = vmatprep.subr.bf16.mxu0 0
        %2623 = vmatpush1.bf16.msra.mxu0 0
        %2624 = vmatprep.subr.bf16.mxu0 0
        %2625 = vmatpush1.bf16.msra.mxu0 0
        %2626 = vmatprep.subr.bf16.mxu0 0
        %2627 = vmatpush1.bf16.msra.mxu0 0
        %2628 = vmatprep.subr.bf16.mxu0 0
        %2629 = vmatpush1.bf16.msra.mxu0 0
        %2630 = vmatprep.subr.bf16.mxu0 0
        %2631 = vmatpush1.bf16.msra.mxu0 0
        %2632 = vmatprep.mubr.bf16.mxu0 0
        %2633 = vmatmul.mubr.bf16.gmra.mrb[0].mxu0 %v2598
        %v2634 = vpop.f32.mrb[0].mxu0
        %v2635 = vadd.f32 0.0, %v2634
        %v2636 = vpop.f32.mrb[0].mxu0
        %v2637 = vadd.f32 0.0, %v2636
        %v2638 = vpop.f32.mrb[0].mxu0
        %v2639 = vpop.f32.mrb[0].mxu0
        %2640 = vdwg.mxu0
        %2641 = vmatprep.subr.bf16.mxu0 %v2590
        %2642 = vmatpush1.bf16.msra.mxu0 %v2589
        %2643 = vmatprep.subr.bf16.mxu0 0
        %2644 = vmatpush1.bf16.msra.mxu0 0
        %2645 = vmatprep.subr.bf16.mxu0 0
        %2646 = vmatpush1.bf16.msra.mxu0 0
        %2647 = vmatprep.subr.bf16.mxu0 0
        %2648 = vmatpush1.bf16.msra.mxu0 0
        %2649 = vmatprep.subr.bf16.mxu0 0
        %2650 = vmatpush1.bf16.msra.mxu0 0
        %2651 = vmatprep.subr.bf16.mxu0 0
        %2652 = vmatpush1.bf16.msra.mxu0 0
        %2653 = vmatprep.subr.bf16.mxu0 0
        %2654 = vmatpush1.bf16.msra.mxu0 0
        %2655 = vmatprep.subr.bf16.mxu0 0
        %2656 = vmatpush1.bf16.msra.mxu0 0
        %2657 = vmatprep.subr.bf16.mxu0 0
        %2658 = vmatpush1.bf16.msra.mxu0 0
        %2659 = vmatprep.subr.bf16.mxu0 0
        %2660 = vmatpush1.bf16.msra.mxu0 0
        %2661 = vmatprep.subr.bf16.mxu0 0
        %2662 = vmatpush1.bf16.msra.mxu0 0
        %2663 = vmatprep.subr.bf16.mxu0 0
        %2664 = vmatpush1.bf16.msra.mxu0 0
        %2665 = vmatprep.subr.bf16.mxu0 0
        %2666 = vmatpush1.bf16.msra.mxu0 0
        %2667 = vmatprep.subr.bf16.mxu0 0
        %2668 = vmatpush1.bf16.msra.mxu0 0
        %2669 = vmatprep.subr.bf16.mxu0 0
        %2670 = vmatpush1.bf16.msra.mxu0 0
        %2671 = vmatprep.subr.bf16.mxu0 0
        %2672 = vmatpush1.bf16.msra.mxu0 0
        %2673 = vmatprep.mubr.bf16.mxu0 0
        %2674 = vmatmul.mubr.bf16.gmra.mrb[0].mxu0 %v2598
        %v2675 = vpop.f32.mrb[0].mxu0
        %v2676 = vadd.f32 0.0, %v2675
        %v2677 = vpop.f32.mrb[0].mxu0
        %v2678 = vadd.f32 0.0, %v2677
        %v2679 = vpop.f32.mrb[0].mxu0
        %v2680 = vpop.f32.mrb[0].mxu0
        %2681 = vdwg.mxu0
        %2682 = vmatprep.subr.bf16.mxu0 0
        %2683 = vmatpush1.bf16.msra.mxu0 %v2591
        %2684 = vmatprep.subr.bf16.mxu0 0
        %2685 = vmatpush1.bf16.msra.mxu0 0
        %2686 = vmatprep.subr.bf16.mxu0 0
        %2687 = vmatpush1.bf16.msra.mxu0 0
        %2688 = vmatprep.subr.bf16.mxu0 0
        %2689 = vmatpush1.bf16.msra.mxu0 0
        %2690 = vmatprep.subr.bf16.mxu0 0
        %2691 = vmatpush1.bf16.msra.mxu0 0
        %2692 = vmatprep.subr.bf16.mxu0 0
        %2693 = vmatpush1.bf16.msra.mxu0 0
        %2694 = vmatprep.subr.bf16.mxu0 0
        %2695 = vmatpush1.bf16.msra.mxu0 0
        %2696 = vmatprep.subr.bf16.mxu0 0
        %2697 = vmatpush1.bf16.msra.mxu0 0
        %2698 = vmatprep.subr.bf16.mxu0 0
        %2699 = vmatpush1.bf16.msra.mxu0 0
        %2700 = vmatprep.subr.bf16.mxu0 0
        %2701 = vmatpush1.bf16.msra.mxu0 0
        %2702 = vmatprep.subr.bf16.mxu0 0
        %2703 = vmatpush1.bf16.msra.mxu0 0
        %2704 = vmatprep.subr.bf16.mxu0 0
        %2705 = vmatpush1.bf16.msra.mxu0 0
        %2706 = vmatprep.subr.bf16.mxu0 0
        %2707 = vmatpush1.bf16.msra.mxu0 0
        %2708 = vmatprep.subr.bf16.mxu0 0
        %2709 = vmatpush1.bf16.msra.mxu0 0
        %2710 = vmatprep.subr.bf16.mxu0 0
        %2711 = vmatpush1.bf16.msra.mxu0 0
        %2712 = vmatprep.subr.bf16.mxu0 0
        %2713 = vmatpush1.bf16.msra.mxu0 0
        %2714 = vmatprep.mubr.bf16.mxu0 0
        %2715 = vmatmul.mubr.bf16.gmra.mrb[0].mxu0 %v2598
        %v2716 = vpop.f32.mrb[0].mxu0
        %v2717 = vadd.f32 0.0, %v2716
        %v2718 = vpop.f32.mrb[0].mxu0
        %v2719 = vpop.f32.mrb[0].mxu0
        %v2720 = vpop.f32.mrb[0].mxu0
        %2721 = vdwg.mxu0
        %vm2722 = vcmask 122880
        %v2723 = vsel %vm2722, %v1497, 0.0
        %2724 = vadd.xlane.f32.xlu0 %v2723
        %v2725 = vpop.xlane.xlu0 %2724
        %v2726 = vsel %vm2722, %v1498, 0.0
        %2727 = vadd.xlane.f32.xlu0 %v2726
        %v2728 = vpop.xlane.xlu0 %2727
        %v2729 = vsel %vm2722, %v1499, 0.0
        %2730 = vadd.xlane.f32.xlu0 %v2729
        %v2731 = vpop.xlane.xlu0 %2730
        %v2732 = vsel %vm2722, %v1500, 0.0
        %2733 = vadd.xlane.f32.xlu0 %v2732
        %v2734 = vpop.xlane.xlu0 %2733
        %v2735 = vsel %vm2722, %v1501, 0.0
        %2736 = vadd.xlane.f32.xlu0 %v2735
        %v2737 = vpop.xlane.xlu0 %2736
        %v2738 = vsel %vm2722, %v1502, 0.0
        %2739 = vadd.xlane.f32.xlu0 %v2738
        %v2740 = vpop.xlane.xlu0 %2739
        %v2741 = vsel %vm2722, %v1503, 0.0
        %2742 = vadd.xlane.f32.xlu0 %v2741
        %v2743 = vpop.xlane.xlu0 %2742
        %v2744 = vsel %vm2722, %v1504, 0.0
        %2745 = vadd.xlane.f32.xlu0 %v2744
        %v2746 = vpop.xlane.xlu0 %2745
        %v2747 = vmax.f32 %v2725, 1e-09
        %v2748 = vmax.f32 %v2728, 1e-09
        %v2749 = vmax.f32 %v2731, 1e-09
        %v2750 = vmax.f32 %v2734, 1e-09
        %v2751 = vmax.f32 %v2737, 1e-09
        %v2752 = vmax.f32 %v2740, 1e-09
        %v2753 = vmax.f32 %v2743, 1e-09
        %v2754 = vmax.f32 %v2746, 1e-09
        %v2755 = vlaneseq
        %v2756 = vshrl.u32 %v2755, 7
        %v2757 = vsub.s32 0, %v2756
        %v2758 = vrot.slane %v2747, %v2757
        %v2759 = vlaneseq
        %v2760 = vshrl.u32 %v2759, 7
        %v2761 = vsub.s32 0, %v2760
        %v2762 = vrot.slane %v2748, %v2761
        %v2763 = vlaneseq
        %v2764 = vshrl.u32 %v2763, 7
        %v2765 = vsub.s32 0, %v2764
        %v2766 = vrot.slane %v2749, %v2765
        %v2767 = vlaneseq
        %v2768 = vshrl.u32 %v2767, 7
        %v2769 = vsub.s32 0, %v2768
        %v2770 = vrot.slane %v2750, %v2769
        %v2771 = vlaneseq
        %v2772 = vshrl.u32 %v2771, 7
        %v2773 = vsub.s32 0, %v2772
        %v2774 = vrot.slane %v2751, %v2773
        %v2775 = vlaneseq
        %v2776 = vshrl.u32 %v2775, 7
        %v2777 = vsub.s32 0, %v2776
        %v2778 = vrot.slane %v2752, %v2777
        %v2779 = vlaneseq
        %v2780 = vshrl.u32 %v2779, 7
        %v2781 = vsub.s32 0, %v2780
        %v2782 = vrot.slane %v2753, %v2781
        %v2783 = vlaneseq
        %v2784 = vshrl.u32 %v2783, 7
        %v2785 = vsub.s32 0, %v2784
        %v2786 = vrot.slane %v2754, %v2785
        %v2787 = vrcp.pop %v2758
        %v2788 = vmul.f32 %v1578, %v2787
        %v2789 = vmul.f32 %v1580, %v2787
        %v2790 = vmul.f32 %v1619, %v2787
        %v2791 = vmul.f32 %v1621, %v2787
        %v2792 = vmul.f32 %v1660, %v2787
        %v2793 = vrcp.pop %v2762
        %v2794 = vmul.f32 %v1729, %v2793
        %v2795 = vmul.f32 %v1731, %v2793
        %v2796 = vmul.f32 %v1770, %v2793
        %v2797 = vmul.f32 %v1772, %v2793
        %v2798 = vmul.f32 %v1811, %v2793
        %v2799 = vrcp.pop %v2766
        %v2800 = vmul.f32 %v1880, %v2799
        %v2801 = vmul.f32 %v1882, %v2799
        %v2802 = vmul.f32 %v1921, %v2799
        %v2803 = vmul.f32 %v1923, %v2799
        %v2804 = vmul.f32 %v1962, %v2799
        %v2805 = vrcp.pop %v2770
        %v2806 = vmul.f32 %v2031, %v2805
        %v2807 = vmul.f32 %v2033, %v2805
        %v2808 = vmul.f32 %v2072, %v2805
        %v2809 = vmul.f32 %v2074, %v2805
        %v2810 = vmul.f32 %v2113, %v2805
        %v2811 = vrcp.pop %v2774
        %v2812 = vmul.f32 %v2182, %v2811
        %v2813 = vmul.f32 %v2184, %v2811
        %v2814 = vmul.f32 %v2223, %v2811
        %v2815 = vmul.f32 %v2225, %v2811
        %v2816 = vmul.f32 %v2264, %v2811
        %v2817 = vrcp.pop %v2778
        %v2818 = vmul.f32 %v2333, %v2817
        %v2819 = vmul.f32 %v2335, %v2817
        %v2820 = vmul.f32 %v2374, %v2817
        %v2821 = vmul.f32 %v2376, %v2817
        %v2822 = vmul.f32 %v2415, %v2817
        %v2823 = vrcp.pop %v2782
        %v2824 = vmul.f32 %v2484, %v2823
        %v2825 = vmul.f32 %v2486, %v2823
        %v2826 = vmul.f32 %v2525, %v2823
        %v2827 = vmul.f32 %v2527, %v2823
        %v2828 = vmul.f32 %v2566, %v2823
        %v2829 = vrcp.pop %v2786
        %v2830 = vmul.f32 %v2635, %v2829
        %v2831 = vmul.f32 %v2637, %v2829
        %v2832 = vmul.f32 %v2676, %v2829
        %v2833 = vmul.f32 %v2678, %v2829
        %v2834 = vmul.f32 %v2717, %v2829
        %v2835 = vld [vmem:[%s1213] sm:$0xff]
        %v2836 = vld [vmem:[%s1213 + $0x8] sm:$0xff]
        %v2837 = vld [vmem:[%s1213 + $0x10] sm:$0xf]
        %v2838 = vld [vmem:[%s1213 + $0x14] sm:$0xff]
        %v2839 = vld [vmem:[%s1213 + $0x1c] sm:$0xff]
        %v2840 = vld [vmem:[%s1213 + $0x24] sm:$0xf]
        %v2841 = vld [vmem:[%s1213 + $0x28] sm:$0xff]
        %v2842 = vld [vmem:[%s1213 + $0x30] sm:$0xff]
        %v2843 = vld [vmem:[%s1213 + $0x38] sm:$0xf]
        %v2844 = vld [vmem:[%s1213 + $0x3c] sm:$0xff]
        %v2845 = vld [vmem:[%s1213 + $0x44] sm:$0xff]
        %v2846 = vld [vmem:[%s1213 + $0x4c] sm:$0xf]
        %v2847 = vld [vmem:[%s1213 + $0x50] sm:$0xff]
        %v2848 = vld [vmem:[%s1213 + $0x58] sm:$0xff]
        %v2849 = vld [vmem:[%s1213 + $0x60] sm:$0xf]
        %v2850 = vld [vmem:[%s1213 + $0x64] sm:$0xff]
        %v2851 = vld [vmem:[%s1213 + $0x6c] sm:$0xff]
        %v2852 = vld [vmem:[%s1213 + $0x74] sm:$0xf]
        %v2853 = vld [vmem:[%s1213 + $0x78] sm:$0xff]
        %v2854 = vld [vmem:[%s1213 + $0x80] sm:$0xff]
        %v2855 = vld [vmem:[%s1213 + $0x88] sm:$0xf]
        %v2856 = vld [vmem:[%s1213 + $0x8c] sm:$0xff]
        %v2857 = vld [vmem:[%s1213 + $0x94] sm:$0xff]
        %v2858 = vld [vmem:[%s1213 + $0x9c] sm:$0xf]
        %v2859 = vld [vmem:[%s1213 + $0xa0] sm:$0xff]
        %v2860 = vld [vmem:[%s1213 + $0xa8] sm:$0xff]
        %v2861 = vld [vmem:[%s1213 + $0xb0] sm:$0xf]
        %v2862 = vld [vmem:[%s1213 + $0xb4] sm:$0xff]
        %v2863 = vld [vmem:[%s1213 + $0xbc] sm:$0xff]
        %v2864 = vld [vmem:[%s1213 + $0xc4] sm:$0xf]
        %v2865 = vld [vmem:[%s1213 + $0xc8] sm:$0xff]
        %v2866 = vld [vmem:[%s1213 + $0xd0] sm:$0xff]
        %v2867 = vld [vmem:[%s1213 + $0xd8] sm:$0xf]
        %v2868 = vld [vmem:[%s1213 + $0xdc] sm:$0xff]
        %v2869 = vld [vmem:[%s1213 + $0xe4] sm:$0xff]
        %v2870 = vld [vmem:[%s1213 + $0xec] sm:$0xf]
        %v2871 = vld [vmem:[%s1213 + $0xf0] sm:$0xff]
        %v2872 = vld [vmem:[%s1213 + $0xf8] sm:$0xff]
        %v2873 = vld [vmem:[%s1213 + $0x100] sm:$0xf]
        %v2874 = vld [vmem:[%s1213 + $0x104] sm:$0xff]
        %v2875 = vld [vmem:[%s1213 + $0x10c] sm:$0xff]
        %v2876 = vld [vmem:[%s1213 + $0x114] sm:$0xf]
        %v2877 = vld [vmem:[%s1213 + $0x118] sm:$0xff]
        %v2878 = vld [vmem:[%s1213 + $0x120] sm:$0xff]
        %v2879 = vld [vmem:[%s1213 + $0x128] sm:$0xf]
        %v2880 = vld [vmem:[%s1213 + $0x12c] sm:$0xff]
        %v2881 = vld [vmem:[%s1213 + $0x134] sm:$0xff]
        %v2882 = vld [vmem:[%s1213 + $0x13c] sm:$0xf]
        %v2883 = vld [vmem:[%s1222] sm:$0x1]
        %v2884 = vld [vmem:[%s1222 + $0x1] sm:$0x1]
        %v2885 = vld [vmem:[%s1222 + $0x2] sm:$0x1]
        %v2886 = vld [vmem:[%s1222 + $0x3] sm:$0x1]
        %v2887 = vld [vmem:[%s1222 + $0x4] sm:$0x1]
        %v2888 = vld [vmem:[%s1222 + $0x5] sm:$0x1]
        %v2889 = vld [vmem:[%s1222 + $0x6] sm:$0x1]
        %v2890 = vld [vmem:[%s1222 + $0x7] sm:$0x1]
        %v2891 = vpack.c.bf16 %v2883, %v2883
        %v2892 = vpack.c.bf16 %v2884, %v2884
        %v2893 = vpack.c.bf16 %v2885, %v2885
        %v2894 = vpack.c.bf16 %v2886, %v2886
        %v2895 = vpack.c.bf16 %v2887, %v2887
        %v2896 = vpack.c.bf16 %v2888, %v2888
        %v2897 = vpack.c.bf16 %v2889, %v2889
        %v2898 = vpack.c.bf16 %v2890, %v2890
        %v2905 = vunpack.c.l.b16 %v2835
        %v2906 = vunpack.c.h.b16 %v2835
        %v2907 = vunpack.c.l.b16 %v2836
        %v2908 = vunpack.c.h.b16 %v2836
        %v2909 = vunpack.c.l.b16 %v2837
        %v2910 = vunpack.c.l.b16 %v2838
        %v2911 = vunpack.c.h.b16 %v2838
        %v2912 = vunpack.c.l.b16 %v2839
        %v2913 = vunpack.c.h.b16 %v2839
        %v2914 = vunpack.c.l.b16 %v2840
        %v2915 = vpack.c.b16 %v2910, %v2905
        %v2916 = vpack.c.b16 %v2911, %v2906
        %v2917 = vpack.c.b16 %v2912, %v2907
        %v2918 = vpack.c.b16 %v2913, %v2908
        %v2919 = vpack.c.b16 %v2914, %v2909
        %v2926 = vsel %vm1539, %v2891, 0
        %2928 = vmatprep.subr.bf16.mxu0 %v2916
        %2929 = vmatpush1.bf16.msra.mxu0 %v2915
        %2930 = vmatprep.subr.bf16.mxu0 0
        %2931 = vmatpush1.bf16.msra.mxu0 0
        %2932 = vmatprep.subr.bf16.mxu0 0
        %2933 = vmatpush1.bf16.msra.mxu0 0
        %2934 = vmatprep.subr.bf16.mxu0 0
        %2935 = vmatpush1.bf16.msra.mxu0 0
        %2936 = vmatprep.subr.bf16.mxu0 0
        %2937 = vmatpush1.bf16.msra.mxu0 0
        %2938 = vmatprep.subr.bf16.mxu0 0
        %2939 = vmatpush1.bf16.msra.mxu0 0
        %2940 = vmatprep.subr.bf16.mxu0 0
        %2941 = vmatpush1.bf16.msra.mxu0 0
        %2942 = vmatprep.subr.bf16.mxu0 0
        %2943 = vmatpush1.bf16.msra.mxu0 0
        %2944 = vmatprep.subr.bf16.mxu0 0
        %2945 = vmatpush1.bf16.msra.mxu0 0
        %2946 = vmatprep.subr.bf16.mxu0 0
        %2947 = vmatpush1.bf16.msra.mxu0 0
        %2948 = vmatprep.subr.bf16.mxu0 0
        %2949 = vmatpush1.bf16.msra.mxu0 0
        %2950 = vmatprep.subr.bf16.mxu0 0
        %2951 = vmatpush1.bf16.msra.mxu0 0
        %2952 = vmatprep.subr.bf16.mxu0 0
        %2953 = vmatpush1.bf16.msra.mxu0 0
        %2954 = vmatprep.subr.bf16.mxu0 0
        %2955 = vmatpush1.bf16.msra.mxu0 0
        %2956 = vmatprep.subr.bf16.mxu0 0
        %2957 = vmatpush1.bf16.msra.mxu0 0
        %2958 = vmatprep.subr.bf16.mxu0 0
        %2959 = vmatpush1.bf16.msra.mxu0 0
        %2960 = vmatprep.mubr.bf16.mxu0 0
        %2961 = vmatmul.mubr.bf16.gmra.mrb[0].mxu0 %v2926
        %v2962 = vpop.f32.mrb[0].mxu0
        %v2963 = vadd.f32 0.0, %v2962
        %v2964 = vpop.f32.mrb[0].mxu0
        %v2965 = vadd.f32 0.0, %v2964
        %v2966 = vpop.f32.mrb[0].mxu0
        %v2967 = vpop.f32.mrb[0].mxu0
        %2968 = vdwg.mxu0
        %2969 = vmatprep.subr.bf16.mxu0 %v2918
        %2970 = vmatpush1.bf16.msra.mxu0 %v2917
        %2971 = vmatprep.subr.bf16.mxu0 0
        %2972 = vmatpush1.bf16.msra.mxu0 0
        %2973 = vmatprep.subr.bf16.mxu0 0
        %2974 = vmatpush1.bf16.msra.mxu0 0
        %2975 = vmatprep.subr.bf16.mxu0 0
        %2976 = vmatpush1.bf16.msra.mxu0 0
        %2977 = vmatprep.subr.bf16.mxu0 0
        %2978 = vmatpush1.bf16.msra.mxu0 0
        %2979 = vmatprep.subr.bf16.mxu0 0
        %2980 = vmatpush1.bf16.msra.mxu0 0
        %2981 = vmatprep.subr.bf16.mxu0 0
        %2982 = vmatpush1.bf16.msra.mxu0 0
        %2983 = vmatprep.subr.bf16.mxu0 0
        %2984 = vmatpush1.bf16.msra.mxu0 0
        %2985 = vmatprep.subr.bf16.mxu0 0
        %2986 = vmatpush1.bf16.msra.mxu0 0
        %2987 = vmatprep.subr.bf16.mxu0 0
        %2988 = vmatpush1.bf16.msra.mxu0 0
        %2989 = vmatprep.subr.bf16.mxu0 0
        %2990 = vmatpush1.bf16.msra.mxu0 0
        %2991 = vmatprep.subr.bf16.mxu0 0
        %2992 = vmatpush1.bf16.msra.mxu0 0
        %2993 = vmatprep.subr.bf16.mxu0 0
        %2994 = vmatpush1.bf16.msra.mxu0 0
        %2995 = vmatprep.subr.bf16.mxu0 0
        %2996 = vmatpush1.bf16.msra.mxu0 0
        %2997 = vmatprep.subr.bf16.mxu0 0
        %2998 = vmatpush1.bf16.msra.mxu0 0
        %2999 = vmatprep.subr.bf16.mxu0 0
        %3000 = vmatpush1.bf16.msra.mxu0 0
        %3001 = vmatprep.mubr.bf16.mxu0 0
        %3002 = vmatmul.mubr.bf16.gmra.mrb[0].mxu0 %v2926
        %v3003 = vpop.f32.mrb[0].mxu0
        %v3004 = vadd.f32 0.0, %v3003
        %v3005 = vpop.f32.mrb[0].mxu0
        %v3006 = vadd.f32 0.0, %v3005
        %v3007 = vpop.f32.mrb[0].mxu0
        %v3008 = vpop.f32.mrb[0].mxu0
        %3009 = vdwg.mxu0
        %3010 = vmatprep.subr.bf16.mxu0 0
        %3011 = vmatpush1.bf16.msra.mxu0 %v2919
        %3012 = vmatprep.subr.bf16.mxu0 0
        %3013 = vmatpush1.bf16.msra.mxu0 0
        %3014 = vmatprep.subr.bf16.mxu0 0
        %3015 = vmatpush1.bf16.msra.mxu0 0
        %3016 = vmatprep.subr.bf16.mxu0 0
        %3017 = vmatpush1.bf16.msra.mxu0 0
        %3018 = vmatprep.subr.bf16.mxu0 0
        %3019 = vmatpush1.bf16.msra.mxu0 0
        %3020 = vmatprep.subr.bf16.mxu0 0
        %3021 = vmatpush1.bf16.msra.mxu0 0
        %3022 = vmatprep.subr.bf16.mxu0 0
        %3023 = vmatpush1.bf16.msra.mxu0 0
        %3024 = vmatprep.subr.bf16.mxu0 0
        %3025 = vmatpush1.bf16.msra.mxu0 0
        %3026 = vmatprep.subr.bf16.mxu0 0
        %3027 = vmatpush1.bf16.msra.mxu0 0
        %3028 = vmatprep.subr.bf16.mxu0 0
        %3029 = vmatpush1.bf16.msra.mxu0 0
        %3030 = vmatprep.subr.bf16.mxu0 0
        %3031 = vmatpush1.bf16.msra.mxu0 0
        %3032 = vmatprep.subr.bf16.mxu0 0
        %3033 = vmatpush1.bf16.msra.mxu0 0
        %3034 = vmatprep.subr.bf16.mxu0 0
        %3035 = vmatpush1.bf16.msra.mxu0 0
        %3036 = vmatprep.subr.bf16.mxu0 0
        %3037 = vmatpush1.bf16.msra.mxu0 0
        %3038 = vmatprep.subr.bf16.mxu0 0
        %3039 = vmatpush1.bf16.msra.mxu0 0
        %3040 = vmatprep.subr.bf16.mxu0 0
        %3041 = vmatpush1.bf16.msra.mxu0 0
        %3042 = vmatprep.mubr.bf16.mxu0 0
        %3043 = vmatmul.mubr.bf16.gmra.mrb[0].mxu0 %v2926
        %v3044 = vpop.f32.mrb[0].mxu0
        %v3045 = vadd.f32 0.0, %v3044
        %v3046 = vpop.f32.mrb[0].mxu0
        %v3047 = vpop.f32.mrb[0].mxu0
        %v3048 = vpop.f32.mrb[0].mxu0
        %3049 = vdwg.mxu0
        %v3056 = vunpack.c.l.b16 %v2841
        %v3057 = vunpack.c.h.b16 %v2841
        %v3058 = vunpack.c.l.b16 %v2842
        %v3059 = vunpack.c.h.b16 %v2842
        %v3060 = vunpack.c.l.b16 %v2843
        %v3061 = vunpack.c.l.b16 %v2844
        %v3062 = vunpack.c.h.b16 %v2844
        %v3063 = vunpack.c.l.b16 %v2845
        %v3064 = vunpack.c.h.b16 %v2845
        %v3065 = vunpack.c.l.b16 %v2846
        %v3066 = vpack.c.b16 %v3061, %v3056
        %v3067 = vpack.c.b16 %v3062, %v3057
        %v3068 = vpack.c.b16 %v3063, %v3058
        %v3069 = vpack.c.b16 %v3064, %v3059
        %v3070 = vpack.c.b16 %v3065, %v3060
        %v3077 = vsel %vm1539, %v2892, 0
        %3079 = vmatprep.subr.bf16.mxu0 %v3067
        %3080 = vmatpush1.bf16.msra.mxu0 %v3066
        %3081 = vmatprep.subr.bf16.mxu0 0
        %3082 = vmatpush1.bf16.msra.mxu0 0
        %3083 = vmatprep.subr.bf16.mxu0 0
        %3084 = vmatpush1.bf16.msra.mxu0 0
        %3085 = vmatprep.subr.bf16.mxu0 0
        %3086 = vmatpush1.bf16.msra.mxu0 0
        %3087 = vmatprep.subr.bf16.mxu0 0
        %3088 = vmatpush1.bf16.msra.mxu0 0
        %3089 = vmatprep.subr.bf16.mxu0 0
        %3090 = vmatpush1.bf16.msra.mxu0 0
        %3091 = vmatprep.subr.bf16.mxu0 0
        %3092 = vmatpush1.bf16.msra.mxu0 0
        %3093 = vmatprep.subr.bf16.mxu0 0
        %3094 = vmatpush1.bf16.msra.mxu0 0
        %3095 = vmatprep.subr.bf16.mxu0 0
        %3096 = vmatpush1.bf16.msra.mxu0 0
        %3097 = vmatprep.subr.bf16.mxu0 0
        %3098 = vmatpush1.bf16.msra.mxu0 0
        %3099 = vmatprep.subr.bf16.mxu0 0
        %3100 = vmatpush1.bf16.msra.mxu0 0
        %3101 = vmatprep.subr.bf16.mxu0 0
        %3102 = vmatpush1.bf16.msra.mxu0 0
        %3103 = vmatprep.subr.bf16.mxu0 0
        %3104 = vmatpush1.bf16.msra.mxu0 0
        %3105 = vmatprep.subr.bf16.mxu0 0
        %3106 = vmatpush1.bf16.msra.mxu0 0
        %3107 = vmatprep.subr.bf16.mxu0 0
        %3108 = vmatpush1.bf16.msra.mxu0 0
        %3109 = vmatprep.subr.bf16.mxu0 0
        %3110 = vmatpush1.bf16.msra.mxu0 0
        %3111 = vmatprep.mubr.bf16.mxu0 0
        %3112 = vmatmul.mubr.bf16.gmra.mrb[0].mxu0 %v3077
        %v3113 = vpop.f32.mrb[0].mxu0
        %v3114 = vadd.f32 0.0, %v3113
        %v3115 = vpop.f32.mrb[0].mxu0
        %v3116 = vadd.f32 0.0, %v3115
        %v3117 = vpop.f32.mrb[0].mxu0
        %v3118 = vpop.f32.mrb[0].mxu0
        %3119 = vdwg.mxu0
        %3120 = vmatprep.subr.bf16.mxu0 %v3069
        %3121 = vmatpush1.bf16.msra.mxu0 %v3068
        %3122 = vmatprep.subr.bf16.mxu0 0
        %3123 = vmatpush1.bf16.msra.mxu0 0
        %3124 = vmatprep.subr.bf16.mxu0 0
        %3125 = vmatpush1.bf16.msra.mxu0 0
        %3126 = vmatprep.subr.bf16.mxu0 0
        %3127 = vmatpush1.bf16.msra.mxu0 0
        %3128 = vmatprep.subr.bf16.mxu0 0
        %3129 = vmatpush1.bf16.msra.mxu0 0
        %3130 = vmatprep.subr.bf16.mxu0 0
        %3131 = vmatpush1.bf16.msra.mxu0 0
        %3132 = vmatprep.subr.bf16.mxu0 0
        %3133 = vmatpush1.bf16.msra.mxu0 0
        %3134 = vmatprep.subr.bf16.mxu0 0
        %3135 = vmatpush1.bf16.msra.mxu0 0
        %3136 = vmatprep.subr.bf16.mxu0 0
        %3137 = vmatpush1.bf16.msra.mxu0 0
        %3138 = vmatprep.subr.bf16.mxu0 0
        %3139 = vmatpush1.bf16.msra.mxu0 0
        %3140 = vmatprep.subr.bf16.mxu0 0
        %3141 = vmatpush1.bf16.msra.mxu0 0
        %3142 = vmatprep.subr.bf16.mxu0 0
        %3143 = vmatpush1.bf16.msra.mxu0 0
        %3144 = vmatprep.subr.bf16.mxu0 0
        %3145 = vmatpush1.bf16.msra.mxu0 0
        %3146 = vmatprep.subr.bf16.mxu0 0
        %3147 = vmatpush1.bf16.msra.mxu0 0
        %3148 = vmatprep.subr.bf16.mxu0 0
        %3149 = vmatpush1.bf16.msra.mxu0 0
        %3150 = vmatprep.subr.bf16.mxu0 0
        %3151 = vmatpush1.bf16.msra.mxu0 0
        %3152 = vmatprep.mubr.bf16.mxu0 0
        %3153 = vmatmul.mubr.bf16.gmra.mrb[0].mxu0 %v3077
        %v3154 = vpop.f32.mrb[0].mxu0
        %v3155 = vadd.f32 0.0, %v3154
        %v3156 = vpop.f32.mrb[0].mxu0
        %v3157 = vadd.f32 0.0, %v3156
        %v3158 = vpop.f32.mrb[0].mxu0
        %v3159 = vpop.f32.mrb[0].mxu0
        %3160 = vdwg.mxu0
        %3161 = vmatprep.subr.bf16.mxu0 0
        %3162 = vmatpush1.bf16.msra.mxu0 %v3070
        %3163 = vmatprep.subr.bf16.mxu0 0
        %3164 = vmatpush1.bf16.msra.mxu0 0
        %3165 = vmatprep.subr.bf16.mxu0 0
        %3166 = vmatpush1.bf16.msra.mxu0 0
        %3167 = vmatprep.subr.bf16.mxu0 0
        %3168 = vmatpush1.bf16.msra.mxu0 0
        %3169 = vmatprep.subr.bf16.mxu0 0
        %3170 = vmatpush1.bf16.msra.mxu0 0
        %3171 = vmatprep.subr.bf16.mxu0 0
        %3172 = vmatpush1.bf16.msra.mxu0 0
        %3173 = vmatprep.subr.bf16.mxu0 0
        %3174 = vmatpush1.bf16.msra.mxu0 0
        %3175 = vmatprep.subr.bf16.mxu0 0
        %3176 = vmatpush1.bf16.msra.mxu0 0
        %3177 = vmatprep.subr.bf16.mxu0 0
        %3178 = vmatpush1.bf16.msra.mxu0 0
        %3179 = vmatprep.subr.bf16.mxu0 0
        %3180 = vmatpush1.bf16.msra.mxu0 0
        %3181 = vmatprep.subr.bf16.mxu0 0
        %3182 = vmatpush1.bf16.msra.mxu0 0
        %3183 = vmatprep.subr.bf16.mxu0 0
        %3184 = vmatpush1.bf16.msra.mxu0 0
        %3185 = vmatprep.subr.bf16.mxu0 0
        %3186 = vmatpush1.bf16.msra.mxu0 0
        %3187 = vmatprep.subr.bf16.mxu0 0
        %3188 = vmatpush1.bf16.msra.mxu0 0
        %3189 = vmatprep.subr.bf16.mxu0 0
        %3190 = vmatpush1.bf16.msra.mxu0 0
        %3191 = vmatprep.subr.bf16.mxu0 0
        %3192 = vmatpush1.bf16.msra.mxu0 0
        %3193 = vmatprep.mubr.bf16.mxu0 0
        %3194 = vmatmul.mubr.bf16.gmra.mrb[0].mxu0 %v3077
        %v3195 = vpop.f32.mrb[0].mxu0
        %v3196 = vadd.f32 0.0, %v3195
        %v3197 = vpop.f32.mrb[0].mxu0
        %v3198 = vpop.f32.mrb[0].mxu0
        %v3199 = vpop.f32.mrb[0].mxu0
        %3200 = vdwg.mxu0
        %v3207 = vunpack.c.l.b16 %v2847
        %v3208 = vunpack.c.h.b16 %v2847
        %v3209 = vunpack.c.l.b16 %v2848
        %v3210 = vunpack.c.h.b16 %v2848
        %v3211 = vunpack.c.l.b16 %v2849
        %v3212 = vunpack.c.l.b16 %v2850
        %v3213 = vunpack.c.h.b16 %v2850
        %v3214 = vunpack.c.l.b16 %v2851
        %v3215 = vunpack.c.h.b16 %v2851
        %v3216 = vunpack.c.l.b16 %v2852
        %v3217 = vpack.c.b16 %v3212, %v3207
        %v3218 = vpack.c.b16 %v3213, %v3208
        %v3219 = vpack.c.b16 %v3214, %v3209
        %v3220 = vpack.c.b16 %v3215, %v3210
        %v3221 = vpack.c.b16 %v3216, %v3211
        %v3228 = vsel %vm1539, %v2893, 0
        %3230 = vmatprep.subr.bf16.mxu0 %v3218
        %3231 = vmatpush1.bf16.msra.mxu0 %v3217
        %3232 = vmatprep.subr.bf16.mxu0 0
        %3233 = vmatpush1.bf16.msra.mxu0 0
        %3234 = vmatprep.subr.bf16.mxu0 0
        %3235 = vmatpush1.bf16.msra.mxu0 0
        %3236 = vmatprep.subr.bf16.mxu0 0
        %3237 = vmatpush1.bf16.msra.mxu0 0
        %3238 = vmatprep.subr.bf16.mxu0 0
        %3239 = vmatpush1.bf16.msra.mxu0 0
        %3240 = vmatprep.subr.bf16.mxu0 0
        %3241 = vmatpush1.bf16.msra.mxu0 0
        %3242 = vmatprep.subr.bf16.mxu0 0
        %3243 = vmatpush1.bf16.msra.mxu0 0
        %3244 = vmatprep.subr.bf16.mxu0 0
        %3245 = vmatpush1.bf16.msra.mxu0 0
        %3246 = vmatprep.subr.bf16.mxu0 0
        %3247 = vmatpush1.bf16.msra.mxu0 0
        %3248 = vmatprep.subr.bf16.mxu0 0
        %3249 = vmatpush1.bf16.msra.mxu0 0
        %3250 = vmatprep.subr.bf16.mxu0 0
        %3251 = vmatpush1.bf16.msra.mxu0 0
        %3252 = vmatprep.subr.bf16.mxu0 0
        %3253 = vmatpush1.bf16.msra.mxu0 0
        %3254 = vmatprep.subr.bf16.mxu0 0
        %3255 = vmatpush1.bf16.msra.mxu0 0
        %3256 = vmatprep.subr.bf16.mxu0 0
        %3257 = vmatpush1.bf16.msra.mxu0 0
        %3258 = vmatprep.subr.bf16.mxu0 0
        %3259 = vmatpush1.bf16.msra.mxu0 0
        %3260 = vmatprep.subr.bf16.mxu0 0
        %3261 = vmatpush1.bf16.msra.mxu0 0
        %3262 = vmatprep.mubr.bf16.mxu0 0
        %3263 = vmatmul.mubr.bf16.gmra.mrb[0].mxu0 %v3228
        %v3264 = vpop.f32.mrb[0].mxu0
        %v3265 = vadd.f32 0.0, %v3264
        %v3266 = vpop.f32.mrb[0].mxu0
        %v3267 = vadd.f32 0.0, %v3266
        %v3268 = vpop.f32.mrb[0].mxu0
        %v3269 = vpop.f32.mrb[0].mxu0
        %3270 = vdwg.mxu0
        %3271 = vmatprep.subr.bf16.mxu0 %v3220
        %3272 = vmatpush1.bf16.msra.mxu0 %v3219
        %3273 = vmatprep.subr.bf16.mxu0 0
        %3274 = vmatpush1.bf16.msra.mxu0 0
        %3275 = vmatprep.subr.bf16.mxu0 0
        %3276 = vmatpush1.bf16.msra.mxu0 0
        %3277 = vmatprep.subr.bf16.mxu0 0
        %3278 = vmatpush1.bf16.msra.mxu0 0
        %3279 = vmatprep.subr.bf16.mxu0 0
        %3280 = vmatpush1.bf16.msra.mxu0 0
        %3281 = vmatprep.subr.bf16.mxu0 0
        %3282 = vmatpush1.bf16.msra.mxu0 0
        %3283 = vmatprep.subr.bf16.mxu0 0
        %3284 = vmatpush1.bf16.msra.mxu0 0
        %3285 = vmatprep.subr.bf16.mxu0 0
        %3286 = vmatpush1.bf16.msra.mxu0 0
        %3287 = vmatprep.subr.bf16.mxu0 0
        %3288 = vmatpush1.bf16.msra.mxu0 0
        %3289 = vmatprep.subr.bf16.mxu0 0
        %3290 = vmatpush1.bf16.msra.mxu0 0
        %3291 = vmatprep.subr.bf16.mxu0 0
        %3292 = vmatpush1.bf16.msra.mxu0 0
        %3293 = vmatprep.subr.bf16.mxu0 0
        %3294 = vmatpush1.bf16.msra.mxu0 0
        %3295 = vmatprep.subr.bf16.mxu0 0
        %3296 = vmatpush1.bf16.msra.mxu0 0
        %3297 = vmatprep.subr.bf16.mxu0 0
        %3298 = vmatpush1.bf16.msra.mxu0 0
        %3299 = vmatprep.subr.bf16.mxu0 0
        %3300 = vmatpush1.bf16.msra.mxu0 0
        %3301 = vmatprep.subr.bf16.mxu0 0
        %3302 = vmatpush1.bf16.msra.mxu0 0
        %3303 = vmatprep.mubr.bf16.mxu0 0
        %3304 = vmatmul.mubr.bf16.gmra.mrb[0].mxu0 %v3228
        %v3305 = vpop.f32.mrb[0].mxu0
        %v3306 = vadd.f32 0.0, %v3305
        %v3307 = vpop.f32.mrb[0].mxu0
        %v3308 = vadd.f32 0.0, %v3307
        %v3309 = vpop.f32.mrb[0].mxu0
        %v3310 = vpop.f32.mrb[0].mxu0
        %3311 = vdwg.mxu0
        %3312 = vmatprep.subr.bf16.mxu0 0
        %3313 = vmatpush1.bf16.msra.mxu0 %v3221
        %3314 = vmatprep.subr.bf16.mxu0 0
        %3315 = vmatpush1.bf16.msra.mxu0 0
        %3316 = vmatprep.subr.bf16.mxu0 0
        %3317 = vmatpush1.bf16.msra.mxu0 0
        %3318 = vmatprep.subr.bf16.mxu0 0
        %3319 = vmatpush1.bf16.msra.mxu0 0
        %3320 = vmatprep.subr.bf16.mxu0 0
        %3321 = vmatpush1.bf16.msra.mxu0 0
        %3322 = vmatprep.subr.bf16.mxu0 0
        %3323 = vmatpush1.bf16.msra.mxu0 0
        %3324 = vmatprep.subr.bf16.mxu0 0
        %3325 = vmatpush1.bf16.msra.mxu0 0
        %3326 = vmatprep.subr.bf16.mxu0 0
        %3327 = vmatpush1.bf16.msra.mxu0 0
        %3328 = vmatprep.subr.bf16.mxu0 0
        %3329 = vmatpush1.bf16.msra.mxu0 0
        %3330 = vmatprep.subr.bf16.mxu0 0
        %3331 = vmatpush1.bf16.msra.mxu0 0
        %3332 = vmatprep.subr.bf16.mxu0 0
        %3333 = vmatpush1.bf16.msra.mxu0 0
        %3334 = vmatprep.subr.bf16.mxu0 0
        %3335 = vmatpush1.bf16.msra.mxu0 0
        %3336 = vmatprep.subr.bf16.mxu0 0
        %3337 = vmatpush1.bf16.msra.mxu0 0
        %3338 = vmatprep.subr.bf16.mxu0 0
        %3339 = vmatpush1.bf16.msra.mxu0 0
        %3340 = vmatprep.subr.bf16.mxu0 0
        %3341 = vmatpush1.bf16.msra.mxu0 0
        %3342 = vmatprep.subr.bf16.mxu0 0
        %3343 = vmatpush1.bf16.msra.mxu0 0
        %3344 = vmatprep.mubr.bf16.mxu0 0
        %3345 = vmatmul.mubr.bf16.gmra.mrb[0].mxu0 %v3228
        %v3346 = vpop.f32.mrb[0].mxu0
        %v3347 = vadd.f32 0.0, %v3346
        %v3348 = vpop.f32.mrb[0].mxu0
        %v3349 = vpop.f32.mrb[0].mxu0
        %v3350 = vpop.f32.mrb[0].mxu0
        %3351 = vdwg.mxu0
        %v3358 = vunpack.c.l.b16 %v2853
        %v3359 = vunpack.c.h.b16 %v2853
        %v3360 = vunpack.c.l.b16 %v2854
        %v3361 = vunpack.c.h.b16 %v2854
        %v3362 = vunpack.c.l.b16 %v2855
        %v3363 = vunpack.c.l.b16 %v2856
        %v3364 = vunpack.c.h.b16 %v2856
        %v3365 = vunpack.c.l.b16 %v2857
        %v3366 = vunpack.c.h.b16 %v2857
        %v3367 = vunpack.c.l.b16 %v2858
        %v3368 = vpack.c.b16 %v3363, %v3358
        %v3369 = vpack.c.b16 %v3364, %v3359
        %v3370 = vpack.c.b16 %v3365, %v3360
        %v3371 = vpack.c.b16 %v3366, %v3361
        %v3372 = vpack.c.b16 %v3367, %v3362
        %v3379 = vsel %vm1539, %v2894, 0
        %3381 = vmatprep.subr.bf16.mxu0 %v3369
        %3382 = vmatpush1.bf16.msra.mxu0 %v3368
        %3383 = vmatprep.subr.bf16.mxu0 0
        %3384 = vmatpush1.bf16.msra.mxu0 0
        %3385 = vmatprep.subr.bf16.mxu0 0
        %3386 = vmatpush1.bf16.msra.mxu0 0
        %3387 = vmatprep.subr.bf16.mxu0 0
        %3388 = vmatpush1.bf16.msra.mxu0 0
        %3389 = vmatprep.subr.bf16.mxu0 0
        %3390 = vmatpush1.bf16.msra.mxu0 0
        %3391 = vmatprep.subr.bf16.mxu0 0
        %3392 = vmatpush1.bf16.msra.mxu0 0
        %3393 = vmatprep.subr.bf16.mxu0 0
        %3394 = vmatpush1.bf16.msra.mxu0 0
        %3395 = vmatprep.subr.bf16.mxu0 0
        %3396 = vmatpush1.bf16.msra.mxu0 0
        %3397 = vmatprep.subr.bf16.mxu0 0
        %3398 = vmatpush1.bf16.msra.mxu0 0
        %3399 = vmatprep.subr.bf16.mxu0 0
        %3400 = vmatpush1.bf16.msra.mxu0 0
        %3401 = vmatprep.subr.bf16.mxu0 0
        %3402 = vmatpush1.bf16.msra.mxu0 0
        %3403 = vmatprep.subr.bf16.mxu0 0
        %3404 = vmatpush1.bf16.msra.mxu0 0
        %3405 = vmatprep.subr.bf16.mxu0 0
        %3406 = vmatpush1.bf16.msra.mxu0 0
        %3407 = vmatprep.subr.bf16.mxu0 0
        %3408 = vmatpush1.bf16.msra.mxu0 0
        %3409 = vmatprep.subr.bf16.mxu0 0
        %3410 = vmatpush1.bf16.msra.mxu0 0
        %3411 = vmatprep.subr.bf16.mxu0 0
        %3412 = vmatpush1.bf16.msra.mxu0 0
        %3413 = vmatprep.mubr.bf16.mxu0 0
        %3414 = vmatmul.mubr.bf16.gmra.mrb[0].mxu0 %v3379
        %v3415 = vpop.f32.mrb[0].mxu0
        %v3416 = vadd.f32 0.0, %v3415
        %v3417 = vpop.f32.mrb[0].mxu0
        %v3418 = vadd.f32 0.0, %v3417
        %v3419 = vpop.f32.mrb[0].mxu0
        %v3420 = vpop.f32.mrb[0].mxu0
        %3421 = vdwg.mxu0
        %3422 = vmatprep.subr.bf16.mxu0 %v3371
        %3423 = vmatpush1.bf16.msra.mxu0 %v3370
        %3424 = vmatprep.subr.bf16.mxu0 0
        %3425 = vmatpush1.bf16.msra.mxu0 0
        %3426 = vmatprep.subr.bf16.mxu0 0
        %3427 = vmatpush1.bf16.msra.mxu0 0
        %3428 = vmatprep.subr.bf16.mxu0 0
        %3429 = vmatpush1.bf16.msra.mxu0 0
        %3430 = vmatprep.subr.bf16.mxu0 0
        %3431 = vmatpush1.bf16.msra.mxu0 0
        %3432 = vmatprep.subr.bf16.mxu0 0
        %3433 = vmatpush1.bf16.msra.mxu0 0
        %3434 = vmatprep.subr.bf16.mxu0 0
        %3435 = vmatpush1.bf16.msra.mxu0 0
        %3436 = vmatprep.subr.bf16.mxu0 0
        %3437 = vmatpush1.bf16.msra.mxu0 0
        %3438 = vmatprep.subr.bf16.mxu0 0
        %3439 = vmatpush1.bf16.msra.mxu0 0
        %3440 = vmatprep.subr.bf16.mxu0 0
        %3441 = vmatpush1.bf16.msra.mxu0 0
        %3442 = vmatprep.subr.bf16.mxu0 0
        %3443 = vmatpush1.bf16.msra.mxu0 0
        %3444 = vmatprep.subr.bf16.mxu0 0
        %3445 = vmatpush1.bf16.msra.mxu0 0
        %3446 = vmatprep.subr.bf16.mxu0 0
        %3447 = vmatpush1.bf16.msra.mxu0 0
        %3448 = vmatprep.subr.bf16.mxu0 0
        %3449 = vmatpush1.bf16.msra.mxu0 0
        %3450 = vmatprep.subr.bf16.mxu0 0
        %3451 = vmatpush1.bf16.msra.mxu0 0
        %3452 = vmatprep.subr.bf16.mxu0 0
        %3453 = vmatpush1.bf16.msra.mxu0 0
        %3454 = vmatprep.mubr.bf16.mxu0 0
        %3455 = vmatmul.mubr.bf16.gmra.mrb[0].mxu0 %v3379
        %v3456 = vpop.f32.mrb[0].mxu0
        %v3457 = vadd.f32 0.0, %v3456
        %v3458 = vpop.f32.mrb[0].mxu0
        %v3459 = vadd.f32 0.0, %v3458
        %v3460 = vpop.f32.mrb[0].mxu0
        %v3461 = vpop.f32.mrb[0].mxu0
        %3462 = vdwg.mxu0
        %3463 = vmatprep.subr.bf16.mxu0 0
        %3464 = vmatpush1.bf16.msra.mxu0 %v3372
        %3465 = vmatprep.subr.bf16.mxu0 0
        %3466 = vmatpush1.bf16.msra.mxu0 0
        %3467 = vmatprep.subr.bf16.mxu0 0
        %3468 = vmatpush1.bf16.msra.mxu0 0
        %3469 = vmatprep.subr.bf16.mxu0 0
        %3470 = vmatpush1.bf16.msra.mxu0 0
        %3471 = vmatprep.subr.bf16.mxu0 0
        %3472 = vmatpush1.bf16.msra.mxu0 0
        %3473 = vmatprep.subr.bf16.mxu0 0
        %3474 = vmatpush1.bf16.msra.mxu0 0
        %3475 = vmatprep.subr.bf16.mxu0 0
        %3476 = vmatpush1.bf16.msra.mxu0 0
        %3477 = vmatprep.subr.bf16.mxu0 0
        %3478 = vmatpush1.bf16.msra.mxu0 0
        %3479 = vmatprep.subr.bf16.mxu0 0
        %3480 = vmatpush1.bf16.msra.mxu0 0
        %3481 = vmatprep.subr.bf16.mxu0 0
        %3482 = vmatpush1.bf16.msra.mxu0 0
        %3483 = vmatprep.subr.bf16.mxu0 0
        %3484 = vmatpush1.bf16.msra.mxu0 0
        %3485 = vmatprep.subr.bf16.mxu0 0
        %3486 = vmatpush1.bf16.msra.mxu0 0
        %3487 = vmatprep.subr.bf16.mxu0 0
        %3488 = vmatpush1.bf16.msra.mxu0 0
        %3489 = vmatprep.subr.bf16.mxu0 0
        %3490 = vmatpush1.bf16.msra.mxu0 0
        %3491 = vmatprep.subr.bf16.mxu0 0
        %3492 = vmatpush1.bf16.msra.mxu0 0
        %3493 = vmatprep.subr.bf16.mxu0 0
        %3494 = vmatpush1.bf16.msra.mxu0 0
        %3495 = vmatprep.mubr.bf16.mxu0 0
        %3496 = vmatmul.mubr.bf16.gmra.mrb[0].mxu0 %v3379
        %v3497 = vpop.f32.mrb[0].mxu0
        %v3498 = vadd.f32 0.0, %v3497
        %v3499 = vpop.f32.mrb[0].mxu0
        %v3500 = vpop.f32.mrb[0].mxu0
        %v3501 = vpop.f32.mrb[0].mxu0
        %3502 = vdwg.mxu0
        %v3509 = vunpack.c.l.b16 %v2859
        %v3510 = vunpack.c.h.b16 %v2859
        %v3511 = vunpack.c.l.b16 %v2860
        %v3512 = vunpack.c.h.b16 %v2860
        %v3513 = vunpack.c.l.b16 %v2861
        %v3514 = vunpack.c.l.b16 %v2862
        %v3515 = vunpack.c.h.b16 %v2862
        %v3516 = vunpack.c.l.b16 %v2863
        %v3517 = vunpack.c.h.b16 %v2863
        %v3518 = vunpack.c.l.b16 %v2864
        %v3519 = vpack.c.b16 %v3514, %v3509
        %v3520 = vpack.c.b16 %v3515, %v3510
        %v3521 = vpack.c.b16 %v3516, %v3511
        %v3522 = vpack.c.b16 %v3517, %v3512
        %v3523 = vpack.c.b16 %v3518, %v3513
        %v3530 = vsel %vm1539, %v2895, 0
        %3532 = vmatprep.subr.bf16.mxu0 %v3520
        %3533 = vmatpush1.bf16.msra.mxu0 %v3519
        %3534 = vmatprep.subr.bf16.mxu0 0
        %3535 = vmatpush1.bf16.msra.mxu0 0
        %3536 = vmatprep.subr.bf16.mxu0 0
        %3537 = vmatpush1.bf16.msra.mxu0 0
        %3538 = vmatprep.subr.bf16.mxu0 0
        %3539 = vmatpush1.bf16.msra.mxu0 0
        %3540 = vmatprep.subr.bf16.mxu0 0
        %3541 = vmatpush1.bf16.msra.mxu0 0
        %3542 = vmatprep.subr.bf16.mxu0 0
        %3543 = vmatpush1.bf16.msra.mxu0 0
        %3544 = vmatprep.subr.bf16.mxu0 0
        %3545 = vmatpush1.bf16.msra.mxu0 0
        %3546 = vmatprep.subr.bf16.mxu0 0
        %3547 = vmatpush1.bf16.msra.mxu0 0
        %3548 = vmatprep.subr.bf16.mxu0 0
        %3549 = vmatpush1.bf16.msra.mxu0 0
        %3550 = vmatprep.subr.bf16.mxu0 0
        %3551 = vmatpush1.bf16.msra.mxu0 0
        %3552 = vmatprep.subr.bf16.mxu0 0
        %3553 = vmatpush1.bf16.msra.mxu0 0
        %3554 = vmatprep.subr.bf16.mxu0 0
        %3555 = vmatpush1.bf16.msra.mxu0 0
        %3556 = vmatprep.subr.bf16.mxu0 0
        %3557 = vmatpush1.bf16.msra.mxu0 0
        %3558 = vmatprep.subr.bf16.mxu0 0
        %3559 = vmatpush1.bf16.msra.mxu0 0
        %3560 = vmatprep.subr.bf16.mxu0 0
        %3561 = vmatpush1.bf16.msra.mxu0 0
        %3562 = vmatprep.subr.bf16.mxu0 0
        %3563 = vmatpush1.bf16.msra.mxu0 0
        %3564 = vmatprep.mubr.bf16.mxu0 0
        %3565 = vmatmul.mubr.bf16.gmra.mrb[0].mxu0 %v3530
        %v3566 = vpop.f32.mrb[0].mxu0
        %v3567 = vadd.f32 0.0, %v3566
        %v3568 = vpop.f32.mrb[0].mxu0
        %v3569 = vadd.f32 0.0, %v3568
        %v3570 = vpop.f32.mrb[0].mxu0
        %v3571 = vpop.f32.mrb[0].mxu0
        %3572 = vdwg.mxu0
        %3573 = vmatprep.subr.bf16.mxu0 %v3522
        %3574 = vmatpush1.bf16.msra.mxu0 %v3521
        %3575 = vmatprep.subr.bf16.mxu0 0
        %3576 = vmatpush1.bf16.msra.mxu0 0
        %3577 = vmatprep.subr.bf16.mxu0 0
        %3578 = vmatpush1.bf16.msra.mxu0 0
        %3579 = vmatprep.subr.bf16.mxu0 0
        %3580 = vmatpush1.bf16.msra.mxu0 0
        %3581 = vmatprep.subr.bf16.mxu0 0
        %3582 = vmatpush1.bf16.msra.mxu0 0
        %3583 = vmatprep.subr.bf16.mxu0 0
        %3584 = vmatpush1.bf16.msra.mxu0 0
        %3585 = vmatprep.subr.bf16.mxu0 0
        %3586 = vmatpush1.bf16.msra.mxu0 0
        %3587 = vmatprep.subr.bf16.mxu0 0
        %3588 = vmatpush1.bf16.msra.mxu0 0
        %3589 = vmatprep.subr.bf16.mxu0 0
        %3590 = vmatpush1.bf16.msra.mxu0 0
        %3591 = vmatprep.subr.bf16.mxu0 0
        %3592 = vmatpush1.bf16.msra.mxu0 0
        %3593 = vmatprep.subr.bf16.mxu0 0
        %3594 = vmatpush1.bf16.msra.mxu0 0
        %3595 = vmatprep.subr.bf16.mxu0 0
        %3596 = vmatpush1.bf16.msra.mxu0 0
        %3597 = vmatprep.subr.bf16.mxu0 0
        %3598 = vmatpush1.bf16.msra.mxu0 0
        %3599 = vmatprep.subr.bf16.mxu0 0
        %3600 = vmatpush1.bf16.msra.mxu0 0
        %3601 = vmatprep.subr.bf16.mxu0 0
        %3602 = vmatpush1.bf16.msra.mxu0 0
        %3603 = vmatprep.subr.bf16.mxu0 0
        %3604 = vmatpush1.bf16.msra.mxu0 0
        %3605 = vmatprep.mubr.bf16.mxu0 0
        %3606 = vmatmul.mubr.bf16.gmra.mrb[0].mxu0 %v3530
        %v3607 = vpop.f32.mrb[0].mxu0
        %v3608 = vadd.f32 0.0, %v3607
        %v3609 = vpop.f32.mrb[0].mxu0
        %v3610 = vadd.f32 0.0, %v3609
        %v3611 = vpop.f32.mrb[0].mxu0
        %v3612 = vpop.f32.mrb[0].mxu0
        %3613 = vdwg.mxu0
        %3614 = vmatprep.subr.bf16.mxu0 0
        %3615 = vmatpush1.bf16.msra.mxu0 %v3523
        %3616 = vmatprep.subr.bf16.mxu0 0
        %3617 = vmatpush1.bf16.msra.mxu0 0
        %3618 = vmatprep.subr.bf16.mxu0 0
        %3619 = vmatpush1.bf16.msra.mxu0 0
        %3620 = vmatprep.subr.bf16.mxu0 0
        %3621 = vmatpush1.bf16.msra.mxu0 0
        %3622 = vmatprep.subr.bf16.mxu0 0
        %3623 = vmatpush1.bf16.msra.mxu0 0
        %3624 = vmatprep.subr.bf16.mxu0 0
        %3625 = vmatpush1.bf16.msra.mxu0 0
        %3626 = vmatprep.subr.bf16.mxu0 0
        %3627 = vmatpush1.bf16.msra.mxu0 0
        %3628 = vmatprep.subr.bf16.mxu0 0
        %3629 = vmatpush1.bf16.msra.mxu0 0
        %3630 = vmatprep.subr.bf16.mxu0 0
        %3631 = vmatpush1.bf16.msra.mxu0 0
        %3632 = vmatprep.subr.bf16.mxu0 0
        %3633 = vmatpush1.bf16.msra.mxu0 0
        %3634 = vmatprep.subr.bf16.mxu0 0
        %3635 = vmatpush1.bf16.msra.mxu0 0
        %3636 = vmatprep.subr.bf16.mxu0 0
        %3637 = vmatpush1.bf16.msra.mxu0 0
        %3638 = vmatprep.subr.bf16.mxu0 0
        %3639 = vmatpush1.bf16.msra.mxu0 0
        %3640 = vmatprep.subr.bf16.mxu0 0
        %3641 = vmatpush1.bf16.msra.mxu0 0
        %3642 = vmatprep.subr.bf16.mxu0 0
        %3643 = vmatpush1.bf16.msra.mxu0 0
        %3644 = vmatprep.subr.bf16.mxu0 0
        %3645 = vmatpush1.bf16.msra.mxu0 0
        %3646 = vmatprep.mubr.bf16.mxu0 0
        %3647 = vmatmul.mubr.bf16.gmra.mrb[0].mxu0 %v3530
        %v3648 = vpop.f32.mrb[0].mxu0
        %v3649 = vadd.f32 0.0, %v3648
        %v3650 = vpop.f32.mrb[0].mxu0
        %v3651 = vpop.f32.mrb[0].mxu0
        %v3652 = vpop.f32.mrb[0].mxu0
        %3653 = vdwg.mxu0
        %v3660 = vunpack.c.l.b16 %v2865
        %v3661 = vunpack.c.h.b16 %v2865
        %v3662 = vunpack.c.l.b16 %v2866
        %v3663 = vunpack.c.h.b16 %v2866
        %v3664 = vunpack.c.l.b16 %v2867
        %v3665 = vunpack.c.l.b16 %v2868
        %v3666 = vunpack.c.h.b16 %v2868
        %v3667 = vunpack.c.l.b16 %v2869
        %v3668 = vunpack.c.h.b16 %v2869
        %v3669 = vunpack.c.l.b16 %v2870
        %v3670 = vpack.c.b16 %v3665, %v3660
        %v3671 = vpack.c.b16 %v3666, %v3661
        %v3672 = vpack.c.b16 %v3667, %v3662
        %v3673 = vpack.c.b16 %v3668, %v3663
        %v3674 = vpack.c.b16 %v3669, %v3664
        %v3681 = vsel %vm1539, %v2896, 0
        %3683 = vmatprep.subr.bf16.mxu0 %v3671
        %3684 = vmatpush1.bf16.msra.mxu0 %v3670
        %3685 = vmatprep.subr.bf16.mxu0 0
        %3686 = vmatpush1.bf16.msra.mxu0 0
        %3687 = vmatprep.subr.bf16.mxu0 0
        %3688 = vmatpush1.bf16.msra.mxu0 0
        %3689 = vmatprep.subr.bf16.mxu0 0
        %3690 = vmatpush1.bf16.msra.mxu0 0
        %3691 = vmatprep.subr.bf16.mxu0 0
        %3692 = vmatpush1.bf16.msra.mxu0 0
        %3693 = vmatprep.subr.bf16.mxu0 0
        %3694 = vmatpush1.bf16.msra.mxu0 0
        %3695 = vmatprep.subr.bf16.mxu0 0
        %3696 = vmatpush1.bf16.msra.mxu0 0
        %3697 = vmatprep.subr.bf16.mxu0 0
        %3698 = vmatpush1.bf16.msra.mxu0 0
        %3699 = vmatprep.subr.bf16.mxu0 0
        %3700 = vmatpush1.bf16.msra.mxu0 0
        %3701 = vmatprep.subr.bf16.mxu0 0
        %3702 = vmatpush1.bf16.msra.mxu0 0
        %3703 = vmatprep.subr.bf16.mxu0 0
        %3704 = vmatpush1.bf16.msra.mxu0 0
        %3705 = vmatprep.subr.bf16.mxu0 0
        %3706 = vmatpush1.bf16.msra.mxu0 0
        %3707 = vmatprep.subr.bf16.mxu0 0
        %3708 = vmatpush1.bf16.msra.mxu0 0
        %3709 = vmatprep.subr.bf16.mxu0 0
        %3710 = vmatpush1.bf16.msra.mxu0 0
        %3711 = vmatprep.subr.bf16.mxu0 0
        %3712 = vmatpush1.bf16.msra.mxu0 0
        %3713 = vmatprep.subr.bf16.mxu0 0
        %3714 = vmatpush1.bf16.msra.mxu0 0
        %3715 = vmatprep.mubr.bf16.mxu0 0
        %3716 = vmatmul.mubr.bf16.gmra.mrb[0].mxu0 %v3681
        %v3717 = vpop.f32.mrb[0].mxu0
        %v3718 = vadd.f32 0.0, %v3717
        %v3719 = vpop.f32.mrb[0].mxu0
        %v3720 = vadd.f32 0.0, %v3719
        %v3721 = vpop.f32.mrb[0].mxu0
        %v3722 = vpop.f32.mrb[0].mxu0
        %3723 = vdwg.mxu0
        %3724 = vmatprep.subr.bf16.mxu0 %v3673
        %3725 = vmatpush1.bf16.msra.mxu0 %v3672
        %3726 = vmatprep.subr.bf16.mxu0 0
        %3727 = vmatpush1.bf16.msra.mxu0 0
        %3728 = vmatprep.subr.bf16.mxu0 0
        %3729 = vmatpush1.bf16.msra.mxu0 0
        %3730 = vmatprep.subr.bf16.mxu0 0
        %3731 = vmatpush1.bf16.msra.mxu0 0
        %3732 = vmatprep.subr.bf16.mxu0 0
        %3733 = vmatpush1.bf16.msra.mxu0 0
        %3734 = vmatprep.subr.bf16.mxu0 0
        %3735 = vmatpush1.bf16.msra.mxu0 0
        %3736 = vmatprep.subr.bf16.mxu0 0
        %3737 = vmatpush1.bf16.msra.mxu0 0
        %3738 = vmatprep.subr.bf16.mxu0 0
        %3739 = vmatpush1.bf16.msra.mxu0 0
        %3740 = vmatprep.subr.bf16.mxu0 0
        %3741 = vmatpush1.bf16.msra.mxu0 0
        %3742 = vmatprep.subr.bf16.mxu0 0
        %3743 = vmatpush1.bf16.msra.mxu0 0
        %3744 = vmatprep.subr.bf16.mxu0 0
        %3745 = vmatpush1.bf16.msra.mxu0 0
        %3746 = vmatprep.subr.bf16.mxu0 0
        %3747 = vmatpush1.bf16.msra.mxu0 0
        %3748 = vmatprep.subr.bf16.mxu0 0
        %3749 = vmatpush1.bf16.msra.mxu0 0
        %3750 = vmatprep.subr.bf16.mxu0 0
        %3751 = vmatpush1.bf16.msra.mxu0 0
        %3752 = vmatprep.subr.bf16.mxu0 0
        %3753 = vmatpush1.bf16.msra.mxu0 0
        %3754 = vmatprep.subr.bf16.mxu0 0
        %3755 = vmatpush1.bf16.msra.mxu0 0
        %3756 = vmatprep.mubr.bf16.mxu0 0
        %3757 = vmatmul.mubr.bf16.gmra.mrb[0].mxu0 %v3681
        %v3758 = vpop.f32.mrb[0].mxu0
        %v3759 = vadd.f32 0.0, %v3758
        %v3760 = vpop.f32.mrb[0].mxu0
        %v3761 = vadd.f32 0.0, %v3760
        %v3762 = vpop.f32.mrb[0].mxu0
        %v3763 = vpop.f32.mrb[0].mxu0
        %3764 = vdwg.mxu0
        %3765 = vmatprep.subr.bf16.mxu0 0
        %3766 = vmatpush1.bf16.msra.mxu0 %v3674
        %3767 = vmatprep.subr.bf16.mxu0 0
        %3768 = vmatpush1.bf16.msra.mxu0 0
        %3769 = vmatprep.subr.bf16.mxu0 0
        %3770 = vmatpush1.bf16.msra.mxu0 0
        %3771 = vmatprep.subr.bf16.mxu0 0
        %3772 = vmatpush1.bf16.msra.mxu0 0
        %3773 = vmatprep.subr.bf16.mxu0 0
        %3774 = vmatpush1.bf16.msra.mxu0 0
        %3775 = vmatprep.subr.bf16.mxu0 0
        %3776 = vmatpush1.bf16.msra.mxu0 0
        %3777 = vmatprep.subr.bf16.mxu0 0
        %3778 = vmatpush1.bf16.msra.mxu0 0
        %3779 = vmatprep.subr.bf16.mxu0 0
        %3780 = vmatpush1.bf16.msra.mxu0 0
        %3781 = vmatprep.subr.bf16.mxu0 0
        %3782 = vmatpush1.bf16.msra.mxu0 0
        %3783 = vmatprep.subr.bf16.mxu0 0
        %3784 = vmatpush1.bf16.msra.mxu0 0
        %3785 = vmatprep.subr.bf16.mxu0 0
        %3786 = vmatpush1.bf16.msra.mxu0 0
        %3787 = vmatprep.subr.bf16.mxu0 0
        %3788 = vmatpush1.bf16.msra.mxu0 0
        %3789 = vmatprep.subr.bf16.mxu0 0
        %3790 = vmatpush1.bf16.msra.mxu0 0
        %3791 = vmatprep.subr.bf16.mxu0 0
        %3792 = vmatpush1.bf16.msra.mxu0 0
        %3793 = vmatprep.subr.bf16.mxu0 0
        %3794 = vmatpush1.bf16.msra.mxu0 0
        %3795 = vmatprep.subr.bf16.mxu0 0
        %3796 = vmatpush1.bf16.msra.mxu0 0
        %3797 = vmatprep.mubr.bf16.mxu0 0
        %3798 = vmatmul.mubr.bf16.gmra.mrb[0].mxu0 %v3681
        %v3799 = vpop.f32.mrb[0].mxu0
        %v3800 = vadd.f32 0.0, %v3799
        %v3801 = vpop.f32.mrb[0].mxu0
        %v3802 = vpop.f32.mrb[0].mxu0
        %v3803 = vpop.f32.mrb[0].mxu0
        %3804 = vdwg.mxu0
        %v3811 = vunpack.c.l.b16 %v2871
        %v3812 = vunpack.c.h.b16 %v2871
        %v3813 = vunpack.c.l.b16 %v2872
        %v3814 = vunpack.c.h.b16 %v2872
        %v3815 = vunpack.c.l.b16 %v2873
        %v3816 = vunpack.c.l.b16 %v2874
        %v3817 = vunpack.c.h.b16 %v2874
        %v3818 = vunpack.c.l.b16 %v2875
        %v3819 = vunpack.c.h.b16 %v2875
        %v3820 = vunpack.c.l.b16 %v2876
        %v3821 = vpack.c.b16 %v3816, %v3811
        %v3822 = vpack.c.b16 %v3817, %v3812
        %v3823 = vpack.c.b16 %v3818, %v3813
        %v3824 = vpack.c.b16 %v3819, %v3814
        %v3825 = vpack.c.b16 %v3820, %v3815
        %v3832 = vsel %vm1539, %v2897, 0
        %3834 = vmatprep.subr.bf16.mxu0 %v3822
        %3835 = vmatpush1.bf16.msra.mxu0 %v3821
        %3836 = vmatprep.subr.bf16.mxu0 0
        %3837 = vmatpush1.bf16.msra.mxu0 0
        %3838 = vmatprep.subr.bf16.mxu0 0
        %3839 = vmatpush1.bf16.msra.mxu0 0
        %3840 = vmatprep.subr.bf16.mxu0 0
        %3841 = vmatpush1.bf16.msra.mxu0 0
        %3842 = vmatprep.subr.bf16.mxu0 0
        %3843 = vmatpush1.bf16.msra.mxu0 0
        %3844 = vmatprep.subr.bf16.mxu0 0
        %3845 = vmatpush1.bf16.msra.mxu0 0
        %3846 = vmatprep.subr.bf16.mxu0 0
        %3847 = vmatpush1.bf16.msra.mxu0 0
        %3848 = vmatprep.subr.bf16.mxu0 0
        %3849 = vmatpush1.bf16.msra.mxu0 0
        %3850 = vmatprep.subr.bf16.mxu0 0
        %3851 = vmatpush1.bf16.msra.mxu0 0
        %3852 = vmatprep.subr.bf16.mxu0 0
        %3853 = vmatpush1.bf16.msra.mxu0 0
        %3854 = vmatprep.subr.bf16.mxu0 0
        %3855 = vmatpush1.bf16.msra.mxu0 0
        %3856 = vmatprep.subr.bf16.mxu0 0
        %3857 = vmatpush1.bf16.msra.mxu0 0
        %3858 = vmatprep.subr.bf16.mxu0 0
        %3859 = vmatpush1.bf16.msra.mxu0 0
        %3860 = vmatprep.subr.bf16.mxu0 0
        %3861 = vmatpush1.bf16.msra.mxu0 0
        %3862 = vmatprep.subr.bf16.mxu0 0
        %3863 = vmatpush1.bf16.msra.mxu0 0
        %3864 = vmatprep.subr.bf16.mxu0 0
        %3865 = vmatpush1.bf16.msra.mxu0 0
        %3866 = vmatprep.mubr.bf16.mxu0 0
        %3867 = vmatmul.mubr.bf16.gmra.mrb[0].mxu0 %v3832
        %v3868 = vpop.f32.mrb[0].mxu0
        %v3869 = vadd.f32 0.0, %v3868
        %v3870 = vpop.f32.mrb[0].mxu0
        %v3871 = vadd.f32 0.0, %v3870
        %v3872 = vpop.f32.mrb[0].mxu0
        %v3873 = vpop.f32.mrb[0].mxu0
        %3874 = vdwg.mxu0
        %3875 = vmatprep.subr.bf16.mxu0 %v3824
        %3876 = vmatpush1.bf16.msra.mxu0 %v3823
        %3877 = vmatprep.subr.bf16.mxu0 0
        %3878 = vmatpush1.bf16.msra.mxu0 0
        %3879 = vmatprep.subr.bf16.mxu0 0
        %3880 = vmatpush1.bf16.msra.mxu0 0
        %3881 = vmatprep.subr.bf16.mxu0 0
        %3882 = vmatpush1.bf16.msra.mxu0 0
        %3883 = vmatprep.subr.bf16.mxu0 0
        %3884 = vmatpush1.bf16.msra.mxu0 0
        %3885 = vmatprep.subr.bf16.mxu0 0
        %3886 = vmatpush1.bf16.msra.mxu0 0
        %3887 = vmatprep.subr.bf16.mxu0 0
        %3888 = vmatpush1.bf16.msra.mxu0 0
        %3889 = vmatprep.subr.bf16.mxu0 0
        %3890 = vmatpush1.bf16.msra.mxu0 0
        %3891 = vmatprep.subr.bf16.mxu0 0
        %3892 = vmatpush1.bf16.msra.mxu0 0
        %3893 = vmatprep.subr.bf16.mxu0 0
        %3894 = vmatpush1.bf16.msra.mxu0 0
        %3895 = vmatprep.subr.bf16.mxu0 0
        %3896 = vmatpush1.bf16.msra.mxu0 0
        %3897 = vmatprep.subr.bf16.mxu0 0
        %3898 = vmatpush1.bf16.msra.mxu0 0
        %3899 = vmatprep.subr.bf16.mxu0 0
        %3900 = vmatpush1.bf16.msra.mxu0 0
        %3901 = vmatprep.subr.bf16.mxu0 0
        %3902 = vmatpush1.bf16.msra.mxu0 0
        %3903 = vmatprep.subr.bf16.mxu0 0
        %3904 = vmatpush1.bf16.msra.mxu0 0
        %3905 = vmatprep.subr.bf16.mxu0 0
        %3906 = vmatpush1.bf16.msra.mxu0 0
        %3907 = vmatprep.mubr.bf16.mxu0 0
        %3908 = vmatmul.mubr.bf16.gmra.mrb[0].mxu0 %v3832
        %v3909 = vpop.f32.mrb[0].mxu0
        %v3910 = vadd.f32 0.0, %v3909
        %v3911 = vpop.f32.mrb[0].mxu0
        %v3912 = vadd.f32 0.0, %v3911
        %v3913 = vpop.f32.mrb[0].mxu0
        %v3914 = vpop.f32.mrb[0].mxu0
        %3915 = vdwg.mxu0
        %3916 = vmatprep.subr.bf16.mxu0 0
        %3917 = vmatpush1.bf16.msra.mxu0 %v3825
        %3918 = vmatprep.subr.bf16.mxu0 0
        %3919 = vmatpush1.bf16.msra.mxu0 0
        %3920 = vmatprep.subr.bf16.mxu0 0
        %3921 = vmatpush1.bf16.msra.mxu0 0
        %3922 = vmatprep.subr.bf16.mxu0 0
        %3923 = vmatpush1.bf16.msra.mxu0 0
        %3924 = vmatprep.subr.bf16.mxu0 0
        %3925 = vmatpush1.bf16.msra.mxu0 0
        %3926 = vmatprep.subr.bf16.mxu0 0
        %3927 = vmatpush1.bf16.msra.mxu0 0
        %3928 = vmatprep.subr.bf16.mxu0 0
        %3929 = vmatpush1.bf16.msra.mxu0 0
        %3930 = vmatprep.subr.bf16.mxu0 0
        %3931 = vmatpush1.bf16.msra.mxu0 0
        %3932 = vmatprep.subr.bf16.mxu0 0
        %3933 = vmatpush1.bf16.msra.mxu0 0
        %3934 = vmatprep.subr.bf16.mxu0 0
        %3935 = vmatpush1.bf16.msra.mxu0 0
        %3936 = vmatprep.subr.bf16.mxu0 0
        %3937 = vmatpush1.bf16.msra.mxu0 0
        %3938 = vmatprep.subr.bf16.mxu0 0
        %3939 = vmatpush1.bf16.msra.mxu0 0
        %3940 = vmatprep.subr.bf16.mxu0 0
        %3941 = vmatpush1.bf16.msra.mxu0 0
        %3942 = vmatprep.subr.bf16.mxu0 0
        %3943 = vmatpush1.bf16.msra.mxu0 0
        %3944 = vmatprep.subr.bf16.mxu0 0
        %3945 = vmatpush1.bf16.msra.mxu0 0
        %3946 = vmatprep.subr.bf16.mxu0 0
        %3947 = vmatpush1.bf16.msra.mxu0 0
        %3948 = vmatprep.mubr.bf16.mxu0 0
        %3949 = vmatmul.mubr.bf16.gmra.mrb[0].mxu0 %v3832
        %v3950 = vpop.f32.mrb[0].mxu0
        %v3951 = vadd.f32 0.0, %v3950
        %v3952 = vpop.f32.mrb[0].mxu0
        %v3953 = vpop.f32.mrb[0].mxu0
        %v3954 = vpop.f32.mrb[0].mxu0
        %3955 = vdwg.mxu0
        %v3962 = vunpack.c.l.b16 %v2877
        %v3963 = vunpack.c.h.b16 %v2877
        %v3964 = vunpack.c.l.b16 %v2878
        %v3965 = vunpack.c.h.b16 %v2878
        %v3966 = vunpack.c.l.b16 %v2879
        %v3967 = vunpack.c.l.b16 %v2880
        %v3968 = vunpack.c.h.b16 %v2880
        %v3969 = vunpack.c.l.b16 %v2881
        %v3970 = vunpack.c.h.b16 %v2881
        %v3971 = vunpack.c.l.b16 %v2882
        %v3972 = vpack.c.b16 %v3967, %v3962
        %v3973 = vpack.c.b16 %v3968, %v3963
        %v3974 = vpack.c.b16 %v3969, %v3964
        %v3975 = vpack.c.b16 %v3970, %v3965
        %v3976 = vpack.c.b16 %v3971, %v3966
        %v3983 = vsel %vm1539, %v2898, 0
        %3985 = vmatprep.subr.bf16.mxu0 %v3973
        %3986 = vmatpush1.bf16.msra.mxu0 %v3972
        %3987 = vmatprep.subr.bf16.mxu0 0
        %3988 = vmatpush1.bf16.msra.mxu0 0
        %3989 = vmatprep.subr.bf16.mxu0 0
        %3990 = vmatpush1.bf16.msra.mxu0 0
        %3991 = vmatprep.subr.bf16.mxu0 0
        %3992 = vmatpush1.bf16.msra.mxu0 0
        %3993 = vmatprep.subr.bf16.mxu0 0
        %3994 = vmatpush1.bf16.msra.mxu0 0
        %3995 = vmatprep.subr.bf16.mxu0 0
        %3996 = vmatpush1.bf16.msra.mxu0 0
        %3997 = vmatprep.subr.bf16.mxu0 0
        %3998 = vmatpush1.bf16.msra.mxu0 0
        %3999 = vmatprep.subr.bf16.mxu0 0
        %4000 = vmatpush1.bf16.msra.mxu0 0
        %4001 = vmatprep.subr.bf16.mxu0 0
        %4002 = vmatpush1.bf16.msra.mxu0 0
        %4003 = vmatprep.subr.bf16.mxu0 0
        %4004 = vmatpush1.bf16.msra.mxu0 0
        %4005 = vmatprep.subr.bf16.mxu0 0
        %4006 = vmatpush1.bf16.msra.mxu0 0
        %4007 = vmatprep.subr.bf16.mxu0 0
        %4008 = vmatpush1.bf16.msra.mxu0 0
        %4009 = vmatprep.subr.bf16.mxu0 0
        %4010 = vmatpush1.bf16.msra.mxu0 0
        %4011 = vmatprep.subr.bf16.mxu0 0
        %4012 = vmatpush1.bf16.msra.mxu0 0
        %4013 = vmatprep.subr.bf16.mxu0 0
        %4014 = vmatpush1.bf16.msra.mxu0 0
        %4015 = vmatprep.subr.bf16.mxu0 0
        %4016 = vmatpush1.bf16.msra.mxu0 0
        %4017 = vmatprep.mubr.bf16.mxu0 0
        %4018 = vmatmul.mubr.bf16.gmra.mrb[0].mxu0 %v3983
        %v4019 = vpop.f32.mrb[0].mxu0
        %v4020 = vadd.f32 0.0, %v4019
        %v4021 = vpop.f32.mrb[0].mxu0
        %v4022 = vadd.f32 0.0, %v4021
        %v4023 = vpop.f32.mrb[0].mxu0
        %v4024 = vpop.f32.mrb[0].mxu0
        %4025 = vdwg.mxu0
        %4026 = vmatprep.subr.bf16.mxu0 %v3975
        %4027 = vmatpush1.bf16.msra.mxu0 %v3974
        %4028 = vmatprep.subr.bf16.mxu0 0
        %4029 = vmatpush1.bf16.msra.mxu0 0
        %4030 = vmatprep.subr.bf16.mxu0 0
        %4031 = vmatpush1.bf16.msra.mxu0 0
        %4032 = vmatprep.subr.bf16.mxu0 0
        %4033 = vmatpush1.bf16.msra.mxu0 0
        %4034 = vmatprep.subr.bf16.mxu0 0
        %4035 = vmatpush1.bf16.msra.mxu0 0
        %4036 = vmatprep.subr.bf16.mxu0 0
        %4037 = vmatpush1.bf16.msra.mxu0 0
        %4038 = vmatprep.subr.bf16.mxu0 0
        %4039 = vmatpush1.bf16.msra.mxu0 0
        %4040 = vmatprep.subr.bf16.mxu0 0
        %4041 = vmatpush1.bf16.msra.mxu0 0
        %4042 = vmatprep.subr.bf16.mxu0 0
        %4043 = vmatpush1.bf16.msra.mxu0 0
        %4044 = vmatprep.subr.bf16.mxu0 0
        %4045 = vmatpush1.bf16.msra.mxu0 0
        %4046 = vmatprep.subr.bf16.mxu0 0
        %4047 = vmatpush1.bf16.msra.mxu0 0
        %4048 = vmatprep.subr.bf16.mxu0 0
        %4049 = vmatpush1.bf16.msra.mxu0 0
        %4050 = vmatprep.subr.bf16.mxu0 0
        %4051 = vmatpush1.bf16.msra.mxu0 0
        %4052 = vmatprep.subr.bf16.mxu0 0
        %4053 = vmatpush1.bf16.msra.mxu0 0
        %4054 = vmatprep.subr.bf16.mxu0 0
        %4055 = vmatpush1.bf16.msra.mxu0 0
        %4056 = vmatprep.subr.bf16.mxu0 0
        %4057 = vmatpush1.bf16.msra.mxu0 0
        %4058 = vmatprep.mubr.bf16.mxu0 0
        %4059 = vmatmul.mubr.bf16.gmra.mrb[0].mxu0 %v3983
        %v4060 = vpop.f32.mrb[0].mxu0
        %v4061 = vadd.f32 0.0, %v4060
        %v4062 = vpop.f32.mrb[0].mxu0
        %v4063 = vadd.f32 0.0, %v4062
        %v4064 = vpop.f32.mrb[0].mxu0
        %v4065 = vpop.f32.mrb[0].mxu0
        %4066 = vdwg.mxu0
        %4067 = vmatprep.subr.bf16.mxu0 0
        %4068 = vmatpush1.bf16.msra.mxu0 %v3976
        %4069 = vmatprep.subr.bf16.mxu0 0
        %4070 = vmatpush1.bf16.msra.mxu0 0
        %4071 = vmatprep.subr.bf16.mxu0 0
        %4072 = vmatpush1.bf16.msra.mxu0 0
        %4073 = vmatprep.subr.bf16.mxu0 0
        %4074 = vmatpush1.bf16.msra.mxu0 0
        %4075 = vmatprep.subr.bf16.mxu0 0
        %4076 = vmatpush1.bf16.msra.mxu0 0
        %4077 = vmatprep.subr.bf16.mxu0 0
        %4078 = vmatpush1.bf16.msra.mxu0 0
        %4079 = vmatprep.subr.bf16.mxu0 0
        %4080 = vmatpush1.bf16.msra.mxu0 0
        %4081 = vmatprep.subr.bf16.mxu0 0
        %4082 = vmatpush1.bf16.msra.mxu0 0
        %4083 = vmatprep.subr.bf16.mxu0 0
        %4084 = vmatpush1.bf16.msra.mxu0 0
        %4085 = vmatprep.subr.bf16.mxu0 0
        %4086 = vmatpush1.bf16.msra.mxu0 0
        %4087 = vmatprep.subr.bf16.mxu0 0
        %4088 = vmatpush1.bf16.msra.mxu0 0
        %4089 = vmatprep.subr.bf16.mxu0 0
        %4090 = vmatpush1.bf16.msra.mxu0 0
        %4091 = vmatprep.subr.bf16.mxu0 0
        %4092 = vmatpush1.bf16.msra.mxu0 0
        %4093 = vmatprep.subr.bf16.mxu0 0
        %4094 = vmatpush1.bf16.msra.mxu0 0
        %4095 = vmatprep.subr.bf16.mxu0 0
        %4096 = vmatpush1.bf16.msra.mxu0 0
        %4097 = vmatprep.subr.bf16.mxu0 0
        %4098 = vmatpush1.bf16.msra.mxu0 0
        %4099 = vmatprep.mubr.bf16.mxu0 0
        %4100 = vmatmul.mubr.bf16.gmra.mrb[0].mxu0 %v3983
        %v4101 = vpop.f32.mrb[0].mxu0
        %v4102 = vadd.f32 0.0, %v4101
        %v4103 = vpop.f32.mrb[0].mxu0
        %v4104 = vpop.f32.mrb[0].mxu0
        %v4105 = vpop.f32.mrb[0].mxu0
        %4106 = vdwg.mxu0
        %v4107 = vsel %vm2722, %v2883, 0.0
        %4108 = vadd.xlane.f32.xlu0 %v4107
        %v4109 = vpop.xlane.xlu0 %4108
        %v4110 = vsel %vm2722, %v2884, 0.0
        %4111 = vadd.xlane.f32.xlu0 %v4110
        %v4112 = vpop.xlane.xlu0 %4111
        %v4113 = vsel %vm2722, %v2885, 0.0
        %4114 = vadd.xlane.f32.xlu0 %v4113
        %v4115 = vpop.xlane.xlu0 %4114
        %v4116 = vsel %vm2722, %v2886, 0.0
        %4117 = vadd.xlane.f32.xlu0 %v4116
        %v4118 = vpop.xlane.xlu0 %4117
        %v4119 = vsel %vm2722, %v2887, 0.0
        %4120 = vadd.xlane.f32.xlu0 %v4119
        %v4121 = vpop.xlane.xlu0 %4120
        %v4122 = vsel %vm2722, %v2888, 0.0
        %4123 = vadd.xlane.f32.xlu0 %v4122
        %v4124 = vpop.xlane.xlu0 %4123
        %v4125 = vsel %vm2722, %v2889, 0.0
        %4126 = vadd.xlane.f32.xlu0 %v4125
        %v4127 = vpop.xlane.xlu0 %4126
        %v4128 = vsel %vm2722, %v2890, 0.0
        %4129 = vadd.xlane.f32.xlu0 %v4128
        %v4130 = vpop.xlane.xlu0 %4129
        %v4131 = vmax.f32 %v4109, 1e-09
        %v4132 = vmax.f32 %v4112, 1e-09
        %v4133 = vmax.f32 %v4115, 1e-09
        %v4134 = vmax.f32 %v4118, 1e-09
        %v4135 = vmax.f32 %v4121, 1e-09
        %v4136 = vmax.f32 %v4124, 1e-09
        %v4137 = vmax.f32 %v4127, 1e-09
        %v4138 = vmax.f32 %v4130, 1e-09
        %v4139 = vlaneseq
        %v4140 = vshrl.u32 %v4139, 7
        %v4141 = vsub.s32 0, %v4140
        %v4142 = vrot.slane %v4131, %v4141
        %v4143 = vlaneseq
        %v4144 = vshrl.u32 %v4143, 7
        %v4145 = vsub.s32 0, %v4144
        %v4146 = vrot.slane %v4132, %v4145
        %v4147 = vlaneseq
        %v4148 = vshrl.u32 %v4147, 7
        %v4149 = vsub.s32 0, %v4148
        %v4150 = vrot.slane %v4133, %v4149
        %v4151 = vlaneseq
        %v4152 = vshrl.u32 %v4151, 7
        %v4153 = vsub.s32 0, %v4152
        %v4154 = vrot.slane %v4134, %v4153
        %v4155 = vlaneseq
        %v4156 = vshrl.u32 %v4155, 7
        %v4157 = vsub.s32 0, %v4156
        %v4158 = vrot.slane %v4135, %v4157
        %v4159 = vlaneseq
        %v4160 = vshrl.u32 %v4159, 7
        %v4161 = vsub.s32 0, %v4160
        %v4162 = vrot.slane %v4136, %v4161
        %v4163 = vlaneseq
        %v4164 = vshrl.u32 %v4163, 7
        %v4165 = vsub.s32 0, %v4164
        %v4166 = vrot.slane %v4137, %v4165
        %v4167 = vlaneseq
        %v4168 = vshrl.u32 %v4167, 7
        %v4169 = vsub.s32 0, %v4168
        %v4170 = vrot.slane %v4138, %v4169
        %v4171 = vrcp.pop %v4142
        %v4172 = vmul.f32 %v2963, %v4171
        %v4173 = vmul.f32 %v2965, %v4171
        %v4174 = vmul.f32 %v3004, %v4171
        %v4175 = vmul.f32 %v3006, %v4171
        %v4176 = vmul.f32 %v3045, %v4171
        %v4177 = vrcp.pop %v4146
        %v4178 = vmul.f32 %v3114, %v4177
        %v4179 = vmul.f32 %v3116, %v4177
        %v4180 = vmul.f32 %v3155, %v4177
        %v4181 = vmul.f32 %v3157, %v4177
        %v4182 = vmul.f32 %v3196, %v4177
        %v4183 = vrcp.pop %v4150
        %v4184 = vmul.f32 %v3265, %v4183
        %v4185 = vmul.f32 %v3267, %v4183
        %v4186 = vmul.f32 %v3306, %v4183
        %v4187 = vmul.f32 %v3308, %v4183
        %v4188 = vmul.f32 %v3347, %v4183
        %v4189 = vrcp.pop %v4154
        %v4190 = vmul.f32 %v3416, %v4189
        %v4191 = vmul.f32 %v3418, %v4189
        %v4192 = vmul.f32 %v3457, %v4189
        %v4193 = vmul.f32 %v3459, %v4189
        %v4194 = vmul.f32 %v3498, %v4189
        %v4195 = vrcp.pop %v4158
        %v4196 = vmul.f32 %v3567, %v4195
        %v4197 = vmul.f32 %v3569, %v4195
        %v4198 = vmul.f32 %v3608, %v4195
        %v4199 = vmul.f32 %v3610, %v4195
        %v4200 = vmul.f32 %v3649, %v4195
        %v4201 = vrcp.pop %v4162
        %v4202 = vmul.f32 %v3718, %v4201
        %v4203 = vmul.f32 %v3720, %v4201
        %v4204 = vmul.f32 %v3759, %v4201
        %v4205 = vmul.f32 %v3761, %v4201
        %v4206 = vmul.f32 %v3800, %v4201
        %v4207 = vrcp.pop %v4166
        %v4208 = vmul.f32 %v3869, %v4207
        %v4209 = vmul.f32 %v3871, %v4207
        %v4210 = vmul.f32 %v3910, %v4207
        %v4211 = vmul.f32 %v3912, %v4207
        %v4212 = vmul.f32 %v3951, %v4207
        %v4213 = vrcp.pop %v4170
        %v4214 = vmul.f32 %v4020, %v4213
        %v4215 = vmul.f32 %v4022, %v4213
        %v4216 = vmul.f32 %v4061, %v4213
        %v4217 = vmul.f32 %v4063, %v4213
        %v4218 = vmul.f32 %v4102, %v4213
        %v4219 = vld [vmem:[#allocation12] sm:$0xff]
        %v4220 = vld [vmem:[#allocation12 + $0x8] sm:$0xff]
        %v4221 = vld [vmem:[#allocation12 + $0x10] sm:$0xff]
        %v4222 = vld [vmem:[#allocation12 + $0x18] sm:$0xff]
        %v4223 = vld [vmem:[#allocation12 + $0x20] sm:$0xff]
        %v4224 = vld [vmem:[#allocation12 + $0x28] sm:$0xff]
        %v4225 = vld [vmem:[#allocation12 + $0x30] sm:$0xff]
        %v4226 = vld [vmem:[#allocation12 + $0x38] sm:$0xff]
        %v4227 = vld [vmem:[#allocation12 + $0x40] sm:$0xff]
        %v4228 = vld [vmem:[#allocation12 + $0x48] sm:$0xff]
        %v4229 = vld [vmem:[#allocation12 + $0x50] sm:$0xff]
        %v4230 = vld [vmem:[#allocation12 + $0x58] sm:$0xff]
        %v4231 = vld [vmem:[#allocation12 + $0x60] sm:$0xff]
        %v4232 = vld [vmem:[#allocation12 + $0x68] sm:$0xff]
        %v4233 = vld [vmem:[#allocation12 + $0x70] sm:$0xff]
        %v4234 = vld [vmem:[#allocation12 + $0x78] sm:$0xff]
        %v4235 = vld [vmem:[#allocation12 + $0x80] sm:$0xff]
        %v4236 = vld [vmem:[#allocation12 + $0x88] sm:$0xff]
        %v4237 = vld [vmem:[#allocation12 + $0x90] sm:$0xff]
        %v4238 = vld [vmem:[#allocation12 + $0x98] sm:$0xff]
        %v4239 = vld [vmem:[#allocation12 + $0xa0] sm:$0xff]
        %v4240 = vld [vmem:[#allocation12 + $0xa8] sm:$0xff]
        %v4241 = vld [vmem:[#allocation12 + $0xb0] sm:$0xff]
        %v4242 = vld [vmem:[#allocation12 + $0xb8] sm:$0xff]
        %v4243 = vld [vmem:[#allocation12 + $0xc0] sm:$0xff]
        %v4244 = vld [vmem:[#allocation12 + $0xc8] sm:$0xff]
        %v4245 = vld [vmem:[#allocation12 + $0xd0] sm:$0xff]
        %v4246 = vld [vmem:[#allocation12 + $0xd8] sm:$0xff]
        %v4247 = vld [vmem:[#allocation12 + $0xe0] sm:$0xff]
        %v4248 = vld [vmem:[#allocation12 + $0xe8] sm:$0xff]
        %v4249 = vld [vmem:[#allocation12 + $0xf0] sm:$0xff]
        %v4250 = vld [vmem:[#allocation12 + $0xf8] sm:$0xff]
        %v4251 = vld [vmem:[#allocation12 + $0x100] sm:$0xff]
        %v4252 = vld [vmem:[#allocation12 + $0x108] sm:$0xff]
        %v4253 = vld [vmem:[#allocation12 + $0x110] sm:$0xff]
        %v4254 = vld [vmem:[#allocation12 + $0x118] sm:$0xff]
        %v4255 = vld [vmem:[#allocation12 + $0x120] sm:$0xff]
        %v4256 = vld [vmem:[#allocation12 + $0x128] sm:$0xff]
        %v4257 = vld [vmem:[#allocation12 + $0x130] sm:$0xff]
        %v4258 = vld [vmem:[#allocation12 + $0x138] sm:$0xff]
        %v4259 = vld [vmem:[#allocation12 + $0x140] sm:$0xff]
        %v4260 = vld [vmem:[#allocation12 + $0x148] sm:$0xff]
        %v4261 = vld [vmem:[#allocation12 + $0x150] sm:$0xff]
        %v4262 = vld [vmem:[#allocation12 + $0x158] sm:$0xff]
        %v4263 = vld [vmem:[#allocation12 + $0x160] sm:$0xff]
        %v4264 = vld [vmem:[#allocation12 + $0x168] sm:$0xff]
        %v4265 = vld [vmem:[#allocation12 + $0x170] sm:$0xff]
        %v4266 = vld [vmem:[#allocation12 + $0x178] sm:$0xff]
        %v4267 = vld [vmem:[#allocation12 + $0x180] sm:$0xff]
        %v4268 = vld [vmem:[#allocation12 + $0x188] sm:$0xff]
        %v4269 = vld [vmem:[#allocation12 + $0x190] sm:$0xff]
        %v4270 = vld [vmem:[#allocation12 + $0x198] sm:$0xff]
        %v4271 = vld [vmem:[#allocation12 + $0x1a0] sm:$0xff]
        %v4272 = vld [vmem:[#allocation12 + $0x1a8] sm:$0xff]
        %v4273 = vld [vmem:[#allocation12 + $0x1b0] sm:$0xff]
        %v4274 = vld [vmem:[#allocation12 + $0x1b8] sm:$0xff]
        %v4275 = vld [vmem:[#allocation12 + $0x1c0] sm:$0xff]
        %v4276 = vld [vmem:[#allocation12 + $0x1c8] sm:$0xff]
        %v4277 = vld [vmem:[#allocation12 + $0x1d0] sm:$0xff]
        %v4278 = vld [vmem:[#allocation12 + $0x1d8] sm:$0xff]
        %v4279 = vld [vmem:[#allocation12 + $0x1e0] sm:$0xff]
        %v4280 = vld [vmem:[#allocation12 + $0x1e8] sm:$0xff]
        %v4281 = vld [vmem:[#allocation12 + $0x1f0] sm:$0xff]
        %v4282 = vld [vmem:[#allocation12 + $0x1f8] sm:$0xff]
        %v4283 = vld [vmem:[#allocation12 + $0x200] sm:$0xff]
        %v4284 = vld [vmem:[#allocation12 + $0x208] sm:$0xff]
        %v4285 = vld [vmem:[#allocation12 + $0x210] sm:$0xff]
        %v4286 = vld [vmem:[#allocation12 + $0x218] sm:$0xff]
        %v4287 = vld [vmem:[#allocation12 + $0x220] sm:$0xff]
        %v4288 = vld [vmem:[#allocation12 + $0x228] sm:$0xff]
        %v4289 = vld [vmem:[#allocation12 + $0x230] sm:$0xff]
        %v4290 = vld [vmem:[#allocation12 + $0x238] sm:$0xff]
        %v4291 = vld [vmem:[#allocation12 + $0x240] sm:$0xff]
        %v4292 = vld [vmem:[#allocation12 + $0x248] sm:$0xff]
        %v4293 = vld [vmem:[#allocation12 + $0x250] sm:$0xff]
        %v4294 = vld [vmem:[#allocation13] sm:$0x1]
        %v4296 = vlaneseq
        %v4297 = vshrl.u32 %v4296, 7
        %v4298 = vsub.s32 0, %v4297
        %v4299 = vrot.slane %v4294, %v4298
        %v4341 = vrot.slane %v2794, 7
        %vm4342 = vcmask 1041409
        %v4343 = vsel %vm4342, %v4341, %v2788
        %v4344 = vrot.slane %v2800, 6
        %vm4345 = vcmask 1042434
        %v4346 = vsel %vm4345, %v4344, %v4343
        %v4347 = vrot.slane %v2806, 5
        %vm4348 = vcmask 1043459
        %v4349 = vsel %vm4348, %v4347, %v4346
        %v4350 = vrot.slane %v2812, 4
        %vm4351 = vcmask 1044484
        %v4352 = vsel %vm4351, %v4350, %v4349
        %v4353 = vrot.slane %v2818, 3
        %vm4354 = vcmask 1045509
        %v4355 = vsel %vm4354, %v4353, %v4352
        %v4356 = vrot.slane %v2824, 2
        %vm4357 = vcmask 1046534
        %v4358 = vsel %vm4357, %v4356, %v4355
        %v4359 = vrot.slane %v2830, 1
        %vm4360 = vcmask 1047559
        %v4361 = vsel %vm4360, %v4359, %v4358
        %v4362 = vrot.slane %v2795, 7
        %v4363 = vsel %vm4342, %v4362, %v2789
        %v4364 = vrot.slane %v2801, 6
        %v4365 = vsel %vm4345, %v4364, %v4363
        %v4366 = vrot.slane %v2807, 5
        %v4367 = vsel %vm4348, %v4366, %v4365
        %v4368 = vrot.slane %v2813, 4
        %v4369 = vsel %vm4351, %v4368, %v4367
        %v4370 = vrot.slane %v2819, 3
        %v4371 = vsel %vm4354, %v4370, %v4369
        %v4372 = vrot.slane %v2825, 2
        %v4373 = vsel %vm4357, %v4372, %v4371
        %v4374 = vrot.slane %v2831, 1
        %v4375 = vsel %vm4360, %v4374, %v4373
        %v4376 = vrot.slane %v2796, 7
        %v4377 = vsel %vm4342, %v4376, %v2790
        %v4378 = vrot.slane %v2802, 6
        %v4379 = vsel %vm4345, %v4378, %v4377
        %v4380 = vrot.slane %v2808, 5
        %v4381 = vsel %vm4348, %v4380, %v4379
        %v4382 = vrot.slane %v2814, 4
        %v4383 = vsel %vm4351, %v4382, %v4381
        %v4384 = vrot.slane %v2820, 3
        %v4385 = vsel %vm4354, %v4384, %v4383
        %v4386 = vrot.slane %v2826, 2
        %v4387 = vsel %vm4357, %v4386, %v4385
        %v4388 = vrot.slane %v2832, 1
        %v4389 = vsel %vm4360, %v4388, %v4387
        %v4390 = vrot.slane %v2797, 7
        %v4391 = vsel %vm4342, %v4390, %v2791
        %v4392 = vrot.slane %v2803, 6
        %v4393 = vsel %vm4345, %v4392, %v4391
        %v4394 = vrot.slane %v2809, 5
        %v4395 = vsel %vm4348, %v4394, %v4393
        %v4396 = vrot.slane %v2815, 4
        %v4397 = vsel %vm4351, %v4396, %v4395
        %v4398 = vrot.slane %v2821, 3
        %v4399 = vsel %vm4354, %v4398, %v4397
        %v4400 = vrot.slane %v2827, 2
        %v4401 = vsel %vm4357, %v4400, %v4399
        %v4402 = vrot.slane %v2833, 1
        %v4403 = vsel %vm4360, %v4402, %v4401
        %v4404 = vrot.slane %v2798, 7
        %v4405 = vsel %vm4342, %v4404, %v2792
        %v4406 = vrot.slane %v2804, 6
        %v4407 = vsel %vm4345, %v4406, %v4405
        %v4408 = vrot.slane %v2810, 5
        %v4409 = vsel %vm4348, %v4408, %v4407
        %v4410 = vrot.slane %v2816, 4
        %v4411 = vsel %vm4351, %v4410, %v4409
        %v4412 = vrot.slane %v2822, 3
        %v4413 = vsel %vm4354, %v4412, %v4411
        %v4414 = vrot.slane %v2828, 2
        %v4415 = vsel %vm4357, %v4414, %v4413
        %v4416 = vrot.slane %v2834, 1
        %v4417 = vsel %vm4360, %v4416, %v4415
        %vm4422 = vcmask 719872
        %v4423 = vsel %vm4422, %v4417, 0
        %4425 = vmatprep.subr.mxu0 0.0
        %4426 = vmatpush1.msra.mxu0 %v4219
        %4427 = vmatprep.subr.mxu0 0.0
        %4428 = vmatpush1.msra.mxu0 %v4220
        %4429 = vmatprep.subr.mxu0 0.0
        %4430 = vmatpush1.msra.mxu0 %v4221
        %4431 = vmatprep.subr.mxu0 0.0
        %4432 = vmatpush1.msra.mxu0 %v4222
        %4433 = vmatprep.subr.mxu0 0.0
        %4434 = vmatpush1.msra.mxu0 %v4223
        %4435 = vmatprep.subr.mxu0 0.0
        %4436 = vmatpush1.msra.mxu0 %v4224
        %4437 = vmatprep.subr.mxu0 0.0
        %4438 = vmatpush1.msra.mxu0 %v4225
        %4439 = vmatprep.subr.mxu0 0.0
        %4440 = vmatpush1.msra.mxu0 %v4226
        %4441 = vmatprep.subr.mxu0 0.0
        %4442 = vmatpush1.msra.mxu0 %v4227
        %4443 = vmatprep.subr.mxu0 0.0
        %4444 = vmatpush1.msra.mxu0 %v4228
        %4445 = vmatprep.subr.mxu0 0.0
        %4446 = vmatpush1.msra.mxu0 %v4229
        %4447 = vmatprep.subr.mxu0 0.0
        %4448 = vmatpush1.msra.mxu0 %v4230
        %4449 = vmatprep.subr.mxu0 0.0
        %4450 = vmatpush1.msra.mxu0 %v4231
        %4451 = vmatprep.subr.mxu0 0.0
        %4452 = vmatpush1.msra.mxu0 %v4232
        %4453 = vmatprep.subr.mxu0 0.0
        %4454 = vmatpush1.msra.mxu0 %v4233
        %4455 = vmatprep.subr.mxu0 0.0
        %4456 = vmatpush1.msra.mxu0 %v4234
        %4457 = vmatprep.subr.mxu0 0.0
        %4458 = vmatpush1.msra.mxu0 %v4235
        %4459 = vmatprep.subr.mxu0 0.0
        %4460 = vmatpush1.msra.mxu0 %v4236
        %4461 = vmatprep.subr.mxu0 0.0
        %4462 = vmatpush1.msra.mxu0 %v4237
        %4463 = vmatprep.subr.mxu0 0.0
        %4464 = vmatpush1.msra.mxu0 %v4238
        %4465 = vmatprep.subr.mxu0 0.0
        %4466 = vmatpush1.msra.mxu0 %v4239
        %4467 = vmatprep.subr.mxu0 0.0
        %4468 = vmatpush1.msra.mxu0 %v4240
        %4469 = vmatprep.subr.mxu0 0.0
        %4470 = vmatpush1.msra.mxu0 %v4241
        %4471 = vmatprep.subr.mxu0 0.0
        %4472 = vmatpush1.msra.mxu0 %v4242
        %4473 = vmatprep.subr.mxu0 0.0
        %4474 = vmatpush1.msra.mxu0 %v4243
        %4475 = vmatprep.subr.mxu0 0.0
        %4476 = vmatpush1.msra.mxu0 %v4244
        %4477 = vmatprep.subr.mxu0 0.0
        %4478 = vmatpush1.msra.mxu0 %v4245
        %4479 = vmatprep.subr.mxu0 0.0
        %4480 = vmatpush1.msra.mxu0 %v4246
        %4481 = vmatprep.subr.mxu0 0.0
        %4482 = vmatpush1.msra.mxu0 %v4247
        %4483 = vmatprep.subr.mxu0 0.0
        %4484 = vmatpush1.msra.mxu0 %v4248
        %4485 = vmatprep.subr.mxu0 0.0
        %4486 = vmatpush1.msra.mxu0 %v4249
        %4487 = vmatprep.subr.mxu0 0.0
        %4488 = vmatpush1.msra.mxu0 %v4250
        %4489 = vmatprep.mubr.f32.mxu0 %v4375
        %4490 = vmatmul.mubr.f32.gmra.mrb[0].mxu0 %v4361
        %v4491 = vpop.f32.mrb[0].mxu0
        %v4492 = vadd.f32 %v4299, %v4491
        %v4493 = vpop.f32.mrb[0].mxu0
        %4494 = vdwg.mxu0
        %4495 = vmatprep.subr.mxu0 0.0
        %4496 = vmatpush1.msra.mxu0 %v4251
        %4497 = vmatprep.subr.mxu0 0.0
        %4498 = vmatpush1.msra.mxu0 %v4252
        %4499 = vmatprep.subr.mxu0 0.0
        %4500 = vmatpush1.msra.mxu0 %v4253
        %4501 = vmatprep.subr.mxu0 0.0
        %4502 = vmatpush1.msra.mxu0 %v4254
        %4503 = vmatprep.subr.mxu0 0.0
        %4504 = vmatpush1.msra.mxu0 %v4255
        %4505 = vmatprep.subr.mxu0 0.0
        %4506 = vmatpush1.msra.mxu0 %v4256
        %4507 = vmatprep.subr.mxu0 0.0
        %4508 = vmatpush1.msra.mxu0 %v4257
        %4509 = vmatprep.subr.mxu0 0.0
        %4510 = vmatpush1.msra.mxu0 %v4258
        %4511 = vmatprep.subr.mxu0 0.0
        %4512 = vmatpush1.msra.mxu0 %v4259
        %4513 = vmatprep.subr.mxu0 0.0
        %4514 = vmatpush1.msra.mxu0 %v4260
        %4515 = vmatprep.subr.mxu0 0.0
        %4516 = vmatpush1.msra.mxu0 %v4261
        %4517 = vmatprep.subr.mxu0 0.0
        %4518 = vmatpush1.msra.mxu0 %v4262
        %4519 = vmatprep.subr.mxu0 0.0
        %4520 = vmatpush1.msra.mxu0 %v4263
        %4521 = vmatprep.subr.mxu0 0.0
        %4522 = vmatpush1.msra.mxu0 %v4264
        %4523 = vmatprep.subr.mxu0 0.0
        %4524 = vmatpush1.msra.mxu0 %v4265
        %4525 = vmatprep.subr.mxu0 0.0
        %4526 = vmatpush1.msra.mxu0 %v4266
        %4527 = vmatprep.subr.mxu0 0.0
        %4528 = vmatpush1.msra.mxu0 %v4267
        %4529 = vmatprep.subr.mxu0 0.0
        %4530 = vmatpush1.msra.mxu0 %v4268
        %4531 = vmatprep.subr.mxu0 0.0
        %4532 = vmatpush1.msra.mxu0 %v4269
        %4533 = vmatprep.subr.mxu0 0.0
        %4534 = vmatpush1.msra.mxu0 %v4270
        %4535 = vmatprep.subr.mxu0 0.0
        %4536 = vmatpush1.msra.mxu0 %v4271
        %4537 = vmatprep.subr.mxu0 0.0
        %4538 = vmatpush1.msra.mxu0 %v4272
        %4539 = vmatprep.subr.mxu0 0.0
        %4540 = vmatpush1.msra.mxu0 %v4273
        %4541 = vmatprep.subr.mxu0 0.0
        %4542 = vmatpush1.msra.mxu0 %v4274
        %4543 = vmatprep.subr.mxu0 0.0
        %4544 = vmatpush1.msra.mxu0 %v4275
        %4545 = vmatprep.subr.mxu0 0.0
        %4546 = vmatpush1.msra.mxu0 %v4276
        %4547 = vmatprep.subr.mxu0 0.0
        %4548 = vmatpush1.msra.mxu0 %v4277
        %4549 = vmatprep.subr.mxu0 0.0
        %4550 = vmatpush1.msra.mxu0 %v4278
        %4551 = vmatprep.subr.mxu0 0.0
        %4552 = vmatpush1.msra.mxu0 %v4279
        %4553 = vmatprep.subr.mxu0 0.0
        %4554 = vmatpush1.msra.mxu0 %v4280
        %4555 = vmatprep.subr.mxu0 0.0
        %4556 = vmatpush1.msra.mxu0 %v4281
        %4557 = vmatprep.subr.mxu0 0.0
        %4558 = vmatpush1.msra.mxu0 %v4282
        %4559 = vmatprep.mubr.f32.mxu0 %v4403
        %4560 = vmatmul.mubr.f32.gmra.mrb[0].mxu0 %v4389
        %v4561 = vpop.f32.mrb[0].mxu0
        %v4562 = vadd.f32 %v4492, %v4561
        %v4563 = vpop.f32.mrb[0].mxu0
        %4564 = vdwg.mxu0
        %4565 = vmatprep.subr.mxu0 0.0
        %4566 = vmatpush1.msra.mxu0 %v4283
        %4567 = vmatprep.subr.mxu0 0.0
        %4568 = vmatpush1.msra.mxu0 %v4284
        %4569 = vmatprep.subr.mxu0 0.0
        %4570 = vmatpush1.msra.mxu0 %v4285
        %4571 = vmatprep.subr.mxu0 0.0
        %4572 = vmatpush1.msra.mxu0 %v4286
        %4573 = vmatprep.subr.mxu0 0.0
        %4574 = vmatpush1.msra.mxu0 %v4287
        %4575 = vmatprep.subr.mxu0 0.0
        %4576 = vmatpush1.msra.mxu0 %v4288
        %4577 = vmatprep.subr.mxu0 0.0
        %4578 = vmatpush1.msra.mxu0 %v4289
        %4579 = vmatprep.subr.mxu0 0.0
        %4580 = vmatpush1.msra.mxu0 %v4290
        %4581 = vmatprep.subr.mxu0 0.0
        %4582 = vmatpush1.msra.mxu0 %v4291
        %4583 = vmatprep.subr.mxu0 0.0
        %4584 = vmatpush1.msra.mxu0 %v4292
        %4585 = vmatprep.subr.mxu0 0.0
        %4586 = vmatpush1.msra.mxu0 %v4293
        %4587 = vmatprep.subr.mxu0 0.0
        %4588 = vmatpush1.msra.mxu0 0.0
        %4589 = vmatprep.subr.mxu0 0.0
        %4590 = vmatpush1.msra.mxu0 0.0
        %4591 = vmatprep.subr.mxu0 0.0
        %4592 = vmatpush1.msra.mxu0 0.0
        %4593 = vmatprep.subr.mxu0 0.0
        %4594 = vmatpush1.msra.mxu0 0.0
        %4595 = vmatprep.subr.mxu0 0.0
        %4596 = vmatpush1.msra.mxu0 0.0
        %4597 = vmatprep.subr.mxu0 0.0
        %4598 = vmatpush1.msra.mxu0 0.0
        %4599 = vmatprep.subr.mxu0 0.0
        %4600 = vmatpush1.msra.mxu0 0.0
        %4601 = vmatprep.subr.mxu0 0.0
        %4602 = vmatpush1.msra.mxu0 0.0
        %4603 = vmatprep.subr.mxu0 0.0
        %4604 = vmatpush1.msra.mxu0 0.0
        %4605 = vmatprep.subr.mxu0 0.0
        %4606 = vmatpush1.msra.mxu0 0.0
        %4607 = vmatprep.subr.mxu0 0.0
        %4608 = vmatpush1.msra.mxu0 0.0
        %4609 = vmatprep.subr.mxu0 0.0
        %4610 = vmatpush1.msra.mxu0 0.0
        %4611 = vmatprep.subr.mxu0 0.0
        %4612 = vmatpush1.msra.mxu0 0.0
        %4613 = vmatprep.subr.mxu0 0.0
        %4614 = vmatpush1.msra.mxu0 0.0
        %4615 = vmatprep.subr.mxu0 0.0
        %4616 = vmatpush1.msra.mxu0 0.0
        %4617 = vmatprep.subr.mxu0 0.0
        %4618 = vmatpush1.msra.mxu0 0.0
        %4619 = vmatprep.subr.mxu0 0.0
        %4620 = vmatpush1.msra.mxu0 0.0
        %4621 = vmatprep.subr.mxu0 0.0
        %4622 = vmatpush1.msra.mxu0 0.0
        %4623 = vmatprep.subr.mxu0 0.0
        %4624 = vmatpush1.msra.mxu0 0.0
        %4625 = vmatprep.subr.mxu0 0.0
        %4626 = vmatpush1.msra.mxu0 0.0
        %4627 = vmatprep.subr.mxu0 0.0
        %4628 = vmatpush1.msra.mxu0 0.0
        %4629 = vmatprep.mubr.f32.mxu0 0.0
        %4630 = vmatmul.mubr.f32.gmra.mrb[0].mxu0 %v4423
        %v4631 = vpop.f32.mrb[0].mxu0
        %v4632 = vadd.f32 %v4562, %v4631
        %v4633 = vpop.f32.mrb[0].mxu0
        %4634 = vdwg.mxu0
        %v4635 = vmax.f32 %v4632, 0.0
        %v4636 = vld [vmem:[%s19] sm:$0xff]
        %v4637 = vld [vmem:[%s19 + $0x8] sm:$0xff]
        %v4638 = vld [vmem:[%s19 + $0x10] sm:$0xff]
        %v4639 = vld [vmem:[%s19 + $0x18] sm:$0xff]
        %v4640 = vld [vmem:[%s19 + $0x20] sm:$0xff]
        %v4641 = vld [vmem:[%s19 + $0x28] sm:$0xff]
        %v4642 = vld [vmem:[%s19 + $0x30] sm:$0xff]
        %v4643 = vld [vmem:[%s19 + $0x38] sm:$0xff]
        %v4644 = vld [vmem:[%s19 + $0x40] sm:$0xff]
        %v4645 = vld [vmem:[%s19 + $0x48] sm:$0xff]
        %v4646 = vld [vmem:[%s19 + $0x50] sm:$0xff]
        %v4647 = vld [vmem:[%s19 + $0x58] sm:$0xff]
        %v4648 = vld [vmem:[%s19 + $0x60] sm:$0xff]
        %v4649 = vld [vmem:[%s19 + $0x68] sm:$0xff]
        %v4650 = vld [vmem:[%s19 + $0x70] sm:$0xff]
        %v4651 = vld [vmem:[%s19 + $0x78] sm:$0xff]
        %v4652 = vld [vmem:[#allocation15] sm:$0x1]
        %v4654 = vlaneseq
        %v4655 = vshrl.u32 %v4654, 7
        %v4656 = vsub.s32 0, %v4655
        %v4657 = vrot.slane %v4652, %v4656
        %4659 = vmatprep.subr.mxu0 0.0
        %4660 = vmatpush1.msra.mxu0 %v4636
        %4661 = vmatprep.subr.mxu0 0.0
        %4662 = vmatpush1.msra.mxu0 %v4637
        %4663 = vmatprep.subr.mxu0 0.0
        %4664 = vmatpush1.msra.mxu0 %v4638
        %4665 = vmatprep.subr.mxu0 0.0
        %4666 = vmatpush1.msra.mxu0 %v4639
        %4667 = vmatprep.subr.mxu0 0.0
        %4668 = vmatpush1.msra.mxu0 %v4640
        %4669 = vmatprep.subr.mxu0 0.0
        %4670 = vmatpush1.msra.mxu0 %v4641
        %4671 = vmatprep.subr.mxu0 0.0
        %4672 = vmatpush1.msra.mxu0 %v4642
        %4673 = vmatprep.subr.mxu0 0.0
        %4674 = vmatpush1.msra.mxu0 %v4643
        %4675 = vmatprep.subr.mxu0 0.0
        %4676 = vmatpush1.msra.mxu0 %v4644
        %4677 = vmatprep.subr.mxu0 0.0
        %4678 = vmatpush1.msra.mxu0 %v4645
        %4679 = vmatprep.subr.mxu0 0.0
        %4680 = vmatpush1.msra.mxu0 %v4646
        %4681 = vmatprep.subr.mxu0 0.0
        %4682 = vmatpush1.msra.mxu0 %v4647
        %4683 = vmatprep.subr.mxu0 0.0
        %4684 = vmatpush1.msra.mxu0 %v4648
        %4685 = vmatprep.subr.mxu0 0.0
        %4686 = vmatpush1.msra.mxu0 %v4649
        %4687 = vmatprep.subr.mxu0 0.0
        %4688 = vmatpush1.msra.mxu0 %v4650
        %4689 = vmatprep.subr.mxu0 0.0
        %4690 = vmatpush1.msra.mxu0 %v4651
        %4691 = vmatprep.subr.mxu0 0.0
        %4692 = vmatpush1.msra.mxu0 0.0
        %4693 = vmatprep.subr.mxu0 0.0
        %4694 = vmatpush1.msra.mxu0 0.0
        %4695 = vmatprep.subr.mxu0 0.0
        %4696 = vmatpush1.msra.mxu0 0.0
        %4697 = vmatprep.subr.mxu0 0.0
        %4698 = vmatpush1.msra.mxu0 0.0
        %4699 = vmatprep.subr.mxu0 0.0
        %4700 = vmatpush1.msra.mxu0 0.0
        %4701 = vmatprep.subr.mxu0 0.0
        %4702 = vmatpush1.msra.mxu0 0.0
        %4703 = vmatprep.subr.mxu0 0.0
        %4704 = vmatpush1.msra.mxu0 0.0
        %4705 = vmatprep.subr.mxu0 0.0
        %4706 = vmatpush1.msra.mxu0 0.0
        %4707 = vmatprep.subr.mxu0 0.0
        %4708 = vmatpush1.msra.mxu0 0.0
        %4709 = vmatprep.subr.mxu0 0.0
        %4710 = vmatpush1.msra.mxu0 0.0
        %4711 = vmatprep.subr.mxu0 0.0
        %4712 = vmatpush1.msra.mxu0 0.0
        %4713 = vmatprep.subr.mxu0 0.0
        %4714 = vmatpush1.msra.mxu0 0.0
        %4715 = vmatprep.subr.mxu0 0.0
        %4716 = vmatpush1.msra.mxu0 0.0
        %4717 = vmatprep.subr.mxu0 0.0
        %4718 = vmatpush1.msra.mxu0 0.0
        %4719 = vmatprep.subr.mxu0 0.0
        %4720 = vmatpush1.msra.mxu0 0.0
        %4721 = vmatprep.subr.mxu0 0.0
        %4722 = vmatpush1.msra.mxu0 0.0
        %4723 = vmatprep.mubr.f32.mxu0 0.0
        %4724 = vmatmul.mubr.f32.gmra.mrb[0].mxu0 %v4635
        %v4725 = vpop.f32.mrb[0].mxu0
        %v4726 = vadd.f32 %v4657, %v4725
        %v4727 = vpop.f32.mrb[0].mxu0
        %4728 = vdwg.mxu0
        %v4729 = vmax.f32 %v4726, 0.0
        %v4730 = vld [vmem:[#allocation16] sm:$0xff]
        %v4731 = vld [vmem:[#allocation16 + $0x8] sm:$0xff]
        %v4732 = vld [vmem:[#allocation16 + $0x10] sm:$0xff]
        %v4733 = vld [vmem:[#allocation16 + $0x18] sm:$0xff]
        %v4734 = vld [vmem:[#allocation16 + $0x20] sm:$0xff]
        %v4735 = vld [vmem:[#allocation16 + $0x28] sm:$0xff]
        %v4736 = vld [vmem:[#allocation16 + $0x30] sm:$0xff]
        %v4737 = vld [vmem:[#allocation16 + $0x38] sm:$0xff]
        %v4738 = vld [vmem:[#allocation16 + $0x40] sm:$0xff]
        %v4739 = vld [vmem:[#allocation16 + $0x48] sm:$0xff]
        %v4740 = vld [vmem:[#allocation16 + $0x50] sm:$0xff]
        %v4741 = vld [vmem:[#allocation16 + $0x58] sm:$0xff]
        %v4742 = vld [vmem:[#allocation16 + $0x60] sm:$0xff]
        %v4743 = vld [vmem:[#allocation16 + $0x68] sm:$0xff]
        %v4744 = vld [vmem:[#allocation16 + $0x70] sm:$0xff]
        %v4745 = vld [vmem:[#allocation16 + $0x78] sm:$0xff]
        %v4746 = vld [vmem:[#allocation16 + $0x80] sm:$0xff]
        %v4747 = vld [vmem:[#allocation16 + $0x88] sm:$0xff]
        %v4748 = vld [vmem:[#allocation16 + $0x90] sm:$0xff]
        %v4749 = vld [vmem:[#allocation16 + $0x98] sm:$0xff]
        %v4750 = vld [vmem:[#allocation16 + $0xa0] sm:$0xff]
        %v4751 = vld [vmem:[#allocation16 + $0xa8] sm:$0xff]
        %v4752 = vld [vmem:[#allocation16 + $0xb0] sm:$0xff]
        %v4753 = vld [vmem:[#allocation16 + $0xb8] sm:$0xff]
        %v4754 = vld [vmem:[#allocation16 + $0xc0] sm:$0xff]
        %v4755 = vld [vmem:[#allocation16 + $0xc8] sm:$0xff]
        %v4756 = vld [vmem:[#allocation16 + $0xd0] sm:$0xff]
        %v4757 = vld [vmem:[#allocation16 + $0xd8] sm:$0xff]
        %v4758 = vld [vmem:[#allocation16 + $0xe0] sm:$0xff]
        %v4759 = vld [vmem:[#allocation16 + $0xe8] sm:$0xff]
        %v4760 = vld [vmem:[#allocation16 + $0xf0] sm:$0xff]
        %v4761 = vld [vmem:[#allocation16 + $0xf8] sm:$0xff]
        %v4762 = vld [vmem:[#allocation16 + $0x100] sm:$0xff]
        %v4763 = vld [vmem:[#allocation16 + $0x108] sm:$0xff]
        %v4764 = vld [vmem:[#allocation16 + $0x110] sm:$0xff]
        %v4765 = vld [vmem:[#allocation16 + $0x118] sm:$0xff]
        %v4766 = vld [vmem:[#allocation16 + $0x120] sm:$0xff]
        %v4767 = vld [vmem:[#allocation16 + $0x128] sm:$0xff]
        %v4768 = vld [vmem:[#allocation16 + $0x130] sm:$0xff]
        %v4769 = vld [vmem:[#allocation16 + $0x138] sm:$0xff]
        %v4770 = vld [vmem:[#allocation16 + $0x140] sm:$0xff]
        %v4771 = vld [vmem:[#allocation16 + $0x148] sm:$0xff]
        %v4772 = vld [vmem:[#allocation16 + $0x150] sm:$0xff]
        %v4773 = vld [vmem:[#allocation16 + $0x158] sm:$0xff]
        %v4774 = vld [vmem:[#allocation16 + $0x160] sm:$0xff]
        %v4775 = vld [vmem:[#allocation16 + $0x168] sm:$0xff]
        %v4776 = vld [vmem:[#allocation16 + $0x170] sm:$0xff]
        %v4777 = vld [vmem:[#allocation16 + $0x178] sm:$0xff]
        %v4778 = vld [vmem:[#allocation16 + $0x180] sm:$0xff]
        %v4779 = vld [vmem:[#allocation16 + $0x188] sm:$0xff]
        %v4780 = vld [vmem:[#allocation16 + $0x190] sm:$0xff]
        %v4781 = vld [vmem:[#allocation16 + $0x198] sm:$0xff]
        %v4782 = vld [vmem:[#allocation16 + $0x1a0] sm:$0xff]
        %v4783 = vld [vmem:[#allocation16 + $0x1a8] sm:$0xff]
        %v4784 = vld [vmem:[#allocation16 + $0x1b0] sm:$0xff]
        %v4785 = vld [vmem:[#allocation16 + $0x1b8] sm:$0xff]
        %v4786 = vld [vmem:[#allocation16 + $0x1c0] sm:$0xff]
        %v4787 = vld [vmem:[#allocation16 + $0x1c8] sm:$0xff]
        %v4788 = vld [vmem:[#allocation16 + $0x1d0] sm:$0xff]
        %v4789 = vld [vmem:[#allocation16 + $0x1d8] sm:$0xff]
        %v4790 = vld [vmem:[#allocation16 + $0x1e0] sm:$0xff]
        %v4791 = vld [vmem:[#allocation16 + $0x1e8] sm:$0xff]
        %v4792 = vld [vmem:[#allocation16 + $0x1f0] sm:$0xff]
        %v4793 = vld [vmem:[#allocation16 + $0x1f8] sm:$0xff]
        %v4794 = vld [vmem:[#allocation16 + $0x200] sm:$0xff]
        %v4795 = vld [vmem:[#allocation16 + $0x208] sm:$0xff]
        %v4796 = vld [vmem:[#allocation16 + $0x210] sm:$0xff]
        %v4797 = vld [vmem:[#allocation16 + $0x218] sm:$0xff]
        %v4798 = vld [vmem:[#allocation16 + $0x220] sm:$0xff]
        %v4799 = vld [vmem:[#allocation16 + $0x228] sm:$0xff]
        %v4800 = vld [vmem:[#allocation16 + $0x230] sm:$0xff]
        %v4801 = vld [vmem:[#allocation16 + $0x238] sm:$0xff]
        %v4802 = vld [vmem:[#allocation16 + $0x240] sm:$0xff]
        %v4803 = vld [vmem:[#allocation16 + $0x248] sm:$0xff]
        %v4804 = vld [vmem:[#allocation16 + $0x250] sm:$0xff]
        %v4805 = vld [vmem:[#allocation18] sm:$0x1]
        %v4807 = vlaneseq
        %v4808 = vshrl.u32 %v4807, 7
        %v4809 = vsub.s32 0, %v4808
        %v4810 = vrot.slane %v4805, %v4809
        %v4852 = vrot.slane %v4178, 7
        %v4853 = vsel %vm4342, %v4852, %v4172
        %v4854 = vrot.slane %v4184, 6
        %v4855 = vsel %vm4345, %v4854, %v4853
        %v4856 = vrot.slane %v4190, 5
        %v4857 = vsel %vm4348, %v4856, %v4855
        %v4858 = vrot.slane %v4196, 4
        %v4859 = vsel %vm4351, %v4858, %v4857
        %v4860 = vrot.slane %v4202, 3
        %v4861 = vsel %vm4354, %v4860, %v4859
        %v4862 = vrot.slane %v4208, 2
        %v4863 = vsel %vm4357, %v4862, %v4861
        %v4864 = vrot.slane %v4214, 1
        %v4865 = vsel %vm4360, %v4864, %v4863
        %v4866 = vrot.slane %v4179, 7
        %v4867 = vsel %vm4342, %v4866, %v4173
        %v4868 = vrot.slane %v4185, 6
        %v4869 = vsel %vm4345, %v4868, %v4867
        %v4870 = vrot.slane %v4191, 5
        %v4871 = vsel %vm4348, %v4870, %v4869
        %v4872 = vrot.slane %v4197, 4
        %v4873 = vsel %vm4351, %v4872, %v4871
        %v4874 = vrot.slane %v4203, 3
        %v4875 = vsel %vm4354, %v4874, %v4873
        %v4876 = vrot.slane %v4209, 2
        %v4877 = vsel %vm4357, %v4876, %v4875
        %v4878 = vrot.slane %v4215, 1
        %v4879 = vsel %vm4360, %v4878, %v4877
        %v4880 = vrot.slane %v4180, 7
        %v4881 = vsel %vm4342, %v4880, %v4174
        %v4882 = vrot.slane %v4186, 6
        %v4883 = vsel %vm4345, %v4882, %v4881
        %v4884 = vrot.slane %v4192, 5
        %v4885 = vsel %vm4348, %v4884, %v4883
        %v4886 = vrot.slane %v4198, 4
        %v4887 = vsel %vm4351, %v4886, %v4885
        %v4888 = vrot.slane %v4204, 3
        %v4889 = vsel %vm4354, %v4888, %v4887
        %v4890 = vrot.slane %v4210, 2
        %v4891 = vsel %vm4357, %v4890, %v4889
        %v4892 = vrot.slane %v4216, 1
        %v4893 = vsel %vm4360, %v4892, %v4891
        %v4894 = vrot.slane %v4181, 7
        %v4895 = vsel %vm4342, %v4894, %v4175
        %v4896 = vrot.slane %v4187, 6
        %v4897 = vsel %vm4345, %v4896, %v4895
        %v4898 = vrot.slane %v4193, 5
        %v4899 = vsel %vm4348, %v4898, %v4897
        %v4900 = vrot.slane %v4199, 4
        %v4901 = vsel %vm4351, %v4900, %v4899
        %v4902 = vrot.slane %v4205, 3
        %v4903 = vsel %vm4354, %v4902, %v4901
        %v4904 = vrot.slane %v4211, 2
        %v4905 = vsel %vm4357, %v4904, %v4903
        %v4906 = vrot.slane %v4217, 1
        %v4907 = vsel %vm4360, %v4906, %v4905
        %v4908 = vrot.slane %v4182, 7
        %v4909 = vsel %vm4342, %v4908, %v4176
        %v4910 = vrot.slane %v4188, 6
        %v4911 = vsel %vm4345, %v4910, %v4909
        %v4912 = vrot.slane %v4194, 5
        %v4913 = vsel %vm4348, %v4912, %v4911
        %v4914 = vrot.slane %v4200, 4
        %v4915 = vsel %vm4351, %v4914, %v4913
        %v4916 = vrot.slane %v4206, 3
        %v4917 = vsel %vm4354, %v4916, %v4915
        %v4918 = vrot.slane %v4212, 2
        %v4919 = vsel %vm4357, %v4918, %v4917
        %v4920 = vrot.slane %v4218, 1
        %v4921 = vsel %vm4360, %v4920, %v4919
        %v4926 = vsel %vm4422, %v4921, 0
        %4928 = vmatprep.subr.mxu0 0.0
        %4929 = vmatpush1.msra.mxu0 %v4730
        %4930 = vmatprep.subr.mxu0 0.0
        %4931 = vmatpush1.msra.mxu0 %v4731
        %4932 = vmatprep.subr.mxu0 0.0
        %4933 = vmatpush1.msra.mxu0 %v4732
        %4934 = vmatprep.subr.mxu0 0.0
        %4935 = vmatpush1.msra.mxu0 %v4733
        %4936 = vmatprep.subr.mxu0 0.0
        %4937 = vmatpush1.msra.mxu0 %v4734
        %4938 = vmatprep.subr.mxu0 0.0
        %4939 = vmatpush1.msra.mxu0 %v4735
        %4940 = vmatprep.subr.mxu0 0.0
        %4941 = vmatpush1.msra.mxu0 %v4736
        %4942 = vmatprep.subr.mxu0 0.0
        %4943 = vmatpush1.msra.mxu0 %v4737
        %4944 = vmatprep.subr.mxu0 0.0
        %4945 = vmatpush1.msra.mxu0 %v4738
        %4946 = vmatprep.subr.mxu0 0.0
        %4947 = vmatpush1.msra.mxu0 %v4739
        %4948 = vmatprep.subr.mxu0 0.0
        %4949 = vmatpush1.msra.mxu0 %v4740
        %4950 = vmatprep.subr.mxu0 0.0
        %4951 = vmatpush1.msra.mxu0 %v4741
        %4952 = vmatprep.subr.mxu0 0.0
        %4953 = vmatpush1.msra.mxu0 %v4742
        %4954 = vmatprep.subr.mxu0 0.0
        %4955 = vmatpush1.msra.mxu0 %v4743
        %4956 = vmatprep.subr.mxu0 0.0
        %4957 = vmatpush1.msra.mxu0 %v4744
        %4958 = vmatprep.subr.mxu0 0.0
        %4959 = vmatpush1.msra.mxu0 %v4745
        %4960 = vmatprep.subr.mxu0 0.0
        %4961 = vmatpush1.msra.mxu0 %v4746
        %4962 = vmatprep.subr.mxu0 0.0
        %4963 = vmatpush1.msra.mxu0 %v4747
        %4964 = vmatprep.subr.mxu0 0.0
        %4965 = vmatpush1.msra.mxu0 %v4748
        %4966 = vmatprep.subr.mxu0 0.0
        %4967 = vmatpush1.msra.mxu0 %v4749
        %4968 = vmatprep.subr.mxu0 0.0
        %4969 = vmatpush1.msra.mxu0 %v4750
        %4970 = vmatprep.subr.mxu0 0.0
        %4971 = vmatpush1.msra.mxu0 %v4751
        %4972 = vmatprep.subr.mxu0 0.0
        %4973 = vmatpush1.msra.mxu0 %v4752
        %4974 = vmatprep.subr.mxu0 0.0
        %4975 = vmatpush1.msra.mxu0 %v4753
        %4976 = vmatprep.subr.mxu0 0.0
        %4977 = vmatpush1.msra.mxu0 %v4754
        %4978 = vmatprep.subr.mxu0 0.0
        %4979 = vmatpush1.msra.mxu0 %v4755
        %4980 = vmatprep.subr.mxu0 0.0
        %4981 = vmatpush1.msra.mxu0 %v4756
        %4982 = vmatprep.subr.mxu0 0.0
        %4983 = vmatpush1.msra.mxu0 %v4757
        %4984 = vmatprep.subr.mxu0 0.0
        %4985 = vmatpush1.msra.mxu0 %v4758
        %4986 = vmatprep.subr.mxu0 0.0
        %4987 = vmatpush1.msra.mxu0 %v4759
        %4988 = vmatprep.subr.mxu0 0.0
        %4989 = vmatpush1.msra.mxu0 %v4760
        %4990 = vmatprep.subr.mxu0 0.0
        %4991 = vmatpush1.msra.mxu0 %v4761
        %4992 = vmatprep.mubr.f32.mxu0 %v4879
        %4993 = vmatmul.mubr.f32.gmra.mrb[0].mxu0 %v4865
        %v4994 = vpop.f32.mrb[0].mxu0
        %v4995 = vadd.f32 %v4810, %v4994
        %v4996 = vpop.f32.mrb[0].mxu0
        %4997 = vdwg.mxu0
        %4998 = vmatprep.subr.mxu0 0.0
        %4999 = vmatpush1.msra.mxu0 %v4762
        %5000 = vmatprep.subr.mxu0 0.0
        %5001 = vmatpush1.msra.mxu0 %v4763
        %5002 = vmatprep.subr.mxu0 0.0
        %5003 = vmatpush1.msra.mxu0 %v4764
        %5004 = vmatprep.subr.mxu0 0.0
        %5005 = vmatpush1.msra.mxu0 %v4765
        %5006 = vmatprep.subr.mxu0 0.0
        %5007 = vmatpush1.msra.mxu0 %v4766
        %5008 = vmatprep.subr.mxu0 0.0
        %5009 = vmatpush1.msra.mxu0 %v4767
        %5010 = vmatprep.subr.mxu0 0.0
        %5011 = vmatpush1.msra.mxu0 %v4768
        %5012 = vmatprep.subr.mxu0 0.0
        %5013 = vmatpush1.msra.mxu0 %v4769
        %5014 = vmatprep.subr.mxu0 0.0
        %5015 = vmatpush1.msra.mxu0 %v4770
        %5016 = vmatprep.subr.mxu0 0.0
        %5017 = vmatpush1.msra.mxu0 %v4771
        %5018 = vmatprep.subr.mxu0 0.0
        %5019 = vmatpush1.msra.mxu0 %v4772
        %5020 = vmatprep.subr.mxu0 0.0
        %5021 = vmatpush1.msra.mxu0 %v4773
        %5022 = vmatprep.subr.mxu0 0.0
        %5023 = vmatpush1.msra.mxu0 %v4774
        %5024 = vmatprep.subr.mxu0 0.0
        %5025 = vmatpush1.msra.mxu0 %v4775
        %5026 = vmatprep.subr.mxu0 0.0
        %5027 = vmatpush1.msra.mxu0 %v4776
        %5028 = vmatprep.subr.mxu0 0.0
        %5029 = vmatpush1.msra.mxu0 %v4777
        %5030 = vmatprep.subr.mxu0 0.0
        %5031 = vmatpush1.msra.mxu0 %v4778
        %5032 = vmatprep.subr.mxu0 0.0
        %5033 = vmatpush1.msra.mxu0 %v4779
        %5034 = vmatprep.subr.mxu0 0.0
        %5035 = vmatpush1.msra.mxu0 %v4780
        %5036 = vmatprep.subr.mxu0 0.0
        %5037 = vmatpush1.msra.mxu0 %v4781
        %5038 = vmatprep.subr.mxu0 0.0
        %5039 = vmatpush1.msra.mxu0 %v4782
        %5040 = vmatprep.subr.mxu0 0.0
        %5041 = vmatpush1.msra.mxu0 %v4783
        %5042 = vmatprep.subr.mxu0 0.0
        %5043 = vmatpush1.msra.mxu0 %v4784
        %5044 = vmatprep.subr.mxu0 0.0
        %5045 = vmatpush1.msra.mxu0 %v4785
        %5046 = vmatprep.subr.mxu0 0.0
        %5047 = vmatpush1.msra.mxu0 %v4786
        %5048 = vmatprep.subr.mxu0 0.0
        %5049 = vmatpush1.msra.mxu0 %v4787
        %5050 = vmatprep.subr.mxu0 0.0
        %5051 = vmatpush1.msra.mxu0 %v4788
        %5052 = vmatprep.subr.mxu0 0.0
        %5053 = vmatpush1.msra.mxu0 %v4789
        %5054 = vmatprep.subr.mxu0 0.0
        %5055 = vmatpush1.msra.mxu0 %v4790
        %5056 = vmatprep.subr.mxu0 0.0
        %5057 = vmatpush1.msra.mxu0 %v4791
        %5058 = vmatprep.subr.mxu0 0.0
        %5059 = vmatpush1.msra.mxu0 %v4792
        %5060 = vmatprep.subr.mxu0 0.0
        %5061 = vmatpush1.msra.mxu0 %v4793
        %5062 = vmatprep.mubr.f32.mxu0 %v4907
        %5063 = vmatmul.mubr.f32.gmra.mrb[0].mxu0 %v4893
        %v5064 = vpop.f32.mrb[0].mxu0
        %v5065 = vadd.f32 %v4995, %v5064
        %v5066 = vpop.f32.mrb[0].mxu0
        %5067 = vdwg.mxu0
        %5068 = vmatprep.subr.mxu0 0.0
        %5069 = vmatpush1.msra.mxu0 %v4794
        %5070 = vmatprep.subr.mxu0 0.0
        %5071 = vmatpush1.msra.mxu0 %v4795
        %5072 = vmatprep.subr.mxu0 0.0
        %5073 = vmatpush1.msra.mxu0 %v4796
        %5074 = vmatprep.subr.mxu0 0.0
        %5075 = vmatpush1.msra.mxu0 %v4797
        %5076 = vmatprep.subr.mxu0 0.0
        %5077 = vmatpush1.msra.mxu0 %v4798
        %5078 = vmatprep.subr.mxu0 0.0
        %5079 = vmatpush1.msra.mxu0 %v4799
        %5080 = vmatprep.subr.mxu0 0.0
        %5081 = vmatpush1.msra.mxu0 %v4800
        %5082 = vmatprep.subr.mxu0 0.0
        %5083 = vmatpush1.msra.mxu0 %v4801
        %5084 = vmatprep.subr.mxu0 0.0
        %5085 = vmatpush1.msra.mxu0 %v4802
        %5086 = vmatprep.subr.mxu0 0.0
        %5087 = vmatpush1.msra.mxu0 %v4803
        %5088 = vmatprep.subr.mxu0 0.0
        %5089 = vmatpush1.msra.mxu0 %v4804
        %5090 = vmatprep.subr.mxu0 0.0
        %5091 = vmatpush1.msra.mxu0 0.0
        %5092 = vmatprep.subr.mxu0 0.0
        %5093 = vmatpush1.msra.mxu0 0.0
        %5094 = vmatprep.subr.mxu0 0.0
        %5095 = vmatpush1.msra.mxu0 0.0
        %5096 = vmatprep.subr.mxu0 0.0
        %5097 = vmatpush1.msra.mxu0 0.0
        %5098 = vmatprep.subr.mxu0 0.0
        %5099 = vmatpush1.msra.mxu0 0.0
        %5100 = vmatprep.subr.mxu0 0.0
        %5101 = vmatpush1.msra.mxu0 0.0
        %5102 = vmatprep.subr.mxu0 0.0
        %5103 = vmatpush1.msra.mxu0 0.0
        %5104 = vmatprep.subr.mxu0 0.0
        %5105 = vmatpush1.msra.mxu0 0.0
        %5106 = vmatprep.subr.mxu0 0.0
        %5107 = vmatpush1.msra.mxu0 0.0
        %5108 = vmatprep.subr.mxu0 0.0
        %5109 = vmatpush1.msra.mxu0 0.0
        %5110 = vmatprep.subr.mxu0 0.0
        %5111 = vmatpush1.msra.mxu0 0.0
        %5112 = vmatprep.subr.mxu0 0.0
        %5113 = vmatpush1.msra.mxu0 0.0
        %5114 = vmatprep.subr.mxu0 0.0
        %5115 = vmatpush1.msra.mxu0 0.0
        %5116 = vmatprep.subr.mxu0 0.0
        %5117 = vmatpush1.msra.mxu0 0.0
        %5118 = vmatprep.subr.mxu0 0.0
        %5119 = vmatpush1.msra.mxu0 0.0
        %5120 = vmatprep.subr.mxu0 0.0
        %5121 = vmatpush1.msra.mxu0 0.0
        %5122 = vmatprep.subr.mxu0 0.0
        %5123 = vmatpush1.msra.mxu0 0.0
        %5124 = vmatprep.subr.mxu0 0.0
        %5125 = vmatpush1.msra.mxu0 0.0
        %5126 = vmatprep.subr.mxu0 0.0
        %5127 = vmatpush1.msra.mxu0 0.0
        %5128 = vmatprep.subr.mxu0 0.0
        %5129 = vmatpush1.msra.mxu0 0.0
        %5130 = vmatprep.subr.mxu0 0.0
        %5131 = vmatpush1.msra.mxu0 0.0
        %5132 = vmatprep.mubr.f32.mxu0 0.0
        %5133 = vmatmul.mubr.f32.gmra.mrb[0].mxu0 %v4926
        %v5134 = vpop.f32.mrb[0].mxu0
        %v5135 = vadd.f32 %v5065, %v5134
        %v5136 = vpop.f32.mrb[0].mxu0
        %5137 = vdwg.mxu0
        %v5138 = vmax.f32 %v5135, 0.0
        %v5139 = vld [vmem:[%s27] sm:$0xff]
        %v5140 = vld [vmem:[%s27 + $0x8] sm:$0xff]
        %v5141 = vld [vmem:[%s27 + $0x10] sm:$0xff]
        %v5142 = vld [vmem:[%s27 + $0x18] sm:$0xff]
        %v5143 = vld [vmem:[%s27 + $0x20] sm:$0xff]
        %v5144 = vld [vmem:[%s27 + $0x28] sm:$0xff]
        %v5145 = vld [vmem:[%s27 + $0x30] sm:$0xff]
        %v5146 = vld [vmem:[%s27 + $0x38] sm:$0xff]
        %v5147 = vld [vmem:[%s27 + $0x40] sm:$0xff]
        %v5148 = vld [vmem:[%s27 + $0x48] sm:$0xff]
        %v5149 = vld [vmem:[%s27 + $0x50] sm:$0xff]
        %v5150 = vld [vmem:[%s27 + $0x58] sm:$0xff]
        %v5151 = vld [vmem:[%s27 + $0x60] sm:$0xff]
        %v5152 = vld [vmem:[%s27 + $0x68] sm:$0xff]
        %v5153 = vld [vmem:[%s27 + $0x70] sm:$0xff]
        %v5154 = vld [vmem:[%s27 + $0x78] sm:$0xff]
        %v5155 = vld [vmem:[#allocation19] sm:$0x1]
        %v5157 = vlaneseq
        %v5158 = vshrl.u32 %v5157, 7
        %v5159 = vsub.s32 0, %v5158
        %v5160 = vrot.slane %v5155, %v5159
        %5162 = vmatprep.subr.mxu0 0.0
        %5163 = vmatpush1.msra.mxu0 %v5139
        %5164 = vmatprep.subr.mxu0 0.0
        %5165 = vmatpush1.msra.mxu0 %v5140
        %5166 = vmatprep.subr.mxu0 0.0
        %5167 = vmatpush1.msra.mxu0 %v5141
        %5168 = vmatprep.subr.mxu0 0.0
        %5169 = vmatpush1.msra.mxu0 %v5142
        %5170 = vmatprep.subr.mxu0 0.0
        %5171 = vmatpush1.msra.mxu0 %v5143
        %5172 = vmatprep.subr.mxu0 0.0
        %5173 = vmatpush1.msra.mxu0 %v5144
        %5174 = vmatprep.subr.mxu0 0.0
        %5175 = vmatpush1.msra.mxu0 %v5145
        %5176 = vmatprep.subr.mxu0 0.0
        %5177 = vmatpush1.msra.mxu0 %v5146
        %5178 = vmatprep.subr.mxu0 0.0
        %5179 = vmatpush1.msra.mxu0 %v5147
        %5180 = vmatprep.subr.mxu0 0.0
        %5181 = vmatpush1.msra.mxu0 %v5148
        %5182 = vmatprep.subr.mxu0 0.0
        %5183 = vmatpush1.msra.mxu0 %v5149
        %5184 = vmatprep.subr.mxu0 0.0
        %5185 = vmatpush1.msra.mxu0 %v5150
        %5186 = vmatprep.subr.mxu0 0.0
        %5187 = vmatpush1.msra.mxu0 %v5151
        %5188 = vmatprep.subr.mxu0 0.0
        %5189 = vmatpush1.msra.mxu0 %v5152
        %5190 = vmatprep.subr.mxu0 0.0
        %5191 = vmatpush1.msra.mxu0 %v5153
        %5192 = vmatprep.subr.mxu0 0.0
        %5193 = vmatpush1.msra.mxu0 %v5154
        %5194 = vmatprep.subr.mxu0 0.0
        %5195 = vmatpush1.msra.mxu0 0.0
        %5196 = vmatprep.subr.mxu0 0.0
        %5197 = vmatpush1.msra.mxu0 0.0
        %5198 = vmatprep.subr.mxu0 0.0
        %5199 = vmatpush1.msra.mxu0 0.0
        %5200 = vmatprep.subr.mxu0 0.0
        %5201 = vmatpush1.msra.mxu0 0.0
        %5202 = vmatprep.subr.mxu0 0.0
        %5203 = vmatpush1.msra.mxu0 0.0
        %5204 = vmatprep.subr.mxu0 0.0
        %5205 = vmatpush1.msra.mxu0 0.0
        %5206 = vmatprep.subr.mxu0 0.0
        %5207 = vmatpush1.msra.mxu0 0.0
        %5208 = vmatprep.subr.mxu0 0.0
        %5209 = vmatpush1.msra.mxu0 0.0
        %5210 = vmatprep.subr.mxu0 0.0
        %5211 = vmatpush1.msra.mxu0 0.0
        %5212 = vmatprep.subr.mxu0 0.0
        %5213 = vmatpush1.msra.mxu0 0.0
        %5214 = vmatprep.subr.mxu0 0.0
        %5215 = vmatpush1.msra.mxu0 0.0
        %5216 = vmatprep.subr.mxu0 0.0
        %5217 = vmatpush1.msra.mxu0 0.0
        %5218 = vmatprep.subr.mxu0 0.0
        %5219 = vmatpush1.msra.mxu0 0.0
        %5220 = vmatprep.subr.mxu0 0.0
        %5221 = vmatpush1.msra.mxu0 0.0
        %5222 = vmatprep.subr.mxu0 0.0
        %5223 = vmatpush1.msra.mxu0 0.0
        %5224 = vmatprep.subr.mxu0 0.0
        %5225 = vmatpush1.msra.mxu0 0.0
        %5226 = vmatprep.mubr.f32.mxu0 0.0
        %5227 = vmatmul.mubr.f32.gmra.mrb[0].mxu0 %v5138
        %v5228 = vpop.f32.mrb[0].mxu0
        %v5229 = vadd.f32 %v5160, %v5228
        %v5230 = vpop.f32.mrb[0].mxu0
        %5231 = vdwg.mxu0
        %v5232 = vmax.f32 %v5229, 0.0
        %v5233 = vld [vmem:[%s1231] sm:$0xff]
        %v5234 = vld [vmem:[#allocation21] sm:$0xff]
        %v5235 = vld [vmem:[#allocation21 + $0x8] sm:$0x3]
        %v5236 = vld [vmem:[#allocation22] sm:$0x1]
        %v5238 = vlaneseq
        %v5239 = vshrl.u32 %v5238, 7
        %v5240 = vsub.s32 0, %v5239
        %v5241 = vrot.slane %v5236, %v5240
        %vm5243 = vcmask 80896
        %v5245 = vsel %vm5243, %v5233, 0
        %vm5247 = vcmask 1041408
        %v5249 = vsel %vm5247, %v5235, 0
        %5251 = vmatprep.subr.mxu0 0.0
        %5252 = vmatpush1.msra.mxu0 %v5234
        %5253 = vmatprep.subr.mxu0 0.0
        %5254 = vmatpush1.msra.mxu0 %v5249
        %5255 = vmatprep.subr.mxu0 0.0
        %5256 = vmatpush1.msra.mxu0 0.0
        %5257 = vmatprep.subr.mxu0 0.0
        %5258 = vmatpush1.msra.mxu0 0.0
        %5259 = vmatprep.subr.mxu0 0.0
        %5260 = vmatpush1.msra.mxu0 0.0
        %5261 = vmatprep.subr.mxu0 0.0
        %5262 = vmatpush1.msra.mxu0 0.0
        %5263 = vmatprep.subr.mxu0 0.0
        %5264 = vmatpush1.msra.mxu0 0.0
        %5265 = vmatprep.subr.mxu0 0.0
        %5266 = vmatpush1.msra.mxu0 0.0
        %5267 = vmatprep.subr.mxu0 0.0
        %5268 = vmatpush1.msra.mxu0 0.0
        %5269 = vmatprep.subr.mxu0 0.0
        %5270 = vmatpush1.msra.mxu0 0.0
        %5271 = vmatprep.subr.mxu0 0.0
        %5272 = vmatpush1.msra.mxu0 0.0
        %5273 = vmatprep.subr.mxu0 0.0
        %5274 = vmatpush1.msra.mxu0 0.0
        %5275 = vmatprep.subr.mxu0 0.0
        %5276 = vmatpush1.msra.mxu0 0.0
        %5277 = vmatprep.subr.mxu0 0.0
        %5278 = vmatpush1.msra.mxu0 0.0
        %5279 = vmatprep.subr.mxu0 0.0
        %5280 = vmatpush1.msra.mxu0 0.0
        %5281 = vmatprep.subr.mxu0 0.0
        %5282 = vmatpush1.msra.mxu0 0.0
        %5283 = vmatprep.subr.mxu0 0.0
        %5284 = vmatpush1.msra.mxu0 0.0
        %5285 = vmatprep.subr.mxu0 0.0
        %5286 = vmatpush1.msra.mxu0 0.0
        %5287 = vmatprep.subr.mxu0 0.0
        %5288 = vmatpush1.msra.mxu0 0.0
        %5289 = vmatprep.subr.mxu0 0.0
        %5290 = vmatpush1.msra.mxu0 0.0
        %5291 = vmatprep.subr.mxu0 0.0
        %5292 = vmatpush1.msra.mxu0 0.0
        %5293 = vmatprep.subr.mxu0 0.0
        %5294 = vmatpush1.msra.mxu0 0.0
        %5295 = vmatprep.subr.mxu0 0.0
        %5296 = vmatpush1.msra.mxu0 0.0
        %5297 = vmatprep.subr.mxu0 0.0
        %5298 = vmatpush1.msra.mxu0 0.0
        %5299 = vmatprep.subr.mxu0 0.0
        %5300 = vmatpush1.msra.mxu0 0.0
        %5301 = vmatprep.subr.mxu0 0.0
        %5302 = vmatpush1.msra.mxu0 0.0
        %5303 = vmatprep.subr.mxu0 0.0
        %5304 = vmatpush1.msra.mxu0 0.0
        %5305 = vmatprep.subr.mxu0 0.0
        %5306 = vmatpush1.msra.mxu0 0.0
        %5307 = vmatprep.subr.mxu0 0.0
        %5308 = vmatpush1.msra.mxu0 0.0
        %5309 = vmatprep.subr.mxu0 0.0
        %5310 = vmatpush1.msra.mxu0 0.0
        %5311 = vmatprep.subr.mxu0 0.0
        %5312 = vmatpush1.msra.mxu0 0.0
        %5313 = vmatprep.subr.mxu0 0.0
        %5314 = vmatpush1.msra.mxu0 0.0
        %5315 = vmatprep.mubr.f32.mxu0 0.0
        %5316 = vmatmul.mubr.f32.gmra.mrb[0].mxu0 %v5245
        %v5317 = vpop.f32.mrb[0].mxu0
        %v5318 = vadd.f32 %v5241, %v5317
        %v5319 = vpop.f32.mrb[0].mxu0
        %5320 = vdwg.mxu0
        %v5321 = vmax.f32 %v5318, 0.0
        %v5322 = vld [vmem:[%s1240] sm:$0xff]
        %v5323 = vld [vmem:[#allocation24] sm:$0xff]
        %v5324 = vld [vmem:[#allocation24 + $0x8] sm:$0x3]
        %v5325 = vld [vmem:[#allocation25] sm:$0x1]
        %v5327 = vlaneseq
        %v5328 = vshrl.u32 %v5327, 7
        %v5329 = vsub.s32 0, %v5328
        %v5330 = vrot.slane %v5325, %v5329
        %v5333 = vsel %vm5243, %v5322, 0
        %v5336 = vsel %vm5247, %v5324, 0
        %5338 = vmatprep.subr.mxu0 0.0
        %5339 = vmatpush1.msra.mxu0 %v5323
        %5340 = vmatprep.subr.mxu0 0.0
        %5341 = vmatpush1.msra.mxu0 %v5336
        %5342 = vmatprep.subr.mxu0 0.0
        %5343 = vmatpush1.msra.mxu0 0.0
        %5344 = vmatprep.subr.mxu0 0.0
        %5345 = vmatpush1.msra.mxu0 0.0
        %5346 = vmatprep.subr.mxu0 0.0
        %5347 = vmatpush1.msra.mxu0 0.0
        %5348 = vmatprep.subr.mxu0 0.0
        %5349 = vmatpush1.msra.mxu0 0.0
        %5350 = vmatprep.subr.mxu0 0.0
        %5351 = vmatpush1.msra.mxu0 0.0
        %5352 = vmatprep.subr.mxu0 0.0
        %5353 = vmatpush1.msra.mxu0 0.0
        %5354 = vmatprep.subr.mxu0 0.0
        %5355 = vmatpush1.msra.mxu0 0.0
        %5356 = vmatprep.subr.mxu0 0.0
        %5357 = vmatpush1.msra.mxu0 0.0
        %5358 = vmatprep.subr.mxu0 0.0
        %5359 = vmatpush1.msra.mxu0 0.0
        %5360 = vmatprep.subr.mxu0 0.0
        %5361 = vmatpush1.msra.mxu0 0.0
        %5362 = vmatprep.subr.mxu0 0.0
        %5363 = vmatpush1.msra.mxu0 0.0
        %5364 = vmatprep.subr.mxu0 0.0
        %5365 = vmatpush1.msra.mxu0 0.0
        %5366 = vmatprep.subr.mxu0 0.0
        %5367 = vmatpush1.msra.mxu0 0.0
        %5368 = vmatprep.subr.mxu0 0.0
        %5369 = vmatpush1.msra.mxu0 0.0
        %5370 = vmatprep.subr.mxu0 0.0
        %5371 = vmatpush1.msra.mxu0 0.0
        %5372 = vmatprep.subr.mxu0 0.0
        %5373 = vmatpush1.msra.mxu0 0.0
        %5374 = vmatprep.subr.mxu0 0.0
        %5375 = vmatpush1.msra.mxu0 0.0
        %5376 = vmatprep.subr.mxu0 0.0
        %5377 = vmatpush1.msra.mxu0 0.0
        %5378 = vmatprep.subr.mxu0 0.0
        %5379 = vmatpush1.msra.mxu0 0.0
        %5380 = vmatprep.subr.mxu0 0.0
        %5381 = vmatpush1.msra.mxu0 0.0
        %5382 = vmatprep.subr.mxu0 0.0
        %5383 = vmatpush1.msra.mxu0 0.0
        %5384 = vmatprep.subr.mxu0 0.0
        %5385 = vmatpush1.msra.mxu0 0.0
        %5386 = vmatprep.subr.mxu0 0.0
        %5387 = vmatpush1.msra.mxu0 0.0
        %5388 = vmatprep.subr.mxu0 0.0
        %5389 = vmatpush1.msra.mxu0 0.0
        %5390 = vmatprep.subr.mxu0 0.0
        %5391 = vmatpush1.msra.mxu0 0.0
        %5392 = vmatprep.subr.mxu0 0.0
        %5393 = vmatpush1.msra.mxu0 0.0
        %5394 = vmatprep.subr.mxu0 0.0
        %5395 = vmatpush1.msra.mxu0 0.0
        %5396 = vmatprep.subr.mxu0 0.0
        %5397 = vmatpush1.msra.mxu0 0.0
        %5398 = vmatprep.subr.mxu0 0.0
        %5399 = vmatpush1.msra.mxu0 0.0
        %5400 = vmatprep.subr.mxu0 0.0
        %5401 = vmatpush1.msra.mxu0 0.0
        %5402 = vmatprep.mubr.f32.mxu0 0.0
        %5403 = vmatmul.mubr.f32.gmra.mrb[0].mxu0 %v5333
        %v5404 = vpop.f32.mrb[0].mxu0
        %v5405 = vadd.f32 %v5330, %v5404
        %v5406 = vpop.f32.mrb[0].mxu0
        %5407 = vdwg.mxu0
        %v5408 = vmax.f32 %v5405, 0.0
        %v5409 = vld [vmem:[#allocation27] sm:$0xff]
        %v5410 = vld [vmem:[#allocation27 + $0x8] sm:$0xff]
        %v5411 = vld [vmem:[#allocation27 + $0x10] sm:$0xff]
        %v5412 = vld [vmem:[#allocation27 + $0x18] sm:$0xff]
        %v5413 = vld [vmem:[#allocation27 + $0x20] sm:$0xff]
        %v5414 = vld [vmem:[#allocation27 + $0x28] sm:$0xff]
        %v5415 = vld [vmem:[#allocation27 + $0x30] sm:$0xff]
        %v5416 = vld [vmem:[#allocation27 + $0x38] sm:$0xff]
        %v5417 = vld [vmem:[#allocation28] sm:$0xff]
        %v5418 = vld [vmem:[#allocation28 + $0x8] sm:$0xff]
        %v5419 = vld [vmem:[#allocation28 + $0x10] sm:$0xff]
        %v5420 = vld [vmem:[#allocation28 + $0x18] sm:$0xff]
        %v5421 = vld [vmem:[#allocation28 + $0x20] sm:$0xff]
        %v5422 = vld [vmem:[#allocation28 + $0x28] sm:$0xff]
        %v5423 = vld [vmem:[#allocation28 + $0x30] sm:$0xff]
        %v5424 = vld [vmem:[#allocation28 + $0x38] sm:$0xff]
        %vm5425 = vcmask 523264
        %v5427 = vsel %vm5425, %v5321, 0
        %5429 = vmatprep.subr.mxu0 0.0
        %5430 = vmatpush1.msra.mxu0 %v5417
        %5431 = vmatprep.subr.mxu0 0.0
        %5432 = vmatpush1.msra.mxu0 %v5418
        %5433 = vmatprep.subr.mxu0 0.0
        %5434 = vmatpush1.msra.mxu0 %v5419
        %5435 = vmatprep.subr.mxu0 0.0
        %5436 = vmatpush1.msra.mxu0 %v5420
        %5437 = vmatprep.subr.mxu0 0.0
        %5438 = vmatpush1.msra.mxu0 %v5421
        %5439 = vmatprep.subr.mxu0 0.0
        %5440 = vmatpush1.msra.mxu0 %v5422
        %5441 = vmatprep.subr.mxu0 0.0
        %5442 = vmatpush1.msra.mxu0 %v5423
        %5443 = vmatprep.subr.mxu0 0.0
        %5444 = vmatpush1.msra.mxu0 %v5424
        %5445 = vmatprep.subr.mxu0 0.0
        %5446 = vmatpush1.msra.mxu0 0.0
        %5447 = vmatprep.subr.mxu0 0.0
        %5448 = vmatpush1.msra.mxu0 0.0
        %5449 = vmatprep.subr.mxu0 0.0
        %5450 = vmatpush1.msra.mxu0 0.0
        %5451 = vmatprep.subr.mxu0 0.0
        %5452 = vmatpush1.msra.mxu0 0.0
        %5453 = vmatprep.subr.mxu0 0.0
        %5454 = vmatpush1.msra.mxu0 0.0
        %5455 = vmatprep.subr.mxu0 0.0
        %5456 = vmatpush1.msra.mxu0 0.0
        %5457 = vmatprep.subr.mxu0 0.0
        %5458 = vmatpush1.msra.mxu0 0.0
        %5459 = vmatprep.subr.mxu0 0.0
        %5460 = vmatpush1.msra.mxu0 0.0
        %5461 = vmatprep.subr.mxu0 0.0
        %5462 = vmatpush1.msra.mxu0 0.0
        %5463 = vmatprep.subr.mxu0 0.0
        %5464 = vmatpush1.msra.mxu0 0.0
        %5465 = vmatprep.subr.mxu0 0.0
        %5466 = vmatpush1.msra.mxu0 0.0
        %5467 = vmatprep.subr.mxu0 0.0
        %5468 = vmatpush1.msra.mxu0 0.0
        %5469 = vmatprep.subr.mxu0 0.0
        %5470 = vmatpush1.msra.mxu0 0.0
        %5471 = vmatprep.subr.mxu0 0.0
        %5472 = vmatpush1.msra.mxu0 0.0
        %5473 = vmatprep.subr.mxu0 0.0
        %5474 = vmatpush1.msra.mxu0 0.0
        %5475 = vmatprep.subr.mxu0 0.0
        %5476 = vmatpush1.msra.mxu0 0.0
        %5477 = vmatprep.subr.mxu0 0.0
        %5478 = vmatpush1.msra.mxu0 0.0
        %5479 = vmatprep.subr.mxu0 0.0
        %5480 = vmatpush1.msra.mxu0 0.0
        %5481 = vmatprep.subr.mxu0 0.0
        %5482 = vmatpush1.msra.mxu0 0.0
        %5483 = vmatprep.subr.mxu0 0.0
        %5484 = vmatpush1.msra.mxu0 0.0
        %5485 = vmatprep.subr.mxu0 0.0
        %5486 = vmatpush1.msra.mxu0 0.0
        %5487 = vmatprep.subr.mxu0 0.0
        %5488 = vmatpush1.msra.mxu0 0.0
        %5489 = vmatprep.subr.mxu0 0.0
        %5490 = vmatpush1.msra.mxu0 0.0
        %5491 = vmatprep.subr.mxu0 0.0
        %5492 = vmatpush1.msra.mxu0 0.0
        %5493 = vmatprep.mubr.f32.mxu0 0.0
        %5494 = vmatmul.mubr.f32.gmra.mrb[0].mxu0 %v5427
        %v5495 = vpop.f32.mrb[0].mxu0
        %v5496 = vadd.f32 0.0, %v5495
        %v5497 = vpop.f32.mrb[0].mxu0
        %5498 = vdwg.mxu0
        %v5500 = vsel %vm5425, %v4729, 0
        %5502 = vmatprep.subr.mxu0 0.0
        %5503 = vmatpush1.msra.mxu0 %v5409
        %5504 = vmatprep.subr.mxu0 0.0
        %5505 = vmatpush1.msra.mxu0 %v5410
        %5506 = vmatprep.subr.mxu0 0.0
        %5507 = vmatpush1.msra.mxu0 %v5411
        %5508 = vmatprep.subr.mxu0 0.0
        %5509 = vmatpush1.msra.mxu0 %v5412
        %5510 = vmatprep.subr.mxu0 0.0
        %5511 = vmatpush1.msra.mxu0 %v5413
        %5512 = vmatprep.subr.mxu0 0.0
        %5513 = vmatpush1.msra.mxu0 %v5414
        %5514 = vmatprep.subr.mxu0 0.0
        %5515 = vmatpush1.msra.mxu0 %v5415
        %5516 = vmatprep.subr.mxu0 0.0
        %5517 = vmatpush1.msra.mxu0 %v5416
        %5518 = vmatprep.subr.mxu0 0.0
        %5519 = vmatpush1.msra.mxu0 0.0
        %5520 = vmatprep.subr.mxu0 0.0
        %5521 = vmatpush1.msra.mxu0 0.0
        %5522 = vmatprep.subr.mxu0 0.0
        %5523 = vmatpush1.msra.mxu0 0.0
        %5524 = vmatprep.subr.mxu0 0.0
        %5525 = vmatpush1.msra.mxu0 0.0
        %5526 = vmatprep.subr.mxu0 0.0
        %5527 = vmatpush1.msra.mxu0 0.0
        %5528 = vmatprep.subr.mxu0 0.0
        %5529 = vmatpush1.msra.mxu0 0.0
        %5530 = vmatprep.subr.mxu0 0.0
        %5531 = vmatpush1.msra.mxu0 0.0
        %5532 = vmatprep.subr.mxu0 0.0
        %5533 = vmatpush1.msra.mxu0 0.0
        %5534 = vmatprep.subr.mxu0 0.0
        %5535 = vmatpush1.msra.mxu0 0.0
        %5536 = vmatprep.subr.mxu0 0.0
        %5537 = vmatpush1.msra.mxu0 0.0
        %5538 = vmatprep.subr.mxu0 0.0
        %5539 = vmatpush1.msra.mxu0 0.0
        %5540 = vmatprep.subr.mxu0 0.0
        %5541 = vmatpush1.msra.mxu0 0.0
        %5542 = vmatprep.subr.mxu0 0.0
        %5543 = vmatpush1.msra.mxu0 0.0
        %5544 = vmatprep.subr.mxu0 0.0
        %5545 = vmatpush1.msra.mxu0 0.0
        %5546 = vmatprep.subr.mxu0 0.0
        %5547 = vmatpush1.msra.mxu0 0.0
        %5548 = vmatprep.subr.mxu0 0.0
        %5549 = vmatpush1.msra.mxu0 0.0
        %5550 = vmatprep.subr.mxu0 0.0
        %5551 = vmatpush1.msra.mxu0 0.0
        %5552 = vmatprep.subr.mxu0 0.0
        %5553 = vmatpush1.msra.mxu0 0.0
        %5554 = vmatprep.subr.mxu0 0.0
        %5555 = vmatpush1.msra.mxu0 0.0
        %5556 = vmatprep.subr.mxu0 0.0
        %5557 = vmatpush1.msra.mxu0 0.0
        %5558 = vmatprep.subr.mxu0 0.0
        %5559 = vmatpush1.msra.mxu0 0.0
        %5560 = vmatprep.subr.mxu0 0.0
        %5561 = vmatpush1.msra.mxu0 0.0
        %5562 = vmatprep.subr.mxu0 0.0
        %5563 = vmatpush1.msra.mxu0 0.0
        %5564 = vmatprep.subr.mxu0 0.0
        %5565 = vmatpush1.msra.mxu0 0.0
        %5566 = vmatprep.mubr.f32.mxu0 0.0
        %5567 = vmatmul.mubr.f32.gmra.mrb[0].mxu0 %v5500
        %v5568 = vpop.f32.mrb[0].mxu0
        %v5569 = vadd.f32 %v5496, %v5568
        %v5570 = vpop.f32.mrb[0].mxu0
        %5571 = vdwg.mxu0
        %v5572 = vld [vmem:[#allocation30] sm:$0x1]
        %v5574 = vlaneseq
        %v5575 = vshrl.u32 %v5574, 7
        %v5576 = vsub.s32 0, %v5575
        %v5577 = vrot.slane %v5572, %v5576
        %v5579 = vadd.f32 %v5569, %v5577
        %v5580 = vmax.f32 %v5579, 0.0
        %v5581 = vld [vmem:[%s45] sm:$0xff]
        %v5582 = vld [vmem:[%s45 + $0x8] sm:$0xff]
        %v5583 = vld [vmem:[%s45 + $0x10] sm:$0xff]
        %v5584 = vld [vmem:[%s45 + $0x18] sm:$0xff]
        %v5585 = vld [vmem:[%s45 + $0x20] sm:$0xff]
        %v5586 = vld [vmem:[%s45 + $0x28] sm:$0xff]
        %v5587 = vld [vmem:[%s45 + $0x30] sm:$0xff]
        %v5588 = vld [vmem:[%s45 + $0x38] sm:$0xff]
        %v5589 = vld [vmem:[#allocation31] sm:$0xff]
        %v5590 = vld [vmem:[#allocation31 + $0x8] sm:$0xff]
        %v5591 = vld [vmem:[#allocation31 + $0x10] sm:$0xff]
        %v5592 = vld [vmem:[#allocation31 + $0x18] sm:$0xff]
        %v5593 = vld [vmem:[#allocation31 + $0x20] sm:$0xff]
        %v5594 = vld [vmem:[#allocation31 + $0x28] sm:$0xff]
        %v5595 = vld [vmem:[#allocation31 + $0x30] sm:$0xff]
        %v5596 = vld [vmem:[#allocation31 + $0x38] sm:$0xff]
        %v5598 = vsel %vm5425, %v5408, 0
        %5600 = vmatprep.subr.mxu0 0.0
        %5601 = vmatpush1.msra.mxu0 %v5589
        %5602 = vmatprep.subr.mxu0 0.0
        %5603 = vmatpush1.msra.mxu0 %v5590
        %5604 = vmatprep.subr.mxu0 0.0
        %5605 = vmatpush1.msra.mxu0 %v5591
        %5606 = vmatprep.subr.mxu0 0.0
        %5607 = vmatpush1.msra.mxu0 %v5592
        %5608 = vmatprep.subr.mxu0 0.0
        %5609 = vmatpush1.msra.mxu0 %v5593
        %5610 = vmatprep.subr.mxu0 0.0
        %5611 = vmatpush1.msra.mxu0 %v5594
        %5612 = vmatprep.subr.mxu0 0.0
        %5613 = vmatpush1.msra.mxu0 %v5595
        %5614 = vmatprep.subr.mxu0 0.0
        %5615 = vmatpush1.msra.mxu0 %v5596
        %5616 = vmatprep.subr.mxu0 0.0
        %5617 = vmatpush1.msra.mxu0 0.0
        %5618 = vmatprep.subr.mxu0 0.0
        %5619 = vmatpush1.msra.mxu0 0.0
        %5620 = vmatprep.subr.mxu0 0.0
        %5621 = vmatpush1.msra.mxu0 0.0
        %5622 = vmatprep.subr.mxu0 0.0
        %5623 = vmatpush1.msra.mxu0 0.0
        %5624 = vmatprep.subr.mxu0 0.0
        %5625 = vmatpush1.msra.mxu0 0.0
        %5626 = vmatprep.subr.mxu0 0.0
        %5627 = vmatpush1.msra.mxu0 0.0
        %5628 = vmatprep.subr.mxu0 0.0
        %5629 = vmatpush1.msra.mxu0 0.0
        %5630 = vmatprep.subr.mxu0 0.0
        %5631 = vmatpush1.msra.mxu0 0.0
        %5632 = vmatprep.subr.mxu0 0.0
        %5633 = vmatpush1.msra.mxu0 0.0
        %5634 = vmatprep.subr.mxu0 0.0
        %5635 = vmatpush1.msra.mxu0 0.0
        %5636 = vmatprep.subr.mxu0 0.0
        %5637 = vmatpush1.msra.mxu0 0.0
        %5638 = vmatprep.subr.mxu0 0.0
        %5639 = vmatpush1.msra.mxu0 0.0
        %5640 = vmatprep.subr.mxu0 0.0
        %5641 = vmatpush1.msra.mxu0 0.0
        %5642 = vmatprep.subr.mxu0 0.0
        %5643 = vmatpush1.msra.mxu0 0.0
        %5644 = vmatprep.subr.mxu0 0.0
        %5645 = vmatpush1.msra.mxu0 0.0
        %5646 = vmatprep.subr.mxu0 0.0
        %5647 = vmatpush1.msra.mxu0 0.0
        %5648 = vmatprep.subr.mxu0 0.0
        %5649 = vmatpush1.msra.mxu0 0.0
        %5650 = vmatprep.subr.mxu0 0.0
        %5651 = vmatpush1.msra.mxu0 0.0
        %5652 = vmatprep.subr.mxu0 0.0
        %5653 = vmatpush1.msra.mxu0 0.0
        %5654 = vmatprep.subr.mxu0 0.0
        %5655 = vmatpush1.msra.mxu0 0.0
        %5656 = vmatprep.subr.mxu0 0.0
        %5657 = vmatpush1.msra.mxu0 0.0
        %5658 = vmatprep.subr.mxu0 0.0
        %5659 = vmatpush1.msra.mxu0 0.0
        %5660 = vmatprep.subr.mxu0 0.0
        %5661 = vmatpush1.msra.mxu0 0.0
        %5662 = vmatprep.subr.mxu0 0.0
        %5663 = vmatpush1.msra.mxu0 0.0
        %5664 = vmatprep.mubr.f32.mxu0 0.0
        %5665 = vmatmul.mubr.f32.gmra.mrb[0].mxu0 %v5598
        %v5666 = vpop.f32.mrb[0].mxu0
        %v5667 = vadd.f32 0.0, %v5666
        %v5668 = vpop.f32.mrb[0].mxu0
        %5669 = vdwg.mxu0
        %v5671 = vsel %vm5425, %v5232, 0
        %5673 = vmatprep.subr.mxu0 0.0
        %5674 = vmatpush1.msra.mxu0 %v5581
        %5675 = vmatprep.subr.mxu0 0.0
        %5676 = vmatpush1.msra.mxu0 %v5582
        %5677 = vmatprep.subr.mxu0 0.0
        %5678 = vmatpush1.msra.mxu0 %v5583
        %5679 = vmatprep.subr.mxu0 0.0
        %5680 = vmatpush1.msra.mxu0 %v5584
        %5681 = vmatprep.subr.mxu0 0.0
        %5682 = vmatpush1.msra.mxu0 %v5585
        %5683 = vmatprep.subr.mxu0 0.0
        %5684 = vmatpush1.msra.mxu0 %v5586
        %5685 = vmatprep.subr.mxu0 0.0
        %5686 = vmatpush1.msra.mxu0 %v5587
        %5687 = vmatprep.subr.mxu0 0.0
        %5688 = vmatpush1.msra.mxu0 %v5588
        %5689 = vmatprep.subr.mxu0 0.0
        %5690 = vmatpush1.msra.mxu0 0.0
        %5691 = vmatprep.subr.mxu0 0.0
        %5692 = vmatpush1.msra.mxu0 0.0
        %5693 = vmatprep.subr.mxu0 0.0
        %5694 = vmatpush1.msra.mxu0 0.0
        %5695 = vmatprep.subr.mxu0 0.0
        %5696 = vmatpush1.msra.mxu0 0.0
        %5697 = vmatprep.subr.mxu0 0.0
        %5698 = vmatpush1.msra.mxu0 0.0
        %5699 = vmatprep.subr.mxu0 0.0
        %5700 = vmatpush1.msra.mxu0 0.0
        %5701 = vmatprep.subr.mxu0 0.0
        %5702 = vmatpush1.msra.mxu0 0.0
        %5703 = vmatprep.subr.mxu0 0.0
        %5704 = vmatpush1.msra.mxu0 0.0
        %5705 = vmatprep.subr.mxu0 0.0
        %5706 = vmatpush1.msra.mxu0 0.0
        %5707 = vmatprep.subr.mxu0 0.0
        %5708 = vmatpush1.msra.mxu0 0.0
        %5709 = vmatprep.subr.mxu0 0.0
        %5710 = vmatpush1.msra.mxu0 0.0
        %5711 = vmatprep.subr.mxu0 0.0
        %5712 = vmatpush1.msra.mxu0 0.0
        %5713 = vmatprep.subr.mxu0 0.0
        %5714 = vmatpush1.msra.mxu0 0.0
        %5715 = vmatprep.subr.mxu0 0.0
        %5716 = vmatpush1.msra.mxu0 0.0
        %5717 = vmatprep.subr.mxu0 0.0
        %5718 = vmatpush1.msra.mxu0 0.0
        %5719 = vmatprep.subr.mxu0 0.0
        %5720 = vmatpush1.msra.mxu0 0.0
        %5721 = vmatprep.subr.mxu0 0.0
        %5722 = vmatpush1.msra.mxu0 0.0
        %5723 = vmatprep.subr.mxu0 0.0
        %5724 = vmatpush1.msra.mxu0 0.0
        %5725 = vmatprep.subr.mxu0 0.0
        %5726 = vmatpush1.msra.mxu0 0.0
        %5727 = vmatprep.subr.mxu0 0.0
        %5728 = vmatpush1.msra.mxu0 0.0
        %5729 = vmatprep.subr.mxu0 0.0
        %5730 = vmatpush1.msra.mxu0 0.0
        %5731 = vmatprep.subr.mxu0 0.0
        %5732 = vmatpush1.msra.mxu0 0.0
        %5733 = vmatprep.subr.mxu0 0.0
        %5734 = vmatpush1.msra.mxu0 0.0
        %5735 = vmatprep.subr.mxu0 0.0
        %5736 = vmatpush1.msra.mxu0 0.0
        %5737 = vmatprep.mubr.f32.mxu0 0.0
        %5738 = vmatmul.mubr.f32.gmra.mrb[0].mxu0 %v5671
        %v5739 = vpop.f32.mrb[0].mxu0
        %v5740 = vadd.f32 %v5667, %v5739
        %v5741 = vpop.f32.mrb[0].mxu0
        %5742 = vdwg.mxu0
        %v5743 = vld [vmem:[#allocation33] sm:$0x1]
        %v5745 = vlaneseq
        %v5746 = vshrl.u32 %v5745, 7
        %v5747 = vsub.s32 0, %v5746
        %v5748 = vrot.slane %v5743, %v5747
        %v5750 = vadd.f32 %v5740, %v5748
        %v5751 = vmax.f32 %v5750, 0.0
        %v5752 = vld [vmem:[%s1249] sm:$0xff]
        %v5753 = vld [vmem:[#allocation34] sm:$0xff]
        %v5754 = vld [vmem:[#allocation34 + $0x8] sm:$0xff]
        %v5755 = vld [vmem:[#allocation34 + $0x10] sm:$0xff]
        %v5756 = vld [vmem:[#allocation34 + $0x18] sm:$0xff]
        %v5757 = vld [vmem:[#allocation34 + $0x20] sm:$0xff]
        %v5758 = vld [vmem:[#allocation34 + $0x28] sm:$0xff]
        %v5759 = vld [vmem:[#allocation34 + $0x30] sm:$0xff]
        %v5760 = vld [vmem:[#allocation34 + $0x38] sm:$0xff]
        %v5761 = vld [vmem:[#allocation36] sm:$0xff]
        %v5762 = vld [vmem:[#allocation36 + $0x8] sm:$0xff]
        %v5763 = vld [vmem:[#allocation36 + $0x10] sm:$0xff]
        %v5764 = vld [vmem:[#allocation36 + $0x18] sm:$0xff]
        %v5765 = vld [vmem:[#allocation36 + $0x20] sm:$0xff]
        %v5766 = vld [vmem:[#allocation36 + $0x28] sm:$0xff]
        %v5767 = vld [vmem:[#allocation36 + $0x30] sm:$0xff]
        %v5768 = vld [vmem:[#allocation36 + $0x38] sm:$0xff]
        %v5770 = vsel %vm5425, %v5751, 0
        %5772 = vmatprep.subr.mxu0 0.0
        %5773 = vmatpush1.msra.mxu0 %v5761
        %5774 = vmatprep.subr.mxu0 0.0
        %5775 = vmatpush1.msra.mxu0 %v5762
        %5776 = vmatprep.subr.mxu0 0.0
        %5777 = vmatpush1.msra.mxu0 %v5763
        %5778 = vmatprep.subr.mxu0 0.0
        %5779 = vmatpush1.msra.mxu0 %v5764
        %5780 = vmatprep.subr.mxu0 0.0
        %5781 = vmatpush1.msra.mxu0 %v5765
        %5782 = vmatprep.subr.mxu0 0.0
        %5783 = vmatpush1.msra.mxu0 %v5766
        %5784 = vmatprep.subr.mxu0 0.0
        %5785 = vmatpush1.msra.mxu0 %v5767
        %5786 = vmatprep.subr.mxu0 0.0
        %5787 = vmatpush1.msra.mxu0 %v5768
        %5788 = vmatprep.subr.mxu0 0.0
        %5789 = vmatpush1.msra.mxu0 0.0
        %5790 = vmatprep.subr.mxu0 0.0
        %5791 = vmatpush1.msra.mxu0 0.0
        %5792 = vmatprep.subr.mxu0 0.0
        %5793 = vmatpush1.msra.mxu0 0.0
        %5794 = vmatprep.subr.mxu0 0.0
        %5795 = vmatpush1.msra.mxu0 0.0
        %5796 = vmatprep.subr.mxu0 0.0
        %5797 = vmatpush1.msra.mxu0 0.0
        %5798 = vmatprep.subr.mxu0 0.0
        %5799 = vmatpush1.msra.mxu0 0.0
        %5800 = vmatprep.subr.mxu0 0.0
        %5801 = vmatpush1.msra.mxu0 0.0
        %5802 = vmatprep.subr.mxu0 0.0
        %5803 = vmatpush1.msra.mxu0 0.0
        %5804 = vmatprep.subr.mxu0 0.0
        %5805 = vmatpush1.msra.mxu0 0.0
        %5806 = vmatprep.subr.mxu0 0.0
        %5807 = vmatpush1.msra.mxu0 0.0
        %5808 = vmatprep.subr.mxu0 0.0
        %5809 = vmatpush1.msra.mxu0 0.0
        %5810 = vmatprep.subr.mxu0 0.0
        %5811 = vmatpush1.msra.mxu0 0.0
        %5812 = vmatprep.subr.mxu0 0.0
        %5813 = vmatpush1.msra.mxu0 0.0
        %5814 = vmatprep.subr.mxu0 0.0
        %5815 = vmatpush1.msra.mxu0 0.0
        %5816 = vmatprep.subr.mxu0 0.0
        %5817 = vmatpush1.msra.mxu0 0.0
        %5818 = vmatprep.subr.mxu0 0.0
        %5819 = vmatpush1.msra.mxu0 0.0
        %5820 = vmatprep.subr.mxu0 0.0
        %5821 = vmatpush1.msra.mxu0 0.0
        %5822 = vmatprep.subr.mxu0 0.0
        %5823 = vmatpush1.msra.mxu0 0.0
        %5824 = vmatprep.subr.mxu0 0.0
        %5825 = vmatpush1.msra.mxu0 0.0
        %5826 = vmatprep.subr.mxu0 0.0
        %5827 = vmatpush1.msra.mxu0 0.0
        %5828 = vmatprep.subr.mxu0 0.0
        %5829 = vmatpush1.msra.mxu0 0.0
        %5830 = vmatprep.subr.mxu0 0.0
        %5831 = vmatpush1.msra.mxu0 0.0
        %5832 = vmatprep.subr.mxu0 0.0
        %5833 = vmatpush1.msra.mxu0 0.0
        %5834 = vmatprep.subr.mxu0 0.0
        %5835 = vmatpush1.msra.mxu0 0.0
        %5836 = vmatprep.mubr.f32.mxu0 0.0
        %5837 = vmatmul.mubr.f32.gmra.mrb[0].mxu0 %v5770
        %v5838 = vpop.f32.mrb[0].mxu0
        %v5839 = vadd.f32 0.0, %v5838
        %v5840 = vpop.f32.mrb[0].mxu0
        %5841 = vdwg.mxu0
        %v5843 = vsel %vm5425, %v5580, 0
        %5845 = vmatprep.subr.mxu0 0.0
        %5846 = vmatpush1.msra.mxu0 %v5753
        %5847 = vmatprep.subr.mxu0 0.0
        %5848 = vmatpush1.msra.mxu0 %v5754
        %5849 = vmatprep.subr.mxu0 0.0
        %5850 = vmatpush1.msra.mxu0 %v5755
        %5851 = vmatprep.subr.mxu0 0.0
        %5852 = vmatpush1.msra.mxu0 %v5756
        %5853 = vmatprep.subr.mxu0 0.0
        %5854 = vmatpush1.msra.mxu0 %v5757
        %5855 = vmatprep.subr.mxu0 0.0
        %5856 = vmatpush1.msra.mxu0 %v5758
        %5857 = vmatprep.subr.mxu0 0.0
        %5858 = vmatpush1.msra.mxu0 %v5759
        %5859 = vmatprep.subr.mxu0 0.0
        %5860 = vmatpush1.msra.mxu0 %v5760
        %5861 = vmatprep.subr.mxu0 0.0
        %5862 = vmatpush1.msra.mxu0 0.0
        %5863 = vmatprep.subr.mxu0 0.0
        %5864 = vmatpush1.msra.mxu0 0.0
        %5865 = vmatprep.subr.mxu0 0.0
        %5866 = vmatpush1.msra.mxu0 0.0
        %5867 = vmatprep.subr.mxu0 0.0
        %5868 = vmatpush1.msra.mxu0 0.0
        %5869 = vmatprep.subr.mxu0 0.0
        %5870 = vmatpush1.msra.mxu0 0.0
        %5871 = vmatprep.subr.mxu0 0.0
        %5872 = vmatpush1.msra.mxu0 0.0
        %5873 = vmatprep.subr.mxu0 0.0
        %5874 = vmatpush1.msra.mxu0 0.0
        %5875 = vmatprep.subr.mxu0 0.0
        %5876 = vmatpush1.msra.mxu0 0.0
        %5877 = vmatprep.subr.mxu0 0.0
        %5878 = vmatpush1.msra.mxu0 0.0
        %5879 = vmatprep.subr.mxu0 0.0
        %5880 = vmatpush1.msra.mxu0 0.0
        %5881 = vmatprep.subr.mxu0 0.0
        %5882 = vmatpush1.msra.mxu0 0.0
        %5883 = vmatprep.subr.mxu0 0.0
        %5884 = vmatpush1.msra.mxu0 0.0
        %5885 = vmatprep.subr.mxu0 0.0
        %5886 = vmatpush1.msra.mxu0 0.0
        %5887 = vmatprep.subr.mxu0 0.0
        %5888 = vmatpush1.msra.mxu0 0.0
        %5889 = vmatprep.subr.mxu0 0.0
        %5890 = vmatpush1.msra.mxu0 0.0
        %5891 = vmatprep.subr.mxu0 0.0
        %5892 = vmatpush1.msra.mxu0 0.0
        %5893 = vmatprep.subr.mxu0 0.0
        %5894 = vmatpush1.msra.mxu0 0.0
        %5895 = vmatprep.subr.mxu0 0.0
        %5896 = vmatpush1.msra.mxu0 0.0
        %5897 = vmatprep.subr.mxu0 0.0
        %5898 = vmatpush1.msra.mxu0 0.0
        %5899 = vmatprep.subr.mxu0 0.0
        %5900 = vmatpush1.msra.mxu0 0.0
        %5901 = vmatprep.subr.mxu0 0.0
        %5902 = vmatpush1.msra.mxu0 0.0
        %5903 = vmatprep.subr.mxu0 0.0
        %5904 = vmatpush1.msra.mxu0 0.0
        %5905 = vmatprep.subr.mxu0 0.0
        %5906 = vmatpush1.msra.mxu0 0.0
        %5907 = vmatprep.subr.mxu0 0.0
        %5908 = vmatpush1.msra.mxu0 0.0
        %5909 = vmatprep.mubr.f32.mxu0 0.0
        %5910 = vmatmul.mubr.f32.gmra.mrb[0].mxu0 %v5843
        %v5911 = vpop.f32.mrb[0].mxu0
        %v5912 = vadd.f32 %v5839, %v5911
        %v5913 = vpop.f32.mrb[0].mxu0
        %5914 = vdwg.mxu0
        %v5915 = vld [vmem:[#allocation37] sm:$0xff]
        %v5916 = vld [vmem:[#allocation37 + $0x8] sm:$0x3]
        %v5918 = vsel %vm5243, %v5752, 0
        %v5921 = vsel %vm5247, %v5916, 0
        %5923 = vmatprep.subr.mxu0 0.0
        %5924 = vmatpush1.msra.mxu0 %v5915
        %5925 = vmatprep.subr.mxu0 0.0
        %5926 = vmatpush1.msra.mxu0 %v5921
        %5927 = vmatprep.subr.mxu0 0.0
        %5928 = vmatpush1.msra.mxu0 0.0
        %5929 = vmatprep.subr.mxu0 0.0
        %5930 = vmatpush1.msra.mxu0 0.0
        %5931 = vmatprep.subr.mxu0 0.0
        %5932 = vmatpush1.msra.mxu0 0.0
        %5933 = vmatprep.subr.mxu0 0.0
        %5934 = vmatpush1.msra.mxu0 0.0
        %5935 = vmatprep.subr.mxu0 0.0
        %5936 = vmatpush1.msra.mxu0 0.0
        %5937 = vmatprep.subr.mxu0 0.0
        %5938 = vmatpush1.msra.mxu0 0.0
        %5939 = vmatprep.subr.mxu0 0.0
        %5940 = vmatpush1.msra.mxu0 0.0
        %5941 = vmatprep.subr.mxu0 0.0
        %5942 = vmatpush1.msra.mxu0 0.0
        %5943 = vmatprep.subr.mxu0 0.0
        %5944 = vmatpush1.msra.mxu0 0.0
        %5945 = vmatprep.subr.mxu0 0.0
        %5946 = vmatpush1.msra.mxu0 0.0
        %5947 = vmatprep.subr.mxu0 0.0
        %5948 = vmatpush1.msra.mxu0 0.0
        %5949 = vmatprep.subr.mxu0 0.0
        %5950 = vmatpush1.msra.mxu0 0.0
        %5951 = vmatprep.subr.mxu0 0.0
        %5952 = vmatpush1.msra.mxu0 0.0
        %5953 = vmatprep.subr.mxu0 0.0
        %5954 = vmatpush1.msra.mxu0 0.0
        %5955 = vmatprep.subr.mxu0 0.0
        %5956 = vmatpush1.msra.mxu0 0.0
        %5957 = vmatprep.subr.mxu0 0.0
        %5958 = vmatpush1.msra.mxu0 0.0
        %5959 = vmatprep.subr.mxu0 0.0
        %5960 = vmatpush1.msra.mxu0 0.0
        %5961 = vmatprep.subr.mxu0 0.0
        %5962 = vmatpush1.msra.mxu0 0.0
        %5963 = vmatprep.subr.mxu0 0.0
        %5964 = vmatpush1.msra.mxu0 0.0
        %5965 = vmatprep.subr.mxu0 0.0
        %5966 = vmatpush1.msra.mxu0 0.0
        %5967 = vmatprep.subr.mxu0 0.0
        %5968 = vmatpush1.msra.mxu0 0.0
        %5969 = vmatprep.subr.mxu0 0.0
        %5970 = vmatpush1.msra.mxu0 0.0
        %5971 = vmatprep.subr.mxu0 0.0
        %5972 = vmatpush1.msra.mxu0 0.0
        %5973 = vmatprep.subr.mxu0 0.0
        %5974 = vmatpush1.msra.mxu0 0.0
        %5975 = vmatprep.subr.mxu0 0.0
        %5976 = vmatpush1.msra.mxu0 0.0
        %5977 = vmatprep.subr.mxu0 0.0
        %5978 = vmatpush1.msra.mxu0 0.0
        %5979 = vmatprep.subr.mxu0 0.0
        %5980 = vmatpush1.msra.mxu0 0.0
        %5981 = vmatprep.subr.mxu0 0.0
        %5982 = vmatpush1.msra.mxu0 0.0
        %5983 = vmatprep.subr.mxu0 0.0
        %5984 = vmatpush1.msra.mxu0 0.0
        %5985 = vmatprep.subr.mxu0 0.0
        %5986 = vmatpush1.msra.mxu0 0.0
        %5987 = vmatprep.mubr.f32.mxu0 0.0
        %5988 = vmatmul.mubr.f32.gmra.mrb[0].mxu0 %v5918
        %v5989 = vpop.f32.mrb[0].mxu0
        %v5990 = vadd.f32 0.0, %v5989
        %v5991 = vpop.f32.mrb[0].mxu0
        %5992 = vdwg.mxu0
        %v5993 = vadd.f32 %v5912, %v5990
        %v5994 = vld [vmem:[#allocation39] sm:$0x1]
        %v5996 = vlaneseq
        %v5997 = vshrl.u32 %v5996, 7
        %v5998 = vsub.s32 0, %v5997
        %v5999 = vrot.slane %v5994, %v5998
        %v6001 = vadd.f32 %v5993, %v5999
        %v6002 = vmax.f32 %v6001, 0.0
        %v6003 = vld [vmem:[%s59] sm:$0xff]
        %v6004 = vld [vmem:[%s59 + $0x8] sm:$0xff]
        %v6005 = vld [vmem:[%s59 + $0x10] sm:$0xff]
        %v6006 = vld [vmem:[%s59 + $0x18] sm:$0xff]
        %v6007 = vld [vmem:[%s59 + $0x20] sm:$0xff]
        %v6008 = vld [vmem:[%s59 + $0x28] sm:$0xff]
        %v6009 = vld [vmem:[%s59 + $0x30] sm:$0xff]
        %v6010 = vld [vmem:[%s59 + $0x38] sm:$0xff]
        %v6011 = vld [vmem:[%s61] sm:$0x1]
        %v6013 = vlaneseq
        %v6014 = vshrl.u32 %v6013, 7
        %v6015 = vsub.s32 0, %v6014
        %v6016 = vrot.slane %v6011, %v6015
        %v6019 = vsel %vm5425, %v6002, 0
        %6021 = vmatprep.subr.mxu0 0.0
        %6022 = vmatpush1.msra.mxu0 %v6003
        %6023 = vmatprep.subr.mxu0 0.0
        %6024 = vmatpush1.msra.mxu0 %v6004
        %6025 = vmatprep.subr.mxu0 0.0
        %6026 = vmatpush1.msra.mxu0 %v6005
        %6027 = vmatprep.subr.mxu0 0.0
        %6028 = vmatpush1.msra.mxu0 %v6006
        %6029 = vmatprep.subr.mxu0 0.0
        %6030 = vmatpush1.msra.mxu0 %v6007
        %6031 = vmatprep.subr.mxu0 0.0
        %6032 = vmatpush1.msra.mxu0 %v6008
        %6033 = vmatprep.subr.mxu0 0.0
        %6034 = vmatpush1.msra.mxu0 %v6009
        %6035 = vmatprep.subr.mxu0 0.0
        %6036 = vmatpush1.msra.mxu0 %v6010
        %6037 = vmatprep.subr.mxu0 0.0
        %6038 = vmatpush1.msra.mxu0 0.0
        %6039 = vmatprep.subr.mxu0 0.0
        %6040 = vmatpush1.msra.mxu0 0.0
        %6041 = vmatprep.subr.mxu0 0.0
        %6042 = vmatpush1.msra.mxu0 0.0
        %6043 = vmatprep.subr.mxu0 0.0
        %6044 = vmatpush1.msra.mxu0 0.0
        %6045 = vmatprep.subr.mxu0 0.0
        %6046 = vmatpush1.msra.mxu0 0.0
        %6047 = vmatprep.subr.mxu0 0.0
        %6048 = vmatpush1.msra.mxu0 0.0
        %6049 = vmatprep.subr.mxu0 0.0
        %6050 = vmatpush1.msra.mxu0 0.0
        %6051 = vmatprep.subr.mxu0 0.0
        %6052 = vmatpush1.msra.mxu0 0.0
        %6053 = vmatprep.subr.mxu0 0.0
        %6054 = vmatpush1.msra.mxu0 0.0
        %6055 = vmatprep.subr.mxu0 0.0
        %6056 = vmatpush1.msra.mxu0 0.0
        %6057 = vmatprep.subr.mxu0 0.0
        %6058 = vmatpush1.msra.mxu0 0.0
        %6059 = vmatprep.subr.mxu0 0.0
        %6060 = vmatpush1.msra.mxu0 0.0
        %6061 = vmatprep.subr.mxu0 0.0
        %6062 = vmatpush1.msra.mxu0 0.0
        %6063 = vmatprep.subr.mxu0 0.0
        %6064 = vmatpush1.msra.mxu0 0.0
        %6065 = vmatprep.subr.mxu0 0.0
        %6066 = vmatpush1.msra.mxu0 0.0
        %6067 = vmatprep.subr.mxu0 0.0
        %6068 = vmatpush1.msra.mxu0 0.0
        %6069 = vmatprep.subr.mxu0 0.0
        %6070 = vmatpush1.msra.mxu0 0.0
        %6071 = vmatprep.subr.mxu0 0.0
        %6072 = vmatpush1.msra.mxu0 0.0
        %6073 = vmatprep.subr.mxu0 0.0
        %6074 = vmatpush1.msra.mxu0 0.0
        %6075 = vmatprep.subr.mxu0 0.0
        %6076 = vmatpush1.msra.mxu0 0.0
        %6077 = vmatprep.subr.mxu0 0.0
        %6078 = vmatpush1.msra.mxu0 0.0
        %6079 = vmatprep.subr.mxu0 0.0
        %6080 = vmatpush1.msra.mxu0 0.0
        %6081 = vmatprep.subr.mxu0 0.0
        %6082 = vmatpush1.msra.mxu0 0.0
        %6083 = vmatprep.subr.mxu0 0.0
        %6084 = vmatpush1.msra.mxu0 0.0
        %6085 = vmatprep.mubr.f32.mxu0 0.0
        %6086 = vmatmul.mubr.f32.gmra.mrb[0].mxu0 %v6019
        %v6087 = vpop.f32.mrb[0].mxu0
        %v6088 = vadd.f32 %v6016, %v6087
        %v6089 = vpop.f32.mrb[0].mxu0
        %6090 = vdwg.mxu0
        %6091 = vst [vmem:[%s1447] sm:$0xff] %v6088
        %p6092 = scmp.lt.s32.totalorder %s95, 1
        %s6093 = scalar_select %p6092, %s95, 1
        %s6094 = smul.addr %s6093, 8
        %s6095 = scalar_lea.vmem %s63, %s6094
        // Predicated region
        $region245: #{ipec_forward.1} parent=143 // pred_check
          %p6096 = pneg %p799
        $region246: #{ipec_forward.1} parent=143 // pred_check_branch
          %6098 = sbr.rel (%p6096) target = $region248
        $region247: #{ipec_forward.1} parent=143 // pred_region
          _
        $region248: #{ipec_forward.1} parent=143 // pred_fallthru
          _
      $region144: #{ipec_forward.1} parent=5 // pred_fallthru
        _
      %p6099 = scmp.le.s32.totalorder 2, %s90
      // Predicated region
      $region249: #{ipec_forward.1} parent=5 // pred_check
        %p6100 = pneg %p6099
      $region250: #{ipec_forward.1} parent=5 // pred_check_branch
        %6102 = sbr.rel (%p6100) target = $region252
      $region251: #{ipec_forward.1} parent=5 // pred_region
        %s6103 = ssub.s32 %s90, 2
        // Predicated region
        $region253: #{ipec_forward.1} parent=251 // pred_check
          %p6104 = pneg %p805
        $region254: #{ipec_forward.1} parent=251 // pred_check_branch
          %6106 = sbr.rel (%p6104) target = $region256
        $region255: #{ipec_forward.1} parent=251 // pred_region
          %p6107 = scmp.lt.s32.totalorder %s96, 1
          %s6108 = scalar_select %p6107, %s96, 1
          %s6109 = smul.addr %s6108, 8
          %s6110 = scalar_lea.vmem %s63, %s6109
        $region256: #{ipec_forward.1} parent=251 // pred_fallthru
          _
      $region252: #{ipec_forward.1} parent=5 // pred_fallthru
        _
    $region6: #{ipec_forward.1} parent=1 // loop_footer
      %s94 = sadd.s32 1, %s90
    $region7: #{ipec_forward.1} parent=1 // loop_footer_branch
      %89 = sbr.rel target = $region3
    $region8: #{ipec_forward.1} parent=1 // loop_exit
      _
    %6111 = vsyncpa [#allocation3], 1
    %s6112 = scalar_lea.sflag [#allocation3], 1
    %6113 = vsyncpa %s6112, 1
    %6114 = vsyncpa [#allocation5], 1
    %s6115 = scalar_lea.sflag [#allocation5], 1
    %6116 = vsyncpa %s6115, 1
    %6117 = vsyncpa [#allocation8], 1
    %s6118 = scalar_lea.sflag [#allocation8], 1
    %6119 = vsyncpa %s6118, 1
    %6120 = vsyncpa [#allocation11], 1
    %s6121 = scalar_lea.sflag [#allocation11], 1
    %6122 = vsyncpa %s6121, 1
    %6123 = vsyncpa [#allocation14], 1
    %6124 = vsyncpa [#allocation17], 1
    %6125 = vsyncpa [#allocation20], 1
    %6126 = vsyncpa [#allocation23], 1
    %6127 = vsyncpa [#allocation26], 1
    %6128 = vsyncpa [#allocation29], 1
    %6129 = vsyncpa [#allocation32], 1
    %6130 = vsyncpa [#allocation35], 1
    %6131 = vsyncpa [#allocation38], 1

</llo_original>
